<compile_context>
chip_gen: v6e
topology: v6e:2x2x1
jax: 0.10.0
libtpu: 0.0.40
codegen_flags: <defaults>
</compile_context>

<pallas_src>
import math

import jax
import jax.numpy as jnp
from jax import lax
from jax.experimental import pallas as pl
from jax.experimental.pallas import tpu as pltpu


def _pick_band_rows(H, W):
    """Image rows per matmul band: target <=128 output rows (M) per MXU call."""
    best = 1
    for bh in range(1, H + 1):
        if H % bh == 0 and bh * W <= 128:
            best = bh
    return best


# ----------------------------------------------------------------------------
# Fused residual-block kernel (one sample per grid step)
# ----------------------------------------------------------------------------
def _make_residual_block_kernel(H, W, C):
    BH = _pick_band_rows(H, W)          # image rows per band
    n_bands = H // BH
    HPW = (H + 2) * W                   # rows of the column-im2col slab

    def kernel(x_ref, w1_ref, b1_ref, w2_ref, b2_ref, o_ref, cols_ref, y1_ref):
        # x_ref   : (1, H*W, C)      f32   unpadded input (one sample)
        # w1/w2   : (3, 3*C, C)      bf16  folded weights [di, dj*C + cin, cout]
        # b1/b2   : (1, C)           f32   biases
        # o_ref   : (1, H*W, C)      f32   output
        # cols_ref: ((H+2)*W, 3*C)   bf16  column-im2col slab (shared by both convs)
        # y1_ref  : (H*W, C)         bf16  conv1 activation (ReLU'd)

        def write_cols(act):
            # act: (H, W, C) bf16.  Build the reflection-padded column-im2col
            # slab: cols[(r)*W + j, dj*C + c] = padded(act)[r, j + dj, c].
            # Row reflection via leading-dim concat, column reflection folded
            # into the three shifted column copies; each slab is stored with a
            # single lane-aligned full-extent store (no masked partial stores).
            rp = jnp.concatenate([act[1:2], act, act[H - 2:H - 1]], axis=0)       # (H+2, W, C)
            left = jnp.concatenate([rp[:, 1:2, :], rp[:, 0:W - 1, :]], axis=1)    # dj = 0
            right = jnp.concatenate([rp[:, 1:W, :], rp[:, W - 2:W - 1, :]], axis=1)  # dj = 2
            cols_ref[:, 0 * C:1 * C] = left.reshape(HPW, C)
            cols_ref[:, 1 * C:2 * C] = rp.reshape(HPW, C)
            cols_ref[:, 2 * C:3 * C] = right.reshape(HPW, C)

        def conv_bands(w_ref, b_ref, finish):
            # 3x3 conv as 3 large-K matmuls per row band; acc is (BH*W, C) f32.
            for b in range(n_bands):
                r0 = b * BH
                acc = None
                for di in range(3):
                    lhs = cols_ref[(r0 + di) * W:(r0 + di + BH) * W, :]           # (BH*W, 3C)
                    d = jnp.dot(lhs, w_ref[di], preferred_element_type=jnp.float32)
                    acc = d if acc is None else acc + d
                finish(r0, acc + b_ref[...])

        # ---- conv1: reflect-pad(x) -> 3x3 conv -> +b1 -> ReLU ----------------
        write_cols(x_ref[0].astype(jnp.bfloat16).reshape(H, W, C))

        def fin1(r0, y):
            # bf16 intermediate feeds conv2's MXU operand (within test tolerance).
            y1_ref[r0 * W:(r0 + BH) * W, :] = jnp.maximum(y, 0.0).astype(jnp.bfloat16)

        conv_bands(w1_ref, b1_ref, fin1)

        # ---- conv2: reflect-pad(y1) -> 3x3 conv -> +b2 -----------------------
        write_cols(y1_ref[...].reshape(H, W, C))

        def fin2(r0, y):
            # residual: out = x + 0.2 * block(x)   (f32 residual path)
            xb = x_ref[0, r0 * W:(r0 + BH) * W, :]
            o_ref[0, r0 * W:(r0 + BH) * W, :] = xb + 0.2 * y

        conv_bands(w2_ref, b2_ref, fin2)

    return kernel


# ----------------------------------------------------------------------------
# Wrapper
# ----------------------------------------------------------------------------
def residual_block_forward(x_nchw, params):
    # PyTorch boundary is NCHW -> NHWC (channels on lanes), flattened to
    # (N, H*W, C) so all kernel loads/stores are lane-dense 2-D slabs.
    x = jnp.transpose(x_nchw, (0, 2, 3, 1)).astype(jnp.float32)
    N, H, W, C = x.shape
    assert H >= 2 and W >= 2, "ReflectionPad2d(1) needs spatial dims >= 2"
    x2 = x.reshape(N, H * W, C)

    # Fold weights for the column-im2col matmuls: (KH, KW, Cin, Cout) -> (3, 3*C, C)
    w1f = params["w1"].reshape(3, 3 * C, C).astype(jnp.bfloat16)
    w2f = params["w2"].reshape(3, 3 * C, C).astype(jnp.bfloat16)
    b1r = params["b1"].reshape(1, C).astype(jnp.float32)
    b2r = params["b2"].reshape(1, C).astype(jnp.float32)

    out = pl.pallas_call(
        _make_residual_block_kernel(H, W, C),
        out_shape=jax.ShapeDtypeStruct((N, H * W, C), jnp.float32),
        grid_spec=pltpu.PrefetchScalarGridSpec(
            num_scalar_prefetch=0,
            grid=(N,),
            in_specs=[
                pl.BlockSpec((1, H * W, C), lambda n: (n, 0, 0)),
                pl.BlockSpec((3, 3 * C, C), lambda n: (0, 0, 0)),
                pl.BlockSpec((1, C), lambda n: (0, 0)),
                pl.BlockSpec((3, 3 * C, C), lambda n: (0, 0, 0)),
                pl.BlockSpec((1, C), lambda n: (0, 0)),
            ],
            out_specs=pl.BlockSpec((1, H * W, C), lambda n: (n, 0, 0)),
            scratch_shapes=[
                pltpu.VMEM(((H + 2) * W, 3 * C), jnp.bfloat16),  # column-im2col slab
                pltpu.VMEM((H * W, C), jnp.bfloat16),            # conv1 activation
            ],
        ),
        compiler_params=pltpu.CompilerParams(
            dimension_semantics=("parallel",),       # batch axis
            vmem_limit_bytes=32 * 1024 * 1024,
        ),
    )(x2, w1f, b1r, w2f, b2r)

    out = out.reshape(N, H, W, C)
    return jnp.transpose(out, (0, 3, 1, 2))


residual_block_forward = jax.jit(residual_block_forward)


# ----------------------------------------------------------------------------
# Deterministic init (PyTorch Conv2d default: uniform(+-1/sqrt(fan_in)))
# ----------------------------------------------------------------------------
def init_residual_block_params(key, in_features):
    k1w, k1b, k2w, k2b = jax.random.split(key, 4)
    bound = 1.0 / math.sqrt(in_features * 3 * 3)
    shape = (3, 3, in_features, in_features)          # (KH, KW, Cin, Cout)
    w1 = jax.random.uniform(k1w, shape, jnp.float32, -bound, bound)
    b1 = jax.random.uniform(k1b, (in_features,), jnp.float32, -bound, bound)
    w2 = jax.random.uniform(k2w, shape, jnp.float32, -bound, bound)
    b2 = jax.random.uniform(k2b, (in_features,), jnp.float32, -bound, bound)
    return {"w1": w1, "b1": b1, "w2": w2, "b2": b2}


# ----------------------------------------------------------------------------
# Pure-JAX reference (f32) for correctness checking
# ----------------------------------------------------------------------------
def _reference_forward(x_nchw, params):
    x = jnp.transpose(x_nchw, (0, 2, 3, 1)).astype(jnp.float32)
    dn = ("NHWC", "HWIO", "NHWC")
    xp = jnp.pad(x, ((0, 0), (1, 1), (1, 1), (0, 0)), mode="reflect")
    y = lax.conv_general_dilated(xp, params["w1"], (1, 1), "VALID",
                                 dimension_numbers=dn) + params["b1"]
    y = jnp.maximum(y, 0.0)
    yp = jnp.pad(y, ((0, 0), (1, 1), (1, 1), (0, 0)), mode="reflect")
    y = lax.conv_general_dilated(yp, params["w2"], (1, 1), "VALID",
                                 dimension_numbers=dn) + params["b2"]
    out = x + 0.2 * y
    return jnp.transpose(out, (0, 3, 1, 2))


# ----------------------------------------------------------------------------
if __name__ == "__main__":
    key = jax.random.PRNGKey(0)
    k_params, k_img = jax.random.split(key)

    N, C, H, W = 2, 128, 16, 16        # lane-dense channel count
    params = init_residual_block_params(k_params, C)
    x = jax.random.normal(k_img, (N, C, H, W), jnp.float32)

    out = jax.block_until_ready(residual_block_forward(x, params))
    ref = jax.block_until_ready(_reference_forward(x, params))

    assert out.shape == (N, C, H, W), (out.shape, (N, C, H, W))
    assert bool(jnp.all(jnp.isfinite(out)))
    max_err = float(jnp.max(jnp.abs(out - ref)))
    assert bool(jnp.allclose(out, ref, atol=5e-2, rtol=5e-2)), max_err
    print("KERNEL_OK")
</pallas_src>

<mosaic_0001>
module attributes {stable_mosaic.version = 11 : i64} {
  func.func @kernel(%arg0: i32, %arg1: memref<1x256x128xf32, #tpu.memory_space<vmem>>, %arg2: memref<3x384x128xbf16, #tpu.memory_space<vmem>>, %arg3: memref<1x128xf32, #tpu.memory_space<vmem>>, %arg4: memref<3x384x128xbf16, #tpu.memory_space<vmem>>, %arg5: memref<1x128xf32, #tpu.memory_space<vmem>>, %arg6: memref<1x256x128xf32, #tpu.memory_space<vmem>>, %arg7: memref<288x384xbf16, #tpu.memory_space<vmem>>, %arg8: memref<256x128xbf16, #tpu.memory_space<vmem>>) attributes {dimension_semantics = [#tpu.dimension_semantics<parallel>], iteration_bounds = array<i64: 2>, scalar_prefetch = 0 : i64, scratch_operands = 2 : i64, tpu.core_type = #tpu.core_type<tc>, window_params = [{transform_indices = @transform_0, window_bounds = array<i64: 1, 256, 128>}, {pipeline_mode = #tpu.pipeline_mode<synchronous>, transform_indices = @transform_1, window_bounds = array<i64: 3, 384, 128>}, {pipeline_mode = #tpu.pipeline_mode<synchronous>, transform_indices = @transform_2, window_bounds = array<i64: 1, 128>}, {pipeline_mode = #tpu.pipeline_mode<synchronous>, transform_indices = @transform_3, window_bounds = array<i64: 3, 384, 128>}, {pipeline_mode = #tpu.pipeline_mode<synchronous>, transform_indices = @transform_4, window_bounds = array<i64: 1, 128>}, {transform_indices = @transform_5, window_bounds = array<i64: 1, 256, 128>}]} {
    %c0 = arith.constant 0 : index
    %c0_0 = arith.constant 0 : index
    %c0_1 = arith.constant 0 : index
    %0 = vector.load %arg1[%c0, %c0_0, %c0_1] : memref<1x256x128xf32, #tpu.memory_space<vmem>>, vector<1x256x128xf32>
    %1 = vector.shape_cast %0 : vector<1x256x128xf32> to vector<256x128xf32>
    %2 = arith.truncf %1 : vector<256x128xf32> to vector<256x128xbf16>
    %3 = vector.shape_cast %2 : vector<256x128xbf16> to vector<16x16x128xbf16>
    %4 = vector.extract_strided_slice %3 {offsets = [1, 0, 0], sizes = [1, 16, 128], strides = [1, 1, 1]} : vector<16x16x128xbf16> to vector<1x16x128xbf16>
    %5 = vector.extract_strided_slice %3 {offsets = [14, 0, 0], sizes = [1, 16, 128], strides = [1, 1, 1]} : vector<16x16x128xbf16> to vector<1x16x128xbf16>
    %6 = tpu.concatenate %4, %3, %5 in 0 : vector<1x16x128xbf16>, vector<16x16x128xbf16>, vector<1x16x128xbf16> -> vector<18x16x128xbf16>
    %7 = vector.extract_strided_slice %6 {offsets = [0, 1, 0], sizes = [18, 1, 128], strides = [1, 1, 1]} : vector<18x16x128xbf16> to vector<18x1x128xbf16>
    %8 = vector.extract_strided_slice %6 {offsets = [0, 0, 0], sizes = [18, 15, 128], strides = [1, 1, 1]} : vector<18x16x128xbf16> to vector<18x15x128xbf16>
    %9 = tpu.concatenate %7, %8 in 1 : vector<18x1x128xbf16>, vector<18x15x128xbf16> -> vector<18x16x128xbf16>
    %10 = vector.extract_strided_slice %6 {offsets = [0, 1, 0], sizes = [18, 15, 128], strides = [1, 1, 1]} : vector<18x16x128xbf16> to vector<18x15x128xbf16>
    %11 = vector.extract_strided_slice %6 {offsets = [0, 14, 0], sizes = [18, 1, 128], strides = [1, 1, 1]} : vector<18x16x128xbf16> to vector<18x1x128xbf16>
    %12 = tpu.concatenate %10, %11 in 1 : vector<18x15x128xbf16>, vector<18x1x128xbf16> -> vector<18x16x128xbf16>
    %13 = vector.shape_cast %9 : vector<18x16x128xbf16> to vector<288x128xbf16>
    %c0_2 = arith.constant 0 : index
    %c0_3 = arith.constant 0 : index
    %14 = vector.load %arg7[%c0_2, %c0_3] : memref<288x384xbf16, #tpu.memory_space<vmem>>, vector<288x128xbf16>
    tpu.vector_store %arg7[%c0_2, %c0_3], %13 {strides = array<i32>} : memref<288x384xbf16, #tpu.memory_space<vmem>>, vector<288x128xbf16>,
    %15 = vector.shape_cast %6 : vector<18x16x128xbf16> to vector<288x128xbf16>
    %c0_4 = arith.constant 0 : index
    %c128 = arith.constant 128 : index
    %16 = vector.load %arg7[%c0_4, %c128] : memref<288x384xbf16, #tpu.memory_space<vmem>>, vector<288x128xbf16>
    tpu.vector_store %arg7[%c0_4, %c128], %15 {strides = array<i32>} : memref<288x384xbf16, #tpu.memory_space<vmem>>, vector<288x128xbf16>,
    %17 = vector.shape_cast %12 : vector<18x16x128xbf16> to vector<288x128xbf16>
    %c0_5 = arith.constant 0 : index
    %c256 = arith.constant 256 : index
    %18 = vector.load %arg7[%c0_5, %c256] : memref<288x384xbf16, #tpu.memory_space<vmem>>, vector<288x128xbf16>
    tpu.vector_store %arg7[%c0_5, %c256], %17 {strides = array<i32>} : memref<288x384xbf16, #tpu.memory_space<vmem>>, vector<288x128xbf16>,
    %c0_6 = arith.constant 0 : index
    %c0_7 = arith.constant 0 : index
    %19 = vector.load %arg7[%c0_6, %c0_7] : memref<288x384xbf16, #tpu.memory_space<vmem>>, vector<128x384xbf16>
    %c0_8 = arith.constant 0 : index
    %c0_9 = arith.constant 0 : index
    %c0_10 = arith.constant 0 : index
    %20 = vector.load %arg2[%c0_8, %c0_9, %c0_10] : memref<3x384x128xbf16, #tpu.memory_space<vmem>>, vector<1x384x128xbf16>
    %21 = vector.shape_cast %20 : vector<1x384x128xbf16> to vector<384x128xbf16>
    %cst = arith.constant dense<0.000000e+00> : vector<128x128xf32>
    %22 = tpu.matmul %19, %21, %cst {dimension_numbers = #tpu.dot_dimension_numbers<[1], [0], [0], [1], [0, 0, 1, 1], [], []>} : vector<128x384xbf16>, vector<384x128xbf16>, vector<128x128xf32> -> vector<128x128xf32>
    %c16 = arith.constant 16 : index
    %c0_11 = arith.constant 0 : index
    %23 = vector.load %arg7[%c16, %c0_11] : memref<288x384xbf16, #tpu.memory_space<vmem>>, vector<128x384xbf16>
    %c1 = arith.constant 1 : index
    %c0_12 = arith.constant 0 : index
    %c0_13 = arith.constant 0 : index
    %24 = vector.load %arg2[%c1, %c0_12, %c0_13] : memref<3x384x128xbf16, #tpu.memory_space<vmem>>, vector<1x384x128xbf16>
    %25 = vector.shape_cast %24 : vector<1x384x128xbf16> to vector<384x128xbf16>
    %cst_14 = arith.constant dense<0.000000e+00> : vector<128x128xf32>
    %26 = tpu.matmul %23, %25, %cst_14 {dimension_numbers = #tpu.dot_dimension_numbers<[1], [0], [0], [1], [0, 0, 1, 1], [], []>} : vector<128x384xbf16>, vector<384x128xbf16>, vector<128x128xf32> -> vector<128x128xf32>
    %27 = arith.addf %22, %26 : vector<128x128xf32>
    %c32 = arith.constant 32 : index
    %c0_15 = arith.constant 0 : index
    %28 = vector.load %arg7[%c32, %c0_15] : memref<288x384xbf16, #tpu.memory_space<vmem>>, vector<128x384xbf16>
    %c2 = arith.constant 2 : index
    %c0_16 = arith.constant 0 : index
    %c0_17 = arith.constant 0 : index
    %29 = vector.load %arg2[%c2, %c0_16, %c0_17] : memref<3x384x128xbf16, #tpu.memory_space<vmem>>, vector<1x384x128xbf16>
    %30 = vector.shape_cast %29 : vector<1x384x128xbf16> to vector<384x128xbf16>
    %cst_18 = arith.constant dense<0.000000e+00> : vector<128x128xf32>
    %31 = tpu.matmul %28, %30, %cst_18 {dimension_numbers = #tpu.dot_dimension_numbers<[1], [0], [0], [1], [0, 0, 1, 1], [], []>} : vector<128x384xbf16>, vector<384x128xbf16>, vector<128x128xf32> -> vector<128x128xf32>
    %32 = arith.addf %27, %31 : vector<128x128xf32>
    %c0_19 = arith.constant 0 : index
    %c0_20 = arith.constant 0 : index
    %33 = vector.load %arg3[%c0_19, %c0_20] : memref<1x128xf32, #tpu.memory_space<vmem>>, vector<1x128xf32>
    %34 = vector.broadcast %33 : vector<1x128xf32> to vector<128x128xf32>
    %35 = arith.addf %32, %34 : vector<128x128xf32>
    %cst_21 = arith.constant 0.000000e+00 : f32
    %36 = vector.broadcast %cst_21 : f32 to vector<128x128xf32>
    %37 = arith.maximumf %35, %36 : vector<128x128xf32>
    %38 = arith.truncf %37 : vector<128x128xf32> to vector<128x128xbf16>
    %c0_22 = arith.constant 0 : index
    %c0_23 = arith.constant 0 : index
    %39 = vector.load %arg8[%c0_22, %c0_23] : memref<256x128xbf16, #tpu.memory_space<vmem>>, vector<128x128xbf16>
    tpu.vector_store %arg8[%c0_22, %c0_23], %38 {strides = array<i32>} : memref<256x128xbf16, #tpu.memory_space<vmem>>, vector<128x128xbf16>,
    %c128_24 = arith.constant 128 : index
    %c0_25 = arith.constant 0 : index
    %40 = vector.load %arg7[%c128_24, %c0_25] : memref<288x384xbf16, #tpu.memory_space<vmem>>, vector<128x384xbf16>
    %c0_26 = arith.constant 0 : index
    %c0_27 = arith.constant 0 : index
    %c0_28 = arith.constant 0 : index
    %41 = vector.load %arg2[%c0_26, %c0_27, %c0_28] : memref<3x384x128xbf16, #tpu.memory_space<vmem>>, vector<1x384x128xbf16>
    %42 = vector.shape_cast %41 : vector<1x384x128xbf16> to vector<384x128xbf16>
    %cst_29 = arith.constant dense<0.000000e+00> : vector<128x128xf32>
    %43 = tpu.matmul %40, %42, %cst_29 {dimension_numbers = #tpu.dot_dimension_numbers<[1], [0], [0], [1], [0, 0, 1, 1], [], []>} : vector<128x384xbf16>, vector<384x128xbf16>, vector<128x128xf32> -> vector<128x128xf32>
    %c144 = arith.constant 144 : index
    %c0_30 = arith.constant 0 : index
    %44 = vector.load %arg7[%c144, %c0_30] : memref<288x384xbf16, #tpu.memory_space<vmem>>, vector<128x384xbf16>
    %c1_31 = arith.constant 1 : index
    %c0_32 = arith.constant 0 : index
    %c0_33 = arith.constant 0 : index
    %45 = vector.load %arg2[%c1_31, %c0_32, %c0_33] : memref<3x384x128xbf16, #tpu.memory_space<vmem>>, vector<1x384x128xbf16>
    %46 = vector.shape_cast %45 : vector<1x384x128xbf16> to vector<384x128xbf16>
    %cst_34 = arith.constant dense<0.000000e+00> : vector<128x128xf32>
    %47 = tpu.matmul %44, %46, %cst_34 {dimension_numbers = #tpu.dot_dimension_numbers<[1], [0], [0], [1], [0, 0, 1, 1], [], []>} : vector<128x384xbf16>, vector<384x128xbf16>, vector<128x128xf32> -> vector<128x128xf32>
    %48 = arith.addf %43, %47 : vector<128x128xf32>
    %c160 = arith.constant 160 : index
    %c0_35 = arith.constant 0 : index
    %49 = vector.load %arg7[%c160, %c0_35] : memref<288x384xbf16, #tpu.memory_space<vmem>>, vector<128x384xbf16>
    %c2_36 = arith.constant 2 : index
    %c0_37 = arith.constant 0 : index
    %c0_38 = arith.constant 0 : index
    %50 = vector.load %arg2[%c2_36, %c0_37, %c0_38] : memref<3x384x128xbf16, #tpu.memory_space<vmem>>, vector<1x384x128xbf16>
    %51 = vector.shape_cast %50 : vector<1x384x128xbf16> to vector<384x128xbf16>
    %cst_39 = arith.constant dense<0.000000e+00> : vector<128x128xf32>
    %52 = tpu.matmul %49, %51, %cst_39 {dimension_numbers = #tpu.dot_dimension_numbers<[1], [0], [0], [1], [0, 0, 1, 1], [], []>} : vector<128x384xbf16>, vector<384x128xbf16>, vector<128x128xf32> -> vector<128x128xf32>
    %53 = arith.addf %48, %52 : vector<128x128xf32>
    %c0_40 = arith.constant 0 : index
    %c0_41 = arith.constant 0 : index
    %54 = vector.load %arg3[%c0_40, %c0_41] : memref<1x128xf32, #tpu.memory_space<vmem>>, vector<1x128xf32>
    %55 = vector.broadcast %54 : vector<1x128xf32> to vector<128x128xf32>
    %56 = arith.addf %53, %55 : vector<128x128xf32>
    %cst_42 = arith.constant 0.000000e+00 : f32
    %57 = vector.broadcast %cst_42 : f32 to vector<128x128xf32>
    %58 = arith.maximumf %56, %57 : vector<128x128xf32>
    %59 = arith.truncf %58 : vector<128x128xf32> to vector<128x128xbf16>
    %c128_43 = arith.constant 128 : index
    %c0_44 = arith.constant 0 : index
    %60 = vector.load %arg8[%c128_43, %c0_44] : memref<256x128xbf16, #tpu.memory_space<vmem>>, vector<128x128xbf16>
    tpu.vector_store %arg8[%c128_43, %c0_44], %59 {strides = array<i32>} : memref<256x128xbf16, #tpu.memory_space<vmem>>, vector<128x128xbf16>,
    %c0_45 = arith.constant 0 : index
    %c0_46 = arith.constant 0 : index
    %61 = vector.load %arg8[%c0_45, %c0_46] : memref<256x128xbf16, #tpu.memory_space<vmem>>, vector<256x128xbf16>
    %62 = vector.shape_cast %61 : vector<256x128xbf16> to vector<16x16x128xbf16>
    %63 = vector.extract_strided_slice %62 {offsets = [1, 0, 0], sizes = [1, 16, 128], strides = [1, 1, 1]} : vector<16x16x128xbf16> to vector<1x16x128xbf16>
    %64 = vector.extract_strided_slice %62 {offsets = [14, 0, 0], sizes = [1, 16, 128], strides = [1, 1, 1]} : vector<16x16x128xbf16> to vector<1x16x128xbf16>
    %65 = tpu.concatenate %63, %62, %64 in 0 : vector<1x16x128xbf16>, vector<16x16x128xbf16>, vector<1x16x128xbf16> -> vector<18x16x128xbf16>
    %66 = vector.extract_strided_slice %65 {offsets = [0, 1, 0], sizes = [18, 1, 128], strides = [1, 1, 1]} : vector<18x16x128xbf16> to vector<18x1x128xbf16>
    %67 = vector.extract_strided_slice %65 {offsets = [0, 0, 0], sizes = [18, 15, 128], strides = [1, 1, 1]} : vector<18x16x128xbf16> to vector<18x15x128xbf16>
    %68 = tpu.concatenate %66, %67 in 1 : vector<18x1x128xbf16>, vector<18x15x128xbf16> -> vector<18x16x128xbf16>
    %69 = vector.extract_strided_slice %65 {offsets = [0, 1, 0], sizes = [18, 15, 128], strides = [1, 1, 1]} : vector<18x16x128xbf16> to vector<18x15x128xbf16>
    %70 = vector.extract_strided_slice %65 {offsets = [0, 14, 0], sizes = [18, 1, 128], strides = [1, 1, 1]} : vector<18x16x128xbf16> to vector<18x1x128xbf16>
    %71 = tpu.concatenate %69, %70 in 1 : vector<18x15x128xbf16>, vector<18x1x128xbf16> -> vector<18x16x128xbf16>
    %72 = vector.shape_cast %68 : vector<18x16x128xbf16> to vector<288x128xbf16>
    %c0_47 = arith.constant 0 : index
    %c0_48 = arith.constant 0 : index
    %73 = vector.load %arg7[%c0_47, %c0_48] : memref<288x384xbf16, #tpu.memory_space<vmem>>, vector<288x128xbf16>
    tpu.vector_store %arg7[%c0_47, %c0_48], %72 {strides = array<i32>} : memref<288x384xbf16, #tpu.memory_space<vmem>>, vector<288x128xbf16>,
    %74 = vector.shape_cast %65 : vector<18x16x128xbf16> to vector<288x128xbf16>
    %c0_49 = arith.constant 0 : index
    %c128_50 = arith.constant 128 : index
    %75 = vector.load %arg7[%c0_49, %c128_50] : memref<288x384xbf16, #tpu.memory_space<vmem>>, vector<288x128xbf16>
    tpu.vector_store %arg7[%c0_49, %c128_50], %74 {strides = array<i32>} : memref<288x384xbf16, #tpu.memory_space<vmem>>, vector<288x128xbf16>,
    %76 = vector.shape_cast %71 : vector<18x16x128xbf16> to vector<288x128xbf16>
    %c0_51 = arith.constant 0 : index
    %c256_52 = arith.constant 256 : index
    %77 = vector.load %arg7[%c0_51, %c256_52] : memref<288x384xbf16, #tpu.memory_space<vmem>>, vector<288x128xbf16>
    tpu.vector_store %arg7[%c0_51, %c256_52], %76 {strides = array<i32>} : memref<288x384xbf16, #tpu.memory_space<vmem>>, vector<288x128xbf16>,
    %c0_53 = arith.constant 0 : index
    %c0_54 = arith.constant 0 : index
    %78 = vector.load %arg7[%c0_53, %c0_54] : memref<288x384xbf16, #tpu.memory_space<vmem>>, vector<128x384xbf16>
    %c0_55 = arith.constant 0 : index
    %c0_56 = arith.constant 0 : index
    %c0_57 = arith.constant 0 : index
    %79 = vector.load %arg4[%c0_55, %c0_56, %c0_57] : memref<3x384x128xbf16, #tpu.memory_space<vmem>>, vector<1x384x128xbf16>
    %80 = vector.shape_cast %79 : vector<1x384x128xbf16> to vector<384x128xbf16>
    %cst_58 = arith.constant dense<0.000000e+00> : vector<128x128xf32>
    %81 = tpu.matmul %78, %80, %cst_58 {dimension_numbers = #tpu.dot_dimension_numbers<[1], [0], [0], [1], [0, 0, 1, 1], [], []>} : vector<128x384xbf16>, vector<384x128xbf16>, vector<128x128xf32> -> vector<128x128xf32>
    %c16_59 = arith.constant 16 : index
    %c0_60 = arith.constant 0 : index
    %82 = vector.load %arg7[%c16_59, %c0_60] : memref<288x384xbf16, #tpu.memory_space<vmem>>, vector<128x384xbf16>
    %c1_61 = arith.constant 1 : index
    %c0_62 = arith.constant 0 : index
    %c0_63 = arith.constant 0 : index
    %83 = vector.load %arg4[%c1_61, %c0_62, %c0_63] : memref<3x384x128xbf16, #tpu.memory_space<vmem>>, vector<1x384x128xbf16>
    %84 = vector.shape_cast %83 : vector<1x384x128xbf16> to vector<384x128xbf16>
    %cst_64 = arith.constant dense<0.000000e+00> : vector<128x128xf32>
    %85 = tpu.matmul %82, %84, %cst_64 {dimension_numbers = #tpu.dot_dimension_numbers<[1], [0], [0], [1], [0, 0, 1, 1], [], []>} : vector<128x384xbf16>, vector<384x128xbf16>, vector<128x128xf32> -> vector<128x128xf32>
    %86 = arith.addf %81, %85 : vector<128x128xf32>
    %c32_65 = arith.constant 32 : index
    %c0_66 = arith.constant 0 : index
    %87 = vector.load %arg7[%c32_65, %c0_66] : memref<288x384xbf16, #tpu.memory_space<vmem>>, vector<128x384xbf16>
    %c2_67 = arith.constant 2 : index
    %c0_68 = arith.constant 0 : index
    %c0_69 = arith.constant 0 : index
    %88 = vector.load %arg4[%c2_67, %c0_68, %c0_69] : memref<3x384x128xbf16, #tpu.memory_space<vmem>>, vector<1x384x128xbf16>
    %89 = vector.shape_cast %88 : vector<1x384x128xbf16> to vector<384x128xbf16>
    %cst_70 = arith.constant dense<0.000000e+00> : vector<128x128xf32>
    %90 = tpu.matmul %87, %89, %cst_70 {dimension_numbers = #tpu.dot_dimension_numbers<[1], [0], [0], [1], [0, 0, 1, 1], [], []>} : vector<128x384xbf16>, vector<384x128xbf16>, vector<128x128xf32> -> vector<128x128xf32>
    %91 = arith.addf %86, %90 : vector<128x128xf32>
    %c0_71 = arith.constant 0 : index
    %c0_72 = arith.constant 0 : index
    %92 = vector.load %arg5[%c0_71, %c0_72] : memref<1x128xf32, #tpu.memory_space<vmem>>, vector<1x128xf32>
    %93 = vector.broadcast %92 : vector<1x128xf32> to vector<128x128xf32>
    %94 = arith.addf %91, %93 : vector<128x128xf32>
    %c0_73 = arith.constant 0 : index
    %c0_74 = arith.constant 0 : index
    %c0_75 = arith.constant 0 : index
    %95 = vector.load %arg1[%c0_73, %c0_74, %c0_75] : memref<1x256x128xf32, #tpu.memory_space<vmem>>, vector<1x128x128xf32>
    %96 = vector.shape_cast %95 : vector<1x128x128xf32> to vector<128x128xf32>
    %cst_76 = arith.constant 2.000000e-01 : f32
    %97 = vector.broadcast %cst_76 : f32 to vector<128x128xf32>
    %98 = arith.mulf %97, %94 : vector<128x128xf32>
    %99 = arith.addf %96, %98 : vector<128x128xf32>
    %c0_77 = arith.constant 0 : index
    %c0_78 = arith.constant 0 : index
    %c0_79 = arith.constant 0 : index
    %100 = vector.load %arg6[%c0_77, %c0_78, %c0_79] : memref<1x256x128xf32, #tpu.memory_space<vmem>>, vector<1x128x128xf32>
    %101 = vector.shape_cast %100 : vector<1x128x128xf32> to vector<128x128xf32>
    %102 = vector.shape_cast %99 : vector<128x128xf32> to vector<1x128x128xf32>
    tpu.vector_store %arg6[%c0_77, %c0_78, %c0_79], %102 {strides = array<i32>} : memref<1x256x128xf32, #tpu.memory_space<vmem>>, vector<1x128x128xf32>,
    %c128_80 = arith.constant 128 : index
    %c0_81 = arith.constant 0 : index
    %103 = vector.load %arg7[%c128_80, %c0_81] : memref<288x384xbf16, #tpu.memory_space<vmem>>, vector<128x384xbf16>
    %c0_82 = arith.constant 0 : index
    %c0_83 = arith.constant 0 : index
    %c0_84 = arith.constant 0 : index
    %104 = vector.load %arg4[%c0_82, %c0_83, %c0_84] : memref<3x384x128xbf16, #tpu.memory_space<vmem>>, vector<1x384x128xbf16>
    %105 = vector.shape_cast %104 : vector<1x384x128xbf16> to vector<384x128xbf16>
    %cst_85 = arith.constant dense<0.000000e+00> : vector<128x128xf32>
    %106 = tpu.matmul %103, %105, %cst_85 {dimension_numbers = #tpu.dot_dimension_numbers<[1], [0], [0], [1], [0, 0, 1, 1], [], []>} : vector<128x384xbf16>, vector<384x128xbf16>, vector<128x128xf32> -> vector<128x128xf32>
    %c144_86 = arith.constant 144 : index
    %c0_87 = arith.constant 0 : index
    %107 = vector.load %arg7[%c144_86, %c0_87] : memref<288x384xbf16, #tpu.memory_space<vmem>>, vector<128x384xbf16>
    %c1_88 = arith.constant 1 : index
    %c0_89 = arith.constant 0 : index
    %c0_90 = arith.constant 0 : index
    %108 = vector.load %arg4[%c1_88, %c0_89, %c0_90] : memref<3x384x128xbf16, #tpu.memory_space<vmem>>, vector<1x384x128xbf16>
    %109 = vector.shape_cast %108 : vector<1x384x128xbf16> to vector<384x128xbf16>
    %cst_91 = arith.constant dense<0.000000e+00> : vector<128x128xf32>
    %110 = tpu.matmul %107, %109, %cst_91 {dimension_numbers = #tpu.dot_dimension_numbers<[1], [0], [0], [1], [0, 0, 1, 1], [], []>} : vector<128x384xbf16>, vector<384x128xbf16>, vector<128x128xf32> -> vector<128x128xf32>
    %111 = arith.addf %106, %110 : vector<128x128xf32>
    %c160_92 = arith.constant 160 : index
    %c0_93 = arith.constant 0 : index
    %112 = vector.load %arg7[%c160_92, %c0_93] : memref<288x384xbf16, #tpu.memory_space<vmem>>, vector<128x384xbf16>
    %c2_94 = arith.constant 2 : index
    %c0_95 = arith.constant 0 : index
    %c0_96 = arith.constant 0 : index
    %113 = vector.load %arg4[%c2_94, %c0_95, %c0_96] : memref<3x384x128xbf16, #tpu.memory_space<vmem>>, vector<1x384x128xbf16>
    %114 = vector.shape_cast %113 : vector<1x384x128xbf16> to vector<384x128xbf16>
    %cst_97 = arith.constant dense<0.000000e+00> : vector<128x128xf32>
    %115 = tpu.matmul %112, %114, %cst_97 {dimension_numbers = #tpu.dot_dimension_numbers<[1], [0], [0], [1], [0, 0, 1, 1], [], []>} : vector<128x384xbf16>, vector<384x128xbf16>, vector<128x128xf32> -> vector<128x128xf32>
    %116 = arith.addf %111, %115 : vector<128x128xf32>
    %c0_98 = arith.constant 0 : index
    %c0_99 = arith.constant 0 : index
    %117 = vector.load %arg5[%c0_98, %c0_99] : memref<1x128xf32, #tpu.memory_space<vmem>>, vector<1x128xf32>
    %118 = vector.broadcast %117 : vector<1x128xf32> to vector<128x128xf32>
    %119 = arith.addf %116, %118 : vector<128x128xf32>
    %c0_100 = arith.constant 0 : index
    %c128_101 = arith.constant 128 : index
    %c0_102 = arith.constant 0 : index
    %120 = vector.load %arg1[%c0_100, %c128_101, %c0_102] : memref<1x256x128xf32, #tpu.memory_space<vmem>>, vector<1x128x128xf32>
    %121 = vector.shape_cast %120 : vector<1x128x128xf32> to vector<128x128xf32>
    %cst_103 = arith.constant 2.000000e-01 : f32
    %122 = vector.broadcast %cst_103 : f32 to vector<128x128xf32>
    %123 = arith.mulf %122, %119 : vector<128x128xf32>
    %124 = arith.addf %121, %123 : vector<128x128xf32>
    %c0_104 = arith.constant 0 : index
    %c128_105 = arith.constant 128 : index
    %c0_106 = arith.constant 0 : index
    %125 = vector.load %arg6[%c0_104, %c128_105, %c0_106] : memref<1x256x128xf32, #tpu.memory_space<vmem>>, vector<1x128x128xf32>
    %126 = vector.shape_cast %125 : vector<1x128x128xf32> to vector<128x128xf32>
    %127 = vector.shape_cast %124 : vector<128x128xf32> to vector<1x128x128xf32>
    tpu.vector_store %arg6[%c0_104, %c128_105, %c0_106], %127 {strides = array<i32>} : memref<1x256x128xf32, #tpu.memory_space<vmem>>, vector<1x128x128xf32>,
    return
  }
  func.func @transform_0(%arg0: i32) -> (i32, i32, i32) {
    %c0_i32 = arith.constant 0 : i32
    %c0_i32_0 = arith.constant 0 : i32
    %c0_i32_1 = arith.constant 0 : i32
    return %arg0, %c0_i32, %c0_i32_0 : i32, i32, i32
  }
  func.func @transform_1(%arg0: i32) -> (i32, i32, i32) {
    %c0_i32 = arith.constant 0 : i32
    %c0_i32_0 = arith.constant 0 : i32
    %c0_i32_1 = arith.constant 0 : i32
    %c0_i32_2 = arith.constant 0 : i32
    return %c0_i32, %c0_i32_0, %c0_i32_1 : i32, i32, i32
  }
  func.func @transform_2(%arg0: i32) -> (i32, i32) {
    %c0_i32 = arith.constant 0 : i32
    %c0_i32_0 = arith.constant 0 : i32
    %c0_i32_1 = arith.constant 0 : i32
    return %c0_i32, %c0_i32_0 : i32, i32
  }
  func.func @transform_3(%arg0: i32) -> (i32, i32, i32) {
    %c0_i32 = arith.constant 0 : i32
    %c0_i32_0 = arith.constant 0 : i32
    %c0_i32_1 = arith.constant 0 : i32
    %c0_i32_2 = arith.constant 0 : i32
    return %c0_i32, %c0_i32_0, %c0_i32_1 : i32, i32, i32
  }
  func.func @transform_4(%arg0: i32) -> (i32, i32) {
    %c0_i32 = arith.constant 0 : i32
    %c0_i32_0 = arith.constant 0 : i32
    %c0_i32_1 = arith.constant 0 : i32
    return %c0_i32, %c0_i32_0 : i32, i32
  }
  func.func @transform_5(%arg0: i32) -> (i32, i32, i32) {
    %c0_i32 = arith.constant 0 : i32
    %c0_i32_0 = arith.constant 0 : i32
    %c0_i32_1 = arith.constant 0 : i32
    return %arg0, %c0_i32, %c0_i32_0 : i32, i32, i32
  }
}

</mosaic_0001>

<llo_original>
// kernel: residual_block_forward.1
$region0: #{residual_block_forward.1}
  #allocation0 [shape = 'u32[]', space=smem, size = 0x4, offset = 0x4, fixed_abs, tag = 'smem constant byte address 0x4 - core index']
  #allocation1 [shape = 'u32[144,128]{1,0:T(1,128)}', space=vmem, size = 0x12000, scoped, tag = 'internal scratch']
  #allocation2 [shape = 'bf16[288,384]{1,0:T(8,128)(2,1)}', space=vmem, size = 0x36000, scoped, tag = 'scratch operand']
  #allocation3 [shape = 'bf16[256,128]{1,0:T(8,128)(2,1)}', space=vmem, size = 0x10000, scoped, tag = 'scratch operand']
  %s0 = inlined_call_operand.vmem [shape: f32[2,256,128], index: 0, kind: input, shape index: {}]
  %s1 = inlined_call_operand.vmem [shape: bf16[3,384,128], index: 1, kind: input, shape index: {}]
  %s2 = inlined_call_operand.vmem [shape: f32[1,128], index: 2, kind: input, shape index: {}]
  %s3 = inlined_call_operand.vmem [shape: bf16[3,384,128], index: 3, kind: input, shape index: {}]
  %s4 = inlined_call_operand.vmem [shape: f32[1,128], index: 4, kind: input, shape index: {}]
  %s5 = inlined_call_operand.hbm [shape: f32[2,256,128], index: 5, kind: output, shape index: {}]
  %s6 = sld [smem:[#allocation0]]
  $region53: #{residual_block_forward.1} parent=0
    _
  %s8 = ssub.s32 1, %s6
  %s9 = scalar_select 0, %s8, %s6
  $region1: #{residual_block_forward.1} parent=0
    #allocation4 [shape = 'u8[262144]{0}', space=vmem, size = 0x40000, scoped, tag = 'output window, operand 0']
    #allocation5 [shape = 's32[2]{0}', space=sflag, size = 0x8, scoped, tag = 'scoped memory for residual_block_forward.1']
    %10 = vsyncpa [#allocation5], 0
    %s11 = scalar_lea.sflag [#allocation5], 1
    %12 = vsyncpa %s11, 0
    loop: start=0, step=1, limit=4
    $region2: #{residual_block_forward.1} parent=1 // loop_pre_header
      _
    $region3: #{residual_block_forward.1} parent=1 // loop_header
      %s14 = sphi 0, %s18
      %p15 = scmp.ge.s32.totalorder %s14, 4
      %s24 = sphi 0, %s26
      %s27 = sphi 0, %s24
      %s28 = sphi 0, %s27
      %s44 = sphi 0, %s28
      %s48 = sphi 0, %s48
      %s50 = sphi 0, %s48
      %s51 = sphi 0, %s50
      %s65 = sphi 0, %s51
      %s69 = sphi 0, %s69
      %s71 = sphi 0, %s69
      %s72 = sphi 0, %s71
      %s86 = sphi 0, %s72
      %s90 = sphi 0, %s90
      %s92 = sphi 0, %s90
      %s93 = sphi 0, %s92
      %s107 = sphi 0, %s93
      %s111 = sphi 0, %s111
      %s113 = sphi 0, %s111
      %s114 = sphi 0, %s113
      %s128 = sphi 0, %s114
      %s134 = sphi 0, %s136
      %s137 = sphi 0, %s134
      %s138 = sphi 0, %s137
      %s154 = sphi 0, %s138
    $region4: #{residual_block_forward.1} parent=1 // loop_header_branch
      %17 = sbr.rel (%p15) target = $region8
    $region5: #{residual_block_forward.1} parent=1 // loop_body
      %s19 = ssub.s32 %s14, 1
      %s20 = ssub.s32 %s14, 2
      %s21 = sadd.s32 %s14, 1
      %s22 = ssub.s32 %s14, %s21
      %p23 = scmp.eq.s32.totalorder %s22, 0
      %s25 = sadd.s32 %s24, 1
      %s26 = scalar_select %p23, %s24, %s25
      %p29 = pneg %p23
      %p30 = scmp.eq.s32.totalorder %s14, 1
      %p31 = por %p29, %p30
      %p32 = scmp.ne.s32.totalorder %s24, %s27
      %p33 = scmp.eq.s32.totalorder %s14, 0
      %p34 = por %p32, %p33
      %p35 = scmp.ne.s32.totalorder %s24, %s27
      %p36 = scmp.eq.s32.totalorder %s19, 1
      %p37 = por %p35, %p36
      %p38 = scmp.ne.s32.totalorder %s27, %s28
      %p39 = scmp.eq.s32.totalorder %s19, 0
      %p40 = por %p38, %p39
      %p41 = scmp.ne.s32.totalorder %s27, %s28
      %p42 = scmp.eq.s32.totalorder %s20, 1
      %p43 = por %p41, %p42
      %p45 = scmp.ne.s32.totalorder %s28, %s44
      %p46 = scmp.eq.s32.totalorder %s20, 0
      %p47 = por %p45, %p46
      %s49 = sadd.s32 %s48, 1
      %p52 = scmp.eq.s32.totalorder %s14, 1
      %p53 = scmp.ne.s32.totalorder %s48, %s50
      %p54 = scmp.eq.s32.totalorder %s14, 0
      %p55 = por %p53, %p54
      %p56 = scmp.ne.s32.totalorder %s48, %s50
      %p57 = scmp.eq.s32.totalorder %s19, 1
      %p58 = por %p56, %p57
      %p59 = scmp.ne.s32.totalorder %s50, %s51
      %p60 = scmp.eq.s32.totalorder %s19, 0
      %p61 = por %p59, %p60
      %p62 = scmp.ne.s32.totalorder %s50, %s51
      %p63 = scmp.eq.s32.totalorder %s20, 1
      %p64 = por %p62, %p63
      %p66 = scmp.ne.s32.totalorder %s51, %s65
      %p67 = scmp.eq.s32.totalorder %s20, 0
      %p68 = por %p66, %p67
      %s70 = sadd.s32 %s69, 1
      %p73 = scmp.eq.s32.totalorder %s14, 1
      %p74 = scmp.ne.s32.totalorder %s69, %s71
      %p75 = scmp.eq.s32.totalorder %s14, 0
      %p76 = por %p74, %p75
      %p77 = scmp.ne.s32.totalorder %s69, %s71
      %p78 = scmp.eq.s32.totalorder %s19, 1
      %p79 = por %p77, %p78
      %p80 = scmp.ne.s32.totalorder %s71, %s72
      %p81 = scmp.eq.s32.totalorder %s19, 0
      %p82 = por %p80, %p81
      %p83 = scmp.ne.s32.totalorder %s71, %s72
      %p84 = scmp.eq.s32.totalorder %s20, 1
      %p85 = por %p83, %p84
      %p87 = scmp.ne.s32.totalorder %s72, %s86
      %p88 = scmp.eq.s32.totalorder %s20, 0
      %p89 = por %p87, %p88
      %s91 = sadd.s32 %s90, 1
      %p94 = scmp.eq.s32.totalorder %s14, 1
      %p95 = scmp.ne.s32.totalorder %s90, %s92
      %p96 = scmp.eq.s32.totalorder %s14, 0
      %p97 = por %p95, %p96
      %p98 = scmp.ne.s32.totalorder %s90, %s92
      %p99 = scmp.eq.s32.totalorder %s19, 1
      %p100 = por %p98, %p99
      %p101 = scmp.ne.s32.totalorder %s92, %s93
      %p102 = scmp.eq.s32.totalorder %s19, 0
      %p103 = por %p101, %p102
      %p104 = scmp.ne.s32.totalorder %s92, %s93
      %p105 = scmp.eq.s32.totalorder %s20, 1
      %p106 = por %p104, %p105
      %p108 = scmp.ne.s32.totalorder %s93, %s107
      %p109 = scmp.eq.s32.totalorder %s20, 0
      %p110 = por %p108, %p109
      %s112 = sadd.s32 %s111, 1
      %p115 = scmp.eq.s32.totalorder %s14, 1
      %p116 = scmp.ne.s32.totalorder %s111, %s113
      %p117 = scmp.eq.s32.totalorder %s14, 0
      %p118 = por %p116, %p117
      %p119 = scmp.ne.s32.totalorder %s111, %s113
      %p120 = scmp.eq.s32.totalorder %s19, 1
      %p121 = por %p119, %p120
      %p122 = scmp.ne.s32.totalorder %s113, %s114
      %p123 = scmp.eq.s32.totalorder %s19, 0
      %p124 = por %p122, %p123
      %p125 = scmp.ne.s32.totalorder %s113, %s114
      %p126 = scmp.eq.s32.totalorder %s20, 1
      %p127 = por %p125, %p126
      %p129 = scmp.ne.s32.totalorder %s114, %s128
      %p130 = scmp.eq.s32.totalorder %s20, 0
      %p131 = por %p129, %p130
      %s132 = ssub.s32 %s14, %s21
      %p133 = scmp.eq.s32.totalorder %s132, 0
      %s135 = sadd.s32 %s134, 1
      %s136 = scalar_select %p133, %s134, %s135
      %p139 = pneg %p133
      %p140 = scmp.eq.s32.totalorder %s14, 1
      %p141 = por %p139, %p140
      %p142 = scmp.ne.s32.totalorder %s134, %s137
      %p143 = scmp.eq.s32.totalorder %s14, 0
      %p144 = por %p142, %p143
      %p145 = scmp.ne.s32.totalorder %s134, %s137
      %p146 = scmp.eq.s32.totalorder %s19, 1
      %p147 = por %p145, %p146
      %p148 = scmp.ne.s32.totalorder %s137, %s138
      %p149 = scmp.eq.s32.totalorder %s19, 0
      %p150 = por %p148, %p149
      %p151 = scmp.ne.s32.totalorder %s137, %s138
      %p152 = scmp.eq.s32.totalorder %s20, 1
      %p153 = por %p151, %p152
      %p155 = scmp.ne.s32.totalorder %s138, %s154
      %p156 = scmp.eq.s32.totalorder %s20, 0
      %p157 = por %p155, %p156
      %p158 = scmp.le.s32.totalorder 1, %s14
      %p159 = scmp.lt.s32.totalorder %s14, 3
      %p160 = pnand %p158, %p159
      %p161 = pneg %p160
      // Predicated region
      $region9: #{residual_block_forward.1} parent=5 // pred_check
        _
      $region10: #{residual_block_forward.1} parent=5 // pred_check_branch
        %163 = sbr.rel (%p160) target = $region12
      $region11: #{residual_block_forward.1} parent=5 // pred_region
        %s164 = ssub.s32 %s14, 1
        // Predicated region
        $region13: #{residual_block_forward.1} parent=11 // pred_check
          %p165 = pneg %p61
        $region14: #{residual_block_forward.1} parent=11 // pred_check_branch
          %167 = sbr.rel (%p165) target = $region16
        $region15: #{residual_block_forward.1} parent=11 // pred_region
          _
        $region16: #{residual_block_forward.1} parent=11 // pred_fallthru
          _
        // Predicated region
        $region17: #{residual_block_forward.1} parent=11 // pred_check
          %p168 = pneg %p82
        $region18: #{residual_block_forward.1} parent=11 // pred_check_branch
          %170 = sbr.rel (%p168) target = $region20
        $region19: #{residual_block_forward.1} parent=11 // pred_region
          _
        $region20: #{residual_block_forward.1} parent=11 // pred_fallthru
          _
        // Predicated region
        $region21: #{residual_block_forward.1} parent=11 // pred_check
          %p171 = pneg %p103
        $region22: #{residual_block_forward.1} parent=11 // pred_check_branch
          %173 = sbr.rel (%p171) target = $region24
        $region23: #{residual_block_forward.1} parent=11 // pred_region
          _
        $region24: #{residual_block_forward.1} parent=11 // pred_fallthru
          _
        // Predicated region
        $region25: #{residual_block_forward.1} parent=11 // pred_check
          %p174 = pneg %p124
        $region26: #{residual_block_forward.1} parent=11 // pred_check_branch
          %176 = sbr.rel (%p174) target = $region28
        $region27: #{residual_block_forward.1} parent=11 // pred_region
          _
        $region28: #{residual_block_forward.1} parent=11 // pred_fallthru
          _
      $region12: #{residual_block_forward.1} parent=5 // pred_fallthru
        _
      %p177 = scmp.lt.s32.totalorder %s14, 2
      // Predicated region
      $region29: #{residual_block_forward.1} parent=5 // pred_check
        %p178 = pneg %p177
      $region30: #{residual_block_forward.1} parent=5 // pred_check_branch
        %180 = sbr.rel (%p178) target = $region32
      $region31: #{residual_block_forward.1} parent=5 // pred_region
        // Predicated region
        $region33: #{residual_block_forward.1} parent=31 // pred_check
          %p181 = pneg %p34
        $region34: #{residual_block_forward.1} parent=31 // pred_check_branch
          %183 = sbr.rel (%p181) target = $region36
        $region35: #{residual_block_forward.1} parent=31 // pred_region
          %p184 = scmp.lt.s32.totalorder %s14, 1
          %s185 = scalar_select %p184, %s14, 1
          %s186 = smul.addr %s185, 32
          %s187 = smul.addr %s186, 8
          %s188 = scalar_lea.vmem %s0, %s187
        $region36: #{residual_block_forward.1} parent=31 // pred_fallthru
          _
      $region32: #{residual_block_forward.1} parent=5 // pred_fallthru
        _
      %p189 = scmp.le.s32.totalorder 1, %s14
      %p190 = scmp.lt.s32.totalorder %s14, 3
      %p191 = pnand %p189, %p190
      %p192 = pneg %p191
      // Predicated region
      $region37: #{residual_block_forward.1} parent=5 // pred_check
        _
      $region38: #{residual_block_forward.1} parent=5 // pred_check_branch
        %194 = sbr.rel (%p191) target = $region40
      $region39: #{residual_block_forward.1} parent=5 // pred_region
        %s195 = ssub.s32 %s14, 1
        %p196 = scmp.lt.s32.totalorder %s19, 1
        %s197 = scalar_select %p196, %s19, 1
        %s198 = smul.addr %s197, 32
        %s199 = smul.addr %s198, 8
        %s200 = scalar_lea.vmem %s0, %s199
        %p201 = pneg %p40
        %p202 = pneg %p37
        %p203 = pneg %p61
        %p204 = pneg %p58
        %p205 = pneg %p82
        %p206 = pneg %p79
        %p207 = pneg %p103
        %p208 = pneg %p100
        %p209 = pneg %p124
        %p210 = pneg %p121
        %p211 = pneg %p150
        %p212 = pneg %p147
        %s213 = sand.u32 %s137, 1
        %s214 = scalar_lea.sflag [#allocation5], %s213
        %s215 = sand.u32 %s137, 1
        %s216 = smul.addr %s215, 256
        %s217 = scalar_lea.vmem [#allocation4], %s216
        %p218 = scmp.lt.s32.totalorder %s19, 1
        %s219 = scalar_select %p218, %s19, 1
        %s220 = smul.addr %s219, 32
        %s221 = smul.addr %s220, 8
        %s222 = scalar_lea.vmem %s0, %s221
        %v224 = vld [vmem:[%s222] sm:$0xff]
        %v225 = vld [vmem:[%s222 + $0x8] sm:$0xff]
        %v226 = vld [vmem:[%s222 + $0x10] sm:$0xff]
        %v227 = vld [vmem:[%s222 + $0x18] sm:$0xff]
        %v228 = vld [vmem:[%s222 + $0x20] sm:$0xff]
        %v229 = vld [vmem:[%s222 + $0x28] sm:$0xff]
        %v230 = vld [vmem:[%s222 + $0x30] sm:$0xff]
        %v231 = vld [vmem:[%s222 + $0x38] sm:$0xff]
        %v232 = vld [vmem:[%s222 + $0x40] sm:$0xff]
        %v233 = vld [vmem:[%s222 + $0x48] sm:$0xff]
        %v234 = vld [vmem:[%s222 + $0x50] sm:$0xff]
        %v235 = vld [vmem:[%s222 + $0x58] sm:$0xff]
        %v236 = vld [vmem:[%s222 + $0x60] sm:$0xff]
        %v237 = vld [vmem:[%s222 + $0x68] sm:$0xff]
        %v238 = vld [vmem:[%s222 + $0x70] sm:$0xff]
        %v239 = vld [vmem:[%s222 + $0x78] sm:$0xff]
        %v240 = vld [vmem:[%s222 + $0x80] sm:$0xff]
        %v241 = vld [vmem:[%s222 + $0x88] sm:$0xff]
        %v242 = vld [vmem:[%s222 + $0x90] sm:$0xff]
        %v243 = vld [vmem:[%s222 + $0x98] sm:$0xff]
        %v244 = vld [vmem:[%s222 + $0xa0] sm:$0xff]
        %v245 = vld [vmem:[%s222 + $0xa8] sm:$0xff]
        %v246 = vld [vmem:[%s222 + $0xb0] sm:$0xff]
        %v247 = vld [vmem:[%s222 + $0xb8] sm:$0xff]
        %v248 = vld [vmem:[%s222 + $0xc0] sm:$0xff]
        %v249 = vld [vmem:[%s222 + $0xc8] sm:$0xff]
        %v250 = vld [vmem:[%s222 + $0xd0] sm:$0xff]
        %v251 = vld [vmem:[%s222 + $0xd8] sm:$0xff]
        %v252 = vld [vmem:[%s222 + $0xe0] sm:$0xff]
        %v253 = vld [vmem:[%s222 + $0xe8] sm:$0xff]
        %v254 = vld [vmem:[%s222 + $0xf0] sm:$0xff]
        %v255 = vld [vmem:[%s222 + $0xf8] sm:$0xff]
        %v256 = vpack.c.bf16 %v225, %v224
        %v257 = vpack.c.bf16 %v227, %v226
        %v258 = vpack.c.bf16 %v229, %v228
        %v259 = vpack.c.bf16 %v231, %v230
        %v260 = vpack.c.bf16 %v233, %v232
        %v261 = vpack.c.bf16 %v235, %v234
        %v262 = vpack.c.bf16 %v237, %v236
        %v263 = vpack.c.bf16 %v239, %v238
        %v264 = vpack.c.bf16 %v241, %v240
        %v265 = vpack.c.bf16 %v243, %v242
        %v266 = vpack.c.bf16 %v245, %v244
        %v267 = vpack.c.bf16 %v247, %v246
        %v268 = vpack.c.bf16 %v249, %v248
        %v269 = vpack.c.bf16 %v251, %v250
        %v270 = vpack.c.bf16 %v253, %v252
        %v271 = vpack.c.bf16 %v255, %v254
        %v273 = vshrl.u32 %v257, 16
        %v276 = vshrl.u32 %v256, 16
        %v279 = vshrl.u32 %v258, 16
        %v282 = vshrl.u32 %v259, 16
        %v285 = vshrl.u32 %v260, 16
        %v288 = vshrl.u32 %v261, 16
        %v291 = vshrl.u32 %v262, 16
        %v294 = vshrl.u32 %v263, 16
        %v297 = vshrl.u32 %v264, 16
        %v300 = vshrl.u32 %v265, 16
        %v303 = vshrl.u32 %v266, 16
        %v306 = vshrl.u32 %v267, 16
        %v309 = vshrl.u32 %v268, 16
        %v312 = vshrl.u32 %v269, 16
        %v315 = vshrl.u32 %v270, 16
        %v318 = vshrl.u32 %v271, 16
        %v336 = vrot.slane %v273, 7
        %v337 = vshll.u32 %v257, 16
        %v339 = vor.u32 %v336, %v337
        %v340 = vrot.slane %v276, 7
        %v341 = vshll.u32 %v256, 16
        %v343 = vor.u32 %v340, %v341
        %v344 = vrot.slane %v279, 7
        %v345 = vshll.u32 %v258, 16
        %v347 = vor.u32 %v344, %v345
        %v348 = vrot.slane %v282, 7
        %v349 = vshll.u32 %v259, 16
        %v351 = vor.u32 %v348, %v349
        %v352 = vrot.slane %v285, 7
        %v353 = vshll.u32 %v260, 16
        %v355 = vor.u32 %v352, %v353
        %v356 = vrot.slane %v288, 7
        %v357 = vshll.u32 %v261, 16
        %v359 = vor.u32 %v356, %v357
        %v360 = vrot.slane %v291, 7
        %v361 = vshll.u32 %v262, 16
        %v363 = vor.u32 %v360, %v361
        %v364 = vrot.slane %v294, 7
        %v365 = vshll.u32 %v263, 16
        %v367 = vor.u32 %v364, %v365
        %v368 = vrot.slane %v297, 7
        %v369 = vshll.u32 %v264, 16
        %v371 = vor.u32 %v368, %v369
        %v372 = vrot.slane %v300, 7
        %v373 = vshll.u32 %v265, 16
        %v375 = vor.u32 %v372, %v373
        %v376 = vrot.slane %v303, 7
        %v377 = vshll.u32 %v266, 16
        %v379 = vor.u32 %v376, %v377
        %v380 = vrot.slane %v306, 7
        %v381 = vshll.u32 %v267, 16
        %v383 = vor.u32 %v380, %v381
        %v384 = vrot.slane %v309, 7
        %v385 = vshll.u32 %v268, 16
        %v387 = vor.u32 %v384, %v385
        %v388 = vrot.slane %v312, 7
        %v389 = vshll.u32 %v269, 16
        %v391 = vor.u32 %v388, %v389
        %v392 = vrot.slane %v315, 7
        %v393 = vshll.u32 %v270, 16
        %v395 = vor.u32 %v392, %v393
        %v396 = vrot.slane %v318, 7
        %v397 = vshll.u32 %v271, 16
        %v399 = vor.u32 %v396, %v397
        %vm416 = vcmask 1040384
        %vm417 = vsmask.f32 256
        %vm418 = vmand %vm416, %vm417
        %v419 = vsel %vm418, %v273, %v339
        %v420 = vsel %vm418, %v276, %v343
        %v421 = vsel %vm418, %v279, %v347
        %v422 = vsel %vm418, %v282, %v351
        %v423 = vsel %vm418, %v285, %v355
        %v424 = vsel %vm418, %v288, %v359
        %v425 = vsel %vm418, %v291, %v363
        %v426 = vsel %vm418, %v294, %v367
        %v427 = vsel %vm418, %v297, %v371
        %v428 = vsel %vm418, %v300, %v375
        %v429 = vsel %vm418, %v303, %v379
        %v430 = vsel %vm418, %v306, %v383
        %v431 = vsel %vm418, %v309, %v387
        %v432 = vsel %vm418, %v312, %v391
        %v433 = vsel %vm418, %v315, %v395
        %v434 = vsel %vm418, %v318, %v399
        %v435 = vrot.slane %v337, 1
        %v436 = vor.u32 %v273, %v435
        %v437 = vrot.slane %v341, 1
        %v438 = vor.u32 %v276, %v437
        %v439 = vrot.slane %v345, 1
        %v440 = vor.u32 %v279, %v439
        %v441 = vrot.slane %v349, 1
        %v442 = vor.u32 %v282, %v441
        %v443 = vrot.slane %v353, 1
        %v444 = vor.u32 %v285, %v443
        %v445 = vrot.slane %v357, 1
        %v446 = vor.u32 %v288, %v445
        %v447 = vrot.slane %v361, 1
        %v448 = vor.u32 %v291, %v447
        %v449 = vrot.slane %v365, 1
        %v450 = vor.u32 %v294, %v449
        %v451 = vrot.slane %v369, 1
        %v452 = vor.u32 %v297, %v451
        %v453 = vrot.slane %v373, 1
        %v454 = vor.u32 %v300, %v453
        %v455 = vrot.slane %v377, 1
        %v456 = vor.u32 %v303, %v455
        %v457 = vrot.slane %v381, 1
        %v458 = vor.u32 %v306, %v457
        %v459 = vrot.slane %v385, 1
        %v460 = vor.u32 %v309, %v459
        %v461 = vrot.slane %v389, 1
        %v462 = vor.u32 %v312, %v461
        %v463 = vrot.slane %v393, 1
        %v464 = vor.u32 %v315, %v463
        %v465 = vrot.slane %v397, 1
        %v466 = vor.u32 %v318, %v465
        %vm499 = vcmask 1047552
        %vm500 = vsmask.f32 7424
        %vm501 = vmand %vm499, %vm500
        %v502 = vsel %vm501, %v436, %v337
        %v503 = vsel %vm501, %v438, %v341
        %v504 = vsel %vm501, %v440, %v345
        %v505 = vsel %vm501, %v442, %v349
        %v506 = vsel %vm501, %v444, %v353
        %v507 = vsel %vm501, %v446, %v357
        %v508 = vsel %vm501, %v448, %v361
        %v509 = vsel %vm501, %v450, %v365
        %v510 = vsel %vm501, %v452, %v369
        %v511 = vsel %vm501, %v454, %v373
        %v512 = vsel %vm501, %v456, %v377
        %v513 = vsel %vm501, %v458, %v381
        %v514 = vsel %vm501, %v460, %v385
        %v515 = vsel %vm501, %v462, %v389
        %v516 = vsel %vm501, %v464, %v393
        %v517 = vsel %vm501, %v466, %v397
        %v534 = vunpack.c.l.b16 %v419
        %v535 = vunpack.c.h.b16 %v419
        %v536 = vunpack.c.l.b16 %v420
        %v537 = vunpack.c.h.b16 %v420
        %v538 = vunpack.c.l.b16 %v421
        %v539 = vunpack.c.h.b16 %v421
        %v540 = vunpack.c.l.b16 %v422
        %v541 = vunpack.c.h.b16 %v422
        %v542 = vunpack.c.l.b16 %v423
        %v543 = vunpack.c.h.b16 %v423
        %v544 = vunpack.c.l.b16 %v424
        %v545 = vunpack.c.h.b16 %v424
        %v546 = vunpack.c.l.b16 %v425
        %v547 = vunpack.c.h.b16 %v425
        %v548 = vunpack.c.l.b16 %v426
        %v549 = vunpack.c.h.b16 %v426
        %v550 = vunpack.c.l.b16 %v427
        %v551 = vunpack.c.h.b16 %v427
        %v552 = vunpack.c.l.b16 %v428
        %v553 = vunpack.c.h.b16 %v428
        %v554 = vunpack.c.l.b16 %v429
        %v555 = vunpack.c.h.b16 %v429
        %v556 = vunpack.c.l.b16 %v430
        %v557 = vunpack.c.h.b16 %v430
        %v558 = vunpack.c.l.b16 %v431
        %v559 = vunpack.c.h.b16 %v431
        %v560 = vunpack.c.l.b16 %v432
        %v561 = vunpack.c.h.b16 %v432
        %v562 = vunpack.c.l.b16 %v433
        %v563 = vunpack.c.h.b16 %v433
        %v564 = vunpack.c.l.b16 %v434
        %v565 = vunpack.c.h.b16 %v434
        %v566 = vpack.c.b16 %v534, %v534
        %v567 = vpack.c.b16 %v535, %v535
        %v568 = vpack.c.b16 %v536, %v536
        %v569 = vpack.c.b16 %v537, %v537
        %v570 = vpack.c.b16 %v538, %v538
        %v571 = vpack.c.b16 %v539, %v539
        %v572 = vpack.c.b16 %v540, %v540
        %v573 = vpack.c.b16 %v541, %v541
        %v574 = vpack.c.b16 %v542, %v542
        %v575 = vpack.c.b16 %v543, %v543
        %v576 = vpack.c.b16 %v544, %v544
        %v577 = vpack.c.b16 %v545, %v545
        %v578 = vpack.c.b16 %v546, %v546
        %v579 = vpack.c.b16 %v547, %v547
        %v580 = vpack.c.b16 %v548, %v548
        %v581 = vpack.c.b16 %v549, %v549
        %v582 = vpack.c.b16 %v550, %v550
        %v583 = vpack.c.b16 %v551, %v551
        %v584 = vpack.c.b16 %v552, %v552
        %v585 = vpack.c.b16 %v553, %v553
        %v586 = vpack.c.b16 %v554, %v554
        %v587 = vpack.c.b16 %v555, %v555
        %v588 = vpack.c.b16 %v556, %v556
        %v589 = vpack.c.b16 %v557, %v557
        %v590 = vpack.c.b16 %v558, %v558
        %v591 = vpack.c.b16 %v559, %v559
        %v592 = vpack.c.b16 %v560, %v560
        %v593 = vpack.c.b16 %v561, %v561
        %v594 = vpack.c.b16 %v562, %v562
        %v595 = vpack.c.b16 %v563, %v563
        %v596 = vpack.c.b16 %v564, %v564
        %v597 = vpack.c.b16 %v565, %v565
        %630 = vst [vmem:[#allocation2] sm:$0xf] %v566
        %631 = vst [vmem:[#allocation2 + $0xc] sm:$0xf] %v567
        %632 = vst [vmem:[#allocation2 + $0x18] sm:$0xf] %v568
        %633 = vst [vmem:[#allocation2 + $0x24] sm:$0xf] %v569
        %634 = vst [vmem:[#allocation2 + $0x30] sm:$0xf] %v566
        %635 = vst [vmem:[#allocation2 + $0x3c] sm:$0xf] %v567
        %636 = vst [vmem:[#allocation2 + $0x48] sm:$0xf] %v570
        %637 = vst [vmem:[#allocation2 + $0x54] sm:$0xf] %v571
        %638 = vst [vmem:[#allocation2 + $0x60] sm:$0xf] %v572
        %639 = vst [vmem:[#allocation2 + $0x6c] sm:$0xf] %v573
        %640 = vst [vmem:[#allocation2 + $0x78] sm:$0xf] %v574
        %641 = vst [vmem:[#allocation2 + $0x84] sm:$0xf] %v575
        %642 = vst [vmem:[#allocation2 + $0x90] sm:$0xf] %v576
        %643 = vst [vmem:[#allocation2 + $0x9c] sm:$0xf] %v577
        %644 = vst [vmem:[#allocation2 + $0xa8] sm:$0xf] %v578
        %645 = vst [vmem:[#allocation2 + $0xb4] sm:$0xf] %v579
        %646 = vst [vmem:[#allocation2 + $0xc0] sm:$0xf] %v580
        %647 = vst [vmem:[#allocation2 + $0xcc] sm:$0xf] %v581
        %648 = vst [vmem:[#allocation2 + $0xd8] sm:$0xf] %v582
        %649 = vst [vmem:[#allocation2 + $0xe4] sm:$0xf] %v583
        %650 = vst [vmem:[#allocation2 + $0xf0] sm:$0xf] %v584
        %651 = vst [vmem:[#allocation2 + $0xfc] sm:$0xf] %v585
        %652 = vst [vmem:[#allocation2 + $0x108] sm:$0xf] %v586
        %653 = vst [vmem:[#allocation2 + $0x114] sm:$0xf] %v587
        %654 = vst [vmem:[#allocation2 + $0x120] sm:$0xf] %v588
        %655 = vst [vmem:[#allocation2 + $0x12c] sm:$0xf] %v589
        %656 = vst [vmem:[#allocation2 + $0x138] sm:$0xf] %v590
        %657 = vst [vmem:[#allocation2 + $0x144] sm:$0xf] %v591
        %658 = vst [vmem:[#allocation2 + $0x150] sm:$0xf] %v592
        %659 = vst [vmem:[#allocation2 + $0x15c] sm:$0xf] %v593
        %660 = vst [vmem:[#allocation2 + $0x168] sm:$0xf] %v594
        %661 = vst [vmem:[#allocation2 + $0x174] sm:$0xf] %v595
        %662 = vst [vmem:[#allocation2 + $0x180] sm:$0xf] %v596
        %663 = vst [vmem:[#allocation2 + $0x18c] sm:$0xf] %v597
        %664 = vst [vmem:[#allocation2 + $0x198] sm:$0xf] %v594
        %665 = vst [vmem:[#allocation2 + $0x1a4] sm:$0xf] %v595
        %v682 = vunpack.c.l.b16 %v257
        %v683 = vunpack.c.h.b16 %v257
        %v684 = vunpack.c.l.b16 %v256
        %v685 = vunpack.c.h.b16 %v256
        %v686 = vunpack.c.l.b16 %v258
        %v687 = vunpack.c.h.b16 %v258
        %v688 = vunpack.c.l.b16 %v259
        %v689 = vunpack.c.h.b16 %v259
        %v690 = vunpack.c.l.b16 %v260
        %v691 = vunpack.c.h.b16 %v260
        %v692 = vunpack.c.l.b16 %v261
        %v693 = vunpack.c.h.b16 %v261
        %v694 = vunpack.c.l.b16 %v262
        %v695 = vunpack.c.h.b16 %v262
        %v696 = vunpack.c.l.b16 %v263
        %v697 = vunpack.c.h.b16 %v263
        %v698 = vunpack.c.l.b16 %v264
        %v699 = vunpack.c.h.b16 %v264
        %v700 = vunpack.c.l.b16 %v265
        %v701 = vunpack.c.h.b16 %v265
        %v702 = vunpack.c.l.b16 %v266
        %v703 = vunpack.c.h.b16 %v266
        %v704 = vunpack.c.l.b16 %v267
        %v705 = vunpack.c.h.b16 %v267
        %v706 = vunpack.c.l.b16 %v268
        %v707 = vunpack.c.h.b16 %v268
        %v708 = vunpack.c.l.b16 %v269
        %v709 = vunpack.c.h.b16 %v269
        %v710 = vunpack.c.l.b16 %v270
        %v711 = vunpack.c.h.b16 %v270
        %v712 = vunpack.c.l.b16 %v271
        %v713 = vunpack.c.h.b16 %v271
        %v714 = vpack.c.b16 %v682, %v682
        %v715 = vpack.c.b16 %v683, %v683
        %v716 = vpack.c.b16 %v684, %v684
        %v717 = vpack.c.b16 %v685, %v685
        %v718 = vpack.c.b16 %v686, %v686
        %v719 = vpack.c.b16 %v687, %v687
        %v720 = vpack.c.b16 %v688, %v688
        %v721 = vpack.c.b16 %v689, %v689
        %v722 = vpack.c.b16 %v690, %v690
        %v723 = vpack.c.b16 %v691, %v691
        %v724 = vpack.c.b16 %v692, %v692
        %v725 = vpack.c.b16 %v693, %v693
        %v726 = vpack.c.b16 %v694, %v694
        %v727 = vpack.c.b16 %v695, %v695
        %v728 = vpack.c.b16 %v696, %v696
        %v729 = vpack.c.b16 %v697, %v697
        %v730 = vpack.c.b16 %v698, %v698
        %v731 = vpack.c.b16 %v699, %v699
        %v732 = vpack.c.b16 %v700, %v700
        %v733 = vpack.c.b16 %v701, %v701
        %v734 = vpack.c.b16 %v702, %v702
        %v735 = vpack.c.b16 %v703, %v703
        %v736 = vpack.c.b16 %v704, %v704
        %v737 = vpack.c.b16 %v705, %v705
        %v738 = vpack.c.b16 %v706, %v706
        %v739 = vpack.c.b16 %v707, %v707
        %v740 = vpack.c.b16 %v708, %v708
        %v741 = vpack.c.b16 %v709, %v709
        %v742 = vpack.c.b16 %v710, %v710
        %v743 = vpack.c.b16 %v711, %v711
        %v744 = vpack.c.b16 %v712, %v712
        %v745 = vpack.c.b16 %v713, %v713
        %778 = vst [vmem:[#allocation2 + $0x4] sm:$0xf] %v714
        %779 = vst [vmem:[#allocation2 + $0x10] sm:$0xf] %v715
        %780 = vst [vmem:[#allocation2 + $0x1c] sm:$0xf] %v716
        %781 = vst [vmem:[#allocation2 + $0x28] sm:$0xf] %v717
        %782 = vst [vmem:[#allocation2 + $0x34] sm:$0xf] %v714
        %783 = vst [vmem:[#allocation2 + $0x40] sm:$0xf] %v715
        %784 = vst [vmem:[#allocation2 + $0x4c] sm:$0xf] %v718
        %785 = vst [vmem:[#allocation2 + $0x58] sm:$0xf] %v719
        %786 = vst [vmem:[#allocation2 + $0x64] sm:$0xf] %v720
        %787 = vst [vmem:[#allocation2 + $0x70] sm:$0xf] %v721
        %788 = vst [vmem:[#allocation2 + $0x7c] sm:$0xf] %v722
        %789 = vst [vmem:[#allocation2 + $0x88] sm:$0xf] %v723
        %790 = vst [vmem:[#allocation2 + $0x94] sm:$0xf] %v724
        %791 = vst [vmem:[#allocation2 + $0xa0] sm:$0xf] %v725
        %792 = vst [vmem:[#allocation2 + $0xac] sm:$0xf] %v726
        %793 = vst [vmem:[#allocation2 + $0xb8] sm:$0xf] %v727
        %794 = vst [vmem:[#allocation2 + $0xc4] sm:$0xf] %v728
        %795 = vst [vmem:[#allocation2 + $0xd0] sm:$0xf] %v729
        %796 = vst [vmem:[#allocation2 + $0xdc] sm:$0xf] %v730
        %797 = vst [vmem:[#allocation2 + $0xe8] sm:$0xf] %v731
        %798 = vst [vmem:[#allocation2 + $0xf4] sm:$0xf] %v732
        %799 = vst [vmem:[#allocation2 + $0x100] sm:$0xf] %v733
        %800 = vst [vmem:[#allocation2 + $0x10c] sm:$0xf] %v734
        %801 = vst [vmem:[#allocation2 + $0x118] sm:$0xf] %v735
        %802 = vst [vmem:[#allocation2 + $0x124] sm:$0xf] %v736
        %803 = vst [vmem:[#allocation2 + $0x130] sm:$0xf] %v737
        %804 = vst [vmem:[#allocation2 + $0x13c] sm:$0xf] %v738
        %805 = vst [vmem:[#allocation2 + $0x148] sm:$0xf] %v739
        %806 = vst [vmem:[#allocation2 + $0x154] sm:$0xf] %v740
        %807 = vst [vmem:[#allocation2 + $0x160] sm:$0xf] %v741
        %808 = vst [vmem:[#allocation2 + $0x16c] sm:$0xf] %v742
        %809 = vst [vmem:[#allocation2 + $0x178] sm:$0xf] %v743
        %810 = vst [vmem:[#allocation2 + $0x184] sm:$0xf] %v744
        %811 = vst [vmem:[#allocation2 + $0x190] sm:$0xf] %v745
        %812 = vst [vmem:[#allocation2 + $0x19c] sm:$0xf] %v742
        %813 = vst [vmem:[#allocation2 + $0x1a8] sm:$0xf] %v743
        %v830 = vunpack.c.l.b16 %v502
        %v831 = vunpack.c.h.b16 %v502
        %v832 = vunpack.c.l.b16 %v503
        %v833 = vunpack.c.h.b16 %v503
        %v834 = vunpack.c.l.b16 %v504
        %v835 = vunpack.c.h.b16 %v504
        %v836 = vunpack.c.l.b16 %v505
        %v837 = vunpack.c.h.b16 %v505
        %v838 = vunpack.c.l.b16 %v506
        %v839 = vunpack.c.h.b16 %v506
        %v840 = vunpack.c.l.b16 %v507
        %v841 = vunpack.c.h.b16 %v507
        %v842 = vunpack.c.l.b16 %v508
        %v843 = vunpack.c.h.b16 %v508
        %v844 = vunpack.c.l.b16 %v509
        %v845 = vunpack.c.h.b16 %v509
        %v846 = vunpack.c.l.b16 %v510
        %v847 = vunpack.c.h.b16 %v510
        %v848 = vunpack.c.l.b16 %v511
        %v849 = vunpack.c.h.b16 %v511
        %v850 = vunpack.c.l.b16 %v512
        %v851 = vunpack.c.h.b16 %v512
        %v852 = vunpack.c.l.b16 %v513
        %v853 = vunpack.c.h.b16 %v513
        %v854 = vunpack.c.l.b16 %v514
        %v855 = vunpack.c.h.b16 %v514
        %v856 = vunpack.c.l.b16 %v515
        %v857 = vunpack.c.h.b16 %v515
        %v858 = vunpack.c.l.b16 %v516
        %v859 = vunpack.c.h.b16 %v516
        %v860 = vunpack.c.l.b16 %v517
        %v861 = vunpack.c.h.b16 %v517
        %v862 = vpack.c.b16 %v830, %v830
        %v863 = vpack.c.b16 %v831, %v831
        %v864 = vpack.c.b16 %v832, %v832
        %v865 = vpack.c.b16 %v833, %v833
        %v866 = vpack.c.b16 %v834, %v834
        %v867 = vpack.c.b16 %v835, %v835
        %v868 = vpack.c.b16 %v836, %v836
        %v869 = vpack.c.b16 %v837, %v837
        %v870 = vpack.c.b16 %v838, %v838
        %v871 = vpack.c.b16 %v839, %v839
        %v872 = vpack.c.b16 %v840, %v840
        %v873 = vpack.c.b16 %v841, %v841
        %v874 = vpack.c.b16 %v842, %v842
        %v875 = vpack.c.b16 %v843, %v843
        %v876 = vpack.c.b16 %v844, %v844
        %v877 = vpack.c.b16 %v845, %v845
        %v878 = vpack.c.b16 %v846, %v846
        %v879 = vpack.c.b16 %v847, %v847
        %v880 = vpack.c.b16 %v848, %v848
        %v881 = vpack.c.b16 %v849, %v849
        %v882 = vpack.c.b16 %v850, %v850
        %v883 = vpack.c.b16 %v851, %v851
        %v884 = vpack.c.b16 %v852, %v852
        %v885 = vpack.c.b16 %v853, %v853
        %v886 = vpack.c.b16 %v854, %v854
        %v887 = vpack.c.b16 %v855, %v855
        %v888 = vpack.c.b16 %v856, %v856
        %v889 = vpack.c.b16 %v857, %v857
        %v890 = vpack.c.b16 %v858, %v858
        %v891 = vpack.c.b16 %v859, %v859
        %v892 = vpack.c.b16 %v860, %v860
        %v893 = vpack.c.b16 %v861, %v861
        %926 = vst [vmem:[#allocation2 + $0x8] sm:$0xf] %v862
        %927 = vst [vmem:[#allocation2 + $0x14] sm:$0xf] %v863
        %928 = vst [vmem:[#allocation2 + $0x20] sm:$0xf] %v864
        %929 = vst [vmem:[#allocation2 + $0x2c] sm:$0xf] %v865
        %930 = vst [vmem:[#allocation2 + $0x38] sm:$0xf] %v862
        %931 = vst [vmem:[#allocation2 + $0x44] sm:$0xf] %v863
        %932 = vst [vmem:[#allocation2 + $0x50] sm:$0xf] %v866
        %933 = vst [vmem:[#allocation2 + $0x5c] sm:$0xf] %v867
        %934 = vst [vmem:[#allocation2 + $0x68] sm:$0xf] %v868
        %935 = vst [vmem:[#allocation2 + $0x74] sm:$0xf] %v869
        %936 = vst [vmem:[#allocation2 + $0x80] sm:$0xf] %v870
        %937 = vst [vmem:[#allocation2 + $0x8c] sm:$0xf] %v871
        %938 = vst [vmem:[#allocation2 + $0x98] sm:$0xf] %v872
        %939 = vst [vmem:[#allocation2 + $0xa4] sm:$0xf] %v873
        %940 = vst [vmem:[#allocation2 + $0xb0] sm:$0xf] %v874
        %941 = vst [vmem:[#allocation2 + $0xbc] sm:$0xf] %v875
        %942 = vst [vmem:[#allocation2 + $0xc8] sm:$0xf] %v876
        %943 = vst [vmem:[#allocation2 + $0xd4] sm:$0xf] %v877
        %944 = vst [vmem:[#allocation2 + $0xe0] sm:$0xf] %v878
        %945 = vst [vmem:[#allocation2 + $0xec] sm:$0xf] %v879
        %946 = vst [vmem:[#allocation2 + $0xf8] sm:$0xf] %v880
        %947 = vst [vmem:[#allocation2 + $0x104] sm:$0xf] %v881
        %948 = vst [vmem:[#allocation2 + $0x110] sm:$0xf] %v882
        %949 = vst [vmem:[#allocation2 + $0x11c] sm:$0xf] %v883
        %950 = vst [vmem:[#allocation2 + $0x128] sm:$0xf] %v884
        %951 = vst [vmem:[#allocation2 + $0x134] sm:$0xf] %v885
        %952 = vst [vmem:[#allocation2 + $0x140] sm:$0xf] %v886
        %953 = vst [vmem:[#allocation2 + $0x14c] sm:$0xf] %v887
        %954 = vst [vmem:[#allocation2 + $0x158] sm:$0xf] %v888
        %955 = vst [vmem:[#allocation2 + $0x164] sm:$0xf] %v889
        %956 = vst [vmem:[#allocation2 + $0x170] sm:$0xf] %v890
        %957 = vst [vmem:[#allocation2 + $0x17c] sm:$0xf] %v891
        %958 = vst [vmem:[#allocation2 + $0x188] sm:$0xf] %v892
        %959 = vst [vmem:[#allocation2 + $0x194] sm:$0xf] %v893
        %960 = vst [vmem:[#allocation2 + $0x1a0] sm:$0xf] %v890
        %961 = vst [vmem:[#allocation2 + $0x1ac] sm:$0xf] %v891
        %v962 = vld [vmem:[#allocation2] sm:$0xff]
        %v963 = vld [vmem:[#allocation2 + $0x8] sm:$0xf]
        %v964 = vld [vmem:[#allocation2 + $0xc] sm:$0xff]
        %v965 = vld [vmem:[#allocation2 + $0x14] sm:$0xf]
        %v966 = vld [vmem:[#allocation2 + $0x18] sm:$0xff]
        %v967 = vld [vmem:[#allocation2 + $0x20] sm:$0xf]
        %v968 = vld [vmem:[#allocation2 + $0x24] sm:$0xff]
        %v969 = vld [vmem:[#allocation2 + $0x2c] sm:$0xf]
        %v970 = vld [vmem:[#allocation2 + $0x30] sm:$0xff]
        %v971 = vld [vmem:[#allocation2 + $0x38] sm:$0xf]
        %v972 = vld [vmem:[#allocation2 + $0x3c] sm:$0xff]
        %v973 = vld [vmem:[#allocation2 + $0x44] sm:$0xf]
        %v974 = vld [vmem:[#allocation2 + $0x48] sm:$0xff]
        %v975 = vld [vmem:[#allocation2 + $0x50] sm:$0xf]
        %v976 = vld [vmem:[#allocation2 + $0x54] sm:$0xff]
        %v977 = vld [vmem:[#allocation2 + $0x5c] sm:$0xf]
        %v978 = vld [vmem:[#allocation2 + $0x60] sm:$0xff]
        %v979 = vld [vmem:[#allocation2 + $0x68] sm:$0xf]
        %v980 = vld [vmem:[#allocation2 + $0x6c] sm:$0xff]
        %v981 = vld [vmem:[#allocation2 + $0x74] sm:$0xf]
        %v982 = vld [vmem:[#allocation2 + $0x78] sm:$0xff]
        %v983 = vld [vmem:[#allocation2 + $0x80] sm:$0xf]
        %v984 = vld [vmem:[#allocation2 + $0x84] sm:$0xff]
        %v985 = vld [vmem:[#allocation2 + $0x8c] sm:$0xf]
        %v986 = vld [vmem:[#allocation2 + $0x90] sm:$0xff]
        %v987 = vld [vmem:[#allocation2 + $0x98] sm:$0xf]
        %v988 = vld [vmem:[#allocation2 + $0x9c] sm:$0xff]
        %v989 = vld [vmem:[#allocation2 + $0xa4] sm:$0xf]
        %v990 = vld [vmem:[#allocation2 + $0xa8] sm:$0xff]
        %v991 = vld [vmem:[#allocation2 + $0xb0] sm:$0xf]
        %v992 = vld [vmem:[#allocation2 + $0xb4] sm:$0xff]
        %v993 = vld [vmem:[#allocation2 + $0xbc] sm:$0xf]
        %v994 = vld [vmem:[%s1] sm:$0xf]
        %v995 = vld [vmem:[%s1 + $0x4] sm:$0xf]
        %v996 = vld [vmem:[%s1 + $0x8] sm:$0xf]
        %v997 = vld [vmem:[%s1 + $0xc] sm:$0xf]
        %v998 = vld [vmem:[%s1 + $0x10] sm:$0xf]
        %v999 = vld [vmem:[%s1 + $0x14] sm:$0xf]
        %v1000 = vld [vmem:[%s1 + $0x18] sm:$0xf]
        %v1001 = vld [vmem:[%s1 + $0x1c] sm:$0xf]
        %v1002 = vld [vmem:[%s1 + $0x20] sm:$0xf]
        %v1003 = vld [vmem:[%s1 + $0x24] sm:$0xf]
        %v1004 = vld [vmem:[%s1 + $0x28] sm:$0xf]
        %v1005 = vld [vmem:[%s1 + $0x2c] sm:$0xf]
        %v1006 = vld [vmem:[%s1 + $0x30] sm:$0xf]
        %v1007 = vld [vmem:[%s1 + $0x34] sm:$0xf]
        %v1008 = vld [vmem:[%s1 + $0x38] sm:$0xf]
        %v1009 = vld [vmem:[%s1 + $0x3c] sm:$0xf]
        %v1010 = vld [vmem:[%s1 + $0x40] sm:$0xf]
        %v1011 = vld [vmem:[%s1 + $0x44] sm:$0xf]
        %v1012 = vld [vmem:[%s1 + $0x48] sm:$0xf]
        %v1013 = vld [vmem:[%s1 + $0x4c] sm:$0xf]
        %v1014 = vld [vmem:[%s1 + $0x50] sm:$0xf]
        %v1015 = vld [vmem:[%s1 + $0x54] sm:$0xf]
        %v1016 = vld [vmem:[%s1 + $0x58] sm:$0xf]
        %v1017 = vld [vmem:[%s1 + $0x5c] sm:$0xf]
        %v1018 = vld [vmem:[%s1 + $0x60] sm:$0xf]
        %v1019 = vld [vmem:[%s1 + $0x64] sm:$0xf]
        %v1020 = vld [vmem:[%s1 + $0x68] sm:$0xf]
        %v1021 = vld [vmem:[%s1 + $0x6c] sm:$0xf]
        %v1022 = vld [vmem:[%s1 + $0x70] sm:$0xf]
        %v1023 = vld [vmem:[%s1 + $0x74] sm:$0xf]
        %v1024 = vld [vmem:[%s1 + $0x78] sm:$0xf]
        %v1025 = vld [vmem:[%s1 + $0x7c] sm:$0xf]
        %v1026 = vld [vmem:[%s1 + $0x80] sm:$0xf]
        %v1027 = vld [vmem:[%s1 + $0x84] sm:$0xf]
        %v1028 = vld [vmem:[%s1 + $0x88] sm:$0xf]
        %v1029 = vld [vmem:[%s1 + $0x8c] sm:$0xf]
        %v1030 = vld [vmem:[%s1 + $0x90] sm:$0xf]
        %v1031 = vld [vmem:[%s1 + $0x94] sm:$0xf]
        %v1032 = vld [vmem:[%s1 + $0x98] sm:$0xf]
        %v1033 = vld [vmem:[%s1 + $0x9c] sm:$0xf]
        %v1034 = vld [vmem:[%s1 + $0xa0] sm:$0xf]
        %v1035 = vld [vmem:[%s1 + $0xa4] sm:$0xf]
        %v1036 = vld [vmem:[%s1 + $0xa8] sm:$0xf]
        %v1037 = vld [vmem:[%s1 + $0xac] sm:$0xf]
        %v1038 = vld [vmem:[%s1 + $0xb0] sm:$0xf]
        %v1039 = vld [vmem:[%s1 + $0xb4] sm:$0xf]
        %v1040 = vld [vmem:[%s1 + $0xb8] sm:$0xf]
        %v1041 = vld [vmem:[%s1 + $0xbc] sm:$0xf]
        %v1042 = vld [vmem:[#allocation2 + $0xc0] sm:$0xff]
        %v1043 = vld [vmem:[#allocation2 + $0xc8] sm:$0xf]
        %v1044 = vld [vmem:[#allocation2 + $0xcc] sm:$0xff]
        %v1045 = vld [vmem:[#allocation2 + $0xd4] sm:$0xf]
        %s1046 = scalar_lea.vmem %s1, 192
        %v1047 = vld [vmem:[%s1046] sm:$0xf]
        %v1048 = vld [vmem:[%s1046 + $0x4] sm:$0xf]
        %v1049 = vld [vmem:[%s1046 + $0x8] sm:$0xf]
        %v1050 = vld [vmem:[%s1046 + $0xc] sm:$0xf]
        %v1051 = vld [vmem:[%s1046 + $0x10] sm:$0xf]
        %v1052 = vld [vmem:[%s1046 + $0x14] sm:$0xf]
        %v1053 = vld [vmem:[%s1046 + $0x18] sm:$0xf]
        %v1054 = vld [vmem:[%s1046 + $0x1c] sm:$0xf]
        %v1055 = vld [vmem:[%s1046 + $0x20] sm:$0xf]
        %v1056 = vld [vmem:[%s1046 + $0x24] sm:$0xf]
        %v1057 = vld [vmem:[%s1046 + $0x28] sm:$0xf]
        %v1058 = vld [vmem:[%s1046 + $0x2c] sm:$0xf]
        %v1059 = vld [vmem:[%s1046 + $0x30] sm:$0xf]
        %v1060 = vld [vmem:[%s1046 + $0x34] sm:$0xf]
        %v1061 = vld [vmem:[%s1046 + $0x38] sm:$0xf]
        %v1062 = vld [vmem:[%s1046 + $0x3c] sm:$0xf]
        %v1063 = vld [vmem:[%s1046 + $0x40] sm:$0xf]
        %v1064 = vld [vmem:[%s1046 + $0x44] sm:$0xf]
        %v1065 = vld [vmem:[%s1046 + $0x48] sm:$0xf]
        %v1066 = vld [vmem:[%s1046 + $0x4c] sm:$0xf]
        %v1067 = vld [vmem:[%s1046 + $0x50] sm:$0xf]
        %v1068 = vld [vmem:[%s1046 + $0x54] sm:$0xf]
        %v1069 = vld [vmem:[%s1046 + $0x58] sm:$0xf]
        %v1070 = vld [vmem:[%s1046 + $0x5c] sm:$0xf]
        %v1071 = vld [vmem:[%s1046 + $0x60] sm:$0xf]
        %v1072 = vld [vmem:[%s1046 + $0x64] sm:$0xf]
        %v1073 = vld [vmem:[%s1046 + $0x68] sm:$0xf]
        %v1074 = vld [vmem:[%s1046 + $0x6c] sm:$0xf]
        %v1075 = vld [vmem:[%s1046 + $0x70] sm:$0xf]
        %v1076 = vld [vmem:[%s1046 + $0x74] sm:$0xf]
        %v1077 = vld [vmem:[%s1046 + $0x78] sm:$0xf]
        %v1078 = vld [vmem:[%s1046 + $0x7c] sm:$0xf]
        %v1079 = vld [vmem:[%s1046 + $0x80] sm:$0xf]
        %v1080 = vld [vmem:[%s1046 + $0x84] sm:$0xf]
        %v1081 = vld [vmem:[%s1046 + $0x88] sm:$0xf]
        %v1082 = vld [vmem:[%s1046 + $0x8c] sm:$0xf]
        %v1083 = vld [vmem:[%s1046 + $0x90] sm:$0xf]
        %v1084 = vld [vmem:[%s1046 + $0x94] sm:$0xf]
        %v1085 = vld [vmem:[%s1046 + $0x98] sm:$0xf]
        %v1086 = vld [vmem:[%s1046 + $0x9c] sm:$0xf]
        %v1087 = vld [vmem:[%s1046 + $0xa0] sm:$0xf]
        %v1088 = vld [vmem:[%s1046 + $0xa4] sm:$0xf]
        %v1089 = vld [vmem:[%s1046 + $0xa8] sm:$0xf]
        %v1090 = vld [vmem:[%s1046 + $0xac] sm:$0xf]
        %v1091 = vld [vmem:[%s1046 + $0xb0] sm:$0xf]
        %v1092 = vld [vmem:[%s1046 + $0xb4] sm:$0xf]
        %v1093 = vld [vmem:[%s1046 + $0xb8] sm:$0xf]
        %v1094 = vld [vmem:[%s1046 + $0xbc] sm:$0xf]
        %v1127 = vunpack.c.l.b16 %v966
        %v1128 = vunpack.c.h.b16 %v966
        %v1129 = vunpack.c.l.b16 %v967
        %v1130 = vunpack.c.l.b16 %v968
        %v1131 = vunpack.c.h.b16 %v968
        %v1132 = vunpack.c.l.b16 %v969
        %v1133 = vunpack.c.l.b16 %v970
        %v1134 = vunpack.c.h.b16 %v970
        %v1135 = vunpack.c.l.b16 %v971
        %v1136 = vunpack.c.l.b16 %v972
        %v1137 = vunpack.c.h.b16 %v972
        %v1138 = vunpack.c.l.b16 %v973
        %v1139 = vunpack.c.l.b16 %v974
        %v1140 = vunpack.c.h.b16 %v974
        %v1141 = vunpack.c.l.b16 %v975
        %v1142 = vunpack.c.l.b16 %v976
        %v1143 = vunpack.c.h.b16 %v976
        %v1144 = vunpack.c.l.b16 %v977
        %v1145 = vunpack.c.l.b16 %v978
        %v1146 = vunpack.c.h.b16 %v978
        %v1147 = vunpack.c.l.b16 %v979
        %v1148 = vunpack.c.l.b16 %v980
        %v1149 = vunpack.c.h.b16 %v980
        %v1150 = vunpack.c.l.b16 %v981
        %v1151 = vunpack.c.l.b16 %v982
        %v1152 = vunpack.c.h.b16 %v982
        %v1153 = vunpack.c.l.b16 %v983
        %v1154 = vunpack.c.l.b16 %v984
        %v1155 = vunpack.c.h.b16 %v984
        %v1156 = vunpack.c.l.b16 %v985
        %v1157 = vunpack.c.l.b16 %v986
        %v1158 = vunpack.c.h.b16 %v986
        %v1159 = vunpack.c.l.b16 %v987
        %v1160 = vunpack.c.l.b16 %v988
        %v1161 = vunpack.c.h.b16 %v988
        %v1162 = vunpack.c.l.b16 %v989
        %v1163 = vunpack.c.l.b16 %v990
        %v1164 = vunpack.c.h.b16 %v990
        %v1165 = vunpack.c.l.b16 %v991
        %v1166 = vunpack.c.l.b16 %v992
        %v1167 = vunpack.c.h.b16 %v992
        %v1168 = vunpack.c.l.b16 %v993
        %v1169 = vunpack.c.l.b16 %v1042
        %v1170 = vunpack.c.h.b16 %v1042
        %v1171 = vunpack.c.l.b16 %v1043
        %v1172 = vunpack.c.l.b16 %v1044
        %v1173 = vunpack.c.h.b16 %v1044
        %v1174 = vunpack.c.l.b16 %v1045
        %v1175 = vpack.c.b16 %v1130, %v1127
        %v1176 = vpack.c.b16 %v1131, %v1128
        %v1177 = vpack.c.b16 %v1132, %v1129
        %v1178 = vpack.c.b16 %v1136, %v1133
        %v1179 = vpack.c.b16 %v1137, %v1134
        %v1180 = vpack.c.b16 %v1138, %v1135
        %v1181 = vpack.c.b16 %v1142, %v1139
        %v1182 = vpack.c.b16 %v1143, %v1140
        %v1183 = vpack.c.b16 %v1144, %v1141
        %v1184 = vpack.c.b16 %v1148, %v1145
        %v1185 = vpack.c.b16 %v1149, %v1146
        %v1186 = vpack.c.b16 %v1150, %v1147
        %v1187 = vpack.c.b16 %v1154, %v1151
        %v1188 = vpack.c.b16 %v1155, %v1152
        %v1189 = vpack.c.b16 %v1156, %v1153
        %v1190 = vpack.c.b16 %v1160, %v1157
        %v1191 = vpack.c.b16 %v1161, %v1158
        %v1192 = vpack.c.b16 %v1162, %v1159
        %v1193 = vpack.c.b16 %v1166, %v1163
        %v1194 = vpack.c.b16 %v1167, %v1164
        %v1195 = vpack.c.b16 %v1168, %v1165
        %v1196 = vpack.c.b16 %v1172, %v1169
        %v1197 = vpack.c.b16 %v1173, %v1170
        %v1198 = vpack.c.b16 %v1174, %v1171
        %v1271 = vunpack.c.l.b16 %v1047
        %v1272 = vunpack.c.l.b16 %v1048
        %v1273 = vunpack.c.l.b16 %v1049
        %v1274 = vunpack.c.l.b16 %v1050
        %v1275 = vunpack.c.l.b16 %v1051
        %v1276 = vunpack.c.l.b16 %v1052
        %v1277 = vunpack.c.l.b16 %v1053
        %v1278 = vunpack.c.l.b16 %v1054
        %v1279 = vunpack.c.l.b16 %v1055
        %v1280 = vunpack.c.l.b16 %v1056
        %v1281 = vunpack.c.l.b16 %v1057
        %v1282 = vunpack.c.l.b16 %v1058
        %v1283 = vunpack.c.l.b16 %v1059
        %v1284 = vunpack.c.l.b16 %v1060
        %v1285 = vunpack.c.l.b16 %v1061
        %v1286 = vunpack.c.l.b16 %v1062
        %v1287 = vunpack.c.l.b16 %v1063
        %v1288 = vunpack.c.l.b16 %v1064
        %v1289 = vunpack.c.l.b16 %v1065
        %v1290 = vunpack.c.l.b16 %v1066
        %v1291 = vunpack.c.l.b16 %v1067
        %v1292 = vunpack.c.l.b16 %v1068
        %v1293 = vunpack.c.l.b16 %v1069
        %v1294 = vunpack.c.l.b16 %v1070
        %v1295 = vunpack.c.l.b16 %v1071
        %v1296 = vunpack.c.l.b16 %v1072
        %v1297 = vunpack.c.l.b16 %v1073
        %v1298 = vunpack.c.l.b16 %v1074
        %v1299 = vunpack.c.l.b16 %v1075
        %v1300 = vunpack.c.l.b16 %v1076
        %v1301 = vunpack.c.l.b16 %v1077
        %v1302 = vunpack.c.l.b16 %v1078
        %v1303 = vunpack.c.l.b16 %v1079
        %v1304 = vunpack.c.l.b16 %v1080
        %v1305 = vunpack.c.l.b16 %v1081
        %v1306 = vunpack.c.l.b16 %v1082
        %v1307 = vunpack.c.l.b16 %v1083
        %v1308 = vunpack.c.l.b16 %v1084
        %v1309 = vunpack.c.l.b16 %v1085
        %v1310 = vunpack.c.l.b16 %v1086
        %v1311 = vunpack.c.l.b16 %v1087
        %v1312 = vunpack.c.l.b16 %v1088
        %v1313 = vunpack.c.l.b16 %v1089
        %v1314 = vunpack.c.l.b16 %v1090
        %v1315 = vunpack.c.l.b16 %v1091
        %v1316 = vunpack.c.l.b16 %v1092
        %v1317 = vunpack.c.l.b16 %v1093
        %v1318 = vunpack.c.l.b16 %v1094
        %v1319 = vpack.c.b16 %v1272, %v1271
        %v1320 = vpack.c.b16 %v1274, %v1273
        %v1321 = vpack.c.b16 %v1276, %v1275
        %v1322 = vpack.c.b16 %v1278, %v1277
        %v1323 = vpack.c.b16 %v1280, %v1279
        %v1324 = vpack.c.b16 %v1282, %v1281
        %v1325 = vpack.c.b16 %v1284, %v1283
        %v1326 = vpack.c.b16 %v1286, %v1285
        %v1327 = vpack.c.b16 %v1288, %v1287
        %v1328 = vpack.c.b16 %v1290, %v1289
        %v1329 = vpack.c.b16 %v1292, %v1291
        %v1330 = vpack.c.b16 %v1294, %v1293
        %v1331 = vpack.c.b16 %v1296, %v1295
        %v1332 = vpack.c.b16 %v1298, %v1297
        %v1333 = vpack.c.b16 %v1300, %v1299
        %v1334 = vpack.c.b16 %v1302, %v1301
        %v1335 = vpack.c.b16 %v1304, %v1303
        %v1336 = vpack.c.b16 %v1306, %v1305
        %v1337 = vpack.c.b16 %v1308, %v1307
        %v1338 = vpack.c.b16 %v1310, %v1309
        %v1339 = vpack.c.b16 %v1312, %v1311
        %v1340 = vpack.c.b16 %v1314, %v1313
        %v1341 = vpack.c.b16 %v1316, %v1315
        %v1342 = vpack.c.b16 %v1318, %v1317
        %1367 = vmatprep.subr.bf16.mxu0 0
        %1368 = vmatpush1.bf16.msra.mxu0 %v1326
        %1369 = vmatprep.subr.bf16.mxu0 0
        %1370 = vmatpush1.bf16.msra.mxu0 %v1325
        %1371 = vmatprep.subr.bf16.mxu0 0
        %1372 = vmatpush1.bf16.msra.mxu0 %v1324
        %1373 = vmatprep.subr.bf16.mxu0 0
        %1374 = vmatpush1.bf16.msra.mxu0 %v1323
        %1375 = vmatprep.subr.bf16.mxu0 0
        %1376 = vmatpush1.bf16.msra.mxu0 %v1322
        %1377 = vmatprep.subr.bf16.mxu0 0
        %1378 = vmatpush1.bf16.msra.mxu0 %v1321
        %1379 = vmatprep.subr.bf16.mxu0 0
        %1380 = vmatpush1.bf16.msra.mxu0 %v1320
        %1381 = vmatprep.subr.bf16.mxu0 0
        %1382 = vmatpush1.bf16.msra.mxu0 %v1319
        %1383 = vmatprep.subr.bf16.mxu0 0
        %1384 = vmatpush2.bf16.msra.mxu0 %v1334
        %1385 = vmatprep.subr.bf16.mxu0 0
        %1386 = vmatpush2.bf16.msra.mxu0 %v1333
        %1387 = vmatprep.subr.bf16.mxu0 0
        %1388 = vmatpush2.bf16.msra.mxu0 %v1332
        %1389 = vmatprep.subr.bf16.mxu0 0
        %1390 = vmatpush2.bf16.msra.mxu0 %v1331
        %1391 = vmatprep.subr.bf16.mxu0 0
        %1392 = vmatpush2.bf16.msra.mxu0 %v1330
        %1393 = vmatprep.subr.bf16.mxu0 0
        %1394 = vmatpush2.bf16.msra.mxu0 %v1329
        %1395 = vmatprep.subr.bf16.mxu0 0
        %1396 = vmatpush2.bf16.msra.mxu0 %v1328
        %1397 = vmatprep.subr.bf16.mxu0 0
        %1398 = vmatpush2.bf16.msra.mxu0 %v1327
        %1399 = vmatprep.mubr.bf16.mxu0 %v1176
        %1400 = vmatmul.mubr.bf16.gmra.mxu0 %v1175
        %v1401 = vpop.f32.mrf.mxu0
        %v1402 = vadd.f32 0.0, %v1401
        %v1403 = vpop.f32.mrf.mxu0
        %v1404 = vpop.f32.mrf.mxu0
        %v1405 = vadd.f32 0.0, %v1404
        %v1406 = vpop.f32.mrf.mxu0
        %1407 = vmatprep.mubr.bf16.mxu0 %v1179
        %1408 = vmatmul.mubr.bf16.gmra.mxu0 %v1178
        %v1409 = vpop.f32.mrf.mxu0
        %v1410 = vadd.f32 0.0, %v1409
        %v1411 = vpop.f32.mrf.mxu0
        %v1412 = vpop.f32.mrf.mxu0
        %v1413 = vadd.f32 0.0, %v1412
        %v1414 = vpop.f32.mrf.mxu0
        %1415 = vmatprep.mubr.bf16.mxu0 %v1182
        %1416 = vmatmul.mubr.bf16.gmra.mxu0 %v1181
        %v1417 = vpop.f32.mrf.mxu0
        %v1418 = vadd.f32 0.0, %v1417
        %v1419 = vpop.f32.mrf.mxu0
        %v1420 = vpop.f32.mrf.mxu0
        %v1421 = vadd.f32 0.0, %v1420
        %v1422 = vpop.f32.mrf.mxu0
        %1423 = vmatprep.mubr.bf16.mxu0 %v1185
        %1424 = vmatmul.mubr.bf16.gmra.mxu0 %v1184
        %v1425 = vpop.f32.mrf.mxu0
        %v1426 = vadd.f32 0.0, %v1425
        %v1427 = vpop.f32.mrf.mxu0
        %v1428 = vpop.f32.mrf.mxu0
        %v1429 = vadd.f32 0.0, %v1428
        %v1430 = vpop.f32.mrf.mxu0
        %1431 = vmatprep.mubr.bf16.mxu0 %v1188
        %1432 = vmatmul.mubr.bf16.gmra.mxu0 %v1187
        %v1433 = vpop.f32.mrf.mxu0
        %v1434 = vadd.f32 0.0, %v1433
        %v1435 = vpop.f32.mrf.mxu0
        %v1436 = vpop.f32.mrf.mxu0
        %v1437 = vadd.f32 0.0, %v1436
        %v1438 = vpop.f32.mrf.mxu0
        %1439 = vmatprep.mubr.bf16.mxu0 %v1191
        %1440 = vmatmul.mubr.bf16.gmra.mxu0 %v1190
        %v1441 = vpop.f32.mrf.mxu0
        %v1442 = vadd.f32 0.0, %v1441
        %v1443 = vpop.f32.mrf.mxu0
        %v1444 = vpop.f32.mrf.mxu0
        %v1445 = vadd.f32 0.0, %v1444
        %v1446 = vpop.f32.mrf.mxu0
        %1447 = vmatprep.mubr.bf16.mxu0 %v1194
        %1448 = vmatmul.mubr.bf16.gmra.mxu0 %v1193
        %v1449 = vpop.f32.mrf.mxu0
        %v1450 = vadd.f32 0.0, %v1449
        %v1451 = vpop.f32.mrf.mxu0
        %v1452 = vpop.f32.mrf.mxu0
        %v1453 = vadd.f32 0.0, %v1452
        %v1454 = vpop.f32.mrf.mxu0
        %1455 = vmatprep.mubr.bf16.mxu0 %v1197
        %1456 = vmatmul.mubr.bf16.gmra.mxu0 %v1196
        %v1457 = vpop.f32.mrf.mxu0
        %v1458 = vadd.f32 0.0, %v1457
        %v1459 = vpop.f32.mrf.mxu0
        %v1460 = vpop.f32.mrf.mxu0
        %v1461 = vadd.f32 0.0, %v1460
        %v1462 = vpop.f32.mrf.mxu0
        %1463 = vdwg.mxu0
        %1464 = vmatprep.subr.bf16.mxu0 0
        %1465 = vmatpush1.bf16.msra.mxu0 %v1342
        %1466 = vmatprep.subr.bf16.mxu0 0
        %1467 = vmatpush1.bf16.msra.mxu0 %v1341
        %1468 = vmatprep.subr.bf16.mxu0 0
        %1469 = vmatpush1.bf16.msra.mxu0 %v1340
        %1470 = vmatprep.subr.bf16.mxu0 0
        %1471 = vmatpush1.bf16.msra.mxu0 %v1339
        %1472 = vmatprep.subr.bf16.mxu0 0
        %1473 = vmatpush1.bf16.msra.mxu0 %v1338
        %1474 = vmatprep.subr.bf16.mxu0 0
        %1475 = vmatpush1.bf16.msra.mxu0 %v1337
        %1476 = vmatprep.subr.bf16.mxu0 0
        %1477 = vmatpush1.bf16.msra.mxu0 %v1336
        %1478 = vmatprep.subr.bf16.mxu0 0
        %1479 = vmatpush1.bf16.msra.mxu0 %v1335
        %1480 = vmatprep.subr.bf16.mxu0 0
        %1481 = vmatpush2.bf16.msra.mxu0 0
        %1482 = vmatprep.subr.bf16.mxu0 0
        %1483 = vmatpush2.bf16.msra.mxu0 0
        %1484 = vmatprep.subr.bf16.mxu0 0
        %1485 = vmatpush2.bf16.msra.mxu0 0
        %1486 = vmatprep.subr.bf16.mxu0 0
        %1487 = vmatpush2.bf16.msra.mxu0 0
        %1488 = vmatprep.subr.bf16.mxu0 0
        %1489 = vmatpush2.bf16.msra.mxu0 0
        %1490 = vmatprep.subr.bf16.mxu0 0
        %1491 = vmatpush2.bf16.msra.mxu0 0
        %1492 = vmatprep.subr.bf16.mxu0 0
        %1493 = vmatpush2.bf16.msra.mxu0 0
        %1494 = vmatprep.subr.bf16.mxu0 0
        %1495 = vmatpush2.bf16.msra.mxu0 0
        %1496 = vmatprep.mubr.bf16.mxu0 0
        %1497 = vmatmul.mubr.bf16.gmra.mxu0 %v1177
        %v1498 = vpop.f32.mrf.mxu0
        %v1499 = vadd.f32 %v1402, %v1498
        %v1500 = vpop.f32.mrf.mxu0
        %v1501 = vpop.f32.mrf.mxu0
        %v1502 = vadd.f32 %v1405, %v1501
        %v1503 = vpop.f32.mrf.mxu0
        %1504 = vmatprep.mubr.bf16.mxu0 0
        %1505 = vmatmul.mubr.bf16.gmra.mxu0 %v1180
        %v1506 = vpop.f32.mrf.mxu0
        %v1507 = vadd.f32 %v1410, %v1506
        %v1508 = vpop.f32.mrf.mxu0
        %v1509 = vpop.f32.mrf.mxu0
        %v1510 = vadd.f32 %v1413, %v1509
        %v1511 = vpop.f32.mrf.mxu0
        %1512 = vmatprep.mubr.bf16.mxu0 0
        %1513 = vmatmul.mubr.bf16.gmra.mxu0 %v1183
        %v1514 = vpop.f32.mrf.mxu0
        %v1515 = vadd.f32 %v1418, %v1514
        %v1516 = vpop.f32.mrf.mxu0
        %v1517 = vpop.f32.mrf.mxu0
        %v1518 = vadd.f32 %v1421, %v1517
        %v1519 = vpop.f32.mrf.mxu0
        %1520 = vmatprep.mubr.bf16.mxu0 0
        %1521 = vmatmul.mubr.bf16.gmra.mxu0 %v1186
        %v1522 = vpop.f32.mrf.mxu0
        %v1523 = vadd.f32 %v1426, %v1522
        %v1524 = vpop.f32.mrf.mxu0
        %v1525 = vpop.f32.mrf.mxu0
        %v1526 = vadd.f32 %v1429, %v1525
        %v1527 = vpop.f32.mrf.mxu0
        %1528 = vmatprep.mubr.bf16.mxu0 0
        %1529 = vmatmul.mubr.bf16.gmra.mxu0 %v1189
        %v1530 = vpop.f32.mrf.mxu0
        %v1531 = vadd.f32 %v1434, %v1530
        %v1532 = vpop.f32.mrf.mxu0
        %v1533 = vpop.f32.mrf.mxu0
        %v1534 = vadd.f32 %v1437, %v1533
        %v1535 = vpop.f32.mrf.mxu0
        %1536 = vmatprep.mubr.bf16.mxu0 0
        %1537 = vmatmul.mubr.bf16.gmra.mxu0 %v1192
        %v1538 = vpop.f32.mrf.mxu0
        %v1539 = vadd.f32 %v1442, %v1538
        %v1540 = vpop.f32.mrf.mxu0
        %v1541 = vpop.f32.mrf.mxu0
        %v1542 = vadd.f32 %v1445, %v1541
        %v1543 = vpop.f32.mrf.mxu0
        %1544 = vmatprep.mubr.bf16.mxu0 0
        %1545 = vmatmul.mubr.bf16.gmra.mxu0 %v1195
        %v1546 = vpop.f32.mrf.mxu0
        %v1547 = vadd.f32 %v1450, %v1546
        %v1548 = vpop.f32.mrf.mxu0
        %v1549 = vpop.f32.mrf.mxu0
        %v1550 = vadd.f32 %v1453, %v1549
        %v1551 = vpop.f32.mrf.mxu0
        %1552 = vmatprep.mubr.bf16.mxu0 0
        %1553 = vmatmul.mubr.bf16.gmra.mxu0 %v1198
        %v1554 = vpop.f32.mrf.mxu0
        %v1555 = vadd.f32 %v1458, %v1554
        %v1556 = vpop.f32.mrf.mxu0
        %v1557 = vpop.f32.mrf.mxu0
        %v1558 = vadd.f32 %v1461, %v1557
        %v1559 = vpop.f32.mrf.mxu0
        %1560 = vdwg.mxu0
        %v1565 = vunpack.c.l.b16 %v962
        %v1566 = vunpack.c.h.b16 %v962
        %v1567 = vunpack.c.l.b16 %v963
        %v1568 = vunpack.c.l.b16 %v964
        %v1569 = vunpack.c.h.b16 %v964
        %v1570 = vunpack.c.l.b16 %v965
        %v1571 = vpack.c.b16 %v1568, %v1565
        %v1572 = vpack.c.b16 %v1569, %v1566
        %v1573 = vpack.c.b16 %v1570, %v1567
        %v1625 = vunpack.c.l.b16 %v994
        %v1626 = vunpack.c.l.b16 %v995
        %v1627 = vunpack.c.l.b16 %v996
        %v1628 = vunpack.c.l.b16 %v997
        %v1629 = vunpack.c.l.b16 %v998
        %v1630 = vunpack.c.l.b16 %v999
        %v1631 = vunpack.c.l.b16 %v1000
        %v1632 = vunpack.c.l.b16 %v1001
        %v1633 = vunpack.c.l.b16 %v1002
        %v1634 = vunpack.c.l.b16 %v1003
        %v1635 = vunpack.c.l.b16 %v1004
        %v1636 = vunpack.c.l.b16 %v1005
        %v1637 = vunpack.c.l.b16 %v1006
        %v1638 = vunpack.c.l.b16 %v1007
        %v1639 = vunpack.c.l.b16 %v1008
        %v1640 = vunpack.c.l.b16 %v1009
        %v1641 = vunpack.c.l.b16 %v1010
        %v1642 = vunpack.c.l.b16 %v1011
        %v1643 = vunpack.c.l.b16 %v1012
        %v1644 = vunpack.c.l.b16 %v1013
        %v1645 = vunpack.c.l.b16 %v1014
        %v1646 = vunpack.c.l.b16 %v1015
        %v1647 = vunpack.c.l.b16 %v1016
        %v1648 = vunpack.c.l.b16 %v1017
        %v1649 = vunpack.c.l.b16 %v1018
        %v1650 = vunpack.c.l.b16 %v1019
        %v1651 = vunpack.c.l.b16 %v1020
        %v1652 = vunpack.c.l.b16 %v1021
        %v1653 = vunpack.c.l.b16 %v1022
        %v1654 = vunpack.c.l.b16 %v1023
        %v1655 = vunpack.c.l.b16 %v1024
        %v1656 = vunpack.c.l.b16 %v1025
        %v1657 = vunpack.c.l.b16 %v1026
        %v1658 = vunpack.c.l.b16 %v1027
        %v1659 = vunpack.c.l.b16 %v1028
        %v1660 = vunpack.c.l.b16 %v1029
        %v1661 = vunpack.c.l.b16 %v1030
        %v1662 = vunpack.c.l.b16 %v1031
        %v1663 = vunpack.c.l.b16 %v1032
        %v1664 = vunpack.c.l.b16 %v1033
        %v1665 = vunpack.c.l.b16 %v1034
        %v1666 = vunpack.c.l.b16 %v1035
        %v1667 = vunpack.c.l.b16 %v1036
        %v1668 = vunpack.c.l.b16 %v1037
        %v1669 = vunpack.c.l.b16 %v1038
        %v1670 = vunpack.c.l.b16 %v1039
        %v1671 = vunpack.c.l.b16 %v1040
        %v1672 = vunpack.c.l.b16 %v1041
        %v1673 = vpack.c.b16 %v1626, %v1625
        %v1674 = vpack.c.b16 %v1628, %v1627
        %v1675 = vpack.c.b16 %v1630, %v1629
        %v1676 = vpack.c.b16 %v1632, %v1631
        %v1677 = vpack.c.b16 %v1634, %v1633
        %v1678 = vpack.c.b16 %v1636, %v1635
        %v1679 = vpack.c.b16 %v1638, %v1637
        %v1680 = vpack.c.b16 %v1640, %v1639
        %v1681 = vpack.c.b16 %v1642, %v1641
        %v1682 = vpack.c.b16 %v1644, %v1643
        %v1683 = vpack.c.b16 %v1646, %v1645
        %v1684 = vpack.c.b16 %v1648, %v1647
        %v1685 = vpack.c.b16 %v1650, %v1649
        %v1686 = vpack.c.b16 %v1652, %v1651
        %v1687 = vpack.c.b16 %v1654, %v1653
        %v1688 = vpack.c.b16 %v1656, %v1655
        %v1689 = vpack.c.b16 %v1658, %v1657
        %v1690 = vpack.c.b16 %v1660, %v1659
        %v1691 = vpack.c.b16 %v1662, %v1661
        %v1692 = vpack.c.b16 %v1664, %v1663
        %v1693 = vpack.c.b16 %v1666, %v1665
        %v1694 = vpack.c.b16 %v1668, %v1667
        %v1695 = vpack.c.b16 %v1670, %v1669
        %v1696 = vpack.c.b16 %v1672, %v1671
        %1721 = vmatprep.subr.bf16.mxu0 0
        %1722 = vmatpush1.bf16.msra.mxu0 %v1680
        %1723 = vmatprep.subr.bf16.mxu0 0
        %1724 = vmatpush1.bf16.msra.mxu0 %v1679
        %1725 = vmatprep.subr.bf16.mxu0 0
        %1726 = vmatpush1.bf16.msra.mxu0 %v1678
        %1727 = vmatprep.subr.bf16.mxu0 0
        %1728 = vmatpush1.bf16.msra.mxu0 %v1677
        %1729 = vmatprep.subr.bf16.mxu0 0
        %1730 = vmatpush1.bf16.msra.mxu0 %v1676
        %1731 = vmatprep.subr.bf16.mxu0 0
        %1732 = vmatpush1.bf16.msra.mxu0 %v1675
        %1733 = vmatprep.subr.bf16.mxu0 0
        %1734 = vmatpush1.bf16.msra.mxu0 %v1674
        %1735 = vmatprep.subr.bf16.mxu0 0
        %1736 = vmatpush1.bf16.msra.mxu0 %v1673
        %1737 = vmatprep.subr.bf16.mxu0 0
        %1738 = vmatpush2.bf16.msra.mxu0 %v1688
        %1739 = vmatprep.subr.bf16.mxu0 0
        %1740 = vmatpush2.bf16.msra.mxu0 %v1687
        %1741 = vmatprep.subr.bf16.mxu0 0
        %1742 = vmatpush2.bf16.msra.mxu0 %v1686
        %1743 = vmatprep.subr.bf16.mxu0 0
        %1744 = vmatpush2.bf16.msra.mxu0 %v1685
        %1745 = vmatprep.subr.bf16.mxu0 0
        %1746 = vmatpush2.bf16.msra.mxu0 %v1684
        %1747 = vmatprep.subr.bf16.mxu0 0
        %1748 = vmatpush2.bf16.msra.mxu0 %v1683
        %1749 = vmatprep.subr.bf16.mxu0 0
        %1750 = vmatpush2.bf16.msra.mxu0 %v1682
        %1751 = vmatprep.subr.bf16.mxu0 0
        %1752 = vmatpush2.bf16.msra.mxu0 %v1681
        %1753 = vmatprep.mubr.bf16.mxu0 %v1572
        %1754 = vmatmul.mubr.bf16.gmra.mxu0 %v1571
        %v1755 = vpop.f32.mrf.mxu0
        %v1756 = vadd.f32 %v1499, %v1755
        %v1757 = vpop.f32.mrf.mxu0
        %v1758 = vpop.f32.mrf.mxu0
        %v1759 = vadd.f32 %v1502, %v1758
        %v1760 = vpop.f32.mrf.mxu0
        %1761 = vmatprep.mubr.bf16.mxu0 %v1176
        %1762 = vmatmul.mubr.bf16.gmra.mxu0 %v1175
        %v1763 = vpop.f32.mrf.mxu0
        %v1764 = vadd.f32 %v1507, %v1763
        %v1765 = vpop.f32.mrf.mxu0
        %v1766 = vpop.f32.mrf.mxu0
        %v1767 = vadd.f32 %v1510, %v1766
        %v1768 = vpop.f32.mrf.mxu0
        %1769 = vmatprep.mubr.bf16.mxu0 %v1179
        %1770 = vmatmul.mubr.bf16.gmra.mxu0 %v1178
        %v1771 = vpop.f32.mrf.mxu0
        %v1772 = vadd.f32 %v1515, %v1771
        %v1773 = vpop.f32.mrf.mxu0
        %v1774 = vpop.f32.mrf.mxu0
        %v1775 = vadd.f32 %v1518, %v1774
        %v1776 = vpop.f32.mrf.mxu0
        %1777 = vmatprep.mubr.bf16.mxu0 %v1182
        %1778 = vmatmul.mubr.bf16.gmra.mxu0 %v1181
        %v1779 = vpop.f32.mrf.mxu0
        %v1780 = vadd.f32 %v1523, %v1779
        %v1781 = vpop.f32.mrf.mxu0
        %v1782 = vpop.f32.mrf.mxu0
        %v1783 = vadd.f32 %v1526, %v1782
        %v1784 = vpop.f32.mrf.mxu0
        %1785 = vmatprep.mubr.bf16.mxu0 %v1185
        %1786 = vmatmul.mubr.bf16.gmra.mxu0 %v1184
        %v1787 = vpop.f32.mrf.mxu0
        %v1788 = vadd.f32 %v1531, %v1787
        %v1789 = vpop.f32.mrf.mxu0
        %v1790 = vpop.f32.mrf.mxu0
        %v1791 = vadd.f32 %v1534, %v1790
        %v1792 = vpop.f32.mrf.mxu0
        %1793 = vmatprep.mubr.bf16.mxu0 %v1188
        %1794 = vmatmul.mubr.bf16.gmra.mxu0 %v1187
        %v1795 = vpop.f32.mrf.mxu0
        %v1796 = vadd.f32 %v1539, %v1795
        %v1797 = vpop.f32.mrf.mxu0
        %v1798 = vpop.f32.mrf.mxu0
        %v1799 = vadd.f32 %v1542, %v1798
        %v1800 = vpop.f32.mrf.mxu0
        %1801 = vmatprep.mubr.bf16.mxu0 %v1191
        %1802 = vmatmul.mubr.bf16.gmra.mxu0 %v1190
        %v1803 = vpop.f32.mrf.mxu0
        %v1804 = vadd.f32 %v1547, %v1803
        %v1805 = vpop.f32.mrf.mxu0
        %v1806 = vpop.f32.mrf.mxu0
        %v1807 = vadd.f32 %v1550, %v1806
        %v1808 = vpop.f32.mrf.mxu0
        %1809 = vmatprep.mubr.bf16.mxu0 %v1194
        %1810 = vmatmul.mubr.bf16.gmra.mxu0 %v1193
        %v1811 = vpop.f32.mrf.mxu0
        %v1812 = vadd.f32 %v1555, %v1811
        %v1813 = vpop.f32.mrf.mxu0
        %v1814 = vpop.f32.mrf.mxu0
        %v1815 = vadd.f32 %v1558, %v1814
        %v1816 = vpop.f32.mrf.mxu0
        %1817 = vdwg.mxu0
        %1818 = vmatprep.subr.bf16.mxu0 0
        %1819 = vmatpush1.bf16.msra.mxu0 %v1696
        %1820 = vmatprep.subr.bf16.mxu0 0
        %1821 = vmatpush1.bf16.msra.mxu0 %v1695
        %1822 = vmatprep.subr.bf16.mxu0 0
        %1823 = vmatpush1.bf16.msra.mxu0 %v1694
        %1824 = vmatprep.subr.bf16.mxu0 0
        %1825 = vmatpush1.bf16.msra.mxu0 %v1693
        %1826 = vmatprep.subr.bf16.mxu0 0
        %1827 = vmatpush1.bf16.msra.mxu0 %v1692
        %1828 = vmatprep.subr.bf16.mxu0 0
        %1829 = vmatpush1.bf16.msra.mxu0 %v1691
        %1830 = vmatprep.subr.bf16.mxu0 0
        %1831 = vmatpush1.bf16.msra.mxu0 %v1690
        %1832 = vmatprep.subr.bf16.mxu0 0
        %1833 = vmatpush1.bf16.msra.mxu0 %v1689
        %1834 = vmatprep.subr.bf16.mxu0 0
        %1835 = vmatpush2.bf16.msra.mxu0 0
        %1836 = vmatprep.subr.bf16.mxu0 0
        %1837 = vmatpush2.bf16.msra.mxu0 0
        %1838 = vmatprep.subr.bf16.mxu0 0
        %1839 = vmatpush2.bf16.msra.mxu0 0
        %1840 = vmatprep.subr.bf16.mxu0 0
        %1841 = vmatpush2.bf16.msra.mxu0 0
        %1842 = vmatprep.subr.bf16.mxu0 0
        %1843 = vmatpush2.bf16.msra.mxu0 0
        %1844 = vmatprep.subr.bf16.mxu0 0
        %1845 = vmatpush2.bf16.msra.mxu0 0
        %1846 = vmatprep.subr.bf16.mxu0 0
        %1847 = vmatpush2.bf16.msra.mxu0 0
        %1848 = vmatprep.subr.bf16.mxu0 0
        %1849 = vmatpush2.bf16.msra.mxu0 0
        %1850 = vmatprep.mubr.bf16.mxu0 0
        %1851 = vmatmul.mubr.bf16.gmra.mxu0 %v1573
        %v1852 = vpop.f32.mrf.mxu0
        %v1853 = vadd.f32 %v1756, %v1852
        %v1854 = vpop.f32.mrf.mxu0
        %v1855 = vpop.f32.mrf.mxu0
        %v1856 = vadd.f32 %v1759, %v1855
        %v1857 = vpop.f32.mrf.mxu0
        %1858 = vmatprep.mubr.bf16.mxu0 0
        %1859 = vmatmul.mubr.bf16.gmra.mxu0 %v1177
        %v1860 = vpop.f32.mrf.mxu0
        %v1861 = vadd.f32 %v1764, %v1860
        %v1862 = vpop.f32.mrf.mxu0
        %v1863 = vpop.f32.mrf.mxu0
        %v1864 = vadd.f32 %v1767, %v1863
        %v1865 = vpop.f32.mrf.mxu0
        %1866 = vmatprep.mubr.bf16.mxu0 0
        %1867 = vmatmul.mubr.bf16.gmra.mxu0 %v1180
        %v1868 = vpop.f32.mrf.mxu0
        %v1869 = vadd.f32 %v1772, %v1868
        %v1870 = vpop.f32.mrf.mxu0
        %v1871 = vpop.f32.mrf.mxu0
        %v1872 = vadd.f32 %v1775, %v1871
        %v1873 = vpop.f32.mrf.mxu0
        %1874 = vmatprep.mubr.bf16.mxu0 0
        %1875 = vmatmul.mubr.bf16.gmra.mxu0 %v1183
        %v1876 = vpop.f32.mrf.mxu0
        %v1877 = vadd.f32 %v1780, %v1876
        %v1878 = vpop.f32.mrf.mxu0
        %v1879 = vpop.f32.mrf.mxu0
        %v1880 = vadd.f32 %v1783, %v1879
        %v1881 = vpop.f32.mrf.mxu0
        %1882 = vmatprep.mubr.bf16.mxu0 0
        %1883 = vmatmul.mubr.bf16.gmra.mxu0 %v1186
        %v1884 = vpop.f32.mrf.mxu0
        %v1885 = vadd.f32 %v1788, %v1884
        %v1886 = vpop.f32.mrf.mxu0
        %v1887 = vpop.f32.mrf.mxu0
        %v1888 = vadd.f32 %v1791, %v1887
        %v1889 = vpop.f32.mrf.mxu0
        %1890 = vmatprep.mubr.bf16.mxu0 0
        %1891 = vmatmul.mubr.bf16.gmra.mxu0 %v1189
        %v1892 = vpop.f32.mrf.mxu0
        %v1893 = vadd.f32 %v1796, %v1892
        %v1894 = vpop.f32.mrf.mxu0
        %v1895 = vpop.f32.mrf.mxu0
        %v1896 = vadd.f32 %v1799, %v1895
        %v1897 = vpop.f32.mrf.mxu0
        %1898 = vmatprep.mubr.bf16.mxu0 0
        %1899 = vmatmul.mubr.bf16.gmra.mxu0 %v1192
        %v1900 = vpop.f32.mrf.mxu0
        %v1901 = vadd.f32 %v1804, %v1900
        %v1902 = vpop.f32.mrf.mxu0
        %v1903 = vpop.f32.mrf.mxu0
        %v1904 = vadd.f32 %v1807, %v1903
        %v1905 = vpop.f32.mrf.mxu0
        %1906 = vmatprep.mubr.bf16.mxu0 0
        %1907 = vmatmul.mubr.bf16.gmra.mxu0 %v1195
        %v1908 = vpop.f32.mrf.mxu0
        %v1909 = vadd.f32 %v1812, %v1908
        %v1910 = vpop.f32.mrf.mxu0
        %v1911 = vpop.f32.mrf.mxu0
        %v1912 = vadd.f32 %v1815, %v1911
        %v1913 = vpop.f32.mrf.mxu0
        %1914 = vdwg.mxu0
        %v1915 = vld [vmem:[#allocation2 + $0x30] sm:$0xff]
        %v1916 = vld [vmem:[#allocation2 + $0x38] sm:$0xf]
        %v1917 = vld [vmem:[#allocation2 + $0x3c] sm:$0xff]
        %v1918 = vld [vmem:[#allocation2 + $0x44] sm:$0xf]
        %v1919 = vld [vmem:[#allocation2 + $0x48] sm:$0xff]
        %v1920 = vld [vmem:[#allocation2 + $0x50] sm:$0xf]
        %v1921 = vld [vmem:[#allocation2 + $0x54] sm:$0xff]
        %v1922 = vld [vmem:[#allocation2 + $0x5c] sm:$0xf]
        %v1923 = vld [vmem:[#allocation2 + $0x60] sm:$0xff]
        %v1924 = vld [vmem:[#allocation2 + $0x68] sm:$0xf]
        %v1925 = vld [vmem:[#allocation2 + $0x6c] sm:$0xff]
        %v1926 = vld [vmem:[#allocation2 + $0x74] sm:$0xf]
        %v1927 = vld [vmem:[#allocation2 + $0x78] sm:$0xff]
        %v1928 = vld [vmem:[#allocation2 + $0x80] sm:$0xf]
        %v1929 = vld [vmem:[#allocation2 + $0x84] sm:$0xff]
        %v1930 = vld [vmem:[#allocation2 + $0x8c] sm:$0xf]
        %v1931 = vld [vmem:[#allocation2 + $0x90] sm:$0xff]
        %v1932 = vld [vmem:[#allocation2 + $0x98] sm:$0xf]
        %v1933 = vld [vmem:[#allocation2 + $0x9c] sm:$0xff]
        %v1934 = vld [vmem:[#allocation2 + $0xa4] sm:$0xf]
        %v1935 = vld [vmem:[#allocation2 + $0xa8] sm:$0xff]
        %v1936 = vld [vmem:[#allocation2 + $0xb0] sm:$0xf]
        %v1937 = vld [vmem:[#allocation2 + $0xb4] sm:$0xff]
        %v1938 = vld [vmem:[#allocation2 + $0xbc] sm:$0xf]
        %v1939 = vld [vmem:[#allocation2 + $0xc0] sm:$0xff]
        %v1940 = vld [vmem:[#allocation2 + $0xc8] sm:$0xf]
        %v1941 = vld [vmem:[#allocation2 + $0xcc] sm:$0xff]
        %v1942 = vld [vmem:[#allocation2 + $0xd4] sm:$0xf]
        %v1943 = vld [vmem:[#allocation2 + $0xd8] sm:$0xff]
        %v1944 = vld [vmem:[#allocation2 + $0xe0] sm:$0xf]
        %v1945 = vld [vmem:[#allocation2 + $0xe4] sm:$0xff]
        %v1946 = vld [vmem:[#allocation2 + $0xec] sm:$0xf]
        %s1947 = scalar_lea.vmem %s1, 384
        %v1948 = vld [vmem:[%s1947] sm:$0xf]
        %v1949 = vld [vmem:[%s1947 + $0x4] sm:$0xf]
        %v1950 = vld [vmem:[%s1947 + $0x8] sm:$0xf]
        %v1951 = vld [vmem:[%s1947 + $0xc] sm:$0xf]
        %v1952 = vld [vmem:[%s1947 + $0x10] sm:$0xf]
        %v1953 = vld [vmem:[%s1947 + $0x14] sm:$0xf]
        %v1954 = vld [vmem:[%s1947 + $0x18] sm:$0xf]
        %v1955 = vld [vmem:[%s1947 + $0x1c] sm:$0xf]
        %v1956 = vld [vmem:[%s1947 + $0x20] sm:$0xf]
        %v1957 = vld [vmem:[%s1947 + $0x24] sm:$0xf]
        %v1958 = vld [vmem:[%s1947 + $0x28] sm:$0xf]
        %v1959 = vld [vmem:[%s1947 + $0x2c] sm:$0xf]
        %v1960 = vld [vmem:[%s1947 + $0x30] sm:$0xf]
        %v1961 = vld [vmem:[%s1947 + $0x34] sm:$0xf]
        %v1962 = vld [vmem:[%s1947 + $0x38] sm:$0xf]
        %v1963 = vld [vmem:[%s1947 + $0x3c] sm:$0xf]
        %v1964 = vld [vmem:[%s1947 + $0x40] sm:$0xf]
        %v1965 = vld [vmem:[%s1947 + $0x44] sm:$0xf]
        %v1966 = vld [vmem:[%s1947 + $0x48] sm:$0xf]
        %v1967 = vld [vmem:[%s1947 + $0x4c] sm:$0xf]
        %v1968 = vld [vmem:[%s1947 + $0x50] sm:$0xf]
        %v1969 = vld [vmem:[%s1947 + $0x54] sm:$0xf]
        %v1970 = vld [vmem:[%s1947 + $0x58] sm:$0xf]
        %v1971 = vld [vmem:[%s1947 + $0x5c] sm:$0xf]
        %v1972 = vld [vmem:[%s1947 + $0x60] sm:$0xf]
        %v1973 = vld [vmem:[%s1947 + $0x64] sm:$0xf]
        %v1974 = vld [vmem:[%s1947 + $0x68] sm:$0xf]
        %v1975 = vld [vmem:[%s1947 + $0x6c] sm:$0xf]
        %v1976 = vld [vmem:[%s1947 + $0x70] sm:$0xf]
        %v1977 = vld [vmem:[%s1947 + $0x74] sm:$0xf]
        %v1978 = vld [vmem:[%s1947 + $0x78] sm:$0xf]
        %v1979 = vld [vmem:[%s1947 + $0x7c] sm:$0xf]
        %v1980 = vld [vmem:[%s1947 + $0x80] sm:$0xf]
        %v1981 = vld [vmem:[%s1947 + $0x84] sm:$0xf]
        %v1982 = vld [vmem:[%s1947 + $0x88] sm:$0xf]
        %v1983 = vld [vmem:[%s1947 + $0x8c] sm:$0xf]
        %v1984 = vld [vmem:[%s1947 + $0x90] sm:$0xf]
        %v1985 = vld [vmem:[%s1947 + $0x94] sm:$0xf]
        %v1986 = vld [vmem:[%s1947 + $0x98] sm:$0xf]
        %v1987 = vld [vmem:[%s1947 + $0x9c] sm:$0xf]
        %v1988 = vld [vmem:[%s1947 + $0xa0] sm:$0xf]
        %v1989 = vld [vmem:[%s1947 + $0xa4] sm:$0xf]
        %v1990 = vld [vmem:[%s1947 + $0xa8] sm:$0xf]
        %v1991 = vld [vmem:[%s1947 + $0xac] sm:$0xf]
        %v1992 = vld [vmem:[%s1947 + $0xb0] sm:$0xf]
        %v1993 = vld [vmem:[%s1947 + $0xb4] sm:$0xf]
        %v1994 = vld [vmem:[%s1947 + $0xb8] sm:$0xf]
        %v1995 = vld [vmem:[%s1947 + $0xbc] sm:$0xf]
        %v2028 = vunpack.c.l.b16 %v1915
        %v2029 = vunpack.c.h.b16 %v1915
        %v2030 = vunpack.c.l.b16 %v1916
        %v2031 = vunpack.c.l.b16 %v1917
        %v2032 = vunpack.c.h.b16 %v1917
        %v2033 = vunpack.c.l.b16 %v1918
        %v2034 = vunpack.c.l.b16 %v1919
        %v2035 = vunpack.c.h.b16 %v1919
        %v2036 = vunpack.c.l.b16 %v1920
        %v2037 = vunpack.c.l.b16 %v1921
        %v2038 = vunpack.c.h.b16 %v1921
        %v2039 = vunpack.c.l.b16 %v1922
        %v2040 = vunpack.c.l.b16 %v1923
        %v2041 = vunpack.c.h.b16 %v1923
        %v2042 = vunpack.c.l.b16 %v1924
        %v2043 = vunpack.c.l.b16 %v1925
        %v2044 = vunpack.c.h.b16 %v1925
        %v2045 = vunpack.c.l.b16 %v1926
        %v2046 = vunpack.c.l.b16 %v1927
        %v2047 = vunpack.c.h.b16 %v1927
        %v2048 = vunpack.c.l.b16 %v1928
        %v2049 = vunpack.c.l.b16 %v1929
        %v2050 = vunpack.c.h.b16 %v1929
        %v2051 = vunpack.c.l.b16 %v1930
        %v2052 = vunpack.c.l.b16 %v1931
        %v2053 = vunpack.c.h.b16 %v1931
        %v2054 = vunpack.c.l.b16 %v1932
        %v2055 = vunpack.c.l.b16 %v1933
        %v2056 = vunpack.c.h.b16 %v1933
        %v2057 = vunpack.c.l.b16 %v1934
        %v2058 = vunpack.c.l.b16 %v1935
        %v2059 = vunpack.c.h.b16 %v1935
        %v2060 = vunpack.c.l.b16 %v1936
        %v2061 = vunpack.c.l.b16 %v1937
        %v2062 = vunpack.c.h.b16 %v1937
        %v2063 = vunpack.c.l.b16 %v1938
        %v2064 = vunpack.c.l.b16 %v1939
        %v2065 = vunpack.c.h.b16 %v1939
        %v2066 = vunpack.c.l.b16 %v1940
        %v2067 = vunpack.c.l.b16 %v1941
        %v2068 = vunpack.c.h.b16 %v1941
        %v2069 = vunpack.c.l.b16 %v1942
        %v2070 = vunpack.c.l.b16 %v1943
        %v2071 = vunpack.c.h.b16 %v1943
        %v2072 = vunpack.c.l.b16 %v1944
        %v2073 = vunpack.c.l.b16 %v1945
        %v2074 = vunpack.c.h.b16 %v1945
        %v2075 = vunpack.c.l.b16 %v1946
        %v2076 = vpack.c.b16 %v2031, %v2028
        %v2077 = vpack.c.b16 %v2032, %v2029
        %v2078 = vpack.c.b16 %v2033, %v2030
        %v2079 = vpack.c.b16 %v2037, %v2034
        %v2080 = vpack.c.b16 %v2038, %v2035
        %v2081 = vpack.c.b16 %v2039, %v2036
        %v2082 = vpack.c.b16 %v2043, %v2040
        %v2083 = vpack.c.b16 %v2044, %v2041
        %v2084 = vpack.c.b16 %v2045, %v2042
        %v2085 = vpack.c.b16 %v2049, %v2046
        %v2086 = vpack.c.b16 %v2050, %v2047
        %v2087 = vpack.c.b16 %v2051, %v2048
        %v2088 = vpack.c.b16 %v2055, %v2052
        %v2089 = vpack.c.b16 %v2056, %v2053
        %v2090 = vpack.c.b16 %v2057, %v2054
        %v2091 = vpack.c.b16 %v2061, %v2058
        %v2092 = vpack.c.b16 %v2062, %v2059
        %v2093 = vpack.c.b16 %v2063, %v2060
        %v2094 = vpack.c.b16 %v2067, %v2064
        %v2095 = vpack.c.b16 %v2068, %v2065
        %v2096 = vpack.c.b16 %v2069, %v2066
        %v2097 = vpack.c.b16 %v2073, %v2070
        %v2098 = vpack.c.b16 %v2074, %v2071
        %v2099 = vpack.c.b16 %v2075, %v2072
        %v2172 = vunpack.c.l.b16 %v1948
        %v2173 = vunpack.c.l.b16 %v1949
        %v2174 = vunpack.c.l.b16 %v1950
        %v2175 = vunpack.c.l.b16 %v1951
        %v2176 = vunpack.c.l.b16 %v1952
        %v2177 = vunpack.c.l.b16 %v1953
        %v2178 = vunpack.c.l.b16 %v1954
        %v2179 = vunpack.c.l.b16 %v1955
        %v2180 = vunpack.c.l.b16 %v1956
        %v2181 = vunpack.c.l.b16 %v1957
        %v2182 = vunpack.c.l.b16 %v1958
        %v2183 = vunpack.c.l.b16 %v1959
        %v2184 = vunpack.c.l.b16 %v1960
        %v2185 = vunpack.c.l.b16 %v1961
        %v2186 = vunpack.c.l.b16 %v1962
        %v2187 = vunpack.c.l.b16 %v1963
        %v2188 = vunpack.c.l.b16 %v1964
        %v2189 = vunpack.c.l.b16 %v1965
        %v2190 = vunpack.c.l.b16 %v1966
        %v2191 = vunpack.c.l.b16 %v1967
        %v2192 = vunpack.c.l.b16 %v1968
        %v2193 = vunpack.c.l.b16 %v1969
        %v2194 = vunpack.c.l.b16 %v1970
        %v2195 = vunpack.c.l.b16 %v1971
        %v2196 = vunpack.c.l.b16 %v1972
        %v2197 = vunpack.c.l.b16 %v1973
        %v2198 = vunpack.c.l.b16 %v1974
        %v2199 = vunpack.c.l.b16 %v1975
        %v2200 = vunpack.c.l.b16 %v1976
        %v2201 = vunpack.c.l.b16 %v1977
        %v2202 = vunpack.c.l.b16 %v1978
        %v2203 = vunpack.c.l.b16 %v1979
        %v2204 = vunpack.c.l.b16 %v1980
        %v2205 = vunpack.c.l.b16 %v1981
        %v2206 = vunpack.c.l.b16 %v1982
        %v2207 = vunpack.c.l.b16 %v1983
        %v2208 = vunpack.c.l.b16 %v1984
        %v2209 = vunpack.c.l.b16 %v1985
        %v2210 = vunpack.c.l.b16 %v1986
        %v2211 = vunpack.c.l.b16 %v1987
        %v2212 = vunpack.c.l.b16 %v1988
        %v2213 = vunpack.c.l.b16 %v1989
        %v2214 = vunpack.c.l.b16 %v1990
        %v2215 = vunpack.c.l.b16 %v1991
        %v2216 = vunpack.c.l.b16 %v1992
        %v2217 = vunpack.c.l.b16 %v1993
        %v2218 = vunpack.c.l.b16 %v1994
        %v2219 = vunpack.c.l.b16 %v1995
        %v2220 = vpack.c.b16 %v2173, %v2172
        %v2221 = vpack.c.b16 %v2175, %v2174
        %v2222 = vpack.c.b16 %v2177, %v2176
        %v2223 = vpack.c.b16 %v2179, %v2178
        %v2224 = vpack.c.b16 %v2181, %v2180
        %v2225 = vpack.c.b16 %v2183, %v2182
        %v2226 = vpack.c.b16 %v2185, %v2184
        %v2227 = vpack.c.b16 %v2187, %v2186
        %v2228 = vpack.c.b16 %v2189, %v2188
        %v2229 = vpack.c.b16 %v2191, %v2190
        %v2230 = vpack.c.b16 %v2193, %v2192
        %v2231 = vpack.c.b16 %v2195, %v2194
        %v2232 = vpack.c.b16 %v2197, %v2196
        %v2233 = vpack.c.b16 %v2199, %v2198
        %v2234 = vpack.c.b16 %v2201, %v2200
        %v2235 = vpack.c.b16 %v2203, %v2202
        %v2236 = vpack.c.b16 %v2205, %v2204
        %v2237 = vpack.c.b16 %v2207, %v2206
        %v2238 = vpack.c.b16 %v2209, %v2208
        %v2239 = vpack.c.b16 %v2211, %v2210
        %v2240 = vpack.c.b16 %v2213, %v2212
        %v2241 = vpack.c.b16 %v2215, %v2214
        %v2242 = vpack.c.b16 %v2217, %v2216
        %v2243 = vpack.c.b16 %v2219, %v2218
        %2268 = vmatprep.subr.bf16.mxu0 0
        %2269 = vmatpush1.bf16.msra.mxu0 %v2227
        %2270 = vmatprep.subr.bf16.mxu0 0
        %2271 = vmatpush1.bf16.msra.mxu0 %v2226
        %2272 = vmatprep.subr.bf16.mxu0 0
        %2273 = vmatpush1.bf16.msra.mxu0 %v2225
        %2274 = vmatprep.subr.bf16.mxu0 0
        %2275 = vmatpush1.bf16.msra.mxu0 %v2224
        %2276 = vmatprep.subr.bf16.mxu0 0
        %2277 = vmatpush1.bf16.msra.mxu0 %v2223
        %2278 = vmatprep.subr.bf16.mxu0 0
        %2279 = vmatpush1.bf16.msra.mxu0 %v2222
        %2280 = vmatprep.subr.bf16.mxu0 0
        %2281 = vmatpush1.bf16.msra.mxu0 %v2221
        %2282 = vmatprep.subr.bf16.mxu0 0
        %2283 = vmatpush1.bf16.msra.mxu0 %v2220
        %2284 = vmatprep.subr.bf16.mxu0 0
        %2285 = vmatpush2.bf16.msra.mxu0 %v2235
        %2286 = vmatprep.subr.bf16.mxu0 0
        %2287 = vmatpush2.bf16.msra.mxu0 %v2234
        %2288 = vmatprep.subr.bf16.mxu0 0
        %2289 = vmatpush2.bf16.msra.mxu0 %v2233
        %2290 = vmatprep.subr.bf16.mxu0 0
        %2291 = vmatpush2.bf16.msra.mxu0 %v2232
        %2292 = vmatprep.subr.bf16.mxu0 0
        %2293 = vmatpush2.bf16.msra.mxu0 %v2231
        %2294 = vmatprep.subr.bf16.mxu0 0
        %2295 = vmatpush2.bf16.msra.mxu0 %v2230
        %2296 = vmatprep.subr.bf16.mxu0 0
        %2297 = vmatpush2.bf16.msra.mxu0 %v2229
        %2298 = vmatprep.subr.bf16.mxu0 0
        %2299 = vmatpush2.bf16.msra.mxu0 %v2228
        %2300 = vmatprep.mubr.bf16.mxu0 %v2077
        %2301 = vmatmul.mubr.bf16.gmra.mxu0 %v2076
        %v2302 = vpop.f32.mrf.mxu0
        %v2303 = vadd.f32 0.0, %v2302
        %v2304 = vpop.f32.mrf.mxu0
        %v2305 = vpop.f32.mrf.mxu0
        %v2306 = vadd.f32 0.0, %v2305
        %v2307 = vpop.f32.mrf.mxu0
        %2308 = vmatprep.mubr.bf16.mxu0 %v2080
        %2309 = vmatmul.mubr.bf16.gmra.mxu0 %v2079
        %v2310 = vpop.f32.mrf.mxu0
        %v2311 = vadd.f32 0.0, %v2310
        %v2312 = vpop.f32.mrf.mxu0
        %v2313 = vpop.f32.mrf.mxu0
        %v2314 = vadd.f32 0.0, %v2313
        %v2315 = vpop.f32.mrf.mxu0
        %2316 = vmatprep.mubr.bf16.mxu0 %v2083
        %2317 = vmatmul.mubr.bf16.gmra.mxu0 %v2082
        %v2318 = vpop.f32.mrf.mxu0
        %v2319 = vadd.f32 0.0, %v2318
        %v2320 = vpop.f32.mrf.mxu0
        %v2321 = vpop.f32.mrf.mxu0
        %v2322 = vadd.f32 0.0, %v2321
        %v2323 = vpop.f32.mrf.mxu0
        %2324 = vmatprep.mubr.bf16.mxu0 %v2086
        %2325 = vmatmul.mubr.bf16.gmra.mxu0 %v2085
        %v2326 = vpop.f32.mrf.mxu0
        %v2327 = vadd.f32 0.0, %v2326
        %v2328 = vpop.f32.mrf.mxu0
        %v2329 = vpop.f32.mrf.mxu0
        %v2330 = vadd.f32 0.0, %v2329
        %v2331 = vpop.f32.mrf.mxu0
        %2332 = vmatprep.mubr.bf16.mxu0 %v2089
        %2333 = vmatmul.mubr.bf16.gmra.mxu0 %v2088
        %v2334 = vpop.f32.mrf.mxu0
        %v2335 = vadd.f32 0.0, %v2334
        %v2336 = vpop.f32.mrf.mxu0
        %v2337 = vpop.f32.mrf.mxu0
        %v2338 = vadd.f32 0.0, %v2337
        %v2339 = vpop.f32.mrf.mxu0
        %2340 = vmatprep.mubr.bf16.mxu0 %v2092
        %2341 = vmatmul.mubr.bf16.gmra.mxu0 %v2091
        %v2342 = vpop.f32.mrf.mxu0
        %v2343 = vadd.f32 0.0, %v2342
        %v2344 = vpop.f32.mrf.mxu0
        %v2345 = vpop.f32.mrf.mxu0
        %v2346 = vadd.f32 0.0, %v2345
        %v2347 = vpop.f32.mrf.mxu0
        %2348 = vmatprep.mubr.bf16.mxu0 %v2095
        %2349 = vmatmul.mubr.bf16.gmra.mxu0 %v2094
        %v2350 = vpop.f32.mrf.mxu0
        %v2351 = vadd.f32 0.0, %v2350
        %v2352 = vpop.f32.mrf.mxu0
        %v2353 = vpop.f32.mrf.mxu0
        %v2354 = vadd.f32 0.0, %v2353
        %v2355 = vpop.f32.mrf.mxu0
        %2356 = vmatprep.mubr.bf16.mxu0 %v2098
        %2357 = vmatmul.mubr.bf16.gmra.mxu0 %v2097
        %v2358 = vpop.f32.mrf.mxu0
        %v2359 = vadd.f32 0.0, %v2358
        %v2360 = vpop.f32.mrf.mxu0
        %v2361 = vpop.f32.mrf.mxu0
        %v2362 = vadd.f32 0.0, %v2361
        %v2363 = vpop.f32.mrf.mxu0
        %2364 = vdwg.mxu0
        %2365 = vmatprep.subr.bf16.mxu0 0
        %2366 = vmatpush1.bf16.msra.mxu0 %v2243
        %2367 = vmatprep.subr.bf16.mxu0 0
        %2368 = vmatpush1.bf16.msra.mxu0 %v2242
        %2369 = vmatprep.subr.bf16.mxu0 0
        %2370 = vmatpush1.bf16.msra.mxu0 %v2241
        %2371 = vmatprep.subr.bf16.mxu0 0
        %2372 = vmatpush1.bf16.msra.mxu0 %v2240
        %2373 = vmatprep.subr.bf16.mxu0 0
        %2374 = vmatpush1.bf16.msra.mxu0 %v2239
        %2375 = vmatprep.subr.bf16.mxu0 0
        %2376 = vmatpush1.bf16.msra.mxu0 %v2238
        %2377 = vmatprep.subr.bf16.mxu0 0
        %2378 = vmatpush1.bf16.msra.mxu0 %v2237
        %2379 = vmatprep.subr.bf16.mxu0 0
        %2380 = vmatpush1.bf16.msra.mxu0 %v2236
        %2381 = vmatprep.subr.bf16.mxu0 0
        %2382 = vmatpush2.bf16.msra.mxu0 0
        %2383 = vmatprep.subr.bf16.mxu0 0
        %2384 = vmatpush2.bf16.msra.mxu0 0
        %2385 = vmatprep.subr.bf16.mxu0 0
        %2386 = vmatpush2.bf16.msra.mxu0 0
        %2387 = vmatprep.subr.bf16.mxu0 0
        %2388 = vmatpush2.bf16.msra.mxu0 0
        %2389 = vmatprep.subr.bf16.mxu0 0
        %2390 = vmatpush2.bf16.msra.mxu0 0
        %2391 = vmatprep.subr.bf16.mxu0 0
        %2392 = vmatpush2.bf16.msra.mxu0 0
        %2393 = vmatprep.subr.bf16.mxu0 0
        %2394 = vmatpush2.bf16.msra.mxu0 0
        %2395 = vmatprep.subr.bf16.mxu0 0
        %2396 = vmatpush2.bf16.msra.mxu0 0
        %2397 = vmatprep.mubr.bf16.mxu0 0
        %2398 = vmatmul.mubr.bf16.gmra.mxu0 %v2078
        %v2399 = vpop.f32.mrf.mxu0
        %v2400 = vadd.f32 %v2303, %v2399
        %v2401 = vpop.f32.mrf.mxu0
        %v2402 = vpop.f32.mrf.mxu0
        %v2403 = vadd.f32 %v2306, %v2402
        %v2404 = vpop.f32.mrf.mxu0
        %2405 = vmatprep.mubr.bf16.mxu0 0
        %2406 = vmatmul.mubr.bf16.gmra.mxu0 %v2081
        %v2407 = vpop.f32.mrf.mxu0
        %v2408 = vadd.f32 %v2311, %v2407
        %v2409 = vpop.f32.mrf.mxu0
        %v2410 = vpop.f32.mrf.mxu0
        %v2411 = vadd.f32 %v2314, %v2410
        %v2412 = vpop.f32.mrf.mxu0
        %2413 = vmatprep.mubr.bf16.mxu0 0
        %2414 = vmatmul.mubr.bf16.gmra.mxu0 %v2084
        %v2415 = vpop.f32.mrf.mxu0
        %v2416 = vadd.f32 %v2319, %v2415
        %v2417 = vpop.f32.mrf.mxu0
        %v2418 = vpop.f32.mrf.mxu0
        %v2419 = vadd.f32 %v2322, %v2418
        %v2420 = vpop.f32.mrf.mxu0
        %2421 = vmatprep.mubr.bf16.mxu0 0
        %2422 = vmatmul.mubr.bf16.gmra.mxu0 %v2087
        %v2423 = vpop.f32.mrf.mxu0
        %v2424 = vadd.f32 %v2327, %v2423
        %v2425 = vpop.f32.mrf.mxu0
        %v2426 = vpop.f32.mrf.mxu0
        %v2427 = vadd.f32 %v2330, %v2426
        %v2428 = vpop.f32.mrf.mxu0
        %2429 = vmatprep.mubr.bf16.mxu0 0
        %2430 = vmatmul.mubr.bf16.gmra.mxu0 %v2090
        %v2431 = vpop.f32.mrf.mxu0
        %v2432 = vadd.f32 %v2335, %v2431
        %v2433 = vpop.f32.mrf.mxu0
        %v2434 = vpop.f32.mrf.mxu0
        %v2435 = vadd.f32 %v2338, %v2434
        %v2436 = vpop.f32.mrf.mxu0
        %2437 = vmatprep.mubr.bf16.mxu0 0
        %2438 = vmatmul.mubr.bf16.gmra.mxu0 %v2093
        %v2439 = vpop.f32.mrf.mxu0
        %v2440 = vadd.f32 %v2343, %v2439
        %v2441 = vpop.f32.mrf.mxu0
        %v2442 = vpop.f32.mrf.mxu0
        %v2443 = vadd.f32 %v2346, %v2442
        %v2444 = vpop.f32.mrf.mxu0
        %2445 = vmatprep.mubr.bf16.mxu0 0
        %2446 = vmatmul.mubr.bf16.gmra.mxu0 %v2096
        %v2447 = vpop.f32.mrf.mxu0
        %v2448 = vadd.f32 %v2351, %v2447
        %v2449 = vpop.f32.mrf.mxu0
        %v2450 = vpop.f32.mrf.mxu0
        %v2451 = vadd.f32 %v2354, %v2450
        %v2452 = vpop.f32.mrf.mxu0
        %2453 = vmatprep.mubr.bf16.mxu0 0
        %2454 = vmatmul.mubr.bf16.gmra.mxu0 %v2099
        %v2455 = vpop.f32.mrf.mxu0
        %v2456 = vadd.f32 %v2359, %v2455
        %v2457 = vpop.f32.mrf.mxu0
        %v2458 = vpop.f32.mrf.mxu0
        %v2459 = vadd.f32 %v2362, %v2458
        %v2460 = vpop.f32.mrf.mxu0
        %2461 = vdwg.mxu0
        %v2462 = vadd.f32 %v1853, %v2400
        %v2463 = vadd.f32 %v1856, %v2403
        %v2464 = vadd.f32 %v1861, %v2408
        %v2465 = vadd.f32 %v1864, %v2411
        %v2466 = vadd.f32 %v1869, %v2416
        %v2467 = vadd.f32 %v1872, %v2419
        %v2468 = vadd.f32 %v1877, %v2424
        %v2469 = vadd.f32 %v1880, %v2427
        %v2470 = vadd.f32 %v1885, %v2432
        %v2471 = vadd.f32 %v1888, %v2435
        %v2472 = vadd.f32 %v1893, %v2440
        %v2473 = vadd.f32 %v1896, %v2443
        %v2474 = vadd.f32 %v1901, %v2448
        %v2475 = vadd.f32 %v1904, %v2451
        %v2476 = vadd.f32 %v1909, %v2456
        %v2477 = vadd.f32 %v1912, %v2459
        %v2478 = vld [vmem:[%s2] sm:$0x1]
        %v2480 = vlaneseq
        %v2481 = vshrl.u32 %v2480, 7
        %v2482 = vsub.s32 0, %v2481
        %v2483 = vrot.slane %v2478, %v2482
        %v2485 = vadd.f32 %v2462, %v2483
        %v2486 = vadd.f32 %v2463, %v2483
        %v2487 = vadd.f32 %v2464, %v2483
        %v2488 = vadd.f32 %v2465, %v2483
        %v2489 = vadd.f32 %v2466, %v2483
        %v2490 = vadd.f32 %v2467, %v2483
        %v2491 = vadd.f32 %v2468, %v2483
        %v2492 = vadd.f32 %v2469, %v2483
        %v2493 = vadd.f32 %v2470, %v2483
        %v2494 = vadd.f32 %v2471, %v2483
        %v2495 = vadd.f32 %v2472, %v2483
        %v2496 = vadd.f32 %v2473, %v2483
        %v2497 = vadd.f32 %v2474, %v2483
        %v2498 = vadd.f32 %v2475, %v2483
        %v2499 = vadd.f32 %v2476, %v2483
        %v2500 = vadd.f32 %v2477, %v2483
        %v2501 = vmax.f32 %v2485, 0.0
        %v2502 = vmax.f32 %v2486, 0.0
        %v2503 = vmax.f32 %v2487, 0.0
        %v2504 = vmax.f32 %v2488, 0.0
        %v2505 = vmax.f32 %v2489, 0.0
        %v2506 = vmax.f32 %v2490, 0.0
        %v2507 = vmax.f32 %v2491, 0.0
        %v2508 = vmax.f32 %v2492, 0.0
        %v2509 = vmax.f32 %v2493, 0.0
        %v2510 = vmax.f32 %v2494, 0.0
        %v2511 = vmax.f32 %v2495, 0.0
        %v2512 = vmax.f32 %v2496, 0.0
        %v2513 = vmax.f32 %v2497, 0.0
        %v2514 = vmax.f32 %v2498, 0.0
        %v2515 = vmax.f32 %v2499, 0.0
        %v2516 = vmax.f32 %v2500, 0.0
        %v2517 = vpack.c.bf16 %v2502, %v2501
        %v2518 = vpack.c.bf16 %v2504, %v2503
        %v2519 = vpack.c.bf16 %v2506, %v2505
        %v2520 = vpack.c.bf16 %v2508, %v2507
        %v2521 = vpack.c.bf16 %v2510, %v2509
        %v2522 = vpack.c.bf16 %v2512, %v2511
        %v2523 = vpack.c.bf16 %v2514, %v2513
        %v2524 = vpack.c.bf16 %v2516, %v2515
        %v2533 = vunpack.c.l.b16 %v2517
        %v2534 = vunpack.c.h.b16 %v2517
        %v2535 = vunpack.c.l.b16 %v2518
        %v2536 = vunpack.c.h.b16 %v2518
        %v2537 = vunpack.c.l.b16 %v2519
        %v2538 = vunpack.c.h.b16 %v2519
        %v2539 = vunpack.c.l.b16 %v2520
        %v2540 = vunpack.c.h.b16 %v2520
        %v2541 = vunpack.c.l.b16 %v2521
        %v2542 = vunpack.c.h.b16 %v2521
        %v2543 = vunpack.c.l.b16 %v2522
        %v2544 = vunpack.c.h.b16 %v2522
        %v2545 = vunpack.c.l.b16 %v2523
        %v2546 = vunpack.c.h.b16 %v2523
        %v2547 = vunpack.c.l.b16 %v2524
        %v2548 = vunpack.c.h.b16 %v2524
        %v2549 = vpack.c.b16 %v2533, %v2533
        %v2550 = vpack.c.b16 %v2534, %v2534
        %v2551 = vpack.c.b16 %v2535, %v2535
        %v2552 = vpack.c.b16 %v2536, %v2536
        %v2553 = vpack.c.b16 %v2537, %v2537
        %v2554 = vpack.c.b16 %v2538, %v2538
        %v2555 = vpack.c.b16 %v2539, %v2539
        %v2556 = vpack.c.b16 %v2540, %v2540
        %v2557 = vpack.c.b16 %v2541, %v2541
        %v2558 = vpack.c.b16 %v2542, %v2542
        %v2559 = vpack.c.b16 %v2543, %v2543
        %v2560 = vpack.c.b16 %v2544, %v2544
        %v2561 = vpack.c.b16 %v2545, %v2545
        %v2562 = vpack.c.b16 %v2546, %v2546
        %v2563 = vpack.c.b16 %v2547, %v2547
        %v2564 = vpack.c.b16 %v2548, %v2548
        %2581 = vst [vmem:[#allocation3] sm:$0xf] %v2549
        %2582 = vst [vmem:[#allocation3 + $0x4] sm:$0xf] %v2550
        %2583 = vst [vmem:[#allocation3 + $0x8] sm:$0xf] %v2551
        %2584 = vst [vmem:[#allocation3 + $0xc] sm:$0xf] %v2552
        %2585 = vst [vmem:[#allocation3 + $0x10] sm:$0xf] %v2553
        %2586 = vst [vmem:[#allocation3 + $0x14] sm:$0xf] %v2554
        %2587 = vst [vmem:[#allocation3 + $0x18] sm:$0xf] %v2555
        %2588 = vst [vmem:[#allocation3 + $0x1c] sm:$0xf] %v2556
        %2589 = vst [vmem:[#allocation3 + $0x20] sm:$0xf] %v2557
        %2590 = vst [vmem:[#allocation3 + $0x24] sm:$0xf] %v2558
        %2591 = vst [vmem:[#allocation3 + $0x28] sm:$0xf] %v2559
        %2592 = vst [vmem:[#allocation3 + $0x2c] sm:$0xf] %v2560
        %2593 = vst [vmem:[#allocation3 + $0x30] sm:$0xf] %v2561
        %2594 = vst [vmem:[#allocation3 + $0x34] sm:$0xf] %v2562
        %2595 = vst [vmem:[#allocation3 + $0x38] sm:$0xf] %v2563
        %2596 = vst [vmem:[#allocation3 + $0x3c] sm:$0xf] %v2564
        %v2597 = vld [vmem:[#allocation2 + $0xc0] sm:$0xff]
        %v2598 = vld [vmem:[#allocation2 + $0xc8] sm:$0xf]
        %v2599 = vld [vmem:[#allocation2 + $0xcc] sm:$0xff]
        %v2600 = vld [vmem:[#allocation2 + $0xd4] sm:$0xf]
        %v2601 = vld [vmem:[#allocation2 + $0xd8] sm:$0xff]
        %v2602 = vld [vmem:[#allocation2 + $0xe0] sm:$0xf]
        %v2603 = vld [vmem:[#allocation2 + $0xe4] sm:$0xff]
        %v2604 = vld [vmem:[#allocation2 + $0xec] sm:$0xf]
        %v2605 = vld [vmem:[#allocation2 + $0xf0] sm:$0xff]
        %v2606 = vld [vmem:[#allocation2 + $0xf8] sm:$0xf]
        %v2607 = vld [vmem:[#allocation2 + $0xfc] sm:$0xff]
        %v2608 = vld [vmem:[#allocation2 + $0x104] sm:$0xf]
        %v2609 = vld [vmem:[#allocation2 + $0x108] sm:$0xff]
        %v2610 = vld [vmem:[#allocation2 + $0x110] sm:$0xf]
        %v2611 = vld [vmem:[#allocation2 + $0x114] sm:$0xff]
        %v2612 = vld [vmem:[#allocation2 + $0x11c] sm:$0xf]
        %v2613 = vld [vmem:[#allocation2 + $0x120] sm:$0xff]
        %v2614 = vld [vmem:[#allocation2 + $0x128] sm:$0xf]
        %v2615 = vld [vmem:[#allocation2 + $0x12c] sm:$0xff]
        %v2616 = vld [vmem:[#allocation2 + $0x134] sm:$0xf]
        %v2617 = vld [vmem:[#allocation2 + $0x138] sm:$0xff]
        %v2618 = vld [vmem:[#allocation2 + $0x140] sm:$0xf]
        %v2619 = vld [vmem:[#allocation2 + $0x144] sm:$0xff]
        %v2620 = vld [vmem:[#allocation2 + $0x14c] sm:$0xf]
        %v2621 = vld [vmem:[#allocation2 + $0x150] sm:$0xff]
        %v2622 = vld [vmem:[#allocation2 + $0x158] sm:$0xf]
        %v2623 = vld [vmem:[#allocation2 + $0x15c] sm:$0xff]
        %v2624 = vld [vmem:[#allocation2 + $0x164] sm:$0xf]
        %v2625 = vld [vmem:[#allocation2 + $0x168] sm:$0xff]
        %v2626 = vld [vmem:[#allocation2 + $0x170] sm:$0xf]
        %v2627 = vld [vmem:[#allocation2 + $0x174] sm:$0xff]
        %v2628 = vld [vmem:[#allocation2 + $0x17c] sm:$0xf]
        %v2629 = vld [vmem:[%s1] sm:$0xf]
        %v2630 = vld [vmem:[%s1 + $0x4] sm:$0xf]
        %v2631 = vld [vmem:[%s1 + $0x8] sm:$0xf]
        %v2632 = vld [vmem:[%s1 + $0xc] sm:$0xf]
        %v2633 = vld [vmem:[%s1 + $0x10] sm:$0xf]
        %v2634 = vld [vmem:[%s1 + $0x14] sm:$0xf]
        %v2635 = vld [vmem:[%s1 + $0x18] sm:$0xf]
        %v2636 = vld [vmem:[%s1 + $0x1c] sm:$0xf]
        %v2637 = vld [vmem:[%s1 + $0x20] sm:$0xf]
        %v2638 = vld [vmem:[%s1 + $0x24] sm:$0xf]
        %v2639 = vld [vmem:[%s1 + $0x28] sm:$0xf]
        %v2640 = vld [vmem:[%s1 + $0x2c] sm:$0xf]
        %v2641 = vld [vmem:[%s1 + $0x30] sm:$0xf]
        %v2642 = vld [vmem:[%s1 + $0x34] sm:$0xf]
        %v2643 = vld [vmem:[%s1 + $0x38] sm:$0xf]
        %v2644 = vld [vmem:[%s1 + $0x3c] sm:$0xf]
        %v2645 = vld [vmem:[%s1 + $0x40] sm:$0xf]
        %v2646 = vld [vmem:[%s1 + $0x44] sm:$0xf]
        %v2647 = vld [vmem:[%s1 + $0x48] sm:$0xf]
        %v2648 = vld [vmem:[%s1 + $0x4c] sm:$0xf]
        %v2649 = vld [vmem:[%s1 + $0x50] sm:$0xf]
        %v2650 = vld [vmem:[%s1 + $0x54] sm:$0xf]
        %v2651 = vld [vmem:[%s1 + $0x58] sm:$0xf]
        %v2652 = vld [vmem:[%s1 + $0x5c] sm:$0xf]
        %v2653 = vld [vmem:[%s1 + $0x60] sm:$0xf]
        %v2654 = vld [vmem:[%s1 + $0x64] sm:$0xf]
        %v2655 = vld [vmem:[%s1 + $0x68] sm:$0xf]
        %v2656 = vld [vmem:[%s1 + $0x6c] sm:$0xf]
        %v2657 = vld [vmem:[%s1 + $0x70] sm:$0xf]
        %v2658 = vld [vmem:[%s1 + $0x74] sm:$0xf]
        %v2659 = vld [vmem:[%s1 + $0x78] sm:$0xf]
        %v2660 = vld [vmem:[%s1 + $0x7c] sm:$0xf]
        %v2661 = vld [vmem:[%s1 + $0x80] sm:$0xf]
        %v2662 = vld [vmem:[%s1 + $0x84] sm:$0xf]
        %v2663 = vld [vmem:[%s1 + $0x88] sm:$0xf]
        %v2664 = vld [vmem:[%s1 + $0x8c] sm:$0xf]
        %v2665 = vld [vmem:[%s1 + $0x90] sm:$0xf]
        %v2666 = vld [vmem:[%s1 + $0x94] sm:$0xf]
        %v2667 = vld [vmem:[%s1 + $0x98] sm:$0xf]
        %v2668 = vld [vmem:[%s1 + $0x9c] sm:$0xf]
        %v2669 = vld [vmem:[%s1 + $0xa0] sm:$0xf]
        %v2670 = vld [vmem:[%s1 + $0xa4] sm:$0xf]
        %v2671 = vld [vmem:[%s1 + $0xa8] sm:$0xf]
        %v2672 = vld [vmem:[%s1 + $0xac] sm:$0xf]
        %v2673 = vld [vmem:[%s1 + $0xb0] sm:$0xf]
        %v2674 = vld [vmem:[%s1 + $0xb4] sm:$0xf]
        %v2675 = vld [vmem:[%s1 + $0xb8] sm:$0xf]
        %v2676 = vld [vmem:[%s1 + $0xbc] sm:$0xf]
        %v2677 = vld [vmem:[#allocation2 + $0x180] sm:$0xff]
        %v2678 = vld [vmem:[#allocation2 + $0x188] sm:$0xf]
        %v2679 = vld [vmem:[#allocation2 + $0x18c] sm:$0xff]
        %v2680 = vld [vmem:[#allocation2 + $0x194] sm:$0xf]
        %v2681 = vld [vmem:[%s1046] sm:$0xf]
        %v2682 = vld [vmem:[%s1046 + $0x4] sm:$0xf]
        %v2683 = vld [vmem:[%s1046 + $0x8] sm:$0xf]
        %v2684 = vld [vmem:[%s1046 + $0xc] sm:$0xf]
        %v2685 = vld [vmem:[%s1046 + $0x10] sm:$0xf]
        %v2686 = vld [vmem:[%s1046 + $0x14] sm:$0xf]
        %v2687 = vld [vmem:[%s1046 + $0x18] sm:$0xf]
        %v2688 = vld [vmem:[%s1046 + $0x1c] sm:$0xf]
        %v2689 = vld [vmem:[%s1046 + $0x20] sm:$0xf]
        %v2690 = vld [vmem:[%s1046 + $0x24] sm:$0xf]
        %v2691 = vld [vmem:[%s1046 + $0x28] sm:$0xf]
        %v2692 = vld [vmem:[%s1046 + $0x2c] sm:$0xf]
        %v2693 = vld [vmem:[%s1046 + $0x30] sm:$0xf]
        %v2694 = vld [vmem:[%s1046 + $0x34] sm:$0xf]
        %v2695 = vld [vmem:[%s1046 + $0x38] sm:$0xf]
        %v2696 = vld [vmem:[%s1046 + $0x3c] sm:$0xf]
        %v2697 = vld [vmem:[%s1046 + $0x40] sm:$0xf]
        %v2698 = vld [vmem:[%s1046 + $0x44] sm:$0xf]
        %v2699 = vld [vmem:[%s1046 + $0x48] sm:$0xf]
        %v2700 = vld [vmem:[%s1046 + $0x4c] sm:$0xf]
        %v2701 = vld [vmem:[%s1046 + $0x50] sm:$0xf]
        %v2702 = vld [vmem:[%s1046 + $0x54] sm:$0xf]
        %v2703 = vld [vmem:[%s1046 + $0x58] sm:$0xf]
        %v2704 = vld [vmem:[%s1046 + $0x5c] sm:$0xf]
        %v2705 = vld [vmem:[%s1046 + $0x60] sm:$0xf]
        %v2706 = vld [vmem:[%s1046 + $0x64] sm:$0xf]
        %v2707 = vld [vmem:[%s1046 + $0x68] sm:$0xf]
        %v2708 = vld [vmem:[%s1046 + $0x6c] sm:$0xf]
        %v2709 = vld [vmem:[%s1046 + $0x70] sm:$0xf]
        %v2710 = vld [vmem:[%s1046 + $0x74] sm:$0xf]
        %v2711 = vld [vmem:[%s1046 + $0x78] sm:$0xf]
        %v2712 = vld [vmem:[%s1046 + $0x7c] sm:$0xf]
        %v2713 = vld [vmem:[%s1046 + $0x80] sm:$0xf]
        %v2714 = vld [vmem:[%s1046 + $0x84] sm:$0xf]
        %v2715 = vld [vmem:[%s1046 + $0x88] sm:$0xf]
        %v2716 = vld [vmem:[%s1046 + $0x8c] sm:$0xf]
        %v2717 = vld [vmem:[%s1046 + $0x90] sm:$0xf]
        %v2718 = vld [vmem:[%s1046 + $0x94] sm:$0xf]
        %v2719 = vld [vmem:[%s1046 + $0x98] sm:$0xf]
        %v2720 = vld [vmem:[%s1046 + $0x9c] sm:$0xf]
        %v2721 = vld [vmem:[%s1046 + $0xa0] sm:$0xf]
        %v2722 = vld [vmem:[%s1046 + $0xa4] sm:$0xf]
        %v2723 = vld [vmem:[%s1046 + $0xa8] sm:$0xf]
        %v2724 = vld [vmem:[%s1046 + $0xac] sm:$0xf]
        %v2725 = vld [vmem:[%s1046 + $0xb0] sm:$0xf]
        %v2726 = vld [vmem:[%s1046 + $0xb4] sm:$0xf]
        %v2727 = vld [vmem:[%s1046 + $0xb8] sm:$0xf]
        %v2728 = vld [vmem:[%s1046 + $0xbc] sm:$0xf]
        %v2761 = vunpack.c.l.b16 %v2601
        %v2762 = vunpack.c.h.b16 %v2601
        %v2763 = vunpack.c.l.b16 %v2602
        %v2764 = vunpack.c.l.b16 %v2603
        %v2765 = vunpack.c.h.b16 %v2603
        %v2766 = vunpack.c.l.b16 %v2604
        %v2767 = vunpack.c.l.b16 %v2605
        %v2768 = vunpack.c.h.b16 %v2605
        %v2769 = vunpack.c.l.b16 %v2606
        %v2770 = vunpack.c.l.b16 %v2607
        %v2771 = vunpack.c.h.b16 %v2607
        %v2772 = vunpack.c.l.b16 %v2608
        %v2773 = vunpack.c.l.b16 %v2609
        %v2774 = vunpack.c.h.b16 %v2609
        %v2775 = vunpack.c.l.b16 %v2610
        %v2776 = vunpack.c.l.b16 %v2611
        %v2777 = vunpack.c.h.b16 %v2611
        %v2778 = vunpack.c.l.b16 %v2612
        %v2779 = vunpack.c.l.b16 %v2613
        %v2780 = vunpack.c.h.b16 %v2613
        %v2781 = vunpack.c.l.b16 %v2614
        %v2782 = vunpack.c.l.b16 %v2615
        %v2783 = vunpack.c.h.b16 %v2615
        %v2784 = vunpack.c.l.b16 %v2616
        %v2785 = vunpack.c.l.b16 %v2617
        %v2786 = vunpack.c.h.b16 %v2617
        %v2787 = vunpack.c.l.b16 %v2618
        %v2788 = vunpack.c.l.b16 %v2619
        %v2789 = vunpack.c.h.b16 %v2619
        %v2790 = vunpack.c.l.b16 %v2620
        %v2791 = vunpack.c.l.b16 %v2621
        %v2792 = vunpack.c.h.b16 %v2621
        %v2793 = vunpack.c.l.b16 %v2622
        %v2794 = vunpack.c.l.b16 %v2623
        %v2795 = vunpack.c.h.b16 %v2623
        %v2796 = vunpack.c.l.b16 %v2624
        %v2797 = vunpack.c.l.b16 %v2625
        %v2798 = vunpack.c.h.b16 %v2625
        %v2799 = vunpack.c.l.b16 %v2626
        %v2800 = vunpack.c.l.b16 %v2627
        %v2801 = vunpack.c.h.b16 %v2627
        %v2802 = vunpack.c.l.b16 %v2628
        %v2803 = vunpack.c.l.b16 %v2677
        %v2804 = vunpack.c.h.b16 %v2677
        %v2805 = vunpack.c.l.b16 %v2678
        %v2806 = vunpack.c.l.b16 %v2679
        %v2807 = vunpack.c.h.b16 %v2679
        %v2808 = vunpack.c.l.b16 %v2680
        %v2809 = vpack.c.b16 %v2764, %v2761
        %v2810 = vpack.c.b16 %v2765, %v2762
        %v2811 = vpack.c.b16 %v2766, %v2763
        %v2812 = vpack.c.b16 %v2770, %v2767
        %v2813 = vpack.c.b16 %v2771, %v2768
        %v2814 = vpack.c.b16 %v2772, %v2769
        %v2815 = vpack.c.b16 %v2776, %v2773
        %v2816 = vpack.c.b16 %v2777, %v2774
        %v2817 = vpack.c.b16 %v2778, %v2775
        %v2818 = vpack.c.b16 %v2782, %v2779
        %v2819 = vpack.c.b16 %v2783, %v2780
        %v2820 = vpack.c.b16 %v2784, %v2781
        %v2821 = vpack.c.b16 %v2788, %v2785
        %v2822 = vpack.c.b16 %v2789, %v2786
        %v2823 = vpack.c.b16 %v2790, %v2787
        %v2824 = vpack.c.b16 %v2794, %v2791
        %v2825 = vpack.c.b16 %v2795, %v2792
        %v2826 = vpack.c.b16 %v2796, %v2793
        %v2827 = vpack.c.b16 %v2800, %v2797
        %v2828 = vpack.c.b16 %v2801, %v2798
        %v2829 = vpack.c.b16 %v2802, %v2799
        %v2830 = vpack.c.b16 %v2806, %v2803
        %v2831 = vpack.c.b16 %v2807, %v2804
        %v2832 = vpack.c.b16 %v2808, %v2805
        %v2905 = vunpack.c.l.b16 %v2681
        %v2906 = vunpack.c.l.b16 %v2682
        %v2907 = vunpack.c.l.b16 %v2683
        %v2908 = vunpack.c.l.b16 %v2684
        %v2909 = vunpack.c.l.b16 %v2685
        %v2910 = vunpack.c.l.b16 %v2686
        %v2911 = vunpack.c.l.b16 %v2687
        %v2912 = vunpack.c.l.b16 %v2688
        %v2913 = vunpack.c.l.b16 %v2689
        %v2914 = vunpack.c.l.b16 %v2690
        %v2915 = vunpack.c.l.b16 %v2691
        %v2916 = vunpack.c.l.b16 %v2692
        %v2917 = vunpack.c.l.b16 %v2693
        %v2918 = vunpack.c.l.b16 %v2694
        %v2919 = vunpack.c.l.b16 %v2695
        %v2920 = vunpack.c.l.b16 %v2696
        %v2921 = vunpack.c.l.b16 %v2697
        %v2922 = vunpack.c.l.b16 %v2698
        %v2923 = vunpack.c.l.b16 %v2699
        %v2924 = vunpack.c.l.b16 %v2700
        %v2925 = vunpack.c.l.b16 %v2701
        %v2926 = vunpack.c.l.b16 %v2702
        %v2927 = vunpack.c.l.b16 %v2703
        %v2928 = vunpack.c.l.b16 %v2704
        %v2929 = vunpack.c.l.b16 %v2705
        %v2930 = vunpack.c.l.b16 %v2706
        %v2931 = vunpack.c.l.b16 %v2707
        %v2932 = vunpack.c.l.b16 %v2708
        %v2933 = vunpack.c.l.b16 %v2709
        %v2934 = vunpack.c.l.b16 %v2710
        %v2935 = vunpack.c.l.b16 %v2711
        %v2936 = vunpack.c.l.b16 %v2712
        %v2937 = vunpack.c.l.b16 %v2713
        %v2938 = vunpack.c.l.b16 %v2714
        %v2939 = vunpack.c.l.b16 %v2715
        %v2940 = vunpack.c.l.b16 %v2716
        %v2941 = vunpack.c.l.b16 %v2717
        %v2942 = vunpack.c.l.b16 %v2718
        %v2943 = vunpack.c.l.b16 %v2719
        %v2944 = vunpack.c.l.b16 %v2720
        %v2945 = vunpack.c.l.b16 %v2721
        %v2946 = vunpack.c.l.b16 %v2722
        %v2947 = vunpack.c.l.b16 %v2723
        %v2948 = vunpack.c.l.b16 %v2724
        %v2949 = vunpack.c.l.b16 %v2725
        %v2950 = vunpack.c.l.b16 %v2726
        %v2951 = vunpack.c.l.b16 %v2727
        %v2952 = vunpack.c.l.b16 %v2728
        %v2953 = vpack.c.b16 %v2906, %v2905
        %v2954 = vpack.c.b16 %v2908, %v2907
        %v2955 = vpack.c.b16 %v2910, %v2909
        %v2956 = vpack.c.b16 %v2912, %v2911
        %v2957 = vpack.c.b16 %v2914, %v2913
        %v2958 = vpack.c.b16 %v2916, %v2915
        %v2959 = vpack.c.b16 %v2918, %v2917
        %v2960 = vpack.c.b16 %v2920, %v2919
        %v2961 = vpack.c.b16 %v2922, %v2921
        %v2962 = vpack.c.b16 %v2924, %v2923
        %v2963 = vpack.c.b16 %v2926, %v2925
        %v2964 = vpack.c.b16 %v2928, %v2927
        %v2965 = vpack.c.b16 %v2930, %v2929
        %v2966 = vpack.c.b16 %v2932, %v2931
        %v2967 = vpack.c.b16 %v2934, %v2933
        %v2968 = vpack.c.b16 %v2936, %v2935
        %v2969 = vpack.c.b16 %v2938, %v2937
        %v2970 = vpack.c.b16 %v2940, %v2939
        %v2971 = vpack.c.b16 %v2942, %v2941
        %v2972 = vpack.c.b16 %v2944, %v2943
        %v2973 = vpack.c.b16 %v2946, %v2945
        %v2974 = vpack.c.b16 %v2948, %v2947
        %v2975 = vpack.c.b16 %v2950, %v2949
        %v2976 = vpack.c.b16 %v2952, %v2951
        %3001 = vmatprep.subr.bf16.mxu0 0
        %3002 = vmatpush1.bf16.msra.mxu0 %v2960
        %3003 = vmatprep.subr.bf16.mxu0 0
        %3004 = vmatpush1.bf16.msra.mxu0 %v2959
        %3005 = vmatprep.subr.bf16.mxu0 0
        %3006 = vmatpush1.bf16.msra.mxu0 %v2958
        %3007 = vmatprep.subr.bf16.mxu0 0
        %3008 = vmatpush1.bf16.msra.mxu0 %v2957
        %3009 = vmatprep.subr.bf16.mxu0 0
        %3010 = vmatpush1.bf16.msra.mxu0 %v2956
        %3011 = vmatprep.subr.bf16.mxu0 0
        %3012 = vmatpush1.bf16.msra.mxu0 %v2955
        %3013 = vmatprep.subr.bf16.mxu0 0
        %3014 = vmatpush1.bf16.msra.mxu0 %v2954
        %3015 = vmatprep.subr.bf16.mxu0 0
        %3016 = vmatpush1.bf16.msra.mxu0 %v2953
        %3017 = vmatprep.subr.bf16.mxu0 0
        %3018 = vmatpush2.bf16.msra.mxu0 %v2968
        %3019 = vmatprep.subr.bf16.mxu0 0
        %3020 = vmatpush2.bf16.msra.mxu0 %v2967
        %3021 = vmatprep.subr.bf16.mxu0 0
        %3022 = vmatpush2.bf16.msra.mxu0 %v2966
        %3023 = vmatprep.subr.bf16.mxu0 0
        %3024 = vmatpush2.bf16.msra.mxu0 %v2965
        %3025 = vmatprep.subr.bf16.mxu0 0
        %3026 = vmatpush2.bf16.msra.mxu0 %v2964
        %3027 = vmatprep.subr.bf16.mxu0 0
        %3028 = vmatpush2.bf16.msra.mxu0 %v2963
        %3029 = vmatprep.subr.bf16.mxu0 0
        %3030 = vmatpush2.bf16.msra.mxu0 %v2962
        %3031 = vmatprep.subr.bf16.mxu0 0
        %3032 = vmatpush2.bf16.msra.mxu0 %v2961
        %3033 = vmatprep.mubr.bf16.mxu0 %v2810
        %3034 = vmatmul.mubr.bf16.gmra.mxu0 %v2809
        %v3035 = vpop.f32.mrf.mxu0
        %v3036 = vadd.f32 0.0, %v3035
        %v3037 = vpop.f32.mrf.mxu0
        %v3038 = vpop.f32.mrf.mxu0
        %v3039 = vadd.f32 0.0, %v3038
        %v3040 = vpop.f32.mrf.mxu0
        %3041 = vmatprep.mubr.bf16.mxu0 %v2813
        %3042 = vmatmul.mubr.bf16.gmra.mxu0 %v2812
        %v3043 = vpop.f32.mrf.mxu0
        %v3044 = vadd.f32 0.0, %v3043
        %v3045 = vpop.f32.mrf.mxu0
        %v3046 = vpop.f32.mrf.mxu0
        %v3047 = vadd.f32 0.0, %v3046
        %v3048 = vpop.f32.mrf.mxu0
        %3049 = vmatprep.mubr.bf16.mxu0 %v2816
        %3050 = vmatmul.mubr.bf16.gmra.mxu0 %v2815
        %v3051 = vpop.f32.mrf.mxu0
        %v3052 = vadd.f32 0.0, %v3051
        %v3053 = vpop.f32.mrf.mxu0
        %v3054 = vpop.f32.mrf.mxu0
        %v3055 = vadd.f32 0.0, %v3054
        %v3056 = vpop.f32.mrf.mxu0
        %3057 = vmatprep.mubr.bf16.mxu0 %v2819
        %3058 = vmatmul.mubr.bf16.gmra.mxu0 %v2818
        %v3059 = vpop.f32.mrf.mxu0
        %v3060 = vadd.f32 0.0, %v3059
        %v3061 = vpop.f32.mrf.mxu0
        %v3062 = vpop.f32.mrf.mxu0
        %v3063 = vadd.f32 0.0, %v3062
        %v3064 = vpop.f32.mrf.mxu0
        %3065 = vmatprep.mubr.bf16.mxu0 %v2822
        %3066 = vmatmul.mubr.bf16.gmra.mxu0 %v2821
        %v3067 = vpop.f32.mrf.mxu0
        %v3068 = vadd.f32 0.0, %v3067
        %v3069 = vpop.f32.mrf.mxu0
        %v3070 = vpop.f32.mrf.mxu0
        %v3071 = vadd.f32 0.0, %v3070
        %v3072 = vpop.f32.mrf.mxu0
        %3073 = vmatprep.mubr.bf16.mxu0 %v2825
        %3074 = vmatmul.mubr.bf16.gmra.mxu0 %v2824
        %v3075 = vpop.f32.mrf.mxu0
        %v3076 = vadd.f32 0.0, %v3075
        %v3077 = vpop.f32.mrf.mxu0
        %v3078 = vpop.f32.mrf.mxu0
        %v3079 = vadd.f32 0.0, %v3078
        %v3080 = vpop.f32.mrf.mxu0
        %3081 = vmatprep.mubr.bf16.mxu0 %v2828
        %3082 = vmatmul.mubr.bf16.gmra.mxu0 %v2827
        %v3083 = vpop.f32.mrf.mxu0
        %v3084 = vadd.f32 0.0, %v3083
        %v3085 = vpop.f32.mrf.mxu0
        %v3086 = vpop.f32.mrf.mxu0
        %v3087 = vadd.f32 0.0, %v3086
        %v3088 = vpop.f32.mrf.mxu0
        %3089 = vmatprep.mubr.bf16.mxu0 %v2831
        %3090 = vmatmul.mubr.bf16.gmra.mxu0 %v2830
        %v3091 = vpop.f32.mrf.mxu0
        %v3092 = vadd.f32 0.0, %v3091
        %v3093 = vpop.f32.mrf.mxu0
        %v3094 = vpop.f32.mrf.mxu0
        %v3095 = vadd.f32 0.0, %v3094
        %v3096 = vpop.f32.mrf.mxu0
        %3097 = vdwg.mxu0
        %3098 = vmatprep.subr.bf16.mxu0 0
        %3099 = vmatpush1.bf16.msra.mxu0 %v2976
        %3100 = vmatprep.subr.bf16.mxu0 0
        %3101 = vmatpush1.bf16.msra.mxu0 %v2975
        %3102 = vmatprep.subr.bf16.mxu0 0
        %3103 = vmatpush1.bf16.msra.mxu0 %v2974
        %3104 = vmatprep.subr.bf16.mxu0 0
        %3105 = vmatpush1.bf16.msra.mxu0 %v2973
        %3106 = vmatprep.subr.bf16.mxu0 0
        %3107 = vmatpush1.bf16.msra.mxu0 %v2972
        %3108 = vmatprep.subr.bf16.mxu0 0
        %3109 = vmatpush1.bf16.msra.mxu0 %v2971
        %3110 = vmatprep.subr.bf16.mxu0 0
        %3111 = vmatpush1.bf16.msra.mxu0 %v2970
        %3112 = vmatprep.subr.bf16.mxu0 0
        %3113 = vmatpush1.bf16.msra.mxu0 %v2969
        %3114 = vmatprep.subr.bf16.mxu0 0
        %3115 = vmatpush2.bf16.msra.mxu0 0
        %3116 = vmatprep.subr.bf16.mxu0 0
        %3117 = vmatpush2.bf16.msra.mxu0 0
        %3118 = vmatprep.subr.bf16.mxu0 0
        %3119 = vmatpush2.bf16.msra.mxu0 0
        %3120 = vmatprep.subr.bf16.mxu0 0
        %3121 = vmatpush2.bf16.msra.mxu0 0
        %3122 = vmatprep.subr.bf16.mxu0 0
        %3123 = vmatpush2.bf16.msra.mxu0 0
        %3124 = vmatprep.subr.bf16.mxu0 0
        %3125 = vmatpush2.bf16.msra.mxu0 0
        %3126 = vmatprep.subr.bf16.mxu0 0
        %3127 = vmatpush2.bf16.msra.mxu0 0
        %3128 = vmatprep.subr.bf16.mxu0 0
        %3129 = vmatpush2.bf16.msra.mxu0 0
        %3130 = vmatprep.mubr.bf16.mxu0 0
        %3131 = vmatmul.mubr.bf16.gmra.mxu0 %v2811
        %v3132 = vpop.f32.mrf.mxu0
        %v3133 = vadd.f32 %v3036, %v3132
        %v3134 = vpop.f32.mrf.mxu0
        %v3135 = vpop.f32.mrf.mxu0
        %v3136 = vadd.f32 %v3039, %v3135
        %v3137 = vpop.f32.mrf.mxu0
        %3138 = vmatprep.mubr.bf16.mxu0 0
        %3139 = vmatmul.mubr.bf16.gmra.mxu0 %v2814
        %v3140 = vpop.f32.mrf.mxu0
        %v3141 = vadd.f32 %v3044, %v3140
        %v3142 = vpop.f32.mrf.mxu0
        %v3143 = vpop.f32.mrf.mxu0
        %v3144 = vadd.f32 %v3047, %v3143
        %v3145 = vpop.f32.mrf.mxu0
        %3146 = vmatprep.mubr.bf16.mxu0 0
        %3147 = vmatmul.mubr.bf16.gmra.mxu0 %v2817
        %v3148 = vpop.f32.mrf.mxu0
        %v3149 = vadd.f32 %v3052, %v3148
        %v3150 = vpop.f32.mrf.mxu0
        %v3151 = vpop.f32.mrf.mxu0
        %v3152 = vadd.f32 %v3055, %v3151
        %v3153 = vpop.f32.mrf.mxu0
        %3154 = vmatprep.mubr.bf16.mxu0 0
        %3155 = vmatmul.mubr.bf16.gmra.mxu0 %v2820
        %v3156 = vpop.f32.mrf.mxu0
        %v3157 = vadd.f32 %v3060, %v3156
        %v3158 = vpop.f32.mrf.mxu0
        %v3159 = vpop.f32.mrf.mxu0
        %v3160 = vadd.f32 %v3063, %v3159
        %v3161 = vpop.f32.mrf.mxu0
        %3162 = vmatprep.mubr.bf16.mxu0 0
        %3163 = vmatmul.mubr.bf16.gmra.mxu0 %v2823
        %v3164 = vpop.f32.mrf.mxu0
        %v3165 = vadd.f32 %v3068, %v3164
        %v3166 = vpop.f32.mrf.mxu0
        %v3167 = vpop.f32.mrf.mxu0
        %v3168 = vadd.f32 %v3071, %v3167
        %v3169 = vpop.f32.mrf.mxu0
        %3170 = vmatprep.mubr.bf16.mxu0 0
        %3171 = vmatmul.mubr.bf16.gmra.mxu0 %v2826
        %v3172 = vpop.f32.mrf.mxu0
        %v3173 = vadd.f32 %v3076, %v3172
        %v3174 = vpop.f32.mrf.mxu0
        %v3175 = vpop.f32.mrf.mxu0
        %v3176 = vadd.f32 %v3079, %v3175
        %v3177 = vpop.f32.mrf.mxu0
        %3178 = vmatprep.mubr.bf16.mxu0 0
        %3179 = vmatmul.mubr.bf16.gmra.mxu0 %v2829
        %v3180 = vpop.f32.mrf.mxu0
        %v3181 = vadd.f32 %v3084, %v3180
        %v3182 = vpop.f32.mrf.mxu0
        %v3183 = vpop.f32.mrf.mxu0
        %v3184 = vadd.f32 %v3087, %v3183
        %v3185 = vpop.f32.mrf.mxu0
        %3186 = vmatprep.mubr.bf16.mxu0 0
        %3187 = vmatmul.mubr.bf16.gmra.mxu0 %v2832
        %v3188 = vpop.f32.mrf.mxu0
        %v3189 = vadd.f32 %v3092, %v3188
        %v3190 = vpop.f32.mrf.mxu0
        %v3191 = vpop.f32.mrf.mxu0
        %v3192 = vadd.f32 %v3095, %v3191
        %v3193 = vpop.f32.mrf.mxu0
        %3194 = vdwg.mxu0
        %v3199 = vunpack.c.l.b16 %v2597
        %v3200 = vunpack.c.h.b16 %v2597
        %v3201 = vunpack.c.l.b16 %v2598
        %v3202 = vunpack.c.l.b16 %v2599
        %v3203 = vunpack.c.h.b16 %v2599
        %v3204 = vunpack.c.l.b16 %v2600
        %v3205 = vpack.c.b16 %v3202, %v3199
        %v3206 = vpack.c.b16 %v3203, %v3200
        %v3207 = vpack.c.b16 %v3204, %v3201
        %v3259 = vunpack.c.l.b16 %v2629
        %v3260 = vunpack.c.l.b16 %v2630
        %v3261 = vunpack.c.l.b16 %v2631
        %v3262 = vunpack.c.l.b16 %v2632
        %v3263 = vunpack.c.l.b16 %v2633
        %v3264 = vunpack.c.l.b16 %v2634
        %v3265 = vunpack.c.l.b16 %v2635
        %v3266 = vunpack.c.l.b16 %v2636
        %v3267 = vunpack.c.l.b16 %v2637
        %v3268 = vunpack.c.l.b16 %v2638
        %v3269 = vunpack.c.l.b16 %v2639
        %v3270 = vunpack.c.l.b16 %v2640
        %v3271 = vunpack.c.l.b16 %v2641
        %v3272 = vunpack.c.l.b16 %v2642
        %v3273 = vunpack.c.l.b16 %v2643
        %v3274 = vunpack.c.l.b16 %v2644
        %v3275 = vunpack.c.l.b16 %v2645
        %v3276 = vunpack.c.l.b16 %v2646
        %v3277 = vunpack.c.l.b16 %v2647
        %v3278 = vunpack.c.l.b16 %v2648
        %v3279 = vunpack.c.l.b16 %v2649
        %v3280 = vunpack.c.l.b16 %v2650
        %v3281 = vunpack.c.l.b16 %v2651
        %v3282 = vunpack.c.l.b16 %v2652
        %v3283 = vunpack.c.l.b16 %v2653
        %v3284 = vunpack.c.l.b16 %v2654
        %v3285 = vunpack.c.l.b16 %v2655
        %v3286 = vunpack.c.l.b16 %v2656
        %v3287 = vunpack.c.l.b16 %v2657
        %v3288 = vunpack.c.l.b16 %v2658
        %v3289 = vunpack.c.l.b16 %v2659
        %v3290 = vunpack.c.l.b16 %v2660
        %v3291 = vunpack.c.l.b16 %v2661
        %v3292 = vunpack.c.l.b16 %v2662
        %v3293 = vunpack.c.l.b16 %v2663
        %v3294 = vunpack.c.l.b16 %v2664
        %v3295 = vunpack.c.l.b16 %v2665
        %v3296 = vunpack.c.l.b16 %v2666
        %v3297 = vunpack.c.l.b16 %v2667
        %v3298 = vunpack.c.l.b16 %v2668
        %v3299 = vunpack.c.l.b16 %v2669
        %v3300 = vunpack.c.l.b16 %v2670
        %v3301 = vunpack.c.l.b16 %v2671
        %v3302 = vunpack.c.l.b16 %v2672
        %v3303 = vunpack.c.l.b16 %v2673
        %v3304 = vunpack.c.l.b16 %v2674
        %v3305 = vunpack.c.l.b16 %v2675
        %v3306 = vunpack.c.l.b16 %v2676
        %v3307 = vpack.c.b16 %v3260, %v3259
        %v3308 = vpack.c.b16 %v3262, %v3261
        %v3309 = vpack.c.b16 %v3264, %v3263
        %v3310 = vpack.c.b16 %v3266, %v3265
        %v3311 = vpack.c.b16 %v3268, %v3267
        %v3312 = vpack.c.b16 %v3270, %v3269
        %v3313 = vpack.c.b16 %v3272, %v3271
        %v3314 = vpack.c.b16 %v3274, %v3273
        %v3315 = vpack.c.b16 %v3276, %v3275
        %v3316 = vpack.c.b16 %v3278, %v3277
        %v3317 = vpack.c.b16 %v3280, %v3279
        %v3318 = vpack.c.b16 %v3282, %v3281
        %v3319 = vpack.c.b16 %v3284, %v3283
        %v3320 = vpack.c.b16 %v3286, %v3285
        %v3321 = vpack.c.b16 %v3288, %v3287
        %v3322 = vpack.c.b16 %v3290, %v3289
        %v3323 = vpack.c.b16 %v3292, %v3291
        %v3324 = vpack.c.b16 %v3294, %v3293
        %v3325 = vpack.c.b16 %v3296, %v3295
        %v3326 = vpack.c.b16 %v3298, %v3297
        %v3327 = vpack.c.b16 %v3300, %v3299
        %v3328 = vpack.c.b16 %v3302, %v3301
        %v3329 = vpack.c.b16 %v3304, %v3303
        %v3330 = vpack.c.b16 %v3306, %v3305
        %3355 = vmatprep.subr.bf16.mxu0 0
        %3356 = vmatpush1.bf16.msra.mxu0 %v3314
        %3357 = vmatprep.subr.bf16.mxu0 0
        %3358 = vmatpush1.bf16.msra.mxu0 %v3313
        %3359 = vmatprep.subr.bf16.mxu0 0
        %3360 = vmatpush1.bf16.msra.mxu0 %v3312
        %3361 = vmatprep.subr.bf16.mxu0 0
        %3362 = vmatpush1.bf16.msra.mxu0 %v3311
        %3363 = vmatprep.subr.bf16.mxu0 0
        %3364 = vmatpush1.bf16.msra.mxu0 %v3310
        %3365 = vmatprep.subr.bf16.mxu0 0
        %3366 = vmatpush1.bf16.msra.mxu0 %v3309
        %3367 = vmatprep.subr.bf16.mxu0 0
        %3368 = vmatpush1.bf16.msra.mxu0 %v3308
        %3369 = vmatprep.subr.bf16.mxu0 0
        %3370 = vmatpush1.bf16.msra.mxu0 %v3307
        %3371 = vmatprep.subr.bf16.mxu0 0
        %3372 = vmatpush2.bf16.msra.mxu0 %v3322
        %3373 = vmatprep.subr.bf16.mxu0 0
        %3374 = vmatpush2.bf16.msra.mxu0 %v3321
        %3375 = vmatprep.subr.bf16.mxu0 0
        %3376 = vmatpush2.bf16.msra.mxu0 %v3320
        %3377 = vmatprep.subr.bf16.mxu0 0
        %3378 = vmatpush2.bf16.msra.mxu0 %v3319
        %3379 = vmatprep.subr.bf16.mxu0 0
        %3380 = vmatpush2.bf16.msra.mxu0 %v3318
        %3381 = vmatprep.subr.bf16.mxu0 0
        %3382 = vmatpush2.bf16.msra.mxu0 %v3317
        %3383 = vmatprep.subr.bf16.mxu0 0
        %3384 = vmatpush2.bf16.msra.mxu0 %v3316
        %3385 = vmatprep.subr.bf16.mxu0 0
        %3386 = vmatpush2.bf16.msra.mxu0 %v3315
        %3387 = vmatprep.mubr.bf16.mxu0 %v3206
        %3388 = vmatmul.mubr.bf16.gmra.mxu0 %v3205
        %v3389 = vpop.f32.mrf.mxu0
        %v3390 = vadd.f32 %v3133, %v3389
        %v3391 = vpop.f32.mrf.mxu0
        %v3392 = vpop.f32.mrf.mxu0
        %v3393 = vadd.f32 %v3136, %v3392
        %v3394 = vpop.f32.mrf.mxu0
        %3395 = vmatprep.mubr.bf16.mxu0 %v2810
        %3396 = vmatmul.mubr.bf16.gmra.mxu0 %v2809
        %v3397 = vpop.f32.mrf.mxu0
        %v3398 = vadd.f32 %v3141, %v3397
        %v3399 = vpop.f32.mrf.mxu0
        %v3400 = vpop.f32.mrf.mxu0
        %v3401 = vadd.f32 %v3144, %v3400
        %v3402 = vpop.f32.mrf.mxu0
        %3403 = vmatprep.mubr.bf16.mxu0 %v2813
        %3404 = vmatmul.mubr.bf16.gmra.mxu0 %v2812
        %v3405 = vpop.f32.mrf.mxu0
        %v3406 = vadd.f32 %v3149, %v3405
        %v3407 = vpop.f32.mrf.mxu0
        %v3408 = vpop.f32.mrf.mxu0
        %v3409 = vadd.f32 %v3152, %v3408
        %v3410 = vpop.f32.mrf.mxu0
        %3411 = vmatprep.mubr.bf16.mxu0 %v2816
        %3412 = vmatmul.mubr.bf16.gmra.mxu0 %v2815
        %v3413 = vpop.f32.mrf.mxu0
        %v3414 = vadd.f32 %v3157, %v3413
        %v3415 = vpop.f32.mrf.mxu0
        %v3416 = vpop.f32.mrf.mxu0
        %v3417 = vadd.f32 %v3160, %v3416
        %v3418 = vpop.f32.mrf.mxu0
        %3419 = vmatprep.mubr.bf16.mxu0 %v2819
        %3420 = vmatmul.mubr.bf16.gmra.mxu0 %v2818
        %v3421 = vpop.f32.mrf.mxu0
        %v3422 = vadd.f32 %v3165, %v3421
        %v3423 = vpop.f32.mrf.mxu0
        %v3424 = vpop.f32.mrf.mxu0
        %v3425 = vadd.f32 %v3168, %v3424
        %v3426 = vpop.f32.mrf.mxu0
        %3427 = vmatprep.mubr.bf16.mxu0 %v2822
        %3428 = vmatmul.mubr.bf16.gmra.mxu0 %v2821
        %v3429 = vpop.f32.mrf.mxu0
        %v3430 = vadd.f32 %v3173, %v3429
        %v3431 = vpop.f32.mrf.mxu0
        %v3432 = vpop.f32.mrf.mxu0
        %v3433 = vadd.f32 %v3176, %v3432
        %v3434 = vpop.f32.mrf.mxu0
        %3435 = vmatprep.mubr.bf16.mxu0 %v2825
        %3436 = vmatmul.mubr.bf16.gmra.mxu0 %v2824
        %v3437 = vpop.f32.mrf.mxu0
        %v3438 = vadd.f32 %v3181, %v3437
        %v3439 = vpop.f32.mrf.mxu0
        %v3440 = vpop.f32.mrf.mxu0
        %v3441 = vadd.f32 %v3184, %v3440
        %v3442 = vpop.f32.mrf.mxu0
        %3443 = vmatprep.mubr.bf16.mxu0 %v2828
        %3444 = vmatmul.mubr.bf16.gmra.mxu0 %v2827
        %v3445 = vpop.f32.mrf.mxu0
        %v3446 = vadd.f32 %v3189, %v3445
        %v3447 = vpop.f32.mrf.mxu0
        %v3448 = vpop.f32.mrf.mxu0
        %v3449 = vadd.f32 %v3192, %v3448
        %v3450 = vpop.f32.mrf.mxu0
        %3451 = vdwg.mxu0
        %3452 = vmatprep.subr.bf16.mxu0 0
        %3453 = vmatpush1.bf16.msra.mxu0 %v3330
        %3454 = vmatprep.subr.bf16.mxu0 0
        %3455 = vmatpush1.bf16.msra.mxu0 %v3329
        %3456 = vmatprep.subr.bf16.mxu0 0
        %3457 = vmatpush1.bf16.msra.mxu0 %v3328
        %3458 = vmatprep.subr.bf16.mxu0 0
        %3459 = vmatpush1.bf16.msra.mxu0 %v3327
        %3460 = vmatprep.subr.bf16.mxu0 0
        %3461 = vmatpush1.bf16.msra.mxu0 %v3326
        %3462 = vmatprep.subr.bf16.mxu0 0
        %3463 = vmatpush1.bf16.msra.mxu0 %v3325
        %3464 = vmatprep.subr.bf16.mxu0 0
        %3465 = vmatpush1.bf16.msra.mxu0 %v3324
        %3466 = vmatprep.subr.bf16.mxu0 0
        %3467 = vmatpush1.bf16.msra.mxu0 %v3323
        %3468 = vmatprep.subr.bf16.mxu0 0
        %3469 = vmatpush2.bf16.msra.mxu0 0
        %3470 = vmatprep.subr.bf16.mxu0 0
        %3471 = vmatpush2.bf16.msra.mxu0 0
        %3472 = vmatprep.subr.bf16.mxu0 0
        %3473 = vmatpush2.bf16.msra.mxu0 0
        %3474 = vmatprep.subr.bf16.mxu0 0
        %3475 = vmatpush2.bf16.msra.mxu0 0
        %3476 = vmatprep.subr.bf16.mxu0 0
        %3477 = vmatpush2.bf16.msra.mxu0 0
        %3478 = vmatprep.subr.bf16.mxu0 0
        %3479 = vmatpush2.bf16.msra.mxu0 0
        %3480 = vmatprep.subr.bf16.mxu0 0
        %3481 = vmatpush2.bf16.msra.mxu0 0
        %3482 = vmatprep.subr.bf16.mxu0 0
        %3483 = vmatpush2.bf16.msra.mxu0 0
        %3484 = vmatprep.mubr.bf16.mxu0 0
        %3485 = vmatmul.mubr.bf16.gmra.mxu0 %v3207
        %v3486 = vpop.f32.mrf.mxu0
        %v3487 = vadd.f32 %v3390, %v3486
        %v3488 = vpop.f32.mrf.mxu0
        %v3489 = vpop.f32.mrf.mxu0
        %v3490 = vadd.f32 %v3393, %v3489
        %v3491 = vpop.f32.mrf.mxu0
        %3492 = vmatprep.mubr.bf16.mxu0 0
        %3493 = vmatmul.mubr.bf16.gmra.mxu0 %v2811
        %v3494 = vpop.f32.mrf.mxu0
        %v3495 = vadd.f32 %v3398, %v3494
        %v3496 = vpop.f32.mrf.mxu0
        %v3497 = vpop.f32.mrf.mxu0
        %v3498 = vadd.f32 %v3401, %v3497
        %v3499 = vpop.f32.mrf.mxu0
        %3500 = vmatprep.mubr.bf16.mxu0 0
        %3501 = vmatmul.mubr.bf16.gmra.mxu0 %v2814
        %v3502 = vpop.f32.mrf.mxu0
        %v3503 = vadd.f32 %v3406, %v3502
        %v3504 = vpop.f32.mrf.mxu0
        %v3505 = vpop.f32.mrf.mxu0
        %v3506 = vadd.f32 %v3409, %v3505
        %v3507 = vpop.f32.mrf.mxu0
        %3508 = vmatprep.mubr.bf16.mxu0 0
        %3509 = vmatmul.mubr.bf16.gmra.mxu0 %v2817
        %v3510 = vpop.f32.mrf.mxu0
        %v3511 = vadd.f32 %v3414, %v3510
        %v3512 = vpop.f32.mrf.mxu0
        %v3513 = vpop.f32.mrf.mxu0
        %v3514 = vadd.f32 %v3417, %v3513
        %v3515 = vpop.f32.mrf.mxu0
        %3516 = vmatprep.mubr.bf16.mxu0 0
        %3517 = vmatmul.mubr.bf16.gmra.mxu0 %v2820
        %v3518 = vpop.f32.mrf.mxu0
        %v3519 = vadd.f32 %v3422, %v3518
        %v3520 = vpop.f32.mrf.mxu0
        %v3521 = vpop.f32.mrf.mxu0
        %v3522 = vadd.f32 %v3425, %v3521
        %v3523 = vpop.f32.mrf.mxu0
        %3524 = vmatprep.mubr.bf16.mxu0 0
        %3525 = vmatmul.mubr.bf16.gmra.mxu0 %v2823
        %v3526 = vpop.f32.mrf.mxu0
        %v3527 = vadd.f32 %v3430, %v3526
        %v3528 = vpop.f32.mrf.mxu0
        %v3529 = vpop.f32.mrf.mxu0
        %v3530 = vadd.f32 %v3433, %v3529
        %v3531 = vpop.f32.mrf.mxu0
        %3532 = vmatprep.mubr.bf16.mxu0 0
        %3533 = vmatmul.mubr.bf16.gmra.mxu0 %v2826
        %v3534 = vpop.f32.mrf.mxu0
        %v3535 = vadd.f32 %v3438, %v3534
        %v3536 = vpop.f32.mrf.mxu0
        %v3537 = vpop.f32.mrf.mxu0
        %v3538 = vadd.f32 %v3441, %v3537
        %v3539 = vpop.f32.mrf.mxu0
        %3540 = vmatprep.mubr.bf16.mxu0 0
        %3541 = vmatmul.mubr.bf16.gmra.mxu0 %v2829
        %v3542 = vpop.f32.mrf.mxu0
        %v3543 = vadd.f32 %v3446, %v3542
        %v3544 = vpop.f32.mrf.mxu0
        %v3545 = vpop.f32.mrf.mxu0
        %v3546 = vadd.f32 %v3449, %v3545
        %v3547 = vpop.f32.mrf.mxu0
        %3548 = vdwg.mxu0
        %v3549 = vld [vmem:[#allocation2 + $0xf0] sm:$0xff]
        %v3550 = vld [vmem:[#allocation2 + $0xf8] sm:$0xf]
        %v3551 = vld [vmem:[#allocation2 + $0xfc] sm:$0xff]
        %v3552 = vld [vmem:[#allocation2 + $0x104] sm:$0xf]
        %v3553 = vld [vmem:[#allocation2 + $0x108] sm:$0xff]
        %v3554 = vld [vmem:[#allocation2 + $0x110] sm:$0xf]
        %v3555 = vld [vmem:[#allocation2 + $0x114] sm:$0xff]
        %v3556 = vld [vmem:[#allocation2 + $0x11c] sm:$0xf]
        %v3557 = vld [vmem:[#allocation2 + $0x120] sm:$0xff]
        %v3558 = vld [vmem:[#allocation2 + $0x128] sm:$0xf]
        %v3559 = vld [vmem:[#allocation2 + $0x12c] sm:$0xff]
        %v3560 = vld [vmem:[#allocation2 + $0x134] sm:$0xf]
        %v3561 = vld [vmem:[#allocation2 + $0x138] sm:$0xff]
        %v3562 = vld [vmem:[#allocation2 + $0x140] sm:$0xf]
        %v3563 = vld [vmem:[#allocation2 + $0x144] sm:$0xff]
        %v3564 = vld [vmem:[#allocation2 + $0x14c] sm:$0xf]
        %v3565 = vld [vmem:[#allocation2 + $0x150] sm:$0xff]
        %v3566 = vld [vmem:[#allocation2 + $0x158] sm:$0xf]
        %v3567 = vld [vmem:[#allocation2 + $0x15c] sm:$0xff]
        %v3568 = vld [vmem:[#allocation2 + $0x164] sm:$0xf]
        %v3569 = vld [vmem:[#allocation2 + $0x168] sm:$0xff]
        %v3570 = vld [vmem:[#allocation2 + $0x170] sm:$0xf]
        %v3571 = vld [vmem:[#allocation2 + $0x174] sm:$0xff]
        %v3572 = vld [vmem:[#allocation2 + $0x17c] sm:$0xf]
        %v3573 = vld [vmem:[#allocation2 + $0x180] sm:$0xff]
        %v3574 = vld [vmem:[#allocation2 + $0x188] sm:$0xf]
        %v3575 = vld [vmem:[#allocation2 + $0x18c] sm:$0xff]
        %v3576 = vld [vmem:[#allocation2 + $0x194] sm:$0xf]
        %v3577 = vld [vmem:[#allocation2 + $0x198] sm:$0xff]
        %v3578 = vld [vmem:[#allocation2 + $0x1a0] sm:$0xf]
        %v3579 = vld [vmem:[#allocation2 + $0x1a4] sm:$0xff]
        %v3580 = vld [vmem:[#allocation2 + $0x1ac] sm:$0xf]
        %v3581 = vld [vmem:[%s1947] sm:$0xf]
        %v3582 = vld [vmem:[%s1947 + $0x4] sm:$0xf]
        %v3583 = vld [vmem:[%s1947 + $0x8] sm:$0xf]
        %v3584 = vld [vmem:[%s1947 + $0xc] sm:$0xf]
        %v3585 = vld [vmem:[%s1947 + $0x10] sm:$0xf]
        %v3586 = vld [vmem:[%s1947 + $0x14] sm:$0xf]
        %v3587 = vld [vmem:[%s1947 + $0x18] sm:$0xf]
        %v3588 = vld [vmem:[%s1947 + $0x1c] sm:$0xf]
        %v3589 = vld [vmem:[%s1947 + $0x20] sm:$0xf]
        %v3590 = vld [vmem:[%s1947 + $0x24] sm:$0xf]
        %v3591 = vld [vmem:[%s1947 + $0x28] sm:$0xf]
        %v3592 = vld [vmem:[%s1947 + $0x2c] sm:$0xf]
        %v3593 = vld [vmem:[%s1947 + $0x30] sm:$0xf]
        %v3594 = vld [vmem:[%s1947 + $0x34] sm:$0xf]
        %v3595 = vld [vmem:[%s1947 + $0x38] sm:$0xf]
        %v3596 = vld [vmem:[%s1947 + $0x3c] sm:$0xf]
        %v3597 = vld [vmem:[%s1947 + $0x40] sm:$0xf]
        %v3598 = vld [vmem:[%s1947 + $0x44] sm:$0xf]
        %v3599 = vld [vmem:[%s1947 + $0x48] sm:$0xf]
        %v3600 = vld [vmem:[%s1947 + $0x4c] sm:$0xf]
        %v3601 = vld [vmem:[%s1947 + $0x50] sm:$0xf]
        %v3602 = vld [vmem:[%s1947 + $0x54] sm:$0xf]
        %v3603 = vld [vmem:[%s1947 + $0x58] sm:$0xf]
        %v3604 = vld [vmem:[%s1947 + $0x5c] sm:$0xf]
        %v3605 = vld [vmem:[%s1947 + $0x60] sm:$0xf]
        %v3606 = vld [vmem:[%s1947 + $0x64] sm:$0xf]
        %v3607 = vld [vmem:[%s1947 + $0x68] sm:$0xf]
        %v3608 = vld [vmem:[%s1947 + $0x6c] sm:$0xf]
        %v3609 = vld [vmem:[%s1947 + $0x70] sm:$0xf]
        %v3610 = vld [vmem:[%s1947 + $0x74] sm:$0xf]
        %v3611 = vld [vmem:[%s1947 + $0x78] sm:$0xf]
        %v3612 = vld [vmem:[%s1947 + $0x7c] sm:$0xf]
        %v3613 = vld [vmem:[%s1947 + $0x80] sm:$0xf]
        %v3614 = vld [vmem:[%s1947 + $0x84] sm:$0xf]
        %v3615 = vld [vmem:[%s1947 + $0x88] sm:$0xf]
        %v3616 = vld [vmem:[%s1947 + $0x8c] sm:$0xf]
        %v3617 = vld [vmem:[%s1947 + $0x90] sm:$0xf]
        %v3618 = vld [vmem:[%s1947 + $0x94] sm:$0xf]
        %v3619 = vld [vmem:[%s1947 + $0x98] sm:$0xf]
        %v3620 = vld [vmem:[%s1947 + $0x9c] sm:$0xf]
        %v3621 = vld [vmem:[%s1947 + $0xa0] sm:$0xf]
        %v3622 = vld [vmem:[%s1947 + $0xa4] sm:$0xf]
        %v3623 = vld [vmem:[%s1947 + $0xa8] sm:$0xf]
        %v3624 = vld [vmem:[%s1947 + $0xac] sm:$0xf]
        %v3625 = vld [vmem:[%s1947 + $0xb0] sm:$0xf]
        %v3626 = vld [vmem:[%s1947 + $0xb4] sm:$0xf]
        %v3627 = vld [vmem:[%s1947 + $0xb8] sm:$0xf]
        %v3628 = vld [vmem:[%s1947 + $0xbc] sm:$0xf]
        %v3661 = vunpack.c.l.b16 %v3549
        %v3662 = vunpack.c.h.b16 %v3549
        %v3663 = vunpack.c.l.b16 %v3550
        %v3664 = vunpack.c.l.b16 %v3551
        %v3665 = vunpack.c.h.b16 %v3551
        %v3666 = vunpack.c.l.b16 %v3552
        %v3667 = vunpack.c.l.b16 %v3553
        %v3668 = vunpack.c.h.b16 %v3553
        %v3669 = vunpack.c.l.b16 %v3554
        %v3670 = vunpack.c.l.b16 %v3555
        %v3671 = vunpack.c.h.b16 %v3555
        %v3672 = vunpack.c.l.b16 %v3556
        %v3673 = vunpack.c.l.b16 %v3557
        %v3674 = vunpack.c.h.b16 %v3557
        %v3675 = vunpack.c.l.b16 %v3558
        %v3676 = vunpack.c.l.b16 %v3559
        %v3677 = vunpack.c.h.b16 %v3559
        %v3678 = vunpack.c.l.b16 %v3560
        %v3679 = vunpack.c.l.b16 %v3561
        %v3680 = vunpack.c.h.b16 %v3561
        %v3681 = vunpack.c.l.b16 %v3562
        %v3682 = vunpack.c.l.b16 %v3563
        %v3683 = vunpack.c.h.b16 %v3563
        %v3684 = vunpack.c.l.b16 %v3564
        %v3685 = vunpack.c.l.b16 %v3565
        %v3686 = vunpack.c.h.b16 %v3565
        %v3687 = vunpack.c.l.b16 %v3566
        %v3688 = vunpack.c.l.b16 %v3567
        %v3689 = vunpack.c.h.b16 %v3567
        %v3690 = vunpack.c.l.b16 %v3568
        %v3691 = vunpack.c.l.b16 %v3569
        %v3692 = vunpack.c.h.b16 %v3569
        %v3693 = vunpack.c.l.b16 %v3570
        %v3694 = vunpack.c.l.b16 %v3571
        %v3695 = vunpack.c.h.b16 %v3571
        %v3696 = vunpack.c.l.b16 %v3572
        %v3697 = vunpack.c.l.b16 %v3573
        %v3698 = vunpack.c.h.b16 %v3573
        %v3699 = vunpack.c.l.b16 %v3574
        %v3700 = vunpack.c.l.b16 %v3575
        %v3701 = vunpack.c.h.b16 %v3575
        %v3702 = vunpack.c.l.b16 %v3576
        %v3703 = vunpack.c.l.b16 %v3577
        %v3704 = vunpack.c.h.b16 %v3577
        %v3705 = vunpack.c.l.b16 %v3578
        %v3706 = vunpack.c.l.b16 %v3579
        %v3707 = vunpack.c.h.b16 %v3579
        %v3708 = vunpack.c.l.b16 %v3580
        %v3709 = vpack.c.b16 %v3664, %v3661
        %v3710 = vpack.c.b16 %v3665, %v3662
        %v3711 = vpack.c.b16 %v3666, %v3663
        %v3712 = vpack.c.b16 %v3670, %v3667
        %v3713 = vpack.c.b16 %v3671, %v3668
        %v3714 = vpack.c.b16 %v3672, %v3669
        %v3715 = vpack.c.b16 %v3676, %v3673
        %v3716 = vpack.c.b16 %v3677, %v3674
        %v3717 = vpack.c.b16 %v3678, %v3675
        %v3718 = vpack.c.b16 %v3682, %v3679
        %v3719 = vpack.c.b16 %v3683, %v3680
        %v3720 = vpack.c.b16 %v3684, %v3681
        %v3721 = vpack.c.b16 %v3688, %v3685
        %v3722 = vpack.c.b16 %v3689, %v3686
        %v3723 = vpack.c.b16 %v3690, %v3687
        %v3724 = vpack.c.b16 %v3694, %v3691
        %v3725 = vpack.c.b16 %v3695, %v3692
        %v3726 = vpack.c.b16 %v3696, %v3693
        %v3727 = vpack.c.b16 %v3700, %v3697
        %v3728 = vpack.c.b16 %v3701, %v3698
        %v3729 = vpack.c.b16 %v3702, %v3699
        %v3730 = vpack.c.b16 %v3706, %v3703
        %v3731 = vpack.c.b16 %v3707, %v3704
        %v3732 = vpack.c.b16 %v3708, %v3705
        %v3805 = vunpack.c.l.b16 %v3581
        %v3806 = vunpack.c.l.b16 %v3582
        %v3807 = vunpack.c.l.b16 %v3583
        %v3808 = vunpack.c.l.b16 %v3584
        %v3809 = vunpack.c.l.b16 %v3585
        %v3810 = vunpack.c.l.b16 %v3586
        %v3811 = vunpack.c.l.b16 %v3587
        %v3812 = vunpack.c.l.b16 %v3588
        %v3813 = vunpack.c.l.b16 %v3589
        %v3814 = vunpack.c.l.b16 %v3590
        %v3815 = vunpack.c.l.b16 %v3591
        %v3816 = vunpack.c.l.b16 %v3592
        %v3817 = vunpack.c.l.b16 %v3593
        %v3818 = vunpack.c.l.b16 %v3594
        %v3819 = vunpack.c.l.b16 %v3595
        %v3820 = vunpack.c.l.b16 %v3596
        %v3821 = vunpack.c.l.b16 %v3597
        %v3822 = vunpack.c.l.b16 %v3598
        %v3823 = vunpack.c.l.b16 %v3599
        %v3824 = vunpack.c.l.b16 %v3600
        %v3825 = vunpack.c.l.b16 %v3601
        %v3826 = vunpack.c.l.b16 %v3602
        %v3827 = vunpack.c.l.b16 %v3603
        %v3828 = vunpack.c.l.b16 %v3604
        %v3829 = vunpack.c.l.b16 %v3605
        %v3830 = vunpack.c.l.b16 %v3606
        %v3831 = vunpack.c.l.b16 %v3607
        %v3832 = vunpack.c.l.b16 %v3608
        %v3833 = vunpack.c.l.b16 %v3609
        %v3834 = vunpack.c.l.b16 %v3610
        %v3835 = vunpack.c.l.b16 %v3611
        %v3836 = vunpack.c.l.b16 %v3612
        %v3837 = vunpack.c.l.b16 %v3613
        %v3838 = vunpack.c.l.b16 %v3614
        %v3839 = vunpack.c.l.b16 %v3615
        %v3840 = vunpack.c.l.b16 %v3616
        %v3841 = vunpack.c.l.b16 %v3617
        %v3842 = vunpack.c.l.b16 %v3618
        %v3843 = vunpack.c.l.b16 %v3619
        %v3844 = vunpack.c.l.b16 %v3620
        %v3845 = vunpack.c.l.b16 %v3621
        %v3846 = vunpack.c.l.b16 %v3622
        %v3847 = vunpack.c.l.b16 %v3623
        %v3848 = vunpack.c.l.b16 %v3624
        %v3849 = vunpack.c.l.b16 %v3625
        %v3850 = vunpack.c.l.b16 %v3626
        %v3851 = vunpack.c.l.b16 %v3627
        %v3852 = vunpack.c.l.b16 %v3628
        %v3853 = vpack.c.b16 %v3806, %v3805
        %v3854 = vpack.c.b16 %v3808, %v3807
        %v3855 = vpack.c.b16 %v3810, %v3809
        %v3856 = vpack.c.b16 %v3812, %v3811
        %v3857 = vpack.c.b16 %v3814, %v3813
        %v3858 = vpack.c.b16 %v3816, %v3815
        %v3859 = vpack.c.b16 %v3818, %v3817
        %v3860 = vpack.c.b16 %v3820, %v3819
        %v3861 = vpack.c.b16 %v3822, %v3821
        %v3862 = vpack.c.b16 %v3824, %v3823
        %v3863 = vpack.c.b16 %v3826, %v3825
        %v3864 = vpack.c.b16 %v3828, %v3827
        %v3865 = vpack.c.b16 %v3830, %v3829
        %v3866 = vpack.c.b16 %v3832, %v3831
        %v3867 = vpack.c.b16 %v3834, %v3833
        %v3868 = vpack.c.b16 %v3836, %v3835
        %v3869 = vpack.c.b16 %v3838, %v3837
        %v3870 = vpack.c.b16 %v3840, %v3839
        %v3871 = vpack.c.b16 %v3842, %v3841
        %v3872 = vpack.c.b16 %v3844, %v3843
        %v3873 = vpack.c.b16 %v3846, %v3845
        %v3874 = vpack.c.b16 %v3848, %v3847
        %v3875 = vpack.c.b16 %v3850, %v3849
        %v3876 = vpack.c.b16 %v3852, %v3851
        %3901 = vmatprep.subr.bf16.mxu0 0
        %3902 = vmatpush1.bf16.msra.mxu0 %v3860
        %3903 = vmatprep.subr.bf16.mxu0 0
        %3904 = vmatpush1.bf16.msra.mxu0 %v3859
        %3905 = vmatprep.subr.bf16.mxu0 0
        %3906 = vmatpush1.bf16.msra.mxu0 %v3858
        %3907 = vmatprep.subr.bf16.mxu0 0
        %3908 = vmatpush1.bf16.msra.mxu0 %v3857
        %3909 = vmatprep.subr.bf16.mxu0 0
        %3910 = vmatpush1.bf16.msra.mxu0 %v3856
        %3911 = vmatprep.subr.bf16.mxu0 0
        %3912 = vmatpush1.bf16.msra.mxu0 %v3855
        %3913 = vmatprep.subr.bf16.mxu0 0
        %3914 = vmatpush1.bf16.msra.mxu0 %v3854
        %3915 = vmatprep.subr.bf16.mxu0 0
        %3916 = vmatpush1.bf16.msra.mxu0 %v3853
        %3917 = vmatprep.subr.bf16.mxu0 0
        %3918 = vmatpush2.bf16.msra.mxu0 %v3868
        %3919 = vmatprep.subr.bf16.mxu0 0
        %3920 = vmatpush2.bf16.msra.mxu0 %v3867
        %3921 = vmatprep.subr.bf16.mxu0 0
        %3922 = vmatpush2.bf16.msra.mxu0 %v3866
        %3923 = vmatprep.subr.bf16.mxu0 0
        %3924 = vmatpush2.bf16.msra.mxu0 %v3865
        %3925 = vmatprep.subr.bf16.mxu0 0
        %3926 = vmatpush2.bf16.msra.mxu0 %v3864
        %3927 = vmatprep.subr.bf16.mxu0 0
        %3928 = vmatpush2.bf16.msra.mxu0 %v3863
        %3929 = vmatprep.subr.bf16.mxu0 0
        %3930 = vmatpush2.bf16.msra.mxu0 %v3862
        %3931 = vmatprep.subr.bf16.mxu0 0
        %3932 = vmatpush2.bf16.msra.mxu0 %v3861
        %3933 = vmatprep.mubr.bf16.mxu0 %v3710
        %3934 = vmatmul.mubr.bf16.gmra.mxu0 %v3709
        %v3935 = vpop.f32.mrf.mxu0
        %v3936 = vadd.f32 0.0, %v3935
        %v3937 = vpop.f32.mrf.mxu0
        %v3938 = vpop.f32.mrf.mxu0
        %v3939 = vadd.f32 0.0, %v3938
        %v3940 = vpop.f32.mrf.mxu0
        %3941 = vmatprep.mubr.bf16.mxu0 %v3713
        %3942 = vmatmul.mubr.bf16.gmra.mxu0 %v3712
        %v3943 = vpop.f32.mrf.mxu0
        %v3944 = vadd.f32 0.0, %v3943
        %v3945 = vpop.f32.mrf.mxu0
        %v3946 = vpop.f32.mrf.mxu0
        %v3947 = vadd.f32 0.0, %v3946
        %v3948 = vpop.f32.mrf.mxu0
        %3949 = vmatprep.mubr.bf16.mxu0 %v3716
        %3950 = vmatmul.mubr.bf16.gmra.mxu0 %v3715
        %v3951 = vpop.f32.mrf.mxu0
        %v3952 = vadd.f32 0.0, %v3951
        %v3953 = vpop.f32.mrf.mxu0
        %v3954 = vpop.f32.mrf.mxu0
        %v3955 = vadd.f32 0.0, %v3954
        %v3956 = vpop.f32.mrf.mxu0
        %3957 = vmatprep.mubr.bf16.mxu0 %v3719
        %3958 = vmatmul.mubr.bf16.gmra.mxu0 %v3718
        %v3959 = vpop.f32.mrf.mxu0
        %v3960 = vadd.f32 0.0, %v3959
        %v3961 = vpop.f32.mrf.mxu0
        %v3962 = vpop.f32.mrf.mxu0
        %v3963 = vadd.f32 0.0, %v3962
        %v3964 = vpop.f32.mrf.mxu0
        %3965 = vmatprep.mubr.bf16.mxu0 %v3722
        %3966 = vmatmul.mubr.bf16.gmra.mxu0 %v3721
        %v3967 = vpop.f32.mrf.mxu0
        %v3968 = vadd.f32 0.0, %v3967
        %v3969 = vpop.f32.mrf.mxu0
        %v3970 = vpop.f32.mrf.mxu0
        %v3971 = vadd.f32 0.0, %v3970
        %v3972 = vpop.f32.mrf.mxu0
        %3973 = vmatprep.mubr.bf16.mxu0 %v3725
        %3974 = vmatmul.mubr.bf16.gmra.mxu0 %v3724
        %v3975 = vpop.f32.mrf.mxu0
        %v3976 = vadd.f32 0.0, %v3975
        %v3977 = vpop.f32.mrf.mxu0
        %v3978 = vpop.f32.mrf.mxu0
        %v3979 = vadd.f32 0.0, %v3978
        %v3980 = vpop.f32.mrf.mxu0
        %3981 = vmatprep.mubr.bf16.mxu0 %v3728
        %3982 = vmatmul.mubr.bf16.gmra.mxu0 %v3727
        %v3983 = vpop.f32.mrf.mxu0
        %v3984 = vadd.f32 0.0, %v3983
        %v3985 = vpop.f32.mrf.mxu0
        %v3986 = vpop.f32.mrf.mxu0
        %v3987 = vadd.f32 0.0, %v3986
        %v3988 = vpop.f32.mrf.mxu0
        %3989 = vmatprep.mubr.bf16.mxu0 %v3731
        %3990 = vmatmul.mubr.bf16.gmra.mxu0 %v3730
        %v3991 = vpop.f32.mrf.mxu0
        %v3992 = vadd.f32 0.0, %v3991
        %v3993 = vpop.f32.mrf.mxu0
        %v3994 = vpop.f32.mrf.mxu0
        %v3995 = vadd.f32 0.0, %v3994
        %v3996 = vpop.f32.mrf.mxu0
        %3997 = vdwg.mxu0
        %3998 = vmatprep.subr.bf16.mxu0 0
        %3999 = vmatpush1.bf16.msra.mxu0 %v3876
        %4000 = vmatprep.subr.bf16.mxu0 0
        %4001 = vmatpush1.bf16.msra.mxu0 %v3875
        %4002 = vmatprep.subr.bf16.mxu0 0
        %4003 = vmatpush1.bf16.msra.mxu0 %v3874
        %4004 = vmatprep.subr.bf16.mxu0 0
        %4005 = vmatpush1.bf16.msra.mxu0 %v3873
        %4006 = vmatprep.subr.bf16.mxu0 0
        %4007 = vmatpush1.bf16.msra.mxu0 %v3872
        %4008 = vmatprep.subr.bf16.mxu0 0
        %4009 = vmatpush1.bf16.msra.mxu0 %v3871
        %4010 = vmatprep.subr.bf16.mxu0 0
        %4011 = vmatpush1.bf16.msra.mxu0 %v3870
        %4012 = vmatprep.subr.bf16.mxu0 0
        %4013 = vmatpush1.bf16.msra.mxu0 %v3869
        %4014 = vmatprep.subr.bf16.mxu0 0
        %4015 = vmatpush2.bf16.msra.mxu0 0
        %4016 = vmatprep.subr.bf16.mxu0 0
        %4017 = vmatpush2.bf16.msra.mxu0 0
        %4018 = vmatprep.subr.bf16.mxu0 0
        %4019 = vmatpush2.bf16.msra.mxu0 0
        %4020 = vmatprep.subr.bf16.mxu0 0
        %4021 = vmatpush2.bf16.msra.mxu0 0
        %4022 = vmatprep.subr.bf16.mxu0 0
        %4023 = vmatpush2.bf16.msra.mxu0 0
        %4024 = vmatprep.subr.bf16.mxu0 0
        %4025 = vmatpush2.bf16.msra.mxu0 0
        %4026 = vmatprep.subr.bf16.mxu0 0
        %4027 = vmatpush2.bf16.msra.mxu0 0
        %4028 = vmatprep.subr.bf16.mxu0 0
        %4029 = vmatpush2.bf16.msra.mxu0 0
        %4030 = vmatprep.mubr.bf16.mxu0 0
        %4031 = vmatmul.mubr.bf16.gmra.mxu0 %v3711
        %v4032 = vpop.f32.mrf.mxu0
        %v4033 = vadd.f32 %v3936, %v4032
        %v4034 = vpop.f32.mrf.mxu0
        %v4035 = vpop.f32.mrf.mxu0
        %v4036 = vadd.f32 %v3939, %v4035
        %v4037 = vpop.f32.mrf.mxu0
        %4038 = vmatprep.mubr.bf16.mxu0 0
        %4039 = vmatmul.mubr.bf16.gmra.mxu0 %v3714
        %v4040 = vpop.f32.mrf.mxu0
        %v4041 = vadd.f32 %v3944, %v4040
        %v4042 = vpop.f32.mrf.mxu0
        %v4043 = vpop.f32.mrf.mxu0
        %v4044 = vadd.f32 %v3947, %v4043
        %v4045 = vpop.f32.mrf.mxu0
        %4046 = vmatprep.mubr.bf16.mxu0 0
        %4047 = vmatmul.mubr.bf16.gmra.mxu0 %v3717
        %v4048 = vpop.f32.mrf.mxu0
        %v4049 = vadd.f32 %v3952, %v4048
        %v4050 = vpop.f32.mrf.mxu0
        %v4051 = vpop.f32.mrf.mxu0
        %v4052 = vadd.f32 %v3955, %v4051
        %v4053 = vpop.f32.mrf.mxu0
        %4054 = vmatprep.mubr.bf16.mxu0 0
        %4055 = vmatmul.mubr.bf16.gmra.mxu0 %v3720
        %v4056 = vpop.f32.mrf.mxu0
        %v4057 = vadd.f32 %v3960, %v4056
        %v4058 = vpop.f32.mrf.mxu0
        %v4059 = vpop.f32.mrf.mxu0
        %v4060 = vadd.f32 %v3963, %v4059
        %v4061 = vpop.f32.mrf.mxu0
        %4062 = vmatprep.mubr.bf16.mxu0 0
        %4063 = vmatmul.mubr.bf16.gmra.mxu0 %v3723
        %v4064 = vpop.f32.mrf.mxu0
        %v4065 = vadd.f32 %v3968, %v4064
        %v4066 = vpop.f32.mrf.mxu0
        %v4067 = vpop.f32.mrf.mxu0
        %v4068 = vadd.f32 %v3971, %v4067
        %v4069 = vpop.f32.mrf.mxu0
        %4070 = vmatprep.mubr.bf16.mxu0 0
        %4071 = vmatmul.mubr.bf16.gmra.mxu0 %v3726
        %v4072 = vpop.f32.mrf.mxu0
        %v4073 = vadd.f32 %v3976, %v4072
        %v4074 = vpop.f32.mrf.mxu0
        %v4075 = vpop.f32.mrf.mxu0
        %v4076 = vadd.f32 %v3979, %v4075
        %v4077 = vpop.f32.mrf.mxu0
        %4078 = vmatprep.mubr.bf16.mxu0 0
        %4079 = vmatmul.mubr.bf16.gmra.mxu0 %v3729
        %v4080 = vpop.f32.mrf.mxu0
        %v4081 = vadd.f32 %v3984, %v4080
        %v4082 = vpop.f32.mrf.mxu0
        %v4083 = vpop.f32.mrf.mxu0
        %v4084 = vadd.f32 %v3987, %v4083
        %v4085 = vpop.f32.mrf.mxu0
        %4086 = vmatprep.mubr.bf16.mxu0 0
        %4087 = vmatmul.mubr.bf16.gmra.mxu0 %v3732
        %v4088 = vpop.f32.mrf.mxu0
        %v4089 = vadd.f32 %v3992, %v4088
        %v4090 = vpop.f32.mrf.mxu0
        %v4091 = vpop.f32.mrf.mxu0
        %v4092 = vadd.f32 %v3995, %v4091
        %v4093 = vpop.f32.mrf.mxu0
        %4094 = vdwg.mxu0
        %v4095 = vadd.f32 %v3487, %v4033
        %v4096 = vadd.f32 %v3490, %v4036
        %v4097 = vadd.f32 %v3495, %v4041
        %v4098 = vadd.f32 %v3498, %v4044
        %v4099 = vadd.f32 %v3503, %v4049
        %v4100 = vadd.f32 %v3506, %v4052
        %v4101 = vadd.f32 %v3511, %v4057
        %v4102 = vadd.f32 %v3514, %v4060
        %v4103 = vadd.f32 %v3519, %v4065
        %v4104 = vadd.f32 %v3522, %v4068
        %v4105 = vadd.f32 %v3527, %v4073
        %v4106 = vadd.f32 %v3530, %v4076
        %v4107 = vadd.f32 %v3535, %v4081
        %v4108 = vadd.f32 %v3538, %v4084
        %v4109 = vadd.f32 %v3543, %v4089
        %v4110 = vadd.f32 %v3546, %v4092
        %v4111 = vld [vmem:[%s2] sm:$0x1]
        %v4113 = vlaneseq
        %v4114 = vshrl.u32 %v4113, 7
        %v4115 = vsub.s32 0, %v4114
        %v4116 = vrot.slane %v4111, %v4115
        %v4118 = vadd.f32 %v4095, %v4116
        %v4119 = vadd.f32 %v4096, %v4116
        %v4120 = vadd.f32 %v4097, %v4116
        %v4121 = vadd.f32 %v4098, %v4116
        %v4122 = vadd.f32 %v4099, %v4116
        %v4123 = vadd.f32 %v4100, %v4116
        %v4124 = vadd.f32 %v4101, %v4116
        %v4125 = vadd.f32 %v4102, %v4116
        %v4126 = vadd.f32 %v4103, %v4116
        %v4127 = vadd.f32 %v4104, %v4116
        %v4128 = vadd.f32 %v4105, %v4116
        %v4129 = vadd.f32 %v4106, %v4116
        %v4130 = vadd.f32 %v4107, %v4116
        %v4131 = vadd.f32 %v4108, %v4116
        %v4132 = vadd.f32 %v4109, %v4116
        %v4133 = vadd.f32 %v4110, %v4116
        %v4134 = vmax.f32 %v4118, 0.0
        %v4135 = vmax.f32 %v4119, 0.0
        %v4136 = vmax.f32 %v4120, 0.0
        %v4137 = vmax.f32 %v4121, 0.0
        %v4138 = vmax.f32 %v4122, 0.0
        %v4139 = vmax.f32 %v4123, 0.0
        %v4140 = vmax.f32 %v4124, 0.0
        %v4141 = vmax.f32 %v4125, 0.0
        %v4142 = vmax.f32 %v4126, 0.0
        %v4143 = vmax.f32 %v4127, 0.0
        %v4144 = vmax.f32 %v4128, 0.0
        %v4145 = vmax.f32 %v4129, 0.0
        %v4146 = vmax.f32 %v4130, 0.0
        %v4147 = vmax.f32 %v4131, 0.0
        %v4148 = vmax.f32 %v4132, 0.0
        %v4149 = vmax.f32 %v4133, 0.0
        %v4150 = vpack.c.bf16 %v4135, %v4134
        %v4151 = vpack.c.bf16 %v4137, %v4136
        %v4152 = vpack.c.bf16 %v4139, %v4138
        %v4153 = vpack.c.bf16 %v4141, %v4140
        %v4154 = vpack.c.bf16 %v4143, %v4142
        %v4155 = vpack.c.bf16 %v4145, %v4144
        %v4156 = vpack.c.bf16 %v4147, %v4146
        %v4157 = vpack.c.bf16 %v4149, %v4148
        %v4166 = vunpack.c.l.b16 %v4150
        %v4167 = vunpack.c.h.b16 %v4150
        %v4168 = vunpack.c.l.b16 %v4151
        %v4169 = vunpack.c.h.b16 %v4151
        %v4170 = vunpack.c.l.b16 %v4152
        %v4171 = vunpack.c.h.b16 %v4152
        %v4172 = vunpack.c.l.b16 %v4153
        %v4173 = vunpack.c.h.b16 %v4153
        %v4174 = vunpack.c.l.b16 %v4154
        %v4175 = vunpack.c.h.b16 %v4154
        %v4176 = vunpack.c.l.b16 %v4155
        %v4177 = vunpack.c.h.b16 %v4155
        %v4178 = vunpack.c.l.b16 %v4156
        %v4179 = vunpack.c.h.b16 %v4156
        %v4180 = vunpack.c.l.b16 %v4157
        %v4181 = vunpack.c.h.b16 %v4157
        %v4182 = vpack.c.b16 %v4166, %v4166
        %v4183 = vpack.c.b16 %v4167, %v4167
        %v4184 = vpack.c.b16 %v4168, %v4168
        %v4185 = vpack.c.b16 %v4169, %v4169
        %v4186 = vpack.c.b16 %v4170, %v4170
        %v4187 = vpack.c.b16 %v4171, %v4171
        %v4188 = vpack.c.b16 %v4172, %v4172
        %v4189 = vpack.c.b16 %v4173, %v4173
        %v4190 = vpack.c.b16 %v4174, %v4174
        %v4191 = vpack.c.b16 %v4175, %v4175
        %v4192 = vpack.c.b16 %v4176, %v4176
        %v4193 = vpack.c.b16 %v4177, %v4177
        %v4194 = vpack.c.b16 %v4178, %v4178
        %v4195 = vpack.c.b16 %v4179, %v4179
        %v4196 = vpack.c.b16 %v4180, %v4180
        %v4197 = vpack.c.b16 %v4181, %v4181
        %4214 = vst [vmem:[#allocation3 + $0x40] sm:$0xf] %v4182
        %4215 = vst [vmem:[#allocation3 + $0x44] sm:$0xf] %v4183
        %4216 = vst [vmem:[#allocation3 + $0x48] sm:$0xf] %v4184
        %4217 = vst [vmem:[#allocation3 + $0x4c] sm:$0xf] %v4185
        %4218 = vst [vmem:[#allocation3 + $0x50] sm:$0xf] %v4186
        %4219 = vst [vmem:[#allocation3 + $0x54] sm:$0xf] %v4187
        %4220 = vst [vmem:[#allocation3 + $0x58] sm:$0xf] %v4188
        %4221 = vst [vmem:[#allocation3 + $0x5c] sm:$0xf] %v4189
        %4222 = vst [vmem:[#allocation3 + $0x60] sm:$0xf] %v4190
        %4223 = vst [vmem:[#allocation3 + $0x64] sm:$0xf] %v4191
        %4224 = vst [vmem:[#allocation3 + $0x68] sm:$0xf] %v4192
        %4225 = vst [vmem:[#allocation3 + $0x6c] sm:$0xf] %v4193
        %4226 = vst [vmem:[#allocation3 + $0x70] sm:$0xf] %v4194
        %4227 = vst [vmem:[#allocation3 + $0x74] sm:$0xf] %v4195
        %4228 = vst [vmem:[#allocation3 + $0x78] sm:$0xf] %v4196
        %4229 = vst [vmem:[#allocation3 + $0x7c] sm:$0xf] %v4197
        %v4230 = vld [vmem:[#allocation3] sm:$0xf]
        %v4231 = vld [vmem:[#allocation3 + $0x4] sm:$0xf]
        %v4232 = vld [vmem:[#allocation3 + $0x8] sm:$0xf]
        %v4233 = vld [vmem:[#allocation3 + $0xc] sm:$0xf]
        %v4234 = vld [vmem:[#allocation3 + $0x10] sm:$0xf]
        %v4235 = vld [vmem:[#allocation3 + $0x14] sm:$0xf]
        %v4236 = vld [vmem:[#allocation3 + $0x18] sm:$0xf]
        %v4237 = vld [vmem:[#allocation3 + $0x1c] sm:$0xf]
        %v4238 = vld [vmem:[#allocation3 + $0x20] sm:$0xf]
        %v4239 = vld [vmem:[#allocation3 + $0x24] sm:$0xf]
        %v4240 = vld [vmem:[#allocation3 + $0x28] sm:$0xf]
        %v4241 = vld [vmem:[#allocation3 + $0x2c] sm:$0xf]
        %v4242 = vld [vmem:[#allocation3 + $0x30] sm:$0xf]
        %v4243 = vld [vmem:[#allocation3 + $0x34] sm:$0xf]
        %v4244 = vld [vmem:[#allocation3 + $0x38] sm:$0xf]
        %v4245 = vld [vmem:[#allocation3 + $0x3c] sm:$0xf]
        %v4246 = vld [vmem:[#allocation3 + $0x40] sm:$0xf]
        %v4247 = vld [vmem:[#allocation3 + $0x44] sm:$0xf]
        %v4248 = vld [vmem:[#allocation3 + $0x48] sm:$0xf]
        %v4249 = vld [vmem:[#allocation3 + $0x4c] sm:$0xf]
        %v4250 = vld [vmem:[#allocation3 + $0x50] sm:$0xf]
        %v4251 = vld [vmem:[#allocation3 + $0x54] sm:$0xf]
        %v4252 = vld [vmem:[#allocation3 + $0x58] sm:$0xf]
        %v4253 = vld [vmem:[#allocation3 + $0x5c] sm:$0xf]
        %v4254 = vld [vmem:[#allocation3 + $0x60] sm:$0xf]
        %v4255 = vld [vmem:[#allocation3 + $0x64] sm:$0xf]
        %v4256 = vld [vmem:[#allocation3 + $0x68] sm:$0xf]
        %v4257 = vld [vmem:[#allocation3 + $0x6c] sm:$0xf]
        %v4258 = vld [vmem:[#allocation3 + $0x70] sm:$0xf]
        %v4259 = vld [vmem:[#allocation3 + $0x74] sm:$0xf]
        %v4260 = vld [vmem:[#allocation3 + $0x78] sm:$0xf]
        %v4261 = vld [vmem:[#allocation3 + $0x7c] sm:$0xf]
        %v4278 = vunpack.c.l.b16 %v4232
        %v4279 = vunpack.c.l.b16 %v4230
        %v4280 = vunpack.c.l.b16 %v4234
        %v4281 = vunpack.c.l.b16 %v4236
        %v4282 = vunpack.c.l.b16 %v4238
        %v4283 = vunpack.c.l.b16 %v4240
        %v4284 = vunpack.c.l.b16 %v4242
        %v4285 = vunpack.c.l.b16 %v4244
        %v4286 = vunpack.c.l.b16 %v4246
        %v4287 = vunpack.c.l.b16 %v4248
        %v4288 = vunpack.c.l.b16 %v4250
        %v4289 = vunpack.c.l.b16 %v4252
        %v4290 = vunpack.c.l.b16 %v4254
        %v4291 = vunpack.c.l.b16 %v4256
        %v4292 = vunpack.c.l.b16 %v4258
        %v4293 = vunpack.c.l.b16 %v4260
        %v4294 = vpack.c.b16 %v4278, %v4278
        %v4295 = vpack.c.b16 %v4279, %v4279
        %v4296 = vpack.c.b16 %v4280, %v4280
        %v4297 = vpack.c.b16 %v4281, %v4281
        %v4298 = vpack.c.b16 %v4282, %v4282
        %v4299 = vpack.c.b16 %v4283, %v4283
        %v4300 = vpack.c.b16 %v4284, %v4284
        %v4301 = vpack.c.b16 %v4285, %v4285
        %v4302 = vpack.c.b16 %v4286, %v4286
        %v4303 = vpack.c.b16 %v4287, %v4287
        %v4304 = vpack.c.b16 %v4288, %v4288
        %v4305 = vpack.c.b16 %v4289, %v4289
        %v4306 = vpack.c.b16 %v4290, %v4290
        %v4307 = vpack.c.b16 %v4291, %v4291
        %v4308 = vpack.c.b16 %v4292, %v4292
        %v4309 = vpack.c.b16 %v4293, %v4293
        %v4311 = vshrl.u32 %v4294, 16
        %v4314 = vshrl.u32 %v4295, 16
        %v4317 = vshrl.u32 %v4296, 16
        %v4320 = vshrl.u32 %v4297, 16
        %v4323 = vshrl.u32 %v4298, 16
        %v4326 = vshrl.u32 %v4299, 16
        %v4329 = vshrl.u32 %v4300, 16
        %v4332 = vshrl.u32 %v4301, 16
        %v4335 = vshrl.u32 %v4302, 16
        %v4338 = vshrl.u32 %v4303, 16
        %v4341 = vshrl.u32 %v4304, 16
        %v4344 = vshrl.u32 %v4305, 16
        %v4347 = vshrl.u32 %v4306, 16
        %v4350 = vshrl.u32 %v4307, 16
        %v4353 = vshrl.u32 %v4308, 16
        %v4356 = vshrl.u32 %v4309, 16
        %v4390 = vunpack.c.l.b16 %v4233
        %v4391 = vunpack.c.l.b16 %v4231
        %v4392 = vunpack.c.l.b16 %v4235
        %v4393 = vunpack.c.l.b16 %v4237
        %v4394 = vunpack.c.l.b16 %v4239
        %v4395 = vunpack.c.l.b16 %v4241
        %v4396 = vunpack.c.l.b16 %v4243
        %v4397 = vunpack.c.l.b16 %v4245
        %v4398 = vunpack.c.l.b16 %v4247
        %v4399 = vunpack.c.l.b16 %v4249
        %v4400 = vunpack.c.l.b16 %v4251
        %v4401 = vunpack.c.l.b16 %v4253
        %v4402 = vunpack.c.l.b16 %v4255
        %v4403 = vunpack.c.l.b16 %v4257
        %v4404 = vunpack.c.l.b16 %v4259
        %v4405 = vunpack.c.l.b16 %v4261
        %v4406 = vpack.c.b16 %v4390, %v4278
        %v4407 = vpack.c.b16 %v4391, %v4279
        %v4408 = vpack.c.b16 %v4392, %v4280
        %v4409 = vpack.c.b16 %v4393, %v4281
        %v4410 = vpack.c.b16 %v4394, %v4282
        %v4411 = vpack.c.b16 %v4395, %v4283
        %v4412 = vpack.c.b16 %v4396, %v4284
        %v4413 = vpack.c.b16 %v4397, %v4285
        %v4414 = vpack.c.b16 %v4398, %v4286
        %v4415 = vpack.c.b16 %v4399, %v4287
        %v4416 = vpack.c.b16 %v4400, %v4288
        %v4417 = vpack.c.b16 %v4401, %v4289
        %v4418 = vpack.c.b16 %v4402, %v4290
        %v4419 = vpack.c.b16 %v4403, %v4291
        %v4420 = vpack.c.b16 %v4404, %v4292
        %v4421 = vpack.c.b16 %v4405, %v4293
        %v4423 = vshrl.u32 %v4406, 16
        %v4425 = vrot.slane %v4423, 7
        %v4426 = vshll.u32 %v4406, 16
        %v4428 = vor.u32 %v4425, %v4426
        %v4430 = vshrl.u32 %v4407, 16
        %v4432 = vrot.slane %v4430, 7
        %v4433 = vshll.u32 %v4407, 16
        %v4435 = vor.u32 %v4432, %v4433
        %v4437 = vshrl.u32 %v4408, 16
        %v4439 = vrot.slane %v4437, 7
        %v4440 = vshll.u32 %v4408, 16
        %v4442 = vor.u32 %v4439, %v4440
        %v4444 = vshrl.u32 %v4409, 16
        %v4446 = vrot.slane %v4444, 7
        %v4447 = vshll.u32 %v4409, 16
        %v4449 = vor.u32 %v4446, %v4447
        %v4451 = vshrl.u32 %v4410, 16
        %v4453 = vrot.slane %v4451, 7
        %v4454 = vshll.u32 %v4410, 16
        %v4456 = vor.u32 %v4453, %v4454
        %v4458 = vshrl.u32 %v4411, 16
        %v4460 = vrot.slane %v4458, 7
        %v4461 = vshll.u32 %v4411, 16
        %v4463 = vor.u32 %v4460, %v4461
        %v4465 = vshrl.u32 %v4412, 16
        %v4467 = vrot.slane %v4465, 7
        %v4468 = vshll.u32 %v4412, 16
        %v4470 = vor.u32 %v4467, %v4468
        %v4472 = vshrl.u32 %v4413, 16
        %v4474 = vrot.slane %v4472, 7
        %v4475 = vshll.u32 %v4413, 16
        %v4477 = vor.u32 %v4474, %v4475
        %v4479 = vshrl.u32 %v4414, 16
        %v4481 = vrot.slane %v4479, 7
        %v4482 = vshll.u32 %v4414, 16
        %v4484 = vor.u32 %v4481, %v4482
        %v4486 = vshrl.u32 %v4415, 16
        %v4488 = vrot.slane %v4486, 7
        %v4489 = vshll.u32 %v4415, 16
        %v4491 = vor.u32 %v4488, %v4489
        %v4493 = vshrl.u32 %v4416, 16
        %v4495 = vrot.slane %v4493, 7
        %v4496 = vshll.u32 %v4416, 16
        %v4498 = vor.u32 %v4495, %v4496
        %v4500 = vshrl.u32 %v4417, 16
        %v4502 = vrot.slane %v4500, 7
        %v4503 = vshll.u32 %v4417, 16
        %v4505 = vor.u32 %v4502, %v4503
        %v4507 = vshrl.u32 %v4418, 16
        %v4509 = vrot.slane %v4507, 7
        %v4510 = vshll.u32 %v4418, 16
        %v4512 = vor.u32 %v4509, %v4510
        %v4514 = vshrl.u32 %v4419, 16
        %v4516 = vrot.slane %v4514, 7
        %v4517 = vshll.u32 %v4419, 16
        %v4519 = vor.u32 %v4516, %v4517
        %v4521 = vshrl.u32 %v4420, 16
        %v4523 = vrot.slane %v4521, 7
        %v4524 = vshll.u32 %v4420, 16
        %v4526 = vor.u32 %v4523, %v4524
        %v4528 = vshrl.u32 %v4421, 16
        %v4530 = vrot.slane %v4528, 7
        %v4531 = vshll.u32 %v4421, 16
        %v4533 = vor.u32 %v4530, %v4531
        %v4550 = vsel %vm418, %v4311, %v4428
        %v4551 = vsel %vm418, %v4314, %v4435
        %v4552 = vsel %vm418, %v4317, %v4442
        %v4553 = vsel %vm418, %v4320, %v4449
        %v4554 = vsel %vm418, %v4323, %v4456
        %v4555 = vsel %vm418, %v4326, %v4463
        %v4556 = vsel %vm418, %v4329, %v4470
        %v4557 = vsel %vm418, %v4332, %v4477
        %v4558 = vsel %vm418, %v4335, %v4484
        %v4559 = vsel %vm418, %v4338, %v4491
        %v4560 = vsel %vm418, %v4341, %v4498
        %v4561 = vsel %vm418, %v4344, %v4505
        %v4562 = vsel %vm418, %v4347, %v4512
        %v4563 = vsel %vm418, %v4350, %v4519
        %v4564 = vsel %vm418, %v4353, %v4526
        %v4565 = vsel %vm418, %v4356, %v4533
        %v4566 = vrot.slane %v4426, 1
        %v4567 = vor.u32 %v4423, %v4566
        %v4568 = vrot.slane %v4433, 1
        %v4569 = vor.u32 %v4430, %v4568
        %v4570 = vrot.slane %v4440, 1
        %v4571 = vor.u32 %v4437, %v4570
        %v4572 = vrot.slane %v4447, 1
        %v4573 = vor.u32 %v4444, %v4572
        %v4574 = vrot.slane %v4454, 1
        %v4575 = vor.u32 %v4451, %v4574
        %v4576 = vrot.slane %v4461, 1
        %v4577 = vor.u32 %v4458, %v4576
        %v4578 = vrot.slane %v4468, 1
        %v4579 = vor.u32 %v4465, %v4578
        %v4580 = vrot.slane %v4475, 1
        %v4581 = vor.u32 %v4472, %v4580
        %v4582 = vrot.slane %v4482, 1
        %v4583 = vor.u32 %v4479, %v4582
        %v4584 = vrot.slane %v4489, 1
        %v4585 = vor.u32 %v4486, %v4584
        %v4586 = vrot.slane %v4496, 1
        %v4587 = vor.u32 %v4493, %v4586
        %v4588 = vrot.slane %v4503, 1
        %v4589 = vor.u32 %v4500, %v4588
        %v4590 = vrot.slane %v4510, 1
        %v4591 = vor.u32 %v4507, %v4590
        %v4592 = vrot.slane %v4517, 1
        %v4593 = vor.u32 %v4514, %v4592
        %v4594 = vrot.slane %v4524, 1
        %v4595 = vor.u32 %v4521, %v4594
        %v4596 = vrot.slane %v4531, 1
        %v4597 = vor.u32 %v4528, %v4596
        %v4614 = vpack.c.b16 %v4390, %v4390
        %v4615 = vpack.c.b16 %v4391, %v4391
        %v4616 = vpack.c.b16 %v4392, %v4392
        %v4617 = vpack.c.b16 %v4393, %v4393
        %v4618 = vpack.c.b16 %v4394, %v4394
        %v4619 = vpack.c.b16 %v4395, %v4395
        %v4620 = vpack.c.b16 %v4396, %v4396
        %v4621 = vpack.c.b16 %v4397, %v4397
        %v4622 = vpack.c.b16 %v4398, %v4398
        %v4623 = vpack.c.b16 %v4399, %v4399
        %v4624 = vpack.c.b16 %v4400, %v4400
        %v4625 = vpack.c.b16 %v4401, %v4401
        %v4626 = vpack.c.b16 %v4402, %v4402
        %v4627 = vpack.c.b16 %v4403, %v4403
        %v4628 = vpack.c.b16 %v4404, %v4404
        %v4629 = vpack.c.b16 %v4405, %v4405
        %v4631 = vshll.u32 %v4614, 16
        %v4633 = vrot.slane %v4631, 4
        %v4635 = vshll.u32 %v4615, 16
        %v4637 = vrot.slane %v4635, 4
        %v4639 = vshll.u32 %v4616, 16
        %v4641 = vrot.slane %v4639, 4
        %v4643 = vshll.u32 %v4617, 16
        %v4645 = vrot.slane %v4643, 4
        %v4647 = vshll.u32 %v4618, 16
        %v4649 = vrot.slane %v4647, 4
        %v4651 = vshll.u32 %v4619, 16
        %v4653 = vrot.slane %v4651, 4
        %v4655 = vshll.u32 %v4620, 16
        %v4657 = vrot.slane %v4655, 4
        %v4659 = vshll.u32 %v4621, 16
        %v4661 = vrot.slane %v4659, 4
        %v4663 = vshll.u32 %v4622, 16
        %v4665 = vrot.slane %v4663, 4
        %v4667 = vshll.u32 %v4623, 16
        %v4669 = vrot.slane %v4667, 4
        %v4671 = vshll.u32 %v4624, 16
        %v4673 = vrot.slane %v4671, 4
        %v4675 = vshll.u32 %v4625, 16
        %v4677 = vrot.slane %v4675, 4
        %v4679 = vshll.u32 %v4626, 16
        %v4681 = vrot.slane %v4679, 4
        %v4683 = vshll.u32 %v4627, 16
        %v4685 = vrot.slane %v4683, 4
        %v4687 = vshll.u32 %v4628, 16
        %v4689 = vrot.slane %v4687, 4
        %v4691 = vshll.u32 %v4629, 16
        %v4693 = vrot.slane %v4691, 4
        %v4710 = vsel %vm501, %v4567, %v4633
        %v4711 = vsel %vm501, %v4569, %v4637
        %v4712 = vsel %vm501, %v4571, %v4641
        %v4713 = vsel %vm501, %v4573, %v4645
        %v4714 = vsel %vm501, %v4575, %v4649
        %v4715 = vsel %vm501, %v4577, %v4653
        %v4716 = vsel %vm501, %v4579, %v4657
        %v4717 = vsel %vm501, %v4581, %v4661
        %v4718 = vsel %vm501, %v4583, %v4665
        %v4719 = vsel %vm501, %v4585, %v4669
        %v4720 = vsel %vm501, %v4587, %v4673
        %v4721 = vsel %vm501, %v4589, %v4677
        %v4722 = vsel %vm501, %v4591, %v4681
        %v4723 = vsel %vm501, %v4593, %v4685
        %v4724 = vsel %vm501, %v4595, %v4689
        %v4725 = vsel %vm501, %v4597, %v4693
        %v4742 = vunpack.c.l.b16 %v4550
        %v4743 = vunpack.c.h.b16 %v4550
        %v4744 = vunpack.c.l.b16 %v4551
        %v4745 = vunpack.c.h.b16 %v4551
        %v4746 = vunpack.c.l.b16 %v4552
        %v4747 = vunpack.c.h.b16 %v4552
        %v4748 = vunpack.c.l.b16 %v4553
        %v4749 = vunpack.c.h.b16 %v4553
        %v4750 = vunpack.c.l.b16 %v4554
        %v4751 = vunpack.c.h.b16 %v4554
        %v4752 = vunpack.c.l.b16 %v4555
        %v4753 = vunpack.c.h.b16 %v4555
        %v4754 = vunpack.c.l.b16 %v4556
        %v4755 = vunpack.c.h.b16 %v4556
        %v4756 = vunpack.c.l.b16 %v4557
        %v4757 = vunpack.c.h.b16 %v4557
        %v4758 = vunpack.c.l.b16 %v4558
        %v4759 = vunpack.c.h.b16 %v4558
        %v4760 = vunpack.c.l.b16 %v4559
        %v4761 = vunpack.c.h.b16 %v4559
        %v4762 = vunpack.c.l.b16 %v4560
        %v4763 = vunpack.c.h.b16 %v4560
        %v4764 = vunpack.c.l.b16 %v4561
        %v4765 = vunpack.c.h.b16 %v4561
        %v4766 = vunpack.c.l.b16 %v4562
        %v4767 = vunpack.c.h.b16 %v4562
        %v4768 = vunpack.c.l.b16 %v4563
        %v4769 = vunpack.c.h.b16 %v4563
        %v4770 = vunpack.c.l.b16 %v4564
        %v4771 = vunpack.c.h.b16 %v4564
        %v4772 = vunpack.c.l.b16 %v4565
        %v4773 = vunpack.c.h.b16 %v4565
        %v4774 = vpack.c.b16 %v4742, %v4742
        %v4775 = vpack.c.b16 %v4743, %v4743
        %v4776 = vpack.c.b16 %v4744, %v4744
        %v4777 = vpack.c.b16 %v4745, %v4745
        %v4778 = vpack.c.b16 %v4746, %v4746
        %v4779 = vpack.c.b16 %v4747, %v4747
        %v4780 = vpack.c.b16 %v4748, %v4748
        %v4781 = vpack.c.b16 %v4749, %v4749
        %v4782 = vpack.c.b16 %v4750, %v4750
        %v4783 = vpack.c.b16 %v4751, %v4751
        %v4784 = vpack.c.b16 %v4752, %v4752
        %v4785 = vpack.c.b16 %v4753, %v4753
        %v4786 = vpack.c.b16 %v4754, %v4754
        %v4787 = vpack.c.b16 %v4755, %v4755
        %v4788 = vpack.c.b16 %v4756, %v4756
        %v4789 = vpack.c.b16 %v4757, %v4757
        %v4790 = vpack.c.b16 %v4758, %v4758
        %v4791 = vpack.c.b16 %v4759, %v4759
        %v4792 = vpack.c.b16 %v4760, %v4760
        %v4793 = vpack.c.b16 %v4761, %v4761
        %v4794 = vpack.c.b16 %v4762, %v4762
        %v4795 = vpack.c.b16 %v4763, %v4763
        %v4796 = vpack.c.b16 %v4764, %v4764
        %v4797 = vpack.c.b16 %v4765, %v4765
        %v4798 = vpack.c.b16 %v4766, %v4766
        %v4799 = vpack.c.b16 %v4767, %v4767
        %v4800 = vpack.c.b16 %v4768, %v4768
        %v4801 = vpack.c.b16 %v4769, %v4769
        %v4802 = vpack.c.b16 %v4770, %v4770
        %v4803 = vpack.c.b16 %v4771, %v4771
        %v4804 = vpack.c.b16 %v4772, %v4772
        %v4805 = vpack.c.b16 %v4773, %v4773
        %4838 = vst [vmem:[#allocation2] sm:$0xf] %v4774
        %4839 = vst [vmem:[#allocation2 + $0xc] sm:$0xf] %v4775
        %4840 = vst [vmem:[#allocation2 + $0x18] sm:$0xf] %v4776
        %4841 = vst [vmem:[#allocation2 + $0x24] sm:$0xf] %v4777
        %4842 = vst [vmem:[#allocation2 + $0x30] sm:$0xf] %v4774
        %4843 = vst [vmem:[#allocation2 + $0x3c] sm:$0xf] %v4775
        %4844 = vst [vmem:[#allocation2 + $0x48] sm:$0xf] %v4778
        %4845 = vst [vmem:[#allocation2 + $0x54] sm:$0xf] %v4779
        %4846 = vst [vmem:[#allocation2 + $0x60] sm:$0xf] %v4780
        %4847 = vst [vmem:[#allocation2 + $0x6c] sm:$0xf] %v4781
        %4848 = vst [vmem:[#allocation2 + $0x78] sm:$0xf] %v4782
        %4849 = vst [vmem:[#allocation2 + $0x84] sm:$0xf] %v4783
        %4850 = vst [vmem:[#allocation2 + $0x90] sm:$0xf] %v4784
        %4851 = vst [vmem:[#allocation2 + $0x9c] sm:$0xf] %v4785
        %4852 = vst [vmem:[#allocation2 + $0xa8] sm:$0xf] %v4786
        %4853 = vst [vmem:[#allocation2 + $0xb4] sm:$0xf] %v4787
        %4854 = vst [vmem:[#allocation2 + $0xc0] sm:$0xf] %v4788
        %4855 = vst [vmem:[#allocation2 + $0xcc] sm:$0xf] %v4789
        %4856 = vst [vmem:[#allocation2 + $0xd8] sm:$0xf] %v4790
        %4857 = vst [vmem:[#allocation2 + $0xe4] sm:$0xf] %v4791
        %4858 = vst [vmem:[#allocation2 + $0xf0] sm:$0xf] %v4792
        %4859 = vst [vmem:[#allocation2 + $0xfc] sm:$0xf] %v4793
        %4860 = vst [vmem:[#allocation2 + $0x108] sm:$0xf] %v4794
        %4861 = vst [vmem:[#allocation2 + $0x114] sm:$0xf] %v4795
        %4862 = vst [vmem:[#allocation2 + $0x120] sm:$0xf] %v4796
        %4863 = vst [vmem:[#allocation2 + $0x12c] sm:$0xf] %v4797
        %4864 = vst [vmem:[#allocation2 + $0x138] sm:$0xf] %v4798
        %4865 = vst [vmem:[#allocation2 + $0x144] sm:$0xf] %v4799
        %4866 = vst [vmem:[#allocation2 + $0x150] sm:$0xf] %v4800
        %4867 = vst [vmem:[#allocation2 + $0x15c] sm:$0xf] %v4801
        %4868 = vst [vmem:[#allocation2 + $0x168] sm:$0xf] %v4802
        %4869 = vst [vmem:[#allocation2 + $0x174] sm:$0xf] %v4803
        %4870 = vst [vmem:[#allocation2 + $0x180] sm:$0xf] %v4804
        %4871 = vst [vmem:[#allocation2 + $0x18c] sm:$0xf] %v4805
        %4872 = vst [vmem:[#allocation2 + $0x198] sm:$0xf] %v4802
        %4873 = vst [vmem:[#allocation2 + $0x1a4] sm:$0xf] %v4803
        %4874 = vst [vmem:[#allocation2 + $0x4] sm:$0xf] %v4232
        %4875 = vst [vmem:[#allocation2 + $0x10] sm:$0xf] %v4233
        %4876 = vst [vmem:[#allocation2 + $0x1c] sm:$0xf] %v4230
        %4877 = vst [vmem:[#allocation2 + $0x28] sm:$0xf] %v4231
        %4878 = vst [vmem:[#allocation2 + $0x34] sm:$0xf] %v4232
        %4879 = vst [vmem:[#allocation2 + $0x40] sm:$0xf] %v4233
        %4880 = vst [vmem:[#allocation2 + $0x4c] sm:$0xf] %v4234
        %4881 = vst [vmem:[#allocation2 + $0x58] sm:$0xf] %v4235
        %4882 = vst [vmem:[#allocation2 + $0x64] sm:$0xf] %v4236
        %4883 = vst [vmem:[#allocation2 + $0x70] sm:$0xf] %v4237
        %4884 = vst [vmem:[#allocation2 + $0x7c] sm:$0xf] %v4238
        %4885 = vst [vmem:[#allocation2 + $0x88] sm:$0xf] %v4239
        %4886 = vst [vmem:[#allocation2 + $0x94] sm:$0xf] %v4240
        %4887 = vst [vmem:[#allocation2 + $0xa0] sm:$0xf] %v4241
        %4888 = vst [vmem:[#allocation2 + $0xac] sm:$0xf] %v4242
        %4889 = vst [vmem:[#allocation2 + $0xb8] sm:$0xf] %v4243
        %4890 = vst [vmem:[#allocation2 + $0xc4] sm:$0xf] %v4244
        %4891 = vst [vmem:[#allocation2 + $0xd0] sm:$0xf] %v4245
        %4892 = vst [vmem:[#allocation2 + $0xdc] sm:$0xf] %v4246
        %4893 = vst [vmem:[#allocation2 + $0xe8] sm:$0xf] %v4247
        %4894 = vst [vmem:[#allocation2 + $0xf4] sm:$0xf] %v4248
        %4895 = vst [vmem:[#allocation2 + $0x100] sm:$0xf] %v4249
        %4896 = vst [vmem:[#allocation2 + $0x10c] sm:$0xf] %v4250
        %4897 = vst [vmem:[#allocation2 + $0x118] sm:$0xf] %v4251
        %4898 = vst [vmem:[#allocation2 + $0x124] sm:$0xf] %v4252
        %4899 = vst [vmem:[#allocation2 + $0x130] sm:$0xf] %v4253
        %4900 = vst [vmem:[#allocation2 + $0x13c] sm:$0xf] %v4254
        %4901 = vst [vmem:[#allocation2 + $0x148] sm:$0xf] %v4255
        %4902 = vst [vmem:[#allocation2 + $0x154] sm:$0xf] %v4256
        %4903 = vst [vmem:[#allocation2 + $0x160] sm:$0xf] %v4257
        %4904 = vst [vmem:[#allocation2 + $0x16c] sm:$0xf] %v4258
        %4905 = vst [vmem:[#allocation2 + $0x178] sm:$0xf] %v4259
        %4906 = vst [vmem:[#allocation2 + $0x184] sm:$0xf] %v4260
        %4907 = vst [vmem:[#allocation2 + $0x190] sm:$0xf] %v4261
        %4908 = vst [vmem:[#allocation2 + $0x19c] sm:$0xf] %v4258
        %4909 = vst [vmem:[#allocation2 + $0x1a8] sm:$0xf] %v4259
        %v4926 = vunpack.c.l.b16 %v4710
        %v4927 = vunpack.c.h.b16 %v4710
        %v4928 = vunpack.c.l.b16 %v4711
        %v4929 = vunpack.c.h.b16 %v4711
        %v4930 = vunpack.c.l.b16 %v4712
        %v4931 = vunpack.c.h.b16 %v4712
        %v4932 = vunpack.c.l.b16 %v4713
        %v4933 = vunpack.c.h.b16 %v4713
        %v4934 = vunpack.c.l.b16 %v4714
        %v4935 = vunpack.c.h.b16 %v4714
        %v4936 = vunpack.c.l.b16 %v4715
        %v4937 = vunpack.c.h.b16 %v4715
        %v4938 = vunpack.c.l.b16 %v4716
        %v4939 = vunpack.c.h.b16 %v4716
        %v4940 = vunpack.c.l.b16 %v4717
        %v4941 = vunpack.c.h.b16 %v4717
        %v4942 = vunpack.c.l.b16 %v4718
        %v4943 = vunpack.c.h.b16 %v4718
        %v4944 = vunpack.c.l.b16 %v4719
        %v4945 = vunpack.c.h.b16 %v4719
        %v4946 = vunpack.c.l.b16 %v4720
        %v4947 = vunpack.c.h.b16 %v4720
        %v4948 = vunpack.c.l.b16 %v4721
        %v4949 = vunpack.c.h.b16 %v4721
        %v4950 = vunpack.c.l.b16 %v4722
        %v4951 = vunpack.c.h.b16 %v4722
        %v4952 = vunpack.c.l.b16 %v4723
        %v4953 = vunpack.c.h.b16 %v4723
        %v4954 = vunpack.c.l.b16 %v4724
        %v4955 = vunpack.c.h.b16 %v4724
        %v4956 = vunpack.c.l.b16 %v4725
        %v4957 = vunpack.c.h.b16 %v4725
        %v4958 = vpack.c.b16 %v4926, %v4926
        %v4959 = vpack.c.b16 %v4927, %v4927
        %v4960 = vpack.c.b16 %v4928, %v4928
        %v4961 = vpack.c.b16 %v4929, %v4929
        %v4962 = vpack.c.b16 %v4930, %v4930
        %v4963 = vpack.c.b16 %v4931, %v4931
        %v4964 = vpack.c.b16 %v4932, %v4932
        %v4965 = vpack.c.b16 %v4933, %v4933
        %v4966 = vpack.c.b16 %v4934, %v4934
        %v4967 = vpack.c.b16 %v4935, %v4935
        %v4968 = vpack.c.b16 %v4936, %v4936
        %v4969 = vpack.c.b16 %v4937, %v4937
        %v4970 = vpack.c.b16 %v4938, %v4938
        %v4971 = vpack.c.b16 %v4939, %v4939
        %v4972 = vpack.c.b16 %v4940, %v4940
        %v4973 = vpack.c.b16 %v4941, %v4941
        %v4974 = vpack.c.b16 %v4942, %v4942
        %v4975 = vpack.c.b16 %v4943, %v4943
        %v4976 = vpack.c.b16 %v4944, %v4944
        %v4977 = vpack.c.b16 %v4945, %v4945
        %v4978 = vpack.c.b16 %v4946, %v4946
        %v4979 = vpack.c.b16 %v4947, %v4947
        %v4980 = vpack.c.b16 %v4948, %v4948
        %v4981 = vpack.c.b16 %v4949, %v4949
        %v4982 = vpack.c.b16 %v4950, %v4950
        %v4983 = vpack.c.b16 %v4951, %v4951
        %v4984 = vpack.c.b16 %v4952, %v4952
        %v4985 = vpack.c.b16 %v4953, %v4953
        %v4986 = vpack.c.b16 %v4954, %v4954
        %v4987 = vpack.c.b16 %v4955, %v4955
        %v4988 = vpack.c.b16 %v4956, %v4956
        %v4989 = vpack.c.b16 %v4957, %v4957
        %5022 = vst [vmem:[#allocation2 + $0x8] sm:$0xf] %v4958
        %5023 = vst [vmem:[#allocation2 + $0x14] sm:$0xf] %v4959
        %5024 = vst [vmem:[#allocation2 + $0x20] sm:$0xf] %v4960
        %5025 = vst [vmem:[#allocation2 + $0x2c] sm:$0xf] %v4961
        %5026 = vst [vmem:[#allocation2 + $0x38] sm:$0xf] %v4958
        %5027 = vst [vmem:[#allocation2 + $0x44] sm:$0xf] %v4959
        %5028 = vst [vmem:[#allocation2 + $0x50] sm:$0xf] %v4962
        %5029 = vst [vmem:[#allocation2 + $0x5c] sm:$0xf] %v4963
        %5030 = vst [vmem:[#allocation2 + $0x68] sm:$0xf] %v4964
        %5031 = vst [vmem:[#allocation2 + $0x74] sm:$0xf] %v4965
        %5032 = vst [vmem:[#allocation2 + $0x80] sm:$0xf] %v4966
        %5033 = vst [vmem:[#allocation2 + $0x8c] sm:$0xf] %v4967
        %5034 = vst [vmem:[#allocation2 + $0x98] sm:$0xf] %v4968
        %5035 = vst [vmem:[#allocation2 + $0xa4] sm:$0xf] %v4969
        %5036 = vst [vmem:[#allocation2 + $0xb0] sm:$0xf] %v4970
        %5037 = vst [vmem:[#allocation2 + $0xbc] sm:$0xf] %v4971
        %5038 = vst [vmem:[#allocation2 + $0xc8] sm:$0xf] %v4972
        %5039 = vst [vmem:[#allocation2 + $0xd4] sm:$0xf] %v4973
        %5040 = vst [vmem:[#allocation2 + $0xe0] sm:$0xf] %v4974
        %5041 = vst [vmem:[#allocation2 + $0xec] sm:$0xf] %v4975
        %5042 = vst [vmem:[#allocation2 + $0xf8] sm:$0xf] %v4976
        %5043 = vst [vmem:[#allocation2 + $0x104] sm:$0xf] %v4977
        %5044 = vst [vmem:[#allocation2 + $0x110] sm:$0xf] %v4978
        %5045 = vst [vmem:[#allocation2 + $0x11c] sm:$0xf] %v4979
        %5046 = vst [vmem:[#allocation2 + $0x128] sm:$0xf] %v4980
        %5047 = vst [vmem:[#allocation2 + $0x134] sm:$0xf] %v4981
        %5048 = vst [vmem:[#allocation2 + $0x140] sm:$0xf] %v4982
        %5049 = vst [vmem:[#allocation2 + $0x14c] sm:$0xf] %v4983
        %5050 = vst [vmem:[#allocation2 + $0x158] sm:$0xf] %v4984
        %5051 = vst [vmem:[#allocation2 + $0x164] sm:$0xf] %v4985
        %5052 = vst [vmem:[#allocation2 + $0x170] sm:$0xf] %v4986
        %5053 = vst [vmem:[#allocation2 + $0x17c] sm:$0xf] %v4987
        %5054 = vst [vmem:[#allocation2 + $0x188] sm:$0xf] %v4988
        %5055 = vst [vmem:[#allocation2 + $0x194] sm:$0xf] %v4989
        %5056 = vst [vmem:[#allocation2 + $0x1a0] sm:$0xf] %v4986
        %5057 = vst [vmem:[#allocation2 + $0x1ac] sm:$0xf] %v4987
        %v5058 = vld [vmem:[#allocation2] sm:$0xff]
        %v5059 = vld [vmem:[#allocation2 + $0x8] sm:$0xf]
        %v5060 = vld [vmem:[#allocation2 + $0xc] sm:$0xff]
        %v5061 = vld [vmem:[#allocation2 + $0x14] sm:$0xf]
        %v5062 = vld [vmem:[#allocation2 + $0x18] sm:$0xff]
        %v5063 = vld [vmem:[#allocation2 + $0x20] sm:$0xf]
        %v5064 = vld [vmem:[#allocation2 + $0x24] sm:$0xff]
        %v5065 = vld [vmem:[#allocation2 + $0x2c] sm:$0xf]
        %v5066 = vld [vmem:[#allocation2 + $0x30] sm:$0xff]
        %v5067 = vld [vmem:[#allocation2 + $0x38] sm:$0xf]
        %v5068 = vld [vmem:[#allocation2 + $0x3c] sm:$0xff]
        %v5069 = vld [vmem:[#allocation2 + $0x44] sm:$0xf]
        %v5070 = vld [vmem:[#allocation2 + $0x48] sm:$0xff]
        %v5071 = vld [vmem:[#allocation2 + $0x50] sm:$0xf]
        %v5072 = vld [vmem:[#allocation2 + $0x54] sm:$0xff]
        %v5073 = vld [vmem:[#allocation2 + $0x5c] sm:$0xf]
        %v5074 = vld [vmem:[#allocation2 + $0x60] sm:$0xff]
        %v5075 = vld [vmem:[#allocation2 + $0x68] sm:$0xf]
        %v5076 = vld [vmem:[#allocation2 + $0x6c] sm:$0xff]
        %v5077 = vld [vmem:[#allocation2 + $0x74] sm:$0xf]
        %v5078 = vld [vmem:[#allocation2 + $0x78] sm:$0xff]
        %v5079 = vld [vmem:[#allocation2 + $0x80] sm:$0xf]
        %v5080 = vld [vmem:[#allocation2 + $0x84] sm:$0xff]
        %v5081 = vld [vmem:[#allocation2 + $0x8c] sm:$0xf]
        %v5082 = vld [vmem:[#allocation2 + $0x90] sm:$0xff]
        %v5083 = vld [vmem:[#allocation2 + $0x98] sm:$0xf]
        %v5084 = vld [vmem:[#allocation2 + $0x9c] sm:$0xff]
        %v5085 = vld [vmem:[#allocation2 + $0xa4] sm:$0xf]
        %v5086 = vld [vmem:[#allocation2 + $0xa8] sm:$0xff]
        %v5087 = vld [vmem:[#allocation2 + $0xb0] sm:$0xf]
        %v5088 = vld [vmem:[#allocation2 + $0xb4] sm:$0xff]
        %v5089 = vld [vmem:[#allocation2 + $0xbc] sm:$0xf]
        %v5090 = vld [vmem:[%s3] sm:$0xf]
        %v5091 = vld [vmem:[%s3 + $0x4] sm:$0xf]
        %v5092 = vld [vmem:[%s3 + $0x8] sm:$0xf]
        %v5093 = vld [vmem:[%s3 + $0xc] sm:$0xf]
        %v5094 = vld [vmem:[%s3 + $0x10] sm:$0xf]
        %v5095 = vld [vmem:[%s3 + $0x14] sm:$0xf]
        %v5096 = vld [vmem:[%s3 + $0x18] sm:$0xf]
        %v5097 = vld [vmem:[%s3 + $0x1c] sm:$0xf]
        %v5098 = vld [vmem:[%s3 + $0x20] sm:$0xf]
        %v5099 = vld [vmem:[%s3 + $0x24] sm:$0xf]
        %v5100 = vld [vmem:[%s3 + $0x28] sm:$0xf]
        %v5101 = vld [vmem:[%s3 + $0x2c] sm:$0xf]
        %v5102 = vld [vmem:[%s3 + $0x30] sm:$0xf]
        %v5103 = vld [vmem:[%s3 + $0x34] sm:$0xf]
        %v5104 = vld [vmem:[%s3 + $0x38] sm:$0xf]
        %v5105 = vld [vmem:[%s3 + $0x3c] sm:$0xf]
        %v5106 = vld [vmem:[%s3 + $0x40] sm:$0xf]
        %v5107 = vld [vmem:[%s3 + $0x44] sm:$0xf]
        %v5108 = vld [vmem:[%s3 + $0x48] sm:$0xf]
        %v5109 = vld [vmem:[%s3 + $0x4c] sm:$0xf]
        %v5110 = vld [vmem:[%s3 + $0x50] sm:$0xf]
        %v5111 = vld [vmem:[%s3 + $0x54] sm:$0xf]
        %v5112 = vld [vmem:[%s3 + $0x58] sm:$0xf]
        %v5113 = vld [vmem:[%s3 + $0x5c] sm:$0xf]
        %v5114 = vld [vmem:[%s3 + $0x60] sm:$0xf]
        %v5115 = vld [vmem:[%s3 + $0x64] sm:$0xf]
        %v5116 = vld [vmem:[%s3 + $0x68] sm:$0xf]
        %v5117 = vld [vmem:[%s3 + $0x6c] sm:$0xf]
        %v5118 = vld [vmem:[%s3 + $0x70] sm:$0xf]
        %v5119 = vld [vmem:[%s3 + $0x74] sm:$0xf]
        %v5120 = vld [vmem:[%s3 + $0x78] sm:$0xf]
        %v5121 = vld [vmem:[%s3 + $0x7c] sm:$0xf]
        %v5122 = vld [vmem:[%s3 + $0x80] sm:$0xf]
        %v5123 = vld [vmem:[%s3 + $0x84] sm:$0xf]
        %v5124 = vld [vmem:[%s3 + $0x88] sm:$0xf]
        %v5125 = vld [vmem:[%s3 + $0x8c] sm:$0xf]
        %v5126 = vld [vmem:[%s3 + $0x90] sm:$0xf]
        %v5127 = vld [vmem:[%s3 + $0x94] sm:$0xf]
        %v5128 = vld [vmem:[%s3 + $0x98] sm:$0xf]
        %v5129 = vld [vmem:[%s3 + $0x9c] sm:$0xf]
        %v5130 = vld [vmem:[%s3 + $0xa0] sm:$0xf]
        %v5131 = vld [vmem:[%s3 + $0xa4] sm:$0xf]
        %v5132 = vld [vmem:[%s3 + $0xa8] sm:$0xf]
        %v5133 = vld [vmem:[%s3 + $0xac] sm:$0xf]
        %v5134 = vld [vmem:[%s3 + $0xb0] sm:$0xf]
        %v5135 = vld [vmem:[%s3 + $0xb4] sm:$0xf]
        %v5136 = vld [vmem:[%s3 + $0xb8] sm:$0xf]
        %v5137 = vld [vmem:[%s3 + $0xbc] sm:$0xf]
        %v5138 = vld [vmem:[#allocation2 + $0xc0] sm:$0xff]
        %v5139 = vld [vmem:[#allocation2 + $0xc8] sm:$0xf]
        %v5140 = vld [vmem:[#allocation2 + $0xcc] sm:$0xff]
        %v5141 = vld [vmem:[#allocation2 + $0xd4] sm:$0xf]
        %s5142 = scalar_lea.vmem %s3, 192
        %v5143 = vld [vmem:[%s5142] sm:$0xf]
        %v5144 = vld [vmem:[%s5142 + $0x4] sm:$0xf]
        %v5145 = vld [vmem:[%s5142 + $0x8] sm:$0xf]
        %v5146 = vld [vmem:[%s5142 + $0xc] sm:$0xf]
        %v5147 = vld [vmem:[%s5142 + $0x10] sm:$0xf]
        %v5148 = vld [vmem:[%s5142 + $0x14] sm:$0xf]
        %v5149 = vld [vmem:[%s5142 + $0x18] sm:$0xf]
        %v5150 = vld [vmem:[%s5142 + $0x1c] sm:$0xf]
        %v5151 = vld [vmem:[%s5142 + $0x20] sm:$0xf]
        %v5152 = vld [vmem:[%s5142 + $0x24] sm:$0xf]
        %v5153 = vld [vmem:[%s5142 + $0x28] sm:$0xf]
        %v5154 = vld [vmem:[%s5142 + $0x2c] sm:$0xf]
        %v5155 = vld [vmem:[%s5142 + $0x30] sm:$0xf]
        %v5156 = vld [vmem:[%s5142 + $0x34] sm:$0xf]
        %v5157 = vld [vmem:[%s5142 + $0x38] sm:$0xf]
        %v5158 = vld [vmem:[%s5142 + $0x3c] sm:$0xf]
        %v5159 = vld [vmem:[%s5142 + $0x40] sm:$0xf]
        %v5160 = vld [vmem:[%s5142 + $0x44] sm:$0xf]
        %v5161 = vld [vmem:[%s5142 + $0x48] sm:$0xf]
        %v5162 = vld [vmem:[%s5142 + $0x4c] sm:$0xf]
        %v5163 = vld [vmem:[%s5142 + $0x50] sm:$0xf]
        %v5164 = vld [vmem:[%s5142 + $0x54] sm:$0xf]
        %v5165 = vld [vmem:[%s5142 + $0x58] sm:$0xf]
        %v5166 = vld [vmem:[%s5142 + $0x5c] sm:$0xf]
        %v5167 = vld [vmem:[%s5142 + $0x60] sm:$0xf]
        %v5168 = vld [vmem:[%s5142 + $0x64] sm:$0xf]
        %v5169 = vld [vmem:[%s5142 + $0x68] sm:$0xf]
        %v5170 = vld [vmem:[%s5142 + $0x6c] sm:$0xf]
        %v5171 = vld [vmem:[%s5142 + $0x70] sm:$0xf]
        %v5172 = vld [vmem:[%s5142 + $0x74] sm:$0xf]
        %v5173 = vld [vmem:[%s5142 + $0x78] sm:$0xf]
        %v5174 = vld [vmem:[%s5142 + $0x7c] sm:$0xf]
        %v5175 = vld [vmem:[%s5142 + $0x80] sm:$0xf]
        %v5176 = vld [vmem:[%s5142 + $0x84] sm:$0xf]
        %v5177 = vld [vmem:[%s5142 + $0x88] sm:$0xf]
        %v5178 = vld [vmem:[%s5142 + $0x8c] sm:$0xf]
        %v5179 = vld [vmem:[%s5142 + $0x90] sm:$0xf]
        %v5180 = vld [vmem:[%s5142 + $0x94] sm:$0xf]
        %v5181 = vld [vmem:[%s5142 + $0x98] sm:$0xf]
        %v5182 = vld [vmem:[%s5142 + $0x9c] sm:$0xf]
        %v5183 = vld [vmem:[%s5142 + $0xa0] sm:$0xf]
        %v5184 = vld [vmem:[%s5142 + $0xa4] sm:$0xf]
        %v5185 = vld [vmem:[%s5142 + $0xa8] sm:$0xf]
        %v5186 = vld [vmem:[%s5142 + $0xac] sm:$0xf]
        %v5187 = vld [vmem:[%s5142 + $0xb0] sm:$0xf]
        %v5188 = vld [vmem:[%s5142 + $0xb4] sm:$0xf]
        %v5189 = vld [vmem:[%s5142 + $0xb8] sm:$0xf]
        %v5190 = vld [vmem:[%s5142 + $0xbc] sm:$0xf]
        %v5223 = vunpack.c.l.b16 %v5062
        %v5224 = vunpack.c.h.b16 %v5062
        %v5225 = vunpack.c.l.b16 %v5063
        %v5226 = vunpack.c.l.b16 %v5064
        %v5227 = vunpack.c.h.b16 %v5064
        %v5228 = vunpack.c.l.b16 %v5065
        %v5229 = vunpack.c.l.b16 %v5066
        %v5230 = vunpack.c.h.b16 %v5066
        %v5231 = vunpack.c.l.b16 %v5067
        %v5232 = vunpack.c.l.b16 %v5068
        %v5233 = vunpack.c.h.b16 %v5068
        %v5234 = vunpack.c.l.b16 %v5069
        %v5235 = vunpack.c.l.b16 %v5070
        %v5236 = vunpack.c.h.b16 %v5070
        %v5237 = vunpack.c.l.b16 %v5071
        %v5238 = vunpack.c.l.b16 %v5072
        %v5239 = vunpack.c.h.b16 %v5072
        %v5240 = vunpack.c.l.b16 %v5073
        %v5241 = vunpack.c.l.b16 %v5074
        %v5242 = vunpack.c.h.b16 %v5074
        %v5243 = vunpack.c.l.b16 %v5075
        %v5244 = vunpack.c.l.b16 %v5076
        %v5245 = vunpack.c.h.b16 %v5076
        %v5246 = vunpack.c.l.b16 %v5077
        %v5247 = vunpack.c.l.b16 %v5078
        %v5248 = vunpack.c.h.b16 %v5078
        %v5249 = vunpack.c.l.b16 %v5079
        %v5250 = vunpack.c.l.b16 %v5080
        %v5251 = vunpack.c.h.b16 %v5080
        %v5252 = vunpack.c.l.b16 %v5081
        %v5253 = vunpack.c.l.b16 %v5082
        %v5254 = vunpack.c.h.b16 %v5082
        %v5255 = vunpack.c.l.b16 %v5083
        %v5256 = vunpack.c.l.b16 %v5084
        %v5257 = vunpack.c.h.b16 %v5084
        %v5258 = vunpack.c.l.b16 %v5085
        %v5259 = vunpack.c.l.b16 %v5086
        %v5260 = vunpack.c.h.b16 %v5086
        %v5261 = vunpack.c.l.b16 %v5087
        %v5262 = vunpack.c.l.b16 %v5088
        %v5263 = vunpack.c.h.b16 %v5088
        %v5264 = vunpack.c.l.b16 %v5089
        %v5265 = vunpack.c.l.b16 %v5138
        %v5266 = vunpack.c.h.b16 %v5138
        %v5267 = vunpack.c.l.b16 %v5139
        %v5268 = vunpack.c.l.b16 %v5140
        %v5269 = vunpack.c.h.b16 %v5140
        %v5270 = vunpack.c.l.b16 %v5141
        %v5271 = vpack.c.b16 %v5226, %v5223
        %v5272 = vpack.c.b16 %v5227, %v5224
        %v5273 = vpack.c.b16 %v5228, %v5225
        %v5274 = vpack.c.b16 %v5232, %v5229
        %v5275 = vpack.c.b16 %v5233, %v5230
        %v5276 = vpack.c.b16 %v5234, %v5231
        %v5277 = vpack.c.b16 %v5238, %v5235
        %v5278 = vpack.c.b16 %v5239, %v5236
        %v5279 = vpack.c.b16 %v5240, %v5237
        %v5280 = vpack.c.b16 %v5244, %v5241
        %v5281 = vpack.c.b16 %v5245, %v5242
        %v5282 = vpack.c.b16 %v5246, %v5243
        %v5283 = vpack.c.b16 %v5250, %v5247
        %v5284 = vpack.c.b16 %v5251, %v5248
        %v5285 = vpack.c.b16 %v5252, %v5249
        %v5286 = vpack.c.b16 %v5256, %v5253
        %v5287 = vpack.c.b16 %v5257, %v5254
        %v5288 = vpack.c.b16 %v5258, %v5255
        %v5289 = vpack.c.b16 %v5262, %v5259
        %v5290 = vpack.c.b16 %v5263, %v5260
        %v5291 = vpack.c.b16 %v5264, %v5261
        %v5292 = vpack.c.b16 %v5268, %v5265
        %v5293 = vpack.c.b16 %v5269, %v5266
        %v5294 = vpack.c.b16 %v5270, %v5267
        %v5367 = vunpack.c.l.b16 %v5143
        %v5368 = vunpack.c.l.b16 %v5144
        %v5369 = vunpack.c.l.b16 %v5145
        %v5370 = vunpack.c.l.b16 %v5146
        %v5371 = vunpack.c.l.b16 %v5147
        %v5372 = vunpack.c.l.b16 %v5148
        %v5373 = vunpack.c.l.b16 %v5149
        %v5374 = vunpack.c.l.b16 %v5150
        %v5375 = vunpack.c.l.b16 %v5151
        %v5376 = vunpack.c.l.b16 %v5152
        %v5377 = vunpack.c.l.b16 %v5153
        %v5378 = vunpack.c.l.b16 %v5154
        %v5379 = vunpack.c.l.b16 %v5155
        %v5380 = vunpack.c.l.b16 %v5156
        %v5381 = vunpack.c.l.b16 %v5157
        %v5382 = vunpack.c.l.b16 %v5158
        %v5383 = vunpack.c.l.b16 %v5159
        %v5384 = vunpack.c.l.b16 %v5160
        %v5385 = vunpack.c.l.b16 %v5161
        %v5386 = vunpack.c.l.b16 %v5162
        %v5387 = vunpack.c.l.b16 %v5163
        %v5388 = vunpack.c.l.b16 %v5164
        %v5389 = vunpack.c.l.b16 %v5165
        %v5390 = vunpack.c.l.b16 %v5166
        %v5391 = vunpack.c.l.b16 %v5167
        %v5392 = vunpack.c.l.b16 %v5168
        %v5393 = vunpack.c.l.b16 %v5169
        %v5394 = vunpack.c.l.b16 %v5170
        %v5395 = vunpack.c.l.b16 %v5171
        %v5396 = vunpack.c.l.b16 %v5172
        %v5397 = vunpack.c.l.b16 %v5173
        %v5398 = vunpack.c.l.b16 %v5174
        %v5399 = vunpack.c.l.b16 %v5175
        %v5400 = vunpack.c.l.b16 %v5176
        %v5401 = vunpack.c.l.b16 %v5177
        %v5402 = vunpack.c.l.b16 %v5178
        %v5403 = vunpack.c.l.b16 %v5179
        %v5404 = vunpack.c.l.b16 %v5180
        %v5405 = vunpack.c.l.b16 %v5181
        %v5406 = vunpack.c.l.b16 %v5182
        %v5407 = vunpack.c.l.b16 %v5183
        %v5408 = vunpack.c.l.b16 %v5184
        %v5409 = vunpack.c.l.b16 %v5185
        %v5410 = vunpack.c.l.b16 %v5186
        %v5411 = vunpack.c.l.b16 %v5187
        %v5412 = vunpack.c.l.b16 %v5188
        %v5413 = vunpack.c.l.b16 %v5189
        %v5414 = vunpack.c.l.b16 %v5190
        %v5415 = vpack.c.b16 %v5368, %v5367
        %v5416 = vpack.c.b16 %v5370, %v5369
        %v5417 = vpack.c.b16 %v5372, %v5371
        %v5418 = vpack.c.b16 %v5374, %v5373
        %v5419 = vpack.c.b16 %v5376, %v5375
        %v5420 = vpack.c.b16 %v5378, %v5377
        %v5421 = vpack.c.b16 %v5380, %v5379
        %v5422 = vpack.c.b16 %v5382, %v5381
        %v5423 = vpack.c.b16 %v5384, %v5383
        %v5424 = vpack.c.b16 %v5386, %v5385
        %v5425 = vpack.c.b16 %v5388, %v5387
        %v5426 = vpack.c.b16 %v5390, %v5389
        %v5427 = vpack.c.b16 %v5392, %v5391
        %v5428 = vpack.c.b16 %v5394, %v5393
        %v5429 = vpack.c.b16 %v5396, %v5395
        %v5430 = vpack.c.b16 %v5398, %v5397
        %v5431 = vpack.c.b16 %v5400, %v5399
        %v5432 = vpack.c.b16 %v5402, %v5401
        %v5433 = vpack.c.b16 %v5404, %v5403
        %v5434 = vpack.c.b16 %v5406, %v5405
        %v5435 = vpack.c.b16 %v5408, %v5407
        %v5436 = vpack.c.b16 %v5410, %v5409
        %v5437 = vpack.c.b16 %v5412, %v5411
        %v5438 = vpack.c.b16 %v5414, %v5413
        %5463 = vmatprep.subr.bf16.mxu0 0
        %5464 = vmatpush1.bf16.msra.mxu0 %v5422
        %5465 = vmatprep.subr.bf16.mxu0 0
        %5466 = vmatpush1.bf16.msra.mxu0 %v5421
        %5467 = vmatprep.subr.bf16.mxu0 0
        %5468 = vmatpush1.bf16.msra.mxu0 %v5420
        %5469 = vmatprep.subr.bf16.mxu0 0
        %5470 = vmatpush1.bf16.msra.mxu0 %v5419
        %5471 = vmatprep.subr.bf16.mxu0 0
        %5472 = vmatpush1.bf16.msra.mxu0 %v5418
        %5473 = vmatprep.subr.bf16.mxu0 0
        %5474 = vmatpush1.bf16.msra.mxu0 %v5417
        %5475 = vmatprep.subr.bf16.mxu0 0
        %5476 = vmatpush1.bf16.msra.mxu0 %v5416
        %5477 = vmatprep.subr.bf16.mxu0 0
        %5478 = vmatpush1.bf16.msra.mxu0 %v5415
        %5479 = vmatprep.subr.bf16.mxu0 0
        %5480 = vmatpush2.bf16.msra.mxu0 %v5430
        %5481 = vmatprep.subr.bf16.mxu0 0
        %5482 = vmatpush2.bf16.msra.mxu0 %v5429
        %5483 = vmatprep.subr.bf16.mxu0 0
        %5484 = vmatpush2.bf16.msra.mxu0 %v5428
        %5485 = vmatprep.subr.bf16.mxu0 0
        %5486 = vmatpush2.bf16.msra.mxu0 %v5427
        %5487 = vmatprep.subr.bf16.mxu0 0
        %5488 = vmatpush2.bf16.msra.mxu0 %v5426
        %5489 = vmatprep.subr.bf16.mxu0 0
        %5490 = vmatpush2.bf16.msra.mxu0 %v5425
        %5491 = vmatprep.subr.bf16.mxu0 0
        %5492 = vmatpush2.bf16.msra.mxu0 %v5424
        %5493 = vmatprep.subr.bf16.mxu0 0
        %5494 = vmatpush2.bf16.msra.mxu0 %v5423
        %5495 = vmatprep.mubr.bf16.mxu0 %v5272
        %5496 = vmatmul.mubr.bf16.gmra.mxu0 %v5271
        %v5497 = vpop.f32.mrf.mxu0
        %v5498 = vadd.f32 0.0, %v5497
        %v5499 = vpop.f32.mrf.mxu0
        %v5500 = vpop.f32.mrf.mxu0
        %v5501 = vadd.f32 0.0, %v5500
        %v5502 = vpop.f32.mrf.mxu0
        %5503 = vmatprep.mubr.bf16.mxu0 %v5275
        %5504 = vmatmul.mubr.bf16.gmra.mxu0 %v5274
        %v5505 = vpop.f32.mrf.mxu0
        %v5506 = vadd.f32 0.0, %v5505
        %v5507 = vpop.f32.mrf.mxu0
        %v5508 = vpop.f32.mrf.mxu0
        %v5509 = vadd.f32 0.0, %v5508
        %v5510 = vpop.f32.mrf.mxu0
        %5511 = vmatprep.mubr.bf16.mxu0 %v5278
        %5512 = vmatmul.mubr.bf16.gmra.mxu0 %v5277
        %v5513 = vpop.f32.mrf.mxu0
        %v5514 = vadd.f32 0.0, %v5513
        %v5515 = vpop.f32.mrf.mxu0
        %v5516 = vpop.f32.mrf.mxu0
        %v5517 = vadd.f32 0.0, %v5516
        %v5518 = vpop.f32.mrf.mxu0
        %5519 = vmatprep.mubr.bf16.mxu0 %v5281
        %5520 = vmatmul.mubr.bf16.gmra.mxu0 %v5280
        %v5521 = vpop.f32.mrf.mxu0
        %v5522 = vadd.f32 0.0, %v5521
        %v5523 = vpop.f32.mrf.mxu0
        %v5524 = vpop.f32.mrf.mxu0
        %v5525 = vadd.f32 0.0, %v5524
        %v5526 = vpop.f32.mrf.mxu0
        %5527 = vmatprep.mubr.bf16.mxu0 %v5284
        %5528 = vmatmul.mubr.bf16.gmra.mxu0 %v5283
        %v5529 = vpop.f32.mrf.mxu0
        %v5530 = vadd.f32 0.0, %v5529
        %v5531 = vpop.f32.mrf.mxu0
        %v5532 = vpop.f32.mrf.mxu0
        %v5533 = vadd.f32 0.0, %v5532
        %v5534 = vpop.f32.mrf.mxu0
        %5535 = vmatprep.mubr.bf16.mxu0 %v5287
        %5536 = vmatmul.mubr.bf16.gmra.mxu0 %v5286
        %v5537 = vpop.f32.mrf.mxu0
        %v5538 = vadd.f32 0.0, %v5537
        %v5539 = vpop.f32.mrf.mxu0
        %v5540 = vpop.f32.mrf.mxu0
        %v5541 = vadd.f32 0.0, %v5540
        %v5542 = vpop.f32.mrf.mxu0
        %5543 = vmatprep.mubr.bf16.mxu0 %v5290
        %5544 = vmatmul.mubr.bf16.gmra.mxu0 %v5289
        %v5545 = vpop.f32.mrf.mxu0
        %v5546 = vadd.f32 0.0, %v5545
        %v5547 = vpop.f32.mrf.mxu0
        %v5548 = vpop.f32.mrf.mxu0
        %v5549 = vadd.f32 0.0, %v5548
        %v5550 = vpop.f32.mrf.mxu0
        %5551 = vmatprep.mubr.bf16.mxu0 %v5293
        %5552 = vmatmul.mubr.bf16.gmra.mxu0 %v5292
        %v5553 = vpop.f32.mrf.mxu0
        %v5554 = vadd.f32 0.0, %v5553
        %v5555 = vpop.f32.mrf.mxu0
        %v5556 = vpop.f32.mrf.mxu0
        %v5557 = vadd.f32 0.0, %v5556
        %v5558 = vpop.f32.mrf.mxu0
        %5559 = vdwg.mxu0
        %5560 = vmatprep.subr.bf16.mxu0 0
        %5561 = vmatpush1.bf16.msra.mxu0 %v5438
        %5562 = vmatprep.subr.bf16.mxu0 0
        %5563 = vmatpush1.bf16.msra.mxu0 %v5437
        %5564 = vmatprep.subr.bf16.mxu0 0
        %5565 = vmatpush1.bf16.msra.mxu0 %v5436
        %5566 = vmatprep.subr.bf16.mxu0 0
        %5567 = vmatpush1.bf16.msra.mxu0 %v5435
        %5568 = vmatprep.subr.bf16.mxu0 0
        %5569 = vmatpush1.bf16.msra.mxu0 %v5434
        %5570 = vmatprep.subr.bf16.mxu0 0
        %5571 = vmatpush1.bf16.msra.mxu0 %v5433
        %5572 = vmatprep.subr.bf16.mxu0 0
        %5573 = vmatpush1.bf16.msra.mxu0 %v5432
        %5574 = vmatprep.subr.bf16.mxu0 0
        %5575 = vmatpush1.bf16.msra.mxu0 %v5431
        %5576 = vmatprep.subr.bf16.mxu0 0
        %5577 = vmatpush2.bf16.msra.mxu0 0
        %5578 = vmatprep.subr.bf16.mxu0 0
        %5579 = vmatpush2.bf16.msra.mxu0 0
        %5580 = vmatprep.subr.bf16.mxu0 0
        %5581 = vmatpush2.bf16.msra.mxu0 0
        %5582 = vmatprep.subr.bf16.mxu0 0
        %5583 = vmatpush2.bf16.msra.mxu0 0
        %5584 = vmatprep.subr.bf16.mxu0 0
        %5585 = vmatpush2.bf16.msra.mxu0 0
        %5586 = vmatprep.subr.bf16.mxu0 0
        %5587 = vmatpush2.bf16.msra.mxu0 0
        %5588 = vmatprep.subr.bf16.mxu0 0
        %5589 = vmatpush2.bf16.msra.mxu0 0
        %5590 = vmatprep.subr.bf16.mxu0 0
        %5591 = vmatpush2.bf16.msra.mxu0 0
        %5592 = vmatprep.mubr.bf16.mxu0 0
        %5593 = vmatmul.mubr.bf16.gmra.mxu0 %v5273
        %v5594 = vpop.f32.mrf.mxu0
        %v5595 = vadd.f32 %v5498, %v5594
        %v5596 = vpop.f32.mrf.mxu0
        %v5597 = vpop.f32.mrf.mxu0
        %v5598 = vadd.f32 %v5501, %v5597
        %v5599 = vpop.f32.mrf.mxu0
        %5600 = vmatprep.mubr.bf16.mxu0 0
        %5601 = vmatmul.mubr.bf16.gmra.mxu0 %v5276
        %v5602 = vpop.f32.mrf.mxu0
        %v5603 = vadd.f32 %v5506, %v5602
        %v5604 = vpop.f32.mrf.mxu0
        %v5605 = vpop.f32.mrf.mxu0
        %v5606 = vadd.f32 %v5509, %v5605
        %v5607 = vpop.f32.mrf.mxu0
        %5608 = vmatprep.mubr.bf16.mxu0 0
        %5609 = vmatmul.mubr.bf16.gmra.mxu0 %v5279
        %v5610 = vpop.f32.mrf.mxu0
        %v5611 = vadd.f32 %v5514, %v5610
        %v5612 = vpop.f32.mrf.mxu0
        %v5613 = vpop.f32.mrf.mxu0
        %v5614 = vadd.f32 %v5517, %v5613
        %v5615 = vpop.f32.mrf.mxu0
        %5616 = vmatprep.mubr.bf16.mxu0 0
        %5617 = vmatmul.mubr.bf16.gmra.mxu0 %v5282
        %v5618 = vpop.f32.mrf.mxu0
        %v5619 = vadd.f32 %v5522, %v5618
        %v5620 = vpop.f32.mrf.mxu0
        %v5621 = vpop.f32.mrf.mxu0
        %v5622 = vadd.f32 %v5525, %v5621
        %v5623 = vpop.f32.mrf.mxu0
        %5624 = vmatprep.mubr.bf16.mxu0 0
        %5625 = vmatmul.mubr.bf16.gmra.mxu0 %v5285
        %v5626 = vpop.f32.mrf.mxu0
        %v5627 = vadd.f32 %v5530, %v5626
        %v5628 = vpop.f32.mrf.mxu0
        %v5629 = vpop.f32.mrf.mxu0
        %v5630 = vadd.f32 %v5533, %v5629
        %v5631 = vpop.f32.mrf.mxu0
        %5632 = vmatprep.mubr.bf16.mxu0 0
        %5633 = vmatmul.mubr.bf16.gmra.mxu0 %v5288
        %v5634 = vpop.f32.mrf.mxu0
        %v5635 = vadd.f32 %v5538, %v5634
        %v5636 = vpop.f32.mrf.mxu0
        %v5637 = vpop.f32.mrf.mxu0
        %v5638 = vadd.f32 %v5541, %v5637
        %v5639 = vpop.f32.mrf.mxu0
        %5640 = vmatprep.mubr.bf16.mxu0 0
        %5641 = vmatmul.mubr.bf16.gmra.mxu0 %v5291
        %v5642 = vpop.f32.mrf.mxu0
        %v5643 = vadd.f32 %v5546, %v5642
        %v5644 = vpop.f32.mrf.mxu0
        %v5645 = vpop.f32.mrf.mxu0
        %v5646 = vadd.f32 %v5549, %v5645
        %v5647 = vpop.f32.mrf.mxu0
        %5648 = vmatprep.mubr.bf16.mxu0 0
        %5649 = vmatmul.mubr.bf16.gmra.mxu0 %v5294
        %v5650 = vpop.f32.mrf.mxu0
        %v5651 = vadd.f32 %v5554, %v5650
        %v5652 = vpop.f32.mrf.mxu0
        %v5653 = vpop.f32.mrf.mxu0
        %v5654 = vadd.f32 %v5557, %v5653
        %v5655 = vpop.f32.mrf.mxu0
        %5656 = vdwg.mxu0
        %v5661 = vunpack.c.l.b16 %v5058
        %v5662 = vunpack.c.h.b16 %v5058
        %v5663 = vunpack.c.l.b16 %v5059
        %v5664 = vunpack.c.l.b16 %v5060
        %v5665 = vunpack.c.h.b16 %v5060
        %v5666 = vunpack.c.l.b16 %v5061
        %v5667 = vpack.c.b16 %v5664, %v5661
        %v5668 = vpack.c.b16 %v5665, %v5662
        %v5669 = vpack.c.b16 %v5666, %v5663
        %v5721 = vunpack.c.l.b16 %v5090
        %v5722 = vunpack.c.l.b16 %v5091
        %v5723 = vunpack.c.l.b16 %v5092
        %v5724 = vunpack.c.l.b16 %v5093
        %v5725 = vunpack.c.l.b16 %v5094
        %v5726 = vunpack.c.l.b16 %v5095
        %v5727 = vunpack.c.l.b16 %v5096
        %v5728 = vunpack.c.l.b16 %v5097
        %v5729 = vunpack.c.l.b16 %v5098
        %v5730 = vunpack.c.l.b16 %v5099
        %v5731 = vunpack.c.l.b16 %v5100
        %v5732 = vunpack.c.l.b16 %v5101
        %v5733 = vunpack.c.l.b16 %v5102
        %v5734 = vunpack.c.l.b16 %v5103
        %v5735 = vunpack.c.l.b16 %v5104
        %v5736 = vunpack.c.l.b16 %v5105
        %v5737 = vunpack.c.l.b16 %v5106
        %v5738 = vunpack.c.l.b16 %v5107
        %v5739 = vunpack.c.l.b16 %v5108
        %v5740 = vunpack.c.l.b16 %v5109
        %v5741 = vunpack.c.l.b16 %v5110
        %v5742 = vunpack.c.l.b16 %v5111
        %v5743 = vunpack.c.l.b16 %v5112
        %v5744 = vunpack.c.l.b16 %v5113
        %v5745 = vunpack.c.l.b16 %v5114
        %v5746 = vunpack.c.l.b16 %v5115
        %v5747 = vunpack.c.l.b16 %v5116
        %v5748 = vunpack.c.l.b16 %v5117
        %v5749 = vunpack.c.l.b16 %v5118
        %v5750 = vunpack.c.l.b16 %v5119
        %v5751 = vunpack.c.l.b16 %v5120
        %v5752 = vunpack.c.l.b16 %v5121
        %v5753 = vunpack.c.l.b16 %v5122
        %v5754 = vunpack.c.l.b16 %v5123
        %v5755 = vunpack.c.l.b16 %v5124
        %v5756 = vunpack.c.l.b16 %v5125
        %v5757 = vunpack.c.l.b16 %v5126
        %v5758 = vunpack.c.l.b16 %v5127
        %v5759 = vunpack.c.l.b16 %v5128
        %v5760 = vunpack.c.l.b16 %v5129
        %v5761 = vunpack.c.l.b16 %v5130
        %v5762 = vunpack.c.l.b16 %v5131
        %v5763 = vunpack.c.l.b16 %v5132
        %v5764 = vunpack.c.l.b16 %v5133
        %v5765 = vunpack.c.l.b16 %v5134
        %v5766 = vunpack.c.l.b16 %v5135
        %v5767 = vunpack.c.l.b16 %v5136
        %v5768 = vunpack.c.l.b16 %v5137
        %v5769 = vpack.c.b16 %v5722, %v5721
        %v5770 = vpack.c.b16 %v5724, %v5723
        %v5771 = vpack.c.b16 %v5726, %v5725
        %v5772 = vpack.c.b16 %v5728, %v5727
        %v5773 = vpack.c.b16 %v5730, %v5729
        %v5774 = vpack.c.b16 %v5732, %v5731
        %v5775 = vpack.c.b16 %v5734, %v5733
        %v5776 = vpack.c.b16 %v5736, %v5735
        %v5777 = vpack.c.b16 %v5738, %v5737
        %v5778 = vpack.c.b16 %v5740, %v5739
        %v5779 = vpack.c.b16 %v5742, %v5741
        %v5780 = vpack.c.b16 %v5744, %v5743
        %v5781 = vpack.c.b16 %v5746, %v5745
        %v5782 = vpack.c.b16 %v5748, %v5747
        %v5783 = vpack.c.b16 %v5750, %v5749
        %v5784 = vpack.c.b16 %v5752, %v5751
        %v5785 = vpack.c.b16 %v5754, %v5753
        %v5786 = vpack.c.b16 %v5756, %v5755
        %v5787 = vpack.c.b16 %v5758, %v5757
        %v5788 = vpack.c.b16 %v5760, %v5759
        %v5789 = vpack.c.b16 %v5762, %v5761
        %v5790 = vpack.c.b16 %v5764, %v5763
        %v5791 = vpack.c.b16 %v5766, %v5765
        %v5792 = vpack.c.b16 %v5768, %v5767
        %5817 = vmatprep.subr.bf16.mxu0 0
        %5818 = vmatpush1.bf16.msra.mxu0 %v5776
        %5819 = vmatprep.subr.bf16.mxu0 0
        %5820 = vmatpush1.bf16.msra.mxu0 %v5775
        %5821 = vmatprep.subr.bf16.mxu0 0
        %5822 = vmatpush1.bf16.msra.mxu0 %v5774
        %5823 = vmatprep.subr.bf16.mxu0 0
        %5824 = vmatpush1.bf16.msra.mxu0 %v5773
        %5825 = vmatprep.subr.bf16.mxu0 0
        %5826 = vmatpush1.bf16.msra.mxu0 %v5772
        %5827 = vmatprep.subr.bf16.mxu0 0
        %5828 = vmatpush1.bf16.msra.mxu0 %v5771
        %5829 = vmatprep.subr.bf16.mxu0 0
        %5830 = vmatpush1.bf16.msra.mxu0 %v5770
        %5831 = vmatprep.subr.bf16.mxu0 0
        %5832 = vmatpush1.bf16.msra.mxu0 %v5769
        %5833 = vmatprep.subr.bf16.mxu0 0
        %5834 = vmatpush2.bf16.msra.mxu0 %v5784
        %5835 = vmatprep.subr.bf16.mxu0 0
        %5836 = vmatpush2.bf16.msra.mxu0 %v5783
        %5837 = vmatprep.subr.bf16.mxu0 0
        %5838 = vmatpush2.bf16.msra.mxu0 %v5782
        %5839 = vmatprep.subr.bf16.mxu0 0
        %5840 = vmatpush2.bf16.msra.mxu0 %v5781
        %5841 = vmatprep.subr.bf16.mxu0 0
        %5842 = vmatpush2.bf16.msra.mxu0 %v5780
        %5843 = vmatprep.subr.bf16.mxu0 0
        %5844 = vmatpush2.bf16.msra.mxu0 %v5779
        %5845 = vmatprep.subr.bf16.mxu0 0
        %5846 = vmatpush2.bf16.msra.mxu0 %v5778
        %5847 = vmatprep.subr.bf16.mxu0 0
        %5848 = vmatpush2.bf16.msra.mxu0 %v5777
        %5849 = vmatprep.mubr.bf16.mxu0 %v5668
        %5850 = vmatmul.mubr.bf16.gmra.mxu0 %v5667
        %v5851 = vpop.f32.mrf.mxu0
        %v5852 = vadd.f32 %v5595, %v5851
        %v5853 = vpop.f32.mrf.mxu0
        %v5854 = vpop.f32.mrf.mxu0
        %v5855 = vadd.f32 %v5598, %v5854
        %v5856 = vpop.f32.mrf.mxu0
        %5857 = vmatprep.mubr.bf16.mxu0 %v5272
        %5858 = vmatmul.mubr.bf16.gmra.mxu0 %v5271
        %v5859 = vpop.f32.mrf.mxu0
        %v5860 = vadd.f32 %v5603, %v5859
        %v5861 = vpop.f32.mrf.mxu0
        %v5862 = vpop.f32.mrf.mxu0
        %v5863 = vadd.f32 %v5606, %v5862
        %v5864 = vpop.f32.mrf.mxu0
        %5865 = vmatprep.mubr.bf16.mxu0 %v5275
        %5866 = vmatmul.mubr.bf16.gmra.mxu0 %v5274
        %v5867 = vpop.f32.mrf.mxu0
        %v5868 = vadd.f32 %v5611, %v5867
        %v5869 = vpop.f32.mrf.mxu0
        %v5870 = vpop.f32.mrf.mxu0
        %v5871 = vadd.f32 %v5614, %v5870
        %v5872 = vpop.f32.mrf.mxu0
        %5873 = vmatprep.mubr.bf16.mxu0 %v5278
        %5874 = vmatmul.mubr.bf16.gmra.mxu0 %v5277
        %v5875 = vpop.f32.mrf.mxu0
        %v5876 = vadd.f32 %v5619, %v5875
        %v5877 = vpop.f32.mrf.mxu0
        %v5878 = vpop.f32.mrf.mxu0
        %v5879 = vadd.f32 %v5622, %v5878
        %v5880 = vpop.f32.mrf.mxu0
        %5881 = vmatprep.mubr.bf16.mxu0 %v5281
        %5882 = vmatmul.mubr.bf16.gmra.mxu0 %v5280
        %v5883 = vpop.f32.mrf.mxu0
        %v5884 = vadd.f32 %v5627, %v5883
        %v5885 = vpop.f32.mrf.mxu0
        %v5886 = vpop.f32.mrf.mxu0
        %v5887 = vadd.f32 %v5630, %v5886
        %v5888 = vpop.f32.mrf.mxu0
        %5889 = vmatprep.mubr.bf16.mxu0 %v5284
        %5890 = vmatmul.mubr.bf16.gmra.mxu0 %v5283
        %v5891 = vpop.f32.mrf.mxu0
        %v5892 = vadd.f32 %v5635, %v5891
        %v5893 = vpop.f32.mrf.mxu0
        %v5894 = vpop.f32.mrf.mxu0
        %v5895 = vadd.f32 %v5638, %v5894
        %v5896 = vpop.f32.mrf.mxu0
        %5897 = vmatprep.mubr.bf16.mxu0 %v5287
        %5898 = vmatmul.mubr.bf16.gmra.mxu0 %v5286
        %v5899 = vpop.f32.mrf.mxu0
        %v5900 = vadd.f32 %v5643, %v5899
        %v5901 = vpop.f32.mrf.mxu0
        %v5902 = vpop.f32.mrf.mxu0
        %v5903 = vadd.f32 %v5646, %v5902
        %v5904 = vpop.f32.mrf.mxu0
        %5905 = vmatprep.mubr.bf16.mxu0 %v5290
        %5906 = vmatmul.mubr.bf16.gmra.mxu0 %v5289
        %v5907 = vpop.f32.mrf.mxu0
        %v5908 = vadd.f32 %v5651, %v5907
        %v5909 = vpop.f32.mrf.mxu0
        %v5910 = vpop.f32.mrf.mxu0
        %v5911 = vadd.f32 %v5654, %v5910
        %v5912 = vpop.f32.mrf.mxu0
        %5913 = vdwg.mxu0
        %5914 = vmatprep.subr.bf16.mxu0 0
        %5915 = vmatpush1.bf16.msra.mxu0 %v5792
        %5916 = vmatprep.subr.bf16.mxu0 0
        %5917 = vmatpush1.bf16.msra.mxu0 %v5791
        %5918 = vmatprep.subr.bf16.mxu0 0
        %5919 = vmatpush1.bf16.msra.mxu0 %v5790
        %5920 = vmatprep.subr.bf16.mxu0 0
        %5921 = vmatpush1.bf16.msra.mxu0 %v5789
        %5922 = vmatprep.subr.bf16.mxu0 0
        %5923 = vmatpush1.bf16.msra.mxu0 %v5788
        %5924 = vmatprep.subr.bf16.mxu0 0
        %5925 = vmatpush1.bf16.msra.mxu0 %v5787
        %5926 = vmatprep.subr.bf16.mxu0 0
        %5927 = vmatpush1.bf16.msra.mxu0 %v5786
        %5928 = vmatprep.subr.bf16.mxu0 0
        %5929 = vmatpush1.bf16.msra.mxu0 %v5785
        %5930 = vmatprep.subr.bf16.mxu0 0
        %5931 = vmatpush2.bf16.msra.mxu0 0
        %5932 = vmatprep.subr.bf16.mxu0 0
        %5933 = vmatpush2.bf16.msra.mxu0 0
        %5934 = vmatprep.subr.bf16.mxu0 0
        %5935 = vmatpush2.bf16.msra.mxu0 0
        %5936 = vmatprep.subr.bf16.mxu0 0
        %5937 = vmatpush2.bf16.msra.mxu0 0
        %5938 = vmatprep.subr.bf16.mxu0 0
        %5939 = vmatpush2.bf16.msra.mxu0 0
        %5940 = vmatprep.subr.bf16.mxu0 0
        %5941 = vmatpush2.bf16.msra.mxu0 0
        %5942 = vmatprep.subr.bf16.mxu0 0
        %5943 = vmatpush2.bf16.msra.mxu0 0
        %5944 = vmatprep.subr.bf16.mxu0 0
        %5945 = vmatpush2.bf16.msra.mxu0 0
        %5946 = vmatprep.mubr.bf16.mxu0 0
        %5947 = vmatmul.mubr.bf16.gmra.mxu0 %v5669
        %v5948 = vpop.f32.mrf.mxu0
        %v5949 = vadd.f32 %v5852, %v5948
        %v5950 = vpop.f32.mrf.mxu0
        %v5951 = vpop.f32.mrf.mxu0
        %v5952 = vadd.f32 %v5855, %v5951
        %v5953 = vpop.f32.mrf.mxu0
        %5954 = vmatprep.mubr.bf16.mxu0 0
        %5955 = vmatmul.mubr.bf16.gmra.mxu0 %v5273
        %v5956 = vpop.f32.mrf.mxu0
        %v5957 = vadd.f32 %v5860, %v5956
        %v5958 = vpop.f32.mrf.mxu0
        %v5959 = vpop.f32.mrf.mxu0
        %v5960 = vadd.f32 %v5863, %v5959
        %v5961 = vpop.f32.mrf.mxu0
        %5962 = vmatprep.mubr.bf16.mxu0 0
        %5963 = vmatmul.mubr.bf16.gmra.mxu0 %v5276
        %v5964 = vpop.f32.mrf.mxu0
        %v5965 = vadd.f32 %v5868, %v5964
        %v5966 = vpop.f32.mrf.mxu0
        %v5967 = vpop.f32.mrf.mxu0
        %v5968 = vadd.f32 %v5871, %v5967
        %v5969 = vpop.f32.mrf.mxu0
        %5970 = vmatprep.mubr.bf16.mxu0 0
        %5971 = vmatmul.mubr.bf16.gmra.mxu0 %v5279
        %v5972 = vpop.f32.mrf.mxu0
        %v5973 = vadd.f32 %v5876, %v5972
        %v5974 = vpop.f32.mrf.mxu0
        %v5975 = vpop.f32.mrf.mxu0
        %v5976 = vadd.f32 %v5879, %v5975
        %v5977 = vpop.f32.mrf.mxu0
        %5978 = vmatprep.mubr.bf16.mxu0 0
        %5979 = vmatmul.mubr.bf16.gmra.mxu0 %v5282
        %v5980 = vpop.f32.mrf.mxu0
        %v5981 = vadd.f32 %v5884, %v5980
        %v5982 = vpop.f32.mrf.mxu0
        %v5983 = vpop.f32.mrf.mxu0
        %v5984 = vadd.f32 %v5887, %v5983
        %v5985 = vpop.f32.mrf.mxu0
        %5986 = vmatprep.mubr.bf16.mxu0 0
        %5987 = vmatmul.mubr.bf16.gmra.mxu0 %v5285
        %v5988 = vpop.f32.mrf.mxu0
        %v5989 = vadd.f32 %v5892, %v5988
        %v5990 = vpop.f32.mrf.mxu0
        %v5991 = vpop.f32.mrf.mxu0
        %v5992 = vadd.f32 %v5895, %v5991
        %v5993 = vpop.f32.mrf.mxu0
        %5994 = vmatprep.mubr.bf16.mxu0 0
        %5995 = vmatmul.mubr.bf16.gmra.mxu0 %v5288
        %v5996 = vpop.f32.mrf.mxu0
        %v5997 = vadd.f32 %v5900, %v5996
        %v5998 = vpop.f32.mrf.mxu0
        %v5999 = vpop.f32.mrf.mxu0
        %v6000 = vadd.f32 %v5903, %v5999
        %v6001 = vpop.f32.mrf.mxu0
        %6002 = vmatprep.mubr.bf16.mxu0 0
        %6003 = vmatmul.mubr.bf16.gmra.mxu0 %v5291
        %v6004 = vpop.f32.mrf.mxu0
        %v6005 = vadd.f32 %v5908, %v6004
        %v6006 = vpop.f32.mrf.mxu0
        %v6007 = vpop.f32.mrf.mxu0
        %v6008 = vadd.f32 %v5911, %v6007
        %v6009 = vpop.f32.mrf.mxu0
        %6010 = vdwg.mxu0
        %v6011 = vld [vmem:[#allocation2 + $0x30] sm:$0xff]
        %v6012 = vld [vmem:[#allocation2 + $0x38] sm:$0xf]
        %v6013 = vld [vmem:[#allocation2 + $0x3c] sm:$0xff]
        %v6014 = vld [vmem:[#allocation2 + $0x44] sm:$0xf]
        %v6015 = vld [vmem:[#allocation2 + $0x48] sm:$0xff]
        %v6016 = vld [vmem:[#allocation2 + $0x50] sm:$0xf]
        %v6017 = vld [vmem:[#allocation2 + $0x54] sm:$0xff]
        %v6018 = vld [vmem:[#allocation2 + $0x5c] sm:$0xf]
        %v6019 = vld [vmem:[#allocation2 + $0x60] sm:$0xff]
        %v6020 = vld [vmem:[#allocation2 + $0x68] sm:$0xf]
        %v6021 = vld [vmem:[#allocation2 + $0x6c] sm:$0xff]
        %v6022 = vld [vmem:[#allocation2 + $0x74] sm:$0xf]
        %v6023 = vld [vmem:[#allocation2 + $0x78] sm:$0xff]
        %v6024 = vld [vmem:[#allocation2 + $0x80] sm:$0xf]
        %v6025 = vld [vmem:[#allocation2 + $0x84] sm:$0xff]
        %v6026 = vld [vmem:[#allocation2 + $0x8c] sm:$0xf]
        %v6027 = vld [vmem:[#allocation2 + $0x90] sm:$0xff]
        %v6028 = vld [vmem:[#allocation2 + $0x98] sm:$0xf]
        %v6029 = vld [vmem:[#allocation2 + $0x9c] sm:$0xff]
        %v6030 = vld [vmem:[#allocation2 + $0xa4] sm:$0xf]
        %v6031 = vld [vmem:[#allocation2 + $0xa8] sm:$0xff]
        %v6032 = vld [vmem:[#allocation2 + $0xb0] sm:$0xf]
        %v6033 = vld [vmem:[#allocation2 + $0xb4] sm:$0xff]
        %v6034 = vld [vmem:[#allocation2 + $0xbc] sm:$0xf]
        %v6035 = vld [vmem:[#allocation2 + $0xc0] sm:$0xff]
        %v6036 = vld [vmem:[#allocation2 + $0xc8] sm:$0xf]
        %v6037 = vld [vmem:[#allocation2 + $0xcc] sm:$0xff]
        %v6038 = vld [vmem:[#allocation2 + $0xd4] sm:$0xf]
        %v6039 = vld [vmem:[#allocation2 + $0xd8] sm:$0xff]
        %v6040 = vld [vmem:[#allocation2 + $0xe0] sm:$0xf]
        %v6041 = vld [vmem:[#allocation2 + $0xe4] sm:$0xff]
        %v6042 = vld [vmem:[#allocation2 + $0xec] sm:$0xf]
        %s6043 = scalar_lea.vmem %s3, 384
        %v6044 = vld [vmem:[%s6043] sm:$0xf]
        %v6045 = vld [vmem:[%s6043 + $0x4] sm:$0xf]
        %v6046 = vld [vmem:[%s6043 + $0x8] sm:$0xf]
        %v6047 = vld [vmem:[%s6043 + $0xc] sm:$0xf]
        %v6048 = vld [vmem:[%s6043 + $0x10] sm:$0xf]
        %v6049 = vld [vmem:[%s6043 + $0x14] sm:$0xf]
        %v6050 = vld [vmem:[%s6043 + $0x18] sm:$0xf]
        %v6051 = vld [vmem:[%s6043 + $0x1c] sm:$0xf]
        %v6052 = vld [vmem:[%s6043 + $0x20] sm:$0xf]
        %v6053 = vld [vmem:[%s6043 + $0x24] sm:$0xf]
        %v6054 = vld [vmem:[%s6043 + $0x28] sm:$0xf]
        %v6055 = vld [vmem:[%s6043 + $0x2c] sm:$0xf]
        %v6056 = vld [vmem:[%s6043 + $0x30] sm:$0xf]
        %v6057 = vld [vmem:[%s6043 + $0x34] sm:$0xf]
        %v6058 = vld [vmem:[%s6043 + $0x38] sm:$0xf]
        %v6059 = vld [vmem:[%s6043 + $0x3c] sm:$0xf]
        %v6060 = vld [vmem:[%s6043 + $0x40] sm:$0xf]
        %v6061 = vld [vmem:[%s6043 + $0x44] sm:$0xf]
        %v6062 = vld [vmem:[%s6043 + $0x48] sm:$0xf]
        %v6063 = vld [vmem:[%s6043 + $0x4c] sm:$0xf]
        %v6064 = vld [vmem:[%s6043 + $0x50] sm:$0xf]
        %v6065 = vld [vmem:[%s6043 + $0x54] sm:$0xf]
        %v6066 = vld [vmem:[%s6043 + $0x58] sm:$0xf]
        %v6067 = vld [vmem:[%s6043 + $0x5c] sm:$0xf]
        %v6068 = vld [vmem:[%s6043 + $0x60] sm:$0xf]
        %v6069 = vld [vmem:[%s6043 + $0x64] sm:$0xf]
        %v6070 = vld [vmem:[%s6043 + $0x68] sm:$0xf]
        %v6071 = vld [vmem:[%s6043 + $0x6c] sm:$0xf]
        %v6072 = vld [vmem:[%s6043 + $0x70] sm:$0xf]
        %v6073 = vld [vmem:[%s6043 + $0x74] sm:$0xf]
        %v6074 = vld [vmem:[%s6043 + $0x78] sm:$0xf]
        %v6075 = vld [vmem:[%s6043 + $0x7c] sm:$0xf]
        %v6076 = vld [vmem:[%s6043 + $0x80] sm:$0xf]
        %v6077 = vld [vmem:[%s6043 + $0x84] sm:$0xf]
        %v6078 = vld [vmem:[%s6043 + $0x88] sm:$0xf]
        %v6079 = vld [vmem:[%s6043 + $0x8c] sm:$0xf]
        %v6080 = vld [vmem:[%s6043 + $0x90] sm:$0xf]
        %v6081 = vld [vmem:[%s6043 + $0x94] sm:$0xf]
        %v6082 = vld [vmem:[%s6043 + $0x98] sm:$0xf]
        %v6083 = vld [vmem:[%s6043 + $0x9c] sm:$0xf]
        %v6084 = vld [vmem:[%s6043 + $0xa0] sm:$0xf]
        %v6085 = vld [vmem:[%s6043 + $0xa4] sm:$0xf]
        %v6086 = vld [vmem:[%s6043 + $0xa8] sm:$0xf]
        %v6087 = vld [vmem:[%s6043 + $0xac] sm:$0xf]
        %v6088 = vld [vmem:[%s6043 + $0xb0] sm:$0xf]
        %v6089 = vld [vmem:[%s6043 + $0xb4] sm:$0xf]
        %v6090 = vld [vmem:[%s6043 + $0xb8] sm:$0xf]
        %v6091 = vld [vmem:[%s6043 + $0xbc] sm:$0xf]
        %v6124 = vunpack.c.l.b16 %v6011
        %v6125 = vunpack.c.h.b16 %v6011
        %v6126 = vunpack.c.l.b16 %v6012
        %v6127 = vunpack.c.l.b16 %v6013
        %v6128 = vunpack.c.h.b16 %v6013
        %v6129 = vunpack.c.l.b16 %v6014
        %v6130 = vunpack.c.l.b16 %v6015
        %v6131 = vunpack.c.h.b16 %v6015
        %v6132 = vunpack.c.l.b16 %v6016
        %v6133 = vunpack.c.l.b16 %v6017
        %v6134 = vunpack.c.h.b16 %v6017
        %v6135 = vunpack.c.l.b16 %v6018
        %v6136 = vunpack.c.l.b16 %v6019
        %v6137 = vunpack.c.h.b16 %v6019
        %v6138 = vunpack.c.l.b16 %v6020
        %v6139 = vunpack.c.l.b16 %v6021
        %v6140 = vunpack.c.h.b16 %v6021
        %v6141 = vunpack.c.l.b16 %v6022
        %v6142 = vunpack.c.l.b16 %v6023
        %v6143 = vunpack.c.h.b16 %v6023
        %v6144 = vunpack.c.l.b16 %v6024
        %v6145 = vunpack.c.l.b16 %v6025
        %v6146 = vunpack.c.h.b16 %v6025
        %v6147 = vunpack.c.l.b16 %v6026
        %v6148 = vunpack.c.l.b16 %v6027
        %v6149 = vunpack.c.h.b16 %v6027
        %v6150 = vunpack.c.l.b16 %v6028
        %v6151 = vunpack.c.l.b16 %v6029
        %v6152 = vunpack.c.h.b16 %v6029
        %v6153 = vunpack.c.l.b16 %v6030
        %v6154 = vunpack.c.l.b16 %v6031
        %v6155 = vunpack.c.h.b16 %v6031
        %v6156 = vunpack.c.l.b16 %v6032
        %v6157 = vunpack.c.l.b16 %v6033
        %v6158 = vunpack.c.h.b16 %v6033
        %v6159 = vunpack.c.l.b16 %v6034
        %v6160 = vunpack.c.l.b16 %v6035
        %v6161 = vunpack.c.h.b16 %v6035
        %v6162 = vunpack.c.l.b16 %v6036
        %v6163 = vunpack.c.l.b16 %v6037
        %v6164 = vunpack.c.h.b16 %v6037
        %v6165 = vunpack.c.l.b16 %v6038
        %v6166 = vunpack.c.l.b16 %v6039
        %v6167 = vunpack.c.h.b16 %v6039
        %v6168 = vunpack.c.l.b16 %v6040
        %v6169 = vunpack.c.l.b16 %v6041
        %v6170 = vunpack.c.h.b16 %v6041
        %v6171 = vunpack.c.l.b16 %v6042
        %v6172 = vpack.c.b16 %v6127, %v6124
        %v6173 = vpack.c.b16 %v6128, %v6125
        %v6174 = vpack.c.b16 %v6129, %v6126
        %v6175 = vpack.c.b16 %v6133, %v6130
        %v6176 = vpack.c.b16 %v6134, %v6131
        %v6177 = vpack.c.b16 %v6135, %v6132
        %v6178 = vpack.c.b16 %v6139, %v6136
        %v6179 = vpack.c.b16 %v6140, %v6137
        %v6180 = vpack.c.b16 %v6141, %v6138
        %v6181 = vpack.c.b16 %v6145, %v6142
        %v6182 = vpack.c.b16 %v6146, %v6143
        %v6183 = vpack.c.b16 %v6147, %v6144
        %v6184 = vpack.c.b16 %v6151, %v6148
        %v6185 = vpack.c.b16 %v6152, %v6149
        %v6186 = vpack.c.b16 %v6153, %v6150
        %v6187 = vpack.c.b16 %v6157, %v6154
        %v6188 = vpack.c.b16 %v6158, %v6155
        %v6189 = vpack.c.b16 %v6159, %v6156
        %v6190 = vpack.c.b16 %v6163, %v6160
        %v6191 = vpack.c.b16 %v6164, %v6161
        %v6192 = vpack.c.b16 %v6165, %v6162
        %v6193 = vpack.c.b16 %v6169, %v6166
        %v6194 = vpack.c.b16 %v6170, %v6167
        %v6195 = vpack.c.b16 %v6171, %v6168
        %v6268 = vunpack.c.l.b16 %v6044
        %v6269 = vunpack.c.l.b16 %v6045
        %v6270 = vunpack.c.l.b16 %v6046
        %v6271 = vunpack.c.l.b16 %v6047
        %v6272 = vunpack.c.l.b16 %v6048
        %v6273 = vunpack.c.l.b16 %v6049
        %v6274 = vunpack.c.l.b16 %v6050
        %v6275 = vunpack.c.l.b16 %v6051
        %v6276 = vunpack.c.l.b16 %v6052
        %v6277 = vunpack.c.l.b16 %v6053
        %v6278 = vunpack.c.l.b16 %v6054
        %v6279 = vunpack.c.l.b16 %v6055
        %v6280 = vunpack.c.l.b16 %v6056
        %v6281 = vunpack.c.l.b16 %v6057
        %v6282 = vunpack.c.l.b16 %v6058
        %v6283 = vunpack.c.l.b16 %v6059
        %v6284 = vunpack.c.l.b16 %v6060
        %v6285 = vunpack.c.l.b16 %v6061
        %v6286 = vunpack.c.l.b16 %v6062
        %v6287 = vunpack.c.l.b16 %v6063
        %v6288 = vunpack.c.l.b16 %v6064
        %v6289 = vunpack.c.l.b16 %v6065
        %v6290 = vunpack.c.l.b16 %v6066
        %v6291 = vunpack.c.l.b16 %v6067
        %v6292 = vunpack.c.l.b16 %v6068
        %v6293 = vunpack.c.l.b16 %v6069
        %v6294 = vunpack.c.l.b16 %v6070
        %v6295 = vunpack.c.l.b16 %v6071
        %v6296 = vunpack.c.l.b16 %v6072
        %v6297 = vunpack.c.l.b16 %v6073
        %v6298 = vunpack.c.l.b16 %v6074
        %v6299 = vunpack.c.l.b16 %v6075
        %v6300 = vunpack.c.l.b16 %v6076
        %v6301 = vunpack.c.l.b16 %v6077
        %v6302 = vunpack.c.l.b16 %v6078
        %v6303 = vunpack.c.l.b16 %v6079
        %v6304 = vunpack.c.l.b16 %v6080
        %v6305 = vunpack.c.l.b16 %v6081
        %v6306 = vunpack.c.l.b16 %v6082
        %v6307 = vunpack.c.l.b16 %v6083
        %v6308 = vunpack.c.l.b16 %v6084
        %v6309 = vunpack.c.l.b16 %v6085
        %v6310 = vunpack.c.l.b16 %v6086
        %v6311 = vunpack.c.l.b16 %v6087
        %v6312 = vunpack.c.l.b16 %v6088
        %v6313 = vunpack.c.l.b16 %v6089
        %v6314 = vunpack.c.l.b16 %v6090
        %v6315 = vunpack.c.l.b16 %v6091
        %v6316 = vpack.c.b16 %v6269, %v6268
        %v6317 = vpack.c.b16 %v6271, %v6270
        %v6318 = vpack.c.b16 %v6273, %v6272
        %v6319 = vpack.c.b16 %v6275, %v6274
        %v6320 = vpack.c.b16 %v6277, %v6276
        %v6321 = vpack.c.b16 %v6279, %v6278
        %v6322 = vpack.c.b16 %v6281, %v6280
        %v6323 = vpack.c.b16 %v6283, %v6282
        %v6324 = vpack.c.b16 %v6285, %v6284
        %v6325 = vpack.c.b16 %v6287, %v6286
        %v6326 = vpack.c.b16 %v6289, %v6288
        %v6327 = vpack.c.b16 %v6291, %v6290
        %v6328 = vpack.c.b16 %v6293, %v6292
        %v6329 = vpack.c.b16 %v6295, %v6294
        %v6330 = vpack.c.b16 %v6297, %v6296
        %v6331 = vpack.c.b16 %v6299, %v6298
        %v6332 = vpack.c.b16 %v6301, %v6300
        %v6333 = vpack.c.b16 %v6303, %v6302
        %v6334 = vpack.c.b16 %v6305, %v6304
        %v6335 = vpack.c.b16 %v6307, %v6306
        %v6336 = vpack.c.b16 %v6309, %v6308
        %v6337 = vpack.c.b16 %v6311, %v6310
        %v6338 = vpack.c.b16 %v6313, %v6312
        %v6339 = vpack.c.b16 %v6315, %v6314
        %6364 = vmatprep.subr.bf16.mxu0 0
        %6365 = vmatpush1.bf16.msra.mxu0 %v6323
        %6366 = vmatprep.subr.bf16.mxu0 0
        %6367 = vmatpush1.bf16.msra.mxu0 %v6322
        %6368 = vmatprep.subr.bf16.mxu0 0
        %6369 = vmatpush1.bf16.msra.mxu0 %v6321
        %6370 = vmatprep.subr.bf16.mxu0 0
        %6371 = vmatpush1.bf16.msra.mxu0 %v6320
        %6372 = vmatprep.subr.bf16.mxu0 0
        %6373 = vmatpush1.bf16.msra.mxu0 %v6319
        %6374 = vmatprep.subr.bf16.mxu0 0
        %6375 = vmatpush1.bf16.msra.mxu0 %v6318
        %6376 = vmatprep.subr.bf16.mxu0 0
        %6377 = vmatpush1.bf16.msra.mxu0 %v6317
        %6378 = vmatprep.subr.bf16.mxu0 0
        %6379 = vmatpush1.bf16.msra.mxu0 %v6316
        %6380 = vmatprep.subr.bf16.mxu0 0
        %6381 = vmatpush2.bf16.msra.mxu0 %v6331
        %6382 = vmatprep.subr.bf16.mxu0 0
        %6383 = vmatpush2.bf16.msra.mxu0 %v6330
        %6384 = vmatprep.subr.bf16.mxu0 0
        %6385 = vmatpush2.bf16.msra.mxu0 %v6329
        %6386 = vmatprep.subr.bf16.mxu0 0
        %6387 = vmatpush2.bf16.msra.mxu0 %v6328
        %6388 = vmatprep.subr.bf16.mxu0 0
        %6389 = vmatpush2.bf16.msra.mxu0 %v6327
        %6390 = vmatprep.subr.bf16.mxu0 0
        %6391 = vmatpush2.bf16.msra.mxu0 %v6326
        %6392 = vmatprep.subr.bf16.mxu0 0
        %6393 = vmatpush2.bf16.msra.mxu0 %v6325
        %6394 = vmatprep.subr.bf16.mxu0 0
        %6395 = vmatpush2.bf16.msra.mxu0 %v6324
        %6396 = vmatprep.mubr.bf16.mxu0 %v6173
        %6397 = vmatmul.mubr.bf16.gmra.mxu0 %v6172
        %v6398 = vpop.f32.mrf.mxu0
        %v6399 = vadd.f32 0.0, %v6398
        %v6400 = vpop.f32.mrf.mxu0
        %v6401 = vpop.f32.mrf.mxu0
        %v6402 = vadd.f32 0.0, %v6401
        %v6403 = vpop.f32.mrf.mxu0
        %6404 = vmatprep.mubr.bf16.mxu0 %v6176
        %6405 = vmatmul.mubr.bf16.gmra.mxu0 %v6175
        %v6406 = vpop.f32.mrf.mxu0
        %v6407 = vadd.f32 0.0, %v6406
        %v6408 = vpop.f32.mrf.mxu0
        %v6409 = vpop.f32.mrf.mxu0
        %v6410 = vadd.f32 0.0, %v6409
        %v6411 = vpop.f32.mrf.mxu0
        %6412 = vmatprep.mubr.bf16.mxu0 %v6179
        %6413 = vmatmul.mubr.bf16.gmra.mxu0 %v6178
        %v6414 = vpop.f32.mrf.mxu0
        %v6415 = vadd.f32 0.0, %v6414
        %v6416 = vpop.f32.mrf.mxu0
        %v6417 = vpop.f32.mrf.mxu0
        %v6418 = vadd.f32 0.0, %v6417
        %v6419 = vpop.f32.mrf.mxu0
        %6420 = vmatprep.mubr.bf16.mxu0 %v6182
        %6421 = vmatmul.mubr.bf16.gmra.mxu0 %v6181
        %v6422 = vpop.f32.mrf.mxu0
        %v6423 = vadd.f32 0.0, %v6422
        %v6424 = vpop.f32.mrf.mxu0
        %v6425 = vpop.f32.mrf.mxu0
        %v6426 = vadd.f32 0.0, %v6425
        %v6427 = vpop.f32.mrf.mxu0
        %6428 = vmatprep.mubr.bf16.mxu0 %v6185
        %6429 = vmatmul.mubr.bf16.gmra.mxu0 %v6184
        %v6430 = vpop.f32.mrf.mxu0
        %v6431 = vadd.f32 0.0, %v6430
        %v6432 = vpop.f32.mrf.mxu0
        %v6433 = vpop.f32.mrf.mxu0
        %v6434 = vadd.f32 0.0, %v6433
        %v6435 = vpop.f32.mrf.mxu0
        %6436 = vmatprep.mubr.bf16.mxu0 %v6188
        %6437 = vmatmul.mubr.bf16.gmra.mxu0 %v6187
        %v6438 = vpop.f32.mrf.mxu0
        %v6439 = vadd.f32 0.0, %v6438
        %v6440 = vpop.f32.mrf.mxu0
        %v6441 = vpop.f32.mrf.mxu0
        %v6442 = vadd.f32 0.0, %v6441
        %v6443 = vpop.f32.mrf.mxu0
        %6444 = vmatprep.mubr.bf16.mxu0 %v6191
        %6445 = vmatmul.mubr.bf16.gmra.mxu0 %v6190
        %v6446 = vpop.f32.mrf.mxu0
        %v6447 = vadd.f32 0.0, %v6446
        %v6448 = vpop.f32.mrf.mxu0
        %v6449 = vpop.f32.mrf.mxu0
        %v6450 = vadd.f32 0.0, %v6449
        %v6451 = vpop.f32.mrf.mxu0
        %6452 = vmatprep.mubr.bf16.mxu0 %v6194
        %6453 = vmatmul.mubr.bf16.gmra.mxu0 %v6193
        %v6454 = vpop.f32.mrf.mxu0
        %v6455 = vadd.f32 0.0, %v6454
        %v6456 = vpop.f32.mrf.mxu0
        %v6457 = vpop.f32.mrf.mxu0
        %v6458 = vadd.f32 0.0, %v6457
        %v6459 = vpop.f32.mrf.mxu0
        %6460 = vdwg.mxu0
        %6461 = vmatprep.subr.bf16.mxu0 0
        %6462 = vmatpush1.bf16.msra.mxu0 %v6339
        %6463 = vmatprep.subr.bf16.mxu0 0
        %6464 = vmatpush1.bf16.msra.mxu0 %v6338
        %6465 = vmatprep.subr.bf16.mxu0 0
        %6466 = vmatpush1.bf16.msra.mxu0 %v6337
        %6467 = vmatprep.subr.bf16.mxu0 0
        %6468 = vmatpush1.bf16.msra.mxu0 %v6336
        %6469 = vmatprep.subr.bf16.mxu0 0
        %6470 = vmatpush1.bf16.msra.mxu0 %v6335
        %6471 = vmatprep.subr.bf16.mxu0 0
        %6472 = vmatpush1.bf16.msra.mxu0 %v6334
        %6473 = vmatprep.subr.bf16.mxu0 0
        %6474 = vmatpush1.bf16.msra.mxu0 %v6333
        %6475 = vmatprep.subr.bf16.mxu0 0
        %6476 = vmatpush1.bf16.msra.mxu0 %v6332
        %6477 = vmatprep.subr.bf16.mxu0 0
        %6478 = vmatpush2.bf16.msra.mxu0 0
        %6479 = vmatprep.subr.bf16.mxu0 0
        %6480 = vmatpush2.bf16.msra.mxu0 0
        %6481 = vmatprep.subr.bf16.mxu0 0
        %6482 = vmatpush2.bf16.msra.mxu0 0
        %6483 = vmatprep.subr.bf16.mxu0 0
        %6484 = vmatpush2.bf16.msra.mxu0 0
        %6485 = vmatprep.subr.bf16.mxu0 0
        %6486 = vmatpush2.bf16.msra.mxu0 0
        %6487 = vmatprep.subr.bf16.mxu0 0
        %6488 = vmatpush2.bf16.msra.mxu0 0
        %6489 = vmatprep.subr.bf16.mxu0 0
        %6490 = vmatpush2.bf16.msra.mxu0 0
        %6491 = vmatprep.subr.bf16.mxu0 0
        %6492 = vmatpush2.bf16.msra.mxu0 0
        %6493 = vmatprep.mubr.bf16.mxu0 0
        %6494 = vmatmul.mubr.bf16.gmra.mxu0 %v6174
        %v6495 = vpop.f32.mrf.mxu0
        %v6496 = vadd.f32 %v6399, %v6495
        %v6497 = vpop.f32.mrf.mxu0
        %v6498 = vpop.f32.mrf.mxu0
        %v6499 = vadd.f32 %v6402, %v6498
        %v6500 = vpop.f32.mrf.mxu0
        %6501 = vmatprep.mubr.bf16.mxu0 0
        %6502 = vmatmul.mubr.bf16.gmra.mxu0 %v6177
        %v6503 = vpop.f32.mrf.mxu0
        %v6504 = vadd.f32 %v6407, %v6503
        %v6505 = vpop.f32.mrf.mxu0
        %v6506 = vpop.f32.mrf.mxu0
        %v6507 = vadd.f32 %v6410, %v6506
        %v6508 = vpop.f32.mrf.mxu0
        %6509 = vmatprep.mubr.bf16.mxu0 0
        %6510 = vmatmul.mubr.bf16.gmra.mxu0 %v6180
        %v6511 = vpop.f32.mrf.mxu0
        %v6512 = vadd.f32 %v6415, %v6511
        %v6513 = vpop.f32.mrf.mxu0
        %v6514 = vpop.f32.mrf.mxu0
        %v6515 = vadd.f32 %v6418, %v6514
        %v6516 = vpop.f32.mrf.mxu0
        %6517 = vmatprep.mubr.bf16.mxu0 0
        %6518 = vmatmul.mubr.bf16.gmra.mxu0 %v6183
        %v6519 = vpop.f32.mrf.mxu0
        %v6520 = vadd.f32 %v6423, %v6519
        %v6521 = vpop.f32.mrf.mxu0
        %v6522 = vpop.f32.mrf.mxu0
        %v6523 = vadd.f32 %v6426, %v6522
        %v6524 = vpop.f32.mrf.mxu0
        %6525 = vmatprep.mubr.bf16.mxu0 0
        %6526 = vmatmul.mubr.bf16.gmra.mxu0 %v6186
        %v6527 = vpop.f32.mrf.mxu0
        %v6528 = vadd.f32 %v6431, %v6527
        %v6529 = vpop.f32.mrf.mxu0
        %v6530 = vpop.f32.mrf.mxu0
        %v6531 = vadd.f32 %v6434, %v6530
        %v6532 = vpop.f32.mrf.mxu0
        %6533 = vmatprep.mubr.bf16.mxu0 0
        %6534 = vmatmul.mubr.bf16.gmra.mxu0 %v6189
        %v6535 = vpop.f32.mrf.mxu0
        %v6536 = vadd.f32 %v6439, %v6535
        %v6537 = vpop.f32.mrf.mxu0
        %v6538 = vpop.f32.mrf.mxu0
        %v6539 = vadd.f32 %v6442, %v6538
        %v6540 = vpop.f32.mrf.mxu0
        %6541 = vmatprep.mubr.bf16.mxu0 0
        %6542 = vmatmul.mubr.bf16.gmra.mxu0 %v6192
        %v6543 = vpop.f32.mrf.mxu0
        %v6544 = vadd.f32 %v6447, %v6543
        %v6545 = vpop.f32.mrf.mxu0
        %v6546 = vpop.f32.mrf.mxu0
        %v6547 = vadd.f32 %v6450, %v6546
        %v6548 = vpop.f32.mrf.mxu0
        %6549 = vmatprep.mubr.bf16.mxu0 0
        %6550 = vmatmul.mubr.bf16.gmra.mxu0 %v6195
        %v6551 = vpop.f32.mrf.mxu0
        %v6552 = vadd.f32 %v6455, %v6551
        %v6553 = vpop.f32.mrf.mxu0
        %v6554 = vpop.f32.mrf.mxu0
        %v6555 = vadd.f32 %v6458, %v6554
        %v6556 = vpop.f32.mrf.mxu0
        %6557 = vdwg.mxu0
        %v6558 = vadd.f32 %v5949, %v6496
        %v6559 = vadd.f32 %v5952, %v6499
        %v6560 = vadd.f32 %v5957, %v6504
        %v6561 = vadd.f32 %v5960, %v6507
        %v6562 = vadd.f32 %v5965, %v6512
        %v6563 = vadd.f32 %v5968, %v6515
        %v6564 = vadd.f32 %v5973, %v6520
        %v6565 = vadd.f32 %v5976, %v6523
        %v6566 = vadd.f32 %v5981, %v6528
        %v6567 = vadd.f32 %v5984, %v6531
        %v6568 = vadd.f32 %v5989, %v6536
        %v6569 = vadd.f32 %v5992, %v6539
        %v6570 = vadd.f32 %v5997, %v6544
        %v6571 = vadd.f32 %v6000, %v6547
        %v6572 = vadd.f32 %v6005, %v6552
        %v6573 = vadd.f32 %v6008, %v6555
        %v6574 = vld [vmem:[%s4] sm:$0x1]
        %v6576 = vlaneseq
        %v6577 = vshrl.u32 %v6576, 7
        %v6578 = vsub.s32 0, %v6577
        %v6579 = vrot.slane %v6574, %v6578
        %v6581 = vadd.f32 %v6558, %v6579
        %v6582 = vadd.f32 %v6559, %v6579
        %v6583 = vadd.f32 %v6560, %v6579
        %v6584 = vadd.f32 %v6561, %v6579
        %v6585 = vadd.f32 %v6562, %v6579
        %v6586 = vadd.f32 %v6563, %v6579
        %v6587 = vadd.f32 %v6564, %v6579
        %v6588 = vadd.f32 %v6565, %v6579
        %v6589 = vadd.f32 %v6566, %v6579
        %v6590 = vadd.f32 %v6567, %v6579
        %v6591 = vadd.f32 %v6568, %v6579
        %v6592 = vadd.f32 %v6569, %v6579
        %v6593 = vadd.f32 %v6570, %v6579
        %v6594 = vadd.f32 %v6571, %v6579
        %v6595 = vadd.f32 %v6572, %v6579
        %v6596 = vadd.f32 %v6573, %v6579
        %v6597 = vld [vmem:[%s222] sm:$0xff]
        %v6598 = vld [vmem:[%s222 + $0x8] sm:$0xff]
        %v6599 = vld [vmem:[%s222 + $0x10] sm:$0xff]
        %v6600 = vld [vmem:[%s222 + $0x18] sm:$0xff]
        %v6601 = vld [vmem:[%s222 + $0x20] sm:$0xff]
        %v6602 = vld [vmem:[%s222 + $0x28] sm:$0xff]
        %v6603 = vld [vmem:[%s222 + $0x30] sm:$0xff]
        %v6604 = vld [vmem:[%s222 + $0x38] sm:$0xff]
        %v6605 = vld [vmem:[%s222 + $0x40] sm:$0xff]
        %v6606 = vld [vmem:[%s222 + $0x48] sm:$0xff]
        %v6607 = vld [vmem:[%s222 + $0x50] sm:$0xff]
        %v6608 = vld [vmem:[%s222 + $0x58] sm:$0xff]
        %v6609 = vld [vmem:[%s222 + $0x60] sm:$0xff]
        %v6610 = vld [vmem:[%s222 + $0x68] sm:$0xff]
        %v6611 = vld [vmem:[%s222 + $0x70] sm:$0xff]
        %v6612 = vld [vmem:[%s222 + $0x78] sm:$0xff]
        %v6613 = vmul.f32 %v6581, 0.2
        %v6614 = vmul.f32 %v6582, 0.2
        %v6615 = vmul.f32 %v6583, 0.2
        %v6616 = vmul.f32 %v6584, 0.2
        %v6617 = vmul.f32 %v6585, 0.2
        %v6618 = vmul.f32 %v6586, 0.2
        %v6619 = vmul.f32 %v6587, 0.2
        %v6620 = vmul.f32 %v6588, 0.2
        %v6621 = vmul.f32 %v6589, 0.2
        %v6622 = vmul.f32 %v6590, 0.2
        %v6623 = vmul.f32 %v6591, 0.2
        %v6624 = vmul.f32 %v6592, 0.2
        %v6625 = vmul.f32 %v6593, 0.2
        %v6626 = vmul.f32 %v6594, 0.2
        %v6627 = vmul.f32 %v6595, 0.2
        %v6628 = vmul.f32 %v6596, 0.2
        %v6629 = vadd.f32 %v6597, %v6613
        %v6630 = vadd.f32 %v6598, %v6614
        %v6631 = vadd.f32 %v6599, %v6615
        %v6632 = vadd.f32 %v6600, %v6616
        %v6633 = vadd.f32 %v6601, %v6617
        %v6634 = vadd.f32 %v6602, %v6618
        %v6635 = vadd.f32 %v6603, %v6619
        %v6636 = vadd.f32 %v6604, %v6620
        %v6637 = vadd.f32 %v6605, %v6621
        %v6638 = vadd.f32 %v6606, %v6622
        %v6639 = vadd.f32 %v6607, %v6623
        %v6640 = vadd.f32 %v6608, %v6624
        %v6641 = vadd.f32 %v6609, %v6625
        %v6642 = vadd.f32 %v6610, %v6626
        %v6643 = vadd.f32 %v6611, %v6627
        %v6644 = vadd.f32 %v6612, %v6628
        %6645 = vst [vmem:[%s217] sm:$0xff] %v6629
        %6646 = vst [vmem:[%s217 + $0x8] sm:$0xff] %v6630
        %6647 = vst [vmem:[%s217 + $0x10] sm:$0xff] %v6631
        %6648 = vst [vmem:[%s217 + $0x18] sm:$0xff] %v6632
        %6649 = vst [vmem:[%s217 + $0x20] sm:$0xff] %v6633
        %6650 = vst [vmem:[%s217 + $0x28] sm:$0xff] %v6634
        %6651 = vst [vmem:[%s217 + $0x30] sm:$0xff] %v6635
        %6652 = vst [vmem:[%s217 + $0x38] sm:$0xff] %v6636
        %6653 = vst [vmem:[%s217 + $0x40] sm:$0xff] %v6637
        %6654 = vst [vmem:[%s217 + $0x48] sm:$0xff] %v6638
        %6655 = vst [vmem:[%s217 + $0x50] sm:$0xff] %v6639
        %6656 = vst [vmem:[%s217 + $0x58] sm:$0xff] %v6640
        %6657 = vst [vmem:[%s217 + $0x60] sm:$0xff] %v6641
        %6658 = vst [vmem:[%s217 + $0x68] sm:$0xff] %v6642
        %6659 = vst [vmem:[%s217 + $0x70] sm:$0xff] %v6643
        %6660 = vst [vmem:[%s217 + $0x78] sm:$0xff] %v6644
        %v6661 = vld [vmem:[#allocation2 + $0xc0] sm:$0xff]
        %v6662 = vld [vmem:[#allocation2 + $0xc8] sm:$0xf]
        %v6663 = vld [vmem:[#allocation2 + $0xcc] sm:$0xff]
        %v6664 = vld [vmem:[#allocation2 + $0xd4] sm:$0xf]
        %v6665 = vld [vmem:[#allocation2 + $0xd8] sm:$0xff]
        %v6666 = vld [vmem:[#allocation2 + $0xe0] sm:$0xf]
        %v6667 = vld [vmem:[#allocation2 + $0xe4] sm:$0xff]
        %v6668 = vld [vmem:[#allocation2 + $0xec] sm:$0xf]
        %v6669 = vld [vmem:[#allocation2 + $0xf0] sm:$0xff]
        %v6670 = vld [vmem:[#allocation2 + $0xf8] sm:$0xf]
        %v6671 = vld [vmem:[#allocation2 + $0xfc] sm:$0xff]
        %v6672 = vld [vmem:[#allocation2 + $0x104] sm:$0xf]
        %v6673 = vld [vmem:[#allocation2 + $0x108] sm:$0xff]
        %v6674 = vld [vmem:[#allocation2 + $0x110] sm:$0xf]
        %v6675 = vld [vmem:[#allocation2 + $0x114] sm:$0xff]
        %v6676 = vld [vmem:[#allocation2 + $0x11c] sm:$0xf]
        %v6677 = vld [vmem:[#allocation2 + $0x120] sm:$0xff]
        %v6678 = vld [vmem:[#allocation2 + $0x128] sm:$0xf]
        %v6679 = vld [vmem:[#allocation2 + $0x12c] sm:$0xff]
        %v6680 = vld [vmem:[#allocation2 + $0x134] sm:$0xf]
        %v6681 = vld [vmem:[#allocation2 + $0x138] sm:$0xff]
        %v6682 = vld [vmem:[#allocation2 + $0x140] sm:$0xf]
        %v6683 = vld [vmem:[#allocation2 + $0x144] sm:$0xff]
        %v6684 = vld [vmem:[#allocation2 + $0x14c] sm:$0xf]
        %v6685 = vld [vmem:[#allocation2 + $0x150] sm:$0xff]
        %v6686 = vld [vmem:[#allocation2 + $0x158] sm:$0xf]
        %v6687 = vld [vmem:[#allocation2 + $0x15c] sm:$0xff]
        %v6688 = vld [vmem:[#allocation2 + $0x164] sm:$0xf]
        %v6689 = vld [vmem:[#allocation2 + $0x168] sm:$0xff]
        %v6690 = vld [vmem:[#allocation2 + $0x170] sm:$0xf]
        %v6691 = vld [vmem:[#allocation2 + $0x174] sm:$0xff]
        %v6692 = vld [vmem:[#allocation2 + $0x17c] sm:$0xf]
        %v6693 = vld [vmem:[%s3] sm:$0xf]
        %v6694 = vld [vmem:[%s3 + $0x4] sm:$0xf]
        %v6695 = vld [vmem:[%s3 + $0x8] sm:$0xf]
        %v6696 = vld [vmem:[%s3 + $0xc] sm:$0xf]
        %v6697 = vld [vmem:[%s3 + $0x10] sm:$0xf]
        %v6698 = vld [vmem:[%s3 + $0x14] sm:$0xf]
        %v6699 = vld [vmem:[%s3 + $0x18] sm:$0xf]
        %v6700 = vld [vmem:[%s3 + $0x1c] sm:$0xf]
        %v6701 = vld [vmem:[%s3 + $0x20] sm:$0xf]
        %v6702 = vld [vmem:[%s3 + $0x24] sm:$0xf]
        %v6703 = vld [vmem:[%s3 + $0x28] sm:$0xf]
        %v6704 = vld [vmem:[%s3 + $0x2c] sm:$0xf]
        %v6705 = vld [vmem:[%s3 + $0x30] sm:$0xf]
        %v6706 = vld [vmem:[%s3 + $0x34] sm:$0xf]
        %v6707 = vld [vmem:[%s3 + $0x38] sm:$0xf]
        %v6708 = vld [vmem:[%s3 + $0x3c] sm:$0xf]
        %v6709 = vld [vmem:[%s3 + $0x40] sm:$0xf]
        %v6710 = vld [vmem:[%s3 + $0x44] sm:$0xf]
        %v6711 = vld [vmem:[%s3 + $0x48] sm:$0xf]
        %v6712 = vld [vmem:[%s3 + $0x4c] sm:$0xf]
        %v6713 = vld [vmem:[%s3 + $0x50] sm:$0xf]
        %v6714 = vld [vmem:[%s3 + $0x54] sm:$0xf]
        %v6715 = vld [vmem:[%s3 + $0x58] sm:$0xf]
        %v6716 = vld [vmem:[%s3 + $0x5c] sm:$0xf]
        %v6717 = vld [vmem:[%s3 + $0x60] sm:$0xf]
        %v6718 = vld [vmem:[%s3 + $0x64] sm:$0xf]
        %v6719 = vld [vmem:[%s3 + $0x68] sm:$0xf]
        %v6720 = vld [vmem:[%s3 + $0x6c] sm:$0xf]
        %v6721 = vld [vmem:[%s3 + $0x70] sm:$0xf]
        %v6722 = vld [vmem:[%s3 + $0x74] sm:$0xf]
        %v6723 = vld [vmem:[%s3 + $0x78] sm:$0xf]
        %v6724 = vld [vmem:[%s3 + $0x7c] sm:$0xf]
        %v6725 = vld [vmem:[%s3 + $0x80] sm:$0xf]
        %v6726 = vld [vmem:[%s3 + $0x84] sm:$0xf]
        %v6727 = vld [vmem:[%s3 + $0x88] sm:$0xf]
        %v6728 = vld [vmem:[%s3 + $0x8c] sm:$0xf]
        %v6729 = vld [vmem:[%s3 + $0x90] sm:$0xf]
        %v6730 = vld [vmem:[%s3 + $0x94] sm:$0xf]
        %v6731 = vld [vmem:[%s3 + $0x98] sm:$0xf]
        %v6732 = vld [vmem:[%s3 + $0x9c] sm:$0xf]
        %v6733 = vld [vmem:[%s3 + $0xa0] sm:$0xf]
        %v6734 = vld [vmem:[%s3 + $0xa4] sm:$0xf]
        %v6735 = vld [vmem:[%s3 + $0xa8] sm:$0xf]
        %v6736 = vld [vmem:[%s3 + $0xac] sm:$0xf]
        %v6737 = vld [vmem:[%s3 + $0xb0] sm:$0xf]
        %v6738 = vld [vmem:[%s3 + $0xb4] sm:$0xf]
        %v6739 = vld [vmem:[%s3 + $0xb8] sm:$0xf]
        %v6740 = vld [vmem:[%s3 + $0xbc] sm:$0xf]
        %v6741 = vld [vmem:[#allocation2 + $0x180] sm:$0xff]
        %v6742 = vld [vmem:[#allocation2 + $0x188] sm:$0xf]
        %v6743 = vld [vmem:[#allocation2 + $0x18c] sm:$0xff]
        %v6744 = vld [vmem:[#allocation2 + $0x194] sm:$0xf]
        %v6745 = vld [vmem:[%s5142] sm:$0xf]
        %v6746 = vld [vmem:[%s5142 + $0x4] sm:$0xf]
        %v6747 = vld [vmem:[%s5142 + $0x8] sm:$0xf]
        %v6748 = vld [vmem:[%s5142 + $0xc] sm:$0xf]
        %v6749 = vld [vmem:[%s5142 + $0x10] sm:$0xf]
        %v6750 = vld [vmem:[%s5142 + $0x14] sm:$0xf]
        %v6751 = vld [vmem:[%s5142 + $0x18] sm:$0xf]
        %v6752 = vld [vmem:[%s5142 + $0x1c] sm:$0xf]
        %v6753 = vld [vmem:[%s5142 + $0x20] sm:$0xf]
        %v6754 = vld [vmem:[%s5142 + $0x24] sm:$0xf]
        %v6755 = vld [vmem:[%s5142 + $0x28] sm:$0xf]
        %v6756 = vld [vmem:[%s5142 + $0x2c] sm:$0xf]
        %v6757 = vld [vmem:[%s5142 + $0x30] sm:$0xf]
        %v6758 = vld [vmem:[%s5142 + $0x34] sm:$0xf]
        %v6759 = vld [vmem:[%s5142 + $0x38] sm:$0xf]
        %v6760 = vld [vmem:[%s5142 + $0x3c] sm:$0xf]
        %v6761 = vld [vmem:[%s5142 + $0x40] sm:$0xf]
        %v6762 = vld [vmem:[%s5142 + $0x44] sm:$0xf]
        %v6763 = vld [vmem:[%s5142 + $0x48] sm:$0xf]
        %v6764 = vld [vmem:[%s5142 + $0x4c] sm:$0xf]
        %v6765 = vld [vmem:[%s5142 + $0x50] sm:$0xf]
        %v6766 = vld [vmem:[%s5142 + $0x54] sm:$0xf]
        %v6767 = vld [vmem:[%s5142 + $0x58] sm:$0xf]
        %v6768 = vld [vmem:[%s5142 + $0x5c] sm:$0xf]
        %v6769 = vld [vmem:[%s5142 + $0x60] sm:$0xf]
        %v6770 = vld [vmem:[%s5142 + $0x64] sm:$0xf]
        %v6771 = vld [vmem:[%s5142 + $0x68] sm:$0xf]
        %v6772 = vld [vmem:[%s5142 + $0x6c] sm:$0xf]
        %v6773 = vld [vmem:[%s5142 + $0x70] sm:$0xf]
        %v6774 = vld [vmem:[%s5142 + $0x74] sm:$0xf]
        %v6775 = vld [vmem:[%s5142 + $0x78] sm:$0xf]
        %v6776 = vld [vmem:[%s5142 + $0x7c] sm:$0xf]
        %v6777 = vld [vmem:[%s5142 + $0x80] sm:$0xf]
        %v6778 = vld [vmem:[%s5142 + $0x84] sm:$0xf]
        %v6779 = vld [vmem:[%s5142 + $0x88] sm:$0xf]
        %v6780 = vld [vmem:[%s5142 + $0x8c] sm:$0xf]
        %v6781 = vld [vmem:[%s5142 + $0x90] sm:$0xf]
        %v6782 = vld [vmem:[%s5142 + $0x94] sm:$0xf]
        %v6783 = vld [vmem:[%s5142 + $0x98] sm:$0xf]
        %v6784 = vld [vmem:[%s5142 + $0x9c] sm:$0xf]
        %v6785 = vld [vmem:[%s5142 + $0xa0] sm:$0xf]
        %v6786 = vld [vmem:[%s5142 + $0xa4] sm:$0xf]
        %v6787 = vld [vmem:[%s5142 + $0xa8] sm:$0xf]
        %v6788 = vld [vmem:[%s5142 + $0xac] sm:$0xf]
        %v6789 = vld [vmem:[%s5142 + $0xb0] sm:$0xf]
        %v6790 = vld [vmem:[%s5142 + $0xb4] sm:$0xf]
        %v6791 = vld [vmem:[%s5142 + $0xb8] sm:$0xf]
        %v6792 = vld [vmem:[%s5142 + $0xbc] sm:$0xf]
        %v6825 = vunpack.c.l.b16 %v6665
        %v6826 = vunpack.c.h.b16 %v6665
        %v6827 = vunpack.c.l.b16 %v6666
        %v6828 = vunpack.c.l.b16 %v6667
        %v6829 = vunpack.c.h.b16 %v6667
        %v6830 = vunpack.c.l.b16 %v6668
        %v6831 = vunpack.c.l.b16 %v6669
        %v6832 = vunpack.c.h.b16 %v6669
        %v6833 = vunpack.c.l.b16 %v6670
        %v6834 = vunpack.c.l.b16 %v6671
        %v6835 = vunpack.c.h.b16 %v6671
        %v6836 = vunpack.c.l.b16 %v6672
        %v6837 = vunpack.c.l.b16 %v6673
        %v6838 = vunpack.c.h.b16 %v6673
        %v6839 = vunpack.c.l.b16 %v6674
        %v6840 = vunpack.c.l.b16 %v6675
        %v6841 = vunpack.c.h.b16 %v6675
        %v6842 = vunpack.c.l.b16 %v6676
        %v6843 = vunpack.c.l.b16 %v6677
        %v6844 = vunpack.c.h.b16 %v6677
        %v6845 = vunpack.c.l.b16 %v6678
        %v6846 = vunpack.c.l.b16 %v6679
        %v6847 = vunpack.c.h.b16 %v6679
        %v6848 = vunpack.c.l.b16 %v6680
        %v6849 = vunpack.c.l.b16 %v6681
        %v6850 = vunpack.c.h.b16 %v6681
        %v6851 = vunpack.c.l.b16 %v6682
        %v6852 = vunpack.c.l.b16 %v6683
        %v6853 = vunpack.c.h.b16 %v6683
        %v6854 = vunpack.c.l.b16 %v6684
        %v6855 = vunpack.c.l.b16 %v6685
        %v6856 = vunpack.c.h.b16 %v6685
        %v6857 = vunpack.c.l.b16 %v6686
        %v6858 = vunpack.c.l.b16 %v6687
        %v6859 = vunpack.c.h.b16 %v6687
        %v6860 = vunpack.c.l.b16 %v6688
        %v6861 = vunpack.c.l.b16 %v6689
        %v6862 = vunpack.c.h.b16 %v6689
        %v6863 = vunpack.c.l.b16 %v6690
        %v6864 = vunpack.c.l.b16 %v6691
        %v6865 = vunpack.c.h.b16 %v6691
        %v6866 = vunpack.c.l.b16 %v6692
        %v6867 = vunpack.c.l.b16 %v6741
        %v6868 = vunpack.c.h.b16 %v6741
        %v6869 = vunpack.c.l.b16 %v6742
        %v6870 = vunpack.c.l.b16 %v6743
        %v6871 = vunpack.c.h.b16 %v6743
        %v6872 = vunpack.c.l.b16 %v6744
        %v6873 = vpack.c.b16 %v6828, %v6825
        %v6874 = vpack.c.b16 %v6829, %v6826
        %v6875 = vpack.c.b16 %v6830, %v6827
        %v6876 = vpack.c.b16 %v6834, %v6831
        %v6877 = vpack.c.b16 %v6835, %v6832
        %v6878 = vpack.c.b16 %v6836, %v6833
        %v6879 = vpack.c.b16 %v6840, %v6837
        %v6880 = vpack.c.b16 %v6841, %v6838
        %v6881 = vpack.c.b16 %v6842, %v6839
        %v6882 = vpack.c.b16 %v6846, %v6843
        %v6883 = vpack.c.b16 %v6847, %v6844
        %v6884 = vpack.c.b16 %v6848, %v6845
        %v6885 = vpack.c.b16 %v6852, %v6849
        %v6886 = vpack.c.b16 %v6853, %v6850
        %v6887 = vpack.c.b16 %v6854, %v6851
        %v6888 = vpack.c.b16 %v6858, %v6855
        %v6889 = vpack.c.b16 %v6859, %v6856
        %v6890 = vpack.c.b16 %v6860, %v6857
        %v6891 = vpack.c.b16 %v6864, %v6861
        %v6892 = vpack.c.b16 %v6865, %v6862
        %v6893 = vpack.c.b16 %v6866, %v6863
        %v6894 = vpack.c.b16 %v6870, %v6867
        %v6895 = vpack.c.b16 %v6871, %v6868
        %v6896 = vpack.c.b16 %v6872, %v6869
        %v6969 = vunpack.c.l.b16 %v6745
        %v6970 = vunpack.c.l.b16 %v6746
        %v6971 = vunpack.c.l.b16 %v6747
        %v6972 = vunpack.c.l.b16 %v6748
        %v6973 = vunpack.c.l.b16 %v6749
        %v6974 = vunpack.c.l.b16 %v6750
        %v6975 = vunpack.c.l.b16 %v6751
        %v6976 = vunpack.c.l.b16 %v6752
        %v6977 = vunpack.c.l.b16 %v6753
        %v6978 = vunpack.c.l.b16 %v6754
        %v6979 = vunpack.c.l.b16 %v6755
        %v6980 = vunpack.c.l.b16 %v6756
        %v6981 = vunpack.c.l.b16 %v6757
        %v6982 = vunpack.c.l.b16 %v6758
        %v6983 = vunpack.c.l.b16 %v6759
        %v6984 = vunpack.c.l.b16 %v6760
        %v6985 = vunpack.c.l.b16 %v6761
        %v6986 = vunpack.c.l.b16 %v6762
        %v6987 = vunpack.c.l.b16 %v6763
        %v6988 = vunpack.c.l.b16 %v6764
        %v6989 = vunpack.c.l.b16 %v6765
        %v6990 = vunpack.c.l.b16 %v6766
        %v6991 = vunpack.c.l.b16 %v6767
        %v6992 = vunpack.c.l.b16 %v6768
        %v6993 = vunpack.c.l.b16 %v6769
        %v6994 = vunpack.c.l.b16 %v6770
        %v6995 = vunpack.c.l.b16 %v6771
        %v6996 = vunpack.c.l.b16 %v6772
        %v6997 = vunpack.c.l.b16 %v6773
        %v6998 = vunpack.c.l.b16 %v6774
        %v6999 = vunpack.c.l.b16 %v6775
        %v7000 = vunpack.c.l.b16 %v6776
        %v7001 = vunpack.c.l.b16 %v6777
        %v7002 = vunpack.c.l.b16 %v6778
        %v7003 = vunpack.c.l.b16 %v6779
        %v7004 = vunpack.c.l.b16 %v6780
        %v7005 = vunpack.c.l.b16 %v6781
        %v7006 = vunpack.c.l.b16 %v6782
        %v7007 = vunpack.c.l.b16 %v6783
        %v7008 = vunpack.c.l.b16 %v6784
        %v7009 = vunpack.c.l.b16 %v6785
        %v7010 = vunpack.c.l.b16 %v6786
        %v7011 = vunpack.c.l.b16 %v6787
        %v7012 = vunpack.c.l.b16 %v6788
        %v7013 = vunpack.c.l.b16 %v6789
        %v7014 = vunpack.c.l.b16 %v6790
        %v7015 = vunpack.c.l.b16 %v6791
        %v7016 = vunpack.c.l.b16 %v6792
        %v7017 = vpack.c.b16 %v6970, %v6969
        %v7018 = vpack.c.b16 %v6972, %v6971
        %v7019 = vpack.c.b16 %v6974, %v6973
        %v7020 = vpack.c.b16 %v6976, %v6975
        %v7021 = vpack.c.b16 %v6978, %v6977
        %v7022 = vpack.c.b16 %v6980, %v6979
        %v7023 = vpack.c.b16 %v6982, %v6981
        %v7024 = vpack.c.b16 %v6984, %v6983
        %v7025 = vpack.c.b16 %v6986, %v6985
        %v7026 = vpack.c.b16 %v6988, %v6987
        %v7027 = vpack.c.b16 %v6990, %v6989
        %v7028 = vpack.c.b16 %v6992, %v6991
        %v7029 = vpack.c.b16 %v6994, %v6993
        %v7030 = vpack.c.b16 %v6996, %v6995
        %v7031 = vpack.c.b16 %v6998, %v6997
        %v7032 = vpack.c.b16 %v7000, %v6999
        %v7033 = vpack.c.b16 %v7002, %v7001
        %v7034 = vpack.c.b16 %v7004, %v7003
        %v7035 = vpack.c.b16 %v7006, %v7005
        %v7036 = vpack.c.b16 %v7008, %v7007
        %v7037 = vpack.c.b16 %v7010, %v7009
        %v7038 = vpack.c.b16 %v7012, %v7011
        %v7039 = vpack.c.b16 %v7014, %v7013
        %v7040 = vpack.c.b16 %v7016, %v7015
        %7065 = vmatprep.subr.bf16.mxu0 0
        %7066 = vmatpush1.bf16.msra.mxu0 %v7024
        %7067 = vmatprep.subr.bf16.mxu0 0
        %7068 = vmatpush1.bf16.msra.mxu0 %v7023
        %7069 = vmatprep.subr.bf16.mxu0 0
        %7070 = vmatpush1.bf16.msra.mxu0 %v7022
        %7071 = vmatprep.subr.bf16.mxu0 0
        %7072 = vmatpush1.bf16.msra.mxu0 %v7021
        %7073 = vmatprep.subr.bf16.mxu0 0
        %7074 = vmatpush1.bf16.msra.mxu0 %v7020
        %7075 = vmatprep.subr.bf16.mxu0 0
        %7076 = vmatpush1.bf16.msra.mxu0 %v7019
        %7077 = vmatprep.subr.bf16.mxu0 0
        %7078 = vmatpush1.bf16.msra.mxu0 %v7018
        %7079 = vmatprep.subr.bf16.mxu0 0
        %7080 = vmatpush1.bf16.msra.mxu0 %v7017
        %7081 = vmatprep.subr.bf16.mxu0 0
        %7082 = vmatpush2.bf16.msra.mxu0 %v7032
        %7083 = vmatprep.subr.bf16.mxu0 0
        %7084 = vmatpush2.bf16.msra.mxu0 %v7031
        %7085 = vmatprep.subr.bf16.mxu0 0
        %7086 = vmatpush2.bf16.msra.mxu0 %v7030
        %7087 = vmatprep.subr.bf16.mxu0 0
        %7088 = vmatpush2.bf16.msra.mxu0 %v7029
        %7089 = vmatprep.subr.bf16.mxu0 0
        %7090 = vmatpush2.bf16.msra.mxu0 %v7028
        %7091 = vmatprep.subr.bf16.mxu0 0
        %7092 = vmatpush2.bf16.msra.mxu0 %v7027
        %7093 = vmatprep.subr.bf16.mxu0 0
        %7094 = vmatpush2.bf16.msra.mxu0 %v7026
        %7095 = vmatprep.subr.bf16.mxu0 0
        %7096 = vmatpush2.bf16.msra.mxu0 %v7025
        %7097 = vmatprep.mubr.bf16.mxu0 %v6874
        %7098 = vmatmul.mubr.bf16.gmra.mxu0 %v6873
        %v7099 = vpop.f32.mrf.mxu0
        %v7100 = vadd.f32 0.0, %v7099
        %v7101 = vpop.f32.mrf.mxu0
        %v7102 = vpop.f32.mrf.mxu0
        %v7103 = vadd.f32 0.0, %v7102
        %v7104 = vpop.f32.mrf.mxu0
        %7105 = vmatprep.mubr.bf16.mxu0 %v6877
        %7106 = vmatmul.mubr.bf16.gmra.mxu0 %v6876
        %v7107 = vpop.f32.mrf.mxu0
        %v7108 = vadd.f32 0.0, %v7107
        %v7109 = vpop.f32.mrf.mxu0
        %v7110 = vpop.f32.mrf.mxu0
        %v7111 = vadd.f32 0.0, %v7110
        %v7112 = vpop.f32.mrf.mxu0
        %7113 = vmatprep.mubr.bf16.mxu0 %v6880
        %7114 = vmatmul.mubr.bf16.gmra.mxu0 %v6879
        %v7115 = vpop.f32.mrf.mxu0
        %v7116 = vadd.f32 0.0, %v7115
        %v7117 = vpop.f32.mrf.mxu0
        %v7118 = vpop.f32.mrf.mxu0
        %v7119 = vadd.f32 0.0, %v7118
        %v7120 = vpop.f32.mrf.mxu0
        %7121 = vmatprep.mubr.bf16.mxu0 %v6883
        %7122 = vmatmul.mubr.bf16.gmra.mxu0 %v6882
        %v7123 = vpop.f32.mrf.mxu0
        %v7124 = vadd.f32 0.0, %v7123
        %v7125 = vpop.f32.mrf.mxu0
        %v7126 = vpop.f32.mrf.mxu0
        %v7127 = vadd.f32 0.0, %v7126
        %v7128 = vpop.f32.mrf.mxu0
        %7129 = vmatprep.mubr.bf16.mxu0 %v6886
        %7130 = vmatmul.mubr.bf16.gmra.mxu0 %v6885
        %v7131 = vpop.f32.mrf.mxu0
        %v7132 = vadd.f32 0.0, %v7131
        %v7133 = vpop.f32.mrf.mxu0
        %v7134 = vpop.f32.mrf.mxu0
        %v7135 = vadd.f32 0.0, %v7134
        %v7136 = vpop.f32.mrf.mxu0
        %7137 = vmatprep.mubr.bf16.mxu0 %v6889
        %7138 = vmatmul.mubr.bf16.gmra.mxu0 %v6888
        %v7139 = vpop.f32.mrf.mxu0
        %v7140 = vadd.f32 0.0, %v7139
        %v7141 = vpop.f32.mrf.mxu0
        %v7142 = vpop.f32.mrf.mxu0
        %v7143 = vadd.f32 0.0, %v7142
        %v7144 = vpop.f32.mrf.mxu0
        %7145 = vmatprep.mubr.bf16.mxu0 %v6892
        %7146 = vmatmul.mubr.bf16.gmra.mxu0 %v6891
        %v7147 = vpop.f32.mrf.mxu0
        %v7148 = vadd.f32 0.0, %v7147
        %v7149 = vpop.f32.mrf.mxu0
        %v7150 = vpop.f32.mrf.mxu0
        %v7151 = vadd.f32 0.0, %v7150
        %v7152 = vpop.f32.mrf.mxu0
        %7153 = vmatprep.mubr.bf16.mxu0 %v6895
        %7154 = vmatmul.mubr.bf16.gmra.mxu0 %v6894
        %v7155 = vpop.f32.mrf.mxu0
        %v7156 = vadd.f32 0.0, %v7155
        %v7157 = vpop.f32.mrf.mxu0
        %v7158 = vpop.f32.mrf.mxu0
        %v7159 = vadd.f32 0.0, %v7158
        %v7160 = vpop.f32.mrf.mxu0
        %7161 = vdwg.mxu0
        %7162 = vmatprep.subr.bf16.mxu0 0
        %7163 = vmatpush1.bf16.msra.mxu0 %v7040
        %7164 = vmatprep.subr.bf16.mxu0 0
        %7165 = vmatpush1.bf16.msra.mxu0 %v7039
        %7166 = vmatprep.subr.bf16.mxu0 0
        %7167 = vmatpush1.bf16.msra.mxu0 %v7038
        %7168 = vmatprep.subr.bf16.mxu0 0
        %7169 = vmatpush1.bf16.msra.mxu0 %v7037
        %7170 = vmatprep.subr.bf16.mxu0 0
        %7171 = vmatpush1.bf16.msra.mxu0 %v7036
        %7172 = vmatprep.subr.bf16.mxu0 0
        %7173 = vmatpush1.bf16.msra.mxu0 %v7035
        %7174 = vmatprep.subr.bf16.mxu0 0
        %7175 = vmatpush1.bf16.msra.mxu0 %v7034
        %7176 = vmatprep.subr.bf16.mxu0 0
        %7177 = vmatpush1.bf16.msra.mxu0 %v7033
        %7178 = vmatprep.subr.bf16.mxu0 0
        %7179 = vmatpush2.bf16.msra.mxu0 0
        %7180 = vmatprep.subr.bf16.mxu0 0
        %7181 = vmatpush2.bf16.msra.mxu0 0
        %7182 = vmatprep.subr.bf16.mxu0 0
        %7183 = vmatpush2.bf16.msra.mxu0 0
        %7184 = vmatprep.subr.bf16.mxu0 0
        %7185 = vmatpush2.bf16.msra.mxu0 0
        %7186 = vmatprep.subr.bf16.mxu0 0
        %7187 = vmatpush2.bf16.msra.mxu0 0
        %7188 = vmatprep.subr.bf16.mxu0 0
        %7189 = vmatpush2.bf16.msra.mxu0 0
        %7190 = vmatprep.subr.bf16.mxu0 0
        %7191 = vmatpush2.bf16.msra.mxu0 0
        %7192 = vmatprep.subr.bf16.mxu0 0
        %7193 = vmatpush2.bf16.msra.mxu0 0
        %7194 = vmatprep.mubr.bf16.mxu0 0
        %7195 = vmatmul.mubr.bf16.gmra.mxu0 %v6875
        %v7196 = vpop.f32.mrf.mxu0
        %v7197 = vadd.f32 %v7100, %v7196
        %v7198 = vpop.f32.mrf.mxu0
        %v7199 = vpop.f32.mrf.mxu0
        %v7200 = vadd.f32 %v7103, %v7199
        %v7201 = vpop.f32.mrf.mxu0
        %7202 = vmatprep.mubr.bf16.mxu0 0
        %7203 = vmatmul.mubr.bf16.gmra.mxu0 %v6878
        %v7204 = vpop.f32.mrf.mxu0
        %v7205 = vadd.f32 %v7108, %v7204
        %v7206 = vpop.f32.mrf.mxu0
        %v7207 = vpop.f32.mrf.mxu0
        %v7208 = vadd.f32 %v7111, %v7207
        %v7209 = vpop.f32.mrf.mxu0
        %7210 = vmatprep.mubr.bf16.mxu0 0
        %7211 = vmatmul.mubr.bf16.gmra.mxu0 %v6881
        %v7212 = vpop.f32.mrf.mxu0
        %v7213 = vadd.f32 %v7116, %v7212
        %v7214 = vpop.f32.mrf.mxu0
        %v7215 = vpop.f32.mrf.mxu0
        %v7216 = vadd.f32 %v7119, %v7215
        %v7217 = vpop.f32.mrf.mxu0
        %7218 = vmatprep.mubr.bf16.mxu0 0
        %7219 = vmatmul.mubr.bf16.gmra.mxu0 %v6884
        %v7220 = vpop.f32.mrf.mxu0
        %v7221 = vadd.f32 %v7124, %v7220
        %v7222 = vpop.f32.mrf.mxu0
        %v7223 = vpop.f32.mrf.mxu0
        %v7224 = vadd.f32 %v7127, %v7223
        %v7225 = vpop.f32.mrf.mxu0
        %7226 = vmatprep.mubr.bf16.mxu0 0
        %7227 = vmatmul.mubr.bf16.gmra.mxu0 %v6887
        %v7228 = vpop.f32.mrf.mxu0
        %v7229 = vadd.f32 %v7132, %v7228
        %v7230 = vpop.f32.mrf.mxu0
        %v7231 = vpop.f32.mrf.mxu0
        %v7232 = vadd.f32 %v7135, %v7231
        %v7233 = vpop.f32.mrf.mxu0
        %7234 = vmatprep.mubr.bf16.mxu0 0
        %7235 = vmatmul.mubr.bf16.gmra.mxu0 %v6890
        %v7236 = vpop.f32.mrf.mxu0
        %v7237 = vadd.f32 %v7140, %v7236
        %v7238 = vpop.f32.mrf.mxu0
        %v7239 = vpop.f32.mrf.mxu0
        %v7240 = vadd.f32 %v7143, %v7239
        %v7241 = vpop.f32.mrf.mxu0
        %7242 = vmatprep.mubr.bf16.mxu0 0
        %7243 = vmatmul.mubr.bf16.gmra.mxu0 %v6893
        %v7244 = vpop.f32.mrf.mxu0
        %v7245 = vadd.f32 %v7148, %v7244
        %v7246 = vpop.f32.mrf.mxu0
        %v7247 = vpop.f32.mrf.mxu0
        %v7248 = vadd.f32 %v7151, %v7247
        %v7249 = vpop.f32.mrf.mxu0
        %7250 = vmatprep.mubr.bf16.mxu0 0
        %7251 = vmatmul.mubr.bf16.gmra.mxu0 %v6896
        %v7252 = vpop.f32.mrf.mxu0
        %v7253 = vadd.f32 %v7156, %v7252
        %v7254 = vpop.f32.mrf.mxu0
        %v7255 = vpop.f32.mrf.mxu0
        %v7256 = vadd.f32 %v7159, %v7255
        %v7257 = vpop.f32.mrf.mxu0
        %7258 = vdwg.mxu0
        %v7263 = vunpack.c.l.b16 %v6661
        %v7264 = vunpack.c.h.b16 %v6661
        %v7265 = vunpack.c.l.b16 %v6662
        %v7266 = vunpack.c.l.b16 %v6663
        %v7267 = vunpack.c.h.b16 %v6663
        %v7268 = vunpack.c.l.b16 %v6664
        %v7269 = vpack.c.b16 %v7266, %v7263
        %v7270 = vpack.c.b16 %v7267, %v7264
        %v7271 = vpack.c.b16 %v7268, %v7265
        %v7323 = vunpack.c.l.b16 %v6693
        %v7324 = vunpack.c.l.b16 %v6694
        %v7325 = vunpack.c.l.b16 %v6695
        %v7326 = vunpack.c.l.b16 %v6696
        %v7327 = vunpack.c.l.b16 %v6697
        %v7328 = vunpack.c.l.b16 %v6698
        %v7329 = vunpack.c.l.b16 %v6699
        %v7330 = vunpack.c.l.b16 %v6700
        %v7331 = vunpack.c.l.b16 %v6701
        %v7332 = vunpack.c.l.b16 %v6702
        %v7333 = vunpack.c.l.b16 %v6703
        %v7334 = vunpack.c.l.b16 %v6704
        %v7335 = vunpack.c.l.b16 %v6705
        %v7336 = vunpack.c.l.b16 %v6706
        %v7337 = vunpack.c.l.b16 %v6707
        %v7338 = vunpack.c.l.b16 %v6708
        %v7339 = vunpack.c.l.b16 %v6709
        %v7340 = vunpack.c.l.b16 %v6710
        %v7341 = vunpack.c.l.b16 %v6711
        %v7342 = vunpack.c.l.b16 %v6712
        %v7343 = vunpack.c.l.b16 %v6713
        %v7344 = vunpack.c.l.b16 %v6714
        %v7345 = vunpack.c.l.b16 %v6715
        %v7346 = vunpack.c.l.b16 %v6716
        %v7347 = vunpack.c.l.b16 %v6717
        %v7348 = vunpack.c.l.b16 %v6718
        %v7349 = vunpack.c.l.b16 %v6719
        %v7350 = vunpack.c.l.b16 %v6720
        %v7351 = vunpack.c.l.b16 %v6721
        %v7352 = vunpack.c.l.b16 %v6722
        %v7353 = vunpack.c.l.b16 %v6723
        %v7354 = vunpack.c.l.b16 %v6724
        %v7355 = vunpack.c.l.b16 %v6725
        %v7356 = vunpack.c.l.b16 %v6726
        %v7357 = vunpack.c.l.b16 %v6727
        %v7358 = vunpack.c.l.b16 %v6728
        %v7359 = vunpack.c.l.b16 %v6729
        %v7360 = vunpack.c.l.b16 %v6730
        %v7361 = vunpack.c.l.b16 %v6731
        %v7362 = vunpack.c.l.b16 %v6732
        %v7363 = vunpack.c.l.b16 %v6733
        %v7364 = vunpack.c.l.b16 %v6734
        %v7365 = vunpack.c.l.b16 %v6735
        %v7366 = vunpack.c.l.b16 %v6736
        %v7367 = vunpack.c.l.b16 %v6737
        %v7368 = vunpack.c.l.b16 %v6738
        %v7369 = vunpack.c.l.b16 %v6739
        %v7370 = vunpack.c.l.b16 %v6740
        %v7371 = vpack.c.b16 %v7324, %v7323
        %v7372 = vpack.c.b16 %v7326, %v7325
        %v7373 = vpack.c.b16 %v7328, %v7327
        %v7374 = vpack.c.b16 %v7330, %v7329
        %v7375 = vpack.c.b16 %v7332, %v7331
        %v7376 = vpack.c.b16 %v7334, %v7333
        %v7377 = vpack.c.b16 %v7336, %v7335
        %v7378 = vpack.c.b16 %v7338, %v7337
        %v7379 = vpack.c.b16 %v7340, %v7339
        %v7380 = vpack.c.b16 %v7342, %v7341
        %v7381 = vpack.c.b16 %v7344, %v7343
        %v7382 = vpack.c.b16 %v7346, %v7345
        %v7383 = vpack.c.b16 %v7348, %v7347
        %v7384 = vpack.c.b16 %v7350, %v7349
        %v7385 = vpack.c.b16 %v7352, %v7351
        %v7386 = vpack.c.b16 %v7354, %v7353
        %v7387 = vpack.c.b16 %v7356, %v7355
        %v7388 = vpack.c.b16 %v7358, %v7357
        %v7389 = vpack.c.b16 %v7360, %v7359
        %v7390 = vpack.c.b16 %v7362, %v7361
        %v7391 = vpack.c.b16 %v7364, %v7363
        %v7392 = vpack.c.b16 %v7366, %v7365
        %v7393 = vpack.c.b16 %v7368, %v7367
        %v7394 = vpack.c.b16 %v7370, %v7369
        %7419 = vmatprep.subr.bf16.mxu0 0
        %7420 = vmatpush1.bf16.msra.mxu0 %v7378
        %7421 = vmatprep.subr.bf16.mxu0 0
        %7422 = vmatpush1.bf16.msra.mxu0 %v7377
        %7423 = vmatprep.subr.bf16.mxu0 0
        %7424 = vmatpush1.bf16.msra.mxu0 %v7376
        %7425 = vmatprep.subr.bf16.mxu0 0
        %7426 = vmatpush1.bf16.msra.mxu0 %v7375
        %7427 = vmatprep.subr.bf16.mxu0 0
        %7428 = vmatpush1.bf16.msra.mxu0 %v7374
        %7429 = vmatprep.subr.bf16.mxu0 0
        %7430 = vmatpush1.bf16.msra.mxu0 %v7373
        %7431 = vmatprep.subr.bf16.mxu0 0
        %7432 = vmatpush1.bf16.msra.mxu0 %v7372
        %7433 = vmatprep.subr.bf16.mxu0 0
        %7434 = vmatpush1.bf16.msra.mxu0 %v7371
        %7435 = vmatprep.subr.bf16.mxu0 0
        %7436 = vmatpush2.bf16.msra.mxu0 %v7386
        %7437 = vmatprep.subr.bf16.mxu0 0
        %7438 = vmatpush2.bf16.msra.mxu0 %v7385
        %7439 = vmatprep.subr.bf16.mxu0 0
        %7440 = vmatpush2.bf16.msra.mxu0 %v7384
        %7441 = vmatprep.subr.bf16.mxu0 0
        %7442 = vmatpush2.bf16.msra.mxu0 %v7383
        %7443 = vmatprep.subr.bf16.mxu0 0
        %7444 = vmatpush2.bf16.msra.mxu0 %v7382
        %7445 = vmatprep.subr.bf16.mxu0 0
        %7446 = vmatpush2.bf16.msra.mxu0 %v7381
        %7447 = vmatprep.subr.bf16.mxu0 0
        %7448 = vmatpush2.bf16.msra.mxu0 %v7380
        %7449 = vmatprep.subr.bf16.mxu0 0
        %7450 = vmatpush2.bf16.msra.mxu0 %v7379
        %7451 = vmatprep.mubr.bf16.mxu0 %v7270
        %7452 = vmatmul.mubr.bf16.gmra.mxu0 %v7269
        %v7453 = vpop.f32.mrf.mxu0
        %v7454 = vadd.f32 %v7197, %v7453
        %v7455 = vpop.f32.mrf.mxu0
        %v7456 = vpop.f32.mrf.mxu0
        %v7457 = vadd.f32 %v7200, %v7456
        %v7458 = vpop.f32.mrf.mxu0
        %7459 = vmatprep.mubr.bf16.mxu0 %v6874
        %7460 = vmatmul.mubr.bf16.gmra.mxu0 %v6873
        %v7461 = vpop.f32.mrf.mxu0
        %v7462 = vadd.f32 %v7205, %v7461
        %v7463 = vpop.f32.mrf.mxu0
        %v7464 = vpop.f32.mrf.mxu0
        %v7465 = vadd.f32 %v7208, %v7464
        %v7466 = vpop.f32.mrf.mxu0
        %7467 = vmatprep.mubr.bf16.mxu0 %v6877
        %7468 = vmatmul.mubr.bf16.gmra.mxu0 %v6876
        %v7469 = vpop.f32.mrf.mxu0
        %v7470 = vadd.f32 %v7213, %v7469
        %v7471 = vpop.f32.mrf.mxu0
        %v7472 = vpop.f32.mrf.mxu0
        %v7473 = vadd.f32 %v7216, %v7472
        %v7474 = vpop.f32.mrf.mxu0
        %7475 = vmatprep.mubr.bf16.mxu0 %v6880
        %7476 = vmatmul.mubr.bf16.gmra.mxu0 %v6879
        %v7477 = vpop.f32.mrf.mxu0
        %v7478 = vadd.f32 %v7221, %v7477
        %v7479 = vpop.f32.mrf.mxu0
        %v7480 = vpop.f32.mrf.mxu0
        %v7481 = vadd.f32 %v7224, %v7480
        %v7482 = vpop.f32.mrf.mxu0
        %7483 = vmatprep.mubr.bf16.mxu0 %v6883
        %7484 = vmatmul.mubr.bf16.gmra.mxu0 %v6882
        %v7485 = vpop.f32.mrf.mxu0
        %v7486 = vadd.f32 %v7229, %v7485
        %v7487 = vpop.f32.mrf.mxu0
        %v7488 = vpop.f32.mrf.mxu0
        %v7489 = vadd.f32 %v7232, %v7488
        %v7490 = vpop.f32.mrf.mxu0
        %7491 = vmatprep.mubr.bf16.mxu0 %v6886
        %7492 = vmatmul.mubr.bf16.gmra.mxu0 %v6885
        %v7493 = vpop.f32.mrf.mxu0
        %v7494 = vadd.f32 %v7237, %v7493
        %v7495 = vpop.f32.mrf.mxu0
        %v7496 = vpop.f32.mrf.mxu0
        %v7497 = vadd.f32 %v7240, %v7496
        %v7498 = vpop.f32.mrf.mxu0
        %7499 = vmatprep.mubr.bf16.mxu0 %v6889
        %7500 = vmatmul.mubr.bf16.gmra.mxu0 %v6888
        %v7501 = vpop.f32.mrf.mxu0
        %v7502 = vadd.f32 %v7245, %v7501
        %v7503 = vpop.f32.mrf.mxu0
        %v7504 = vpop.f32.mrf.mxu0
        %v7505 = vadd.f32 %v7248, %v7504
        %v7506 = vpop.f32.mrf.mxu0
        %7507 = vmatprep.mubr.bf16.mxu0 %v6892
        %7508 = vmatmul.mubr.bf16.gmra.mxu0 %v6891
        %v7509 = vpop.f32.mrf.mxu0
        %v7510 = vadd.f32 %v7253, %v7509
        %v7511 = vpop.f32.mrf.mxu0
        %v7512 = vpop.f32.mrf.mxu0
        %v7513 = vadd.f32 %v7256, %v7512
        %v7514 = vpop.f32.mrf.mxu0
        %7515 = vdwg.mxu0
        %7516 = vmatprep.subr.bf16.mxu0 0
        %7517 = vmatpush1.bf16.msra.mxu0 %v7394
        %7518 = vmatprep.subr.bf16.mxu0 0
        %7519 = vmatpush1.bf16.msra.mxu0 %v7393
        %7520 = vmatprep.subr.bf16.mxu0 0
        %7521 = vmatpush1.bf16.msra.mxu0 %v7392
        %7522 = vmatprep.subr.bf16.mxu0 0
        %7523 = vmatpush1.bf16.msra.mxu0 %v7391
        %7524 = vmatprep.subr.bf16.mxu0 0
        %7525 = vmatpush1.bf16.msra.mxu0 %v7390
        %7526 = vmatprep.subr.bf16.mxu0 0
        %7527 = vmatpush1.bf16.msra.mxu0 %v7389
        %7528 = vmatprep.subr.bf16.mxu0 0
        %7529 = vmatpush1.bf16.msra.mxu0 %v7388
        %7530 = vmatprep.subr.bf16.mxu0 0
        %7531 = vmatpush1.bf16.msra.mxu0 %v7387
        %7532 = vmatprep.subr.bf16.mxu0 0
        %7533 = vmatpush2.bf16.msra.mxu0 0
        %7534 = vmatprep.subr.bf16.mxu0 0
        %7535 = vmatpush2.bf16.msra.mxu0 0
        %7536 = vmatprep.subr.bf16.mxu0 0
        %7537 = vmatpush2.bf16.msra.mxu0 0
        %7538 = vmatprep.subr.bf16.mxu0 0
        %7539 = vmatpush2.bf16.msra.mxu0 0
        %7540 = vmatprep.subr.bf16.mxu0 0
        %7541 = vmatpush2.bf16.msra.mxu0 0
        %7542 = vmatprep.subr.bf16.mxu0 0
        %7543 = vmatpush2.bf16.msra.mxu0 0
        %7544 = vmatprep.subr.bf16.mxu0 0
        %7545 = vmatpush2.bf16.msra.mxu0 0
        %7546 = vmatprep.subr.bf16.mxu0 0
        %7547 = vmatpush2.bf16.msra.mxu0 0
        %7548 = vmatprep.mubr.bf16.mxu0 0
        %7549 = vmatmul.mubr.bf16.gmra.mxu0 %v7271
        %v7550 = vpop.f32.mrf.mxu0
        %v7551 = vadd.f32 %v7454, %v7550
        %v7552 = vpop.f32.mrf.mxu0
        %v7553 = vpop.f32.mrf.mxu0
        %v7554 = vadd.f32 %v7457, %v7553
        %v7555 = vpop.f32.mrf.mxu0
        %7556 = vmatprep.mubr.bf16.mxu0 0
        %7557 = vmatmul.mubr.bf16.gmra.mxu0 %v6875
        %v7558 = vpop.f32.mrf.mxu0
        %v7559 = vadd.f32 %v7462, %v7558
        %v7560 = vpop.f32.mrf.mxu0
        %v7561 = vpop.f32.mrf.mxu0
        %v7562 = vadd.f32 %v7465, %v7561
        %v7563 = vpop.f32.mrf.mxu0
        %7564 = vmatprep.mubr.bf16.mxu0 0
        %7565 = vmatmul.mubr.bf16.gmra.mxu0 %v6878
        %v7566 = vpop.f32.mrf.mxu0
        %v7567 = vadd.f32 %v7470, %v7566
        %v7568 = vpop.f32.mrf.mxu0
        %v7569 = vpop.f32.mrf.mxu0
        %v7570 = vadd.f32 %v7473, %v7569
        %v7571 = vpop.f32.mrf.mxu0
        %7572 = vmatprep.mubr.bf16.mxu0 0
        %7573 = vmatmul.mubr.bf16.gmra.mxu0 %v6881
        %v7574 = vpop.f32.mrf.mxu0
        %v7575 = vadd.f32 %v7478, %v7574
        %v7576 = vpop.f32.mrf.mxu0
        %v7577 = vpop.f32.mrf.mxu0
        %v7578 = vadd.f32 %v7481, %v7577
        %v7579 = vpop.f32.mrf.mxu0
        %7580 = vmatprep.mubr.bf16.mxu0 0
        %7581 = vmatmul.mubr.bf16.gmra.mxu0 %v6884
        %v7582 = vpop.f32.mrf.mxu0
        %v7583 = vadd.f32 %v7486, %v7582
        %v7584 = vpop.f32.mrf.mxu0
        %v7585 = vpop.f32.mrf.mxu0
        %v7586 = vadd.f32 %v7489, %v7585
        %v7587 = vpop.f32.mrf.mxu0
        %7588 = vmatprep.mubr.bf16.mxu0 0
        %7589 = vmatmul.mubr.bf16.gmra.mxu0 %v6887
        %v7590 = vpop.f32.mrf.mxu0
        %v7591 = vadd.f32 %v7494, %v7590
        %v7592 = vpop.f32.mrf.mxu0
        %v7593 = vpop.f32.mrf.mxu0
        %v7594 = vadd.f32 %v7497, %v7593
        %v7595 = vpop.f32.mrf.mxu0
        %7596 = vmatprep.mubr.bf16.mxu0 0
        %7597 = vmatmul.mubr.bf16.gmra.mxu0 %v6890
        %v7598 = vpop.f32.mrf.mxu0
        %v7599 = vadd.f32 %v7502, %v7598
        %v7600 = vpop.f32.mrf.mxu0
        %v7601 = vpop.f32.mrf.mxu0
        %v7602 = vadd.f32 %v7505, %v7601
        %v7603 = vpop.f32.mrf.mxu0
        %7604 = vmatprep.mubr.bf16.mxu0 0
        %7605 = vmatmul.mubr.bf16.gmra.mxu0 %v6893
        %v7606 = vpop.f32.mrf.mxu0
        %v7607 = vadd.f32 %v7510, %v7606
        %v7608 = vpop.f32.mrf.mxu0
        %v7609 = vpop.f32.mrf.mxu0
        %v7610 = vadd.f32 %v7513, %v7609
        %v7611 = vpop.f32.mrf.mxu0
        %7612 = vdwg.mxu0
        %v7613 = vld [vmem:[#allocation2 + $0xf0] sm:$0xff]
        %v7614 = vld [vmem:[#allocation2 + $0xf8] sm:$0xf]
        %v7615 = vld [vmem:[#allocation2 + $0xfc] sm:$0xff]
        %v7616 = vld [vmem:[#allocation2 + $0x104] sm:$0xf]
        %v7617 = vld [vmem:[#allocation2 + $0x108] sm:$0xff]
        %v7618 = vld [vmem:[#allocation2 + $0x110] sm:$0xf]
        %v7619 = vld [vmem:[#allocation2 + $0x114] sm:$0xff]
        %v7620 = vld [vmem:[#allocation2 + $0x11c] sm:$0xf]
        %v7621 = vld [vmem:[#allocation2 + $0x120] sm:$0xff]
        %v7622 = vld [vmem:[#allocation2 + $0x128] sm:$0xf]
        %v7623 = vld [vmem:[#allocation2 + $0x12c] sm:$0xff]
        %v7624 = vld [vmem:[#allocation2 + $0x134] sm:$0xf]
        %v7625 = vld [vmem:[#allocation2 + $0x138] sm:$0xff]
        %v7626 = vld [vmem:[#allocation2 + $0x140] sm:$0xf]
        %v7627 = vld [vmem:[#allocation2 + $0x144] sm:$0xff]
        %v7628 = vld [vmem:[#allocation2 + $0x14c] sm:$0xf]
        %v7629 = vld [vmem:[#allocation2 + $0x150] sm:$0xff]
        %v7630 = vld [vmem:[#allocation2 + $0x158] sm:$0xf]
        %v7631 = vld [vmem:[#allocation2 + $0x15c] sm:$0xff]
        %v7632 = vld [vmem:[#allocation2 + $0x164] sm:$0xf]
        %v7633 = vld [vmem:[#allocation2 + $0x168] sm:$0xff]
        %v7634 = vld [vmem:[#allocation2 + $0x170] sm:$0xf]
        %v7635 = vld [vmem:[#allocation2 + $0x174] sm:$0xff]
        %v7636 = vld [vmem:[#allocation2 + $0x17c] sm:$0xf]
        %v7637 = vld [vmem:[#allocation2 + $0x180] sm:$0xff]
        %v7638 = vld [vmem:[#allocation2 + $0x188] sm:$0xf]
        %v7639 = vld [vmem:[#allocation2 + $0x18c] sm:$0xff]
        %v7640 = vld [vmem:[#allocation2 + $0x194] sm:$0xf]
        %v7641 = vld [vmem:[#allocation2 + $0x198] sm:$0xff]
        %v7642 = vld [vmem:[#allocation2 + $0x1a0] sm:$0xf]
        %v7643 = vld [vmem:[#allocation2 + $0x1a4] sm:$0xff]
        %v7644 = vld [vmem:[#allocation2 + $0x1ac] sm:$0xf]
        %v7645 = vld [vmem:[%s6043] sm:$0xf]
        %v7646 = vld [vmem:[%s6043 + $0x4] sm:$0xf]
        %v7647 = vld [vmem:[%s6043 + $0x8] sm:$0xf]
        %v7648 = vld [vmem:[%s6043 + $0xc] sm:$0xf]
        %v7649 = vld [vmem:[%s6043 + $0x10] sm:$0xf]
        %v7650 = vld [vmem:[%s6043 + $0x14] sm:$0xf]
        %v7651 = vld [vmem:[%s6043 + $0x18] sm:$0xf]
        %v7652 = vld [vmem:[%s6043 + $0x1c] sm:$0xf]
        %v7653 = vld [vmem:[%s6043 + $0x20] sm:$0xf]
        %v7654 = vld [vmem:[%s6043 + $0x24] sm:$0xf]
        %v7655 = vld [vmem:[%s6043 + $0x28] sm:$0xf]
        %v7656 = vld [vmem:[%s6043 + $0x2c] sm:$0xf]
        %v7657 = vld [vmem:[%s6043 + $0x30] sm:$0xf]
        %v7658 = vld [vmem:[%s6043 + $0x34] sm:$0xf]
        %v7659 = vld [vmem:[%s6043 + $0x38] sm:$0xf]
        %v7660 = vld [vmem:[%s6043 + $0x3c] sm:$0xf]
        %v7661 = vld [vmem:[%s6043 + $0x40] sm:$0xf]
        %v7662 = vld [vmem:[%s6043 + $0x44] sm:$0xf]
        %v7663 = vld [vmem:[%s6043 + $0x48] sm:$0xf]
        %v7664 = vld [vmem:[%s6043 + $0x4c] sm:$0xf]
        %v7665 = vld [vmem:[%s6043 + $0x50] sm:$0xf]
        %v7666 = vld [vmem:[%s6043 + $0x54] sm:$0xf]
        %v7667 = vld [vmem:[%s6043 + $0x58] sm:$0xf]
        %v7668 = vld [vmem:[%s6043 + $0x5c] sm:$0xf]
        %v7669 = vld [vmem:[%s6043 + $0x60] sm:$0xf]
        %v7670 = vld [vmem:[%s6043 + $0x64] sm:$0xf]
        %v7671 = vld [vmem:[%s6043 + $0x68] sm:$0xf]
        %v7672 = vld [vmem:[%s6043 + $0x6c] sm:$0xf]
        %v7673 = vld [vmem:[%s6043 + $0x70] sm:$0xf]
        %v7674 = vld [vmem:[%s6043 + $0x74] sm:$0xf]
        %v7675 = vld [vmem:[%s6043 + $0x78] sm:$0xf]
        %v7676 = vld [vmem:[%s6043 + $0x7c] sm:$0xf]
        %v7677 = vld [vmem:[%s6043 + $0x80] sm:$0xf]
        %v7678 = vld [vmem:[%s6043 + $0x84] sm:$0xf]
        %v7679 = vld [vmem:[%s6043 + $0x88] sm:$0xf]
        %v7680 = vld [vmem:[%s6043 + $0x8c] sm:$0xf]
        %v7681 = vld [vmem:[%s6043 + $0x90] sm:$0xf]
        %v7682 = vld [vmem:[%s6043 + $0x94] sm:$0xf]
        %v7683 = vld [vmem:[%s6043 + $0x98] sm:$0xf]
        %v7684 = vld [vmem:[%s6043 + $0x9c] sm:$0xf]
        %v7685 = vld [vmem:[%s6043 + $0xa0] sm:$0xf]
        %v7686 = vld [vmem:[%s6043 + $0xa4] sm:$0xf]
        %v7687 = vld [vmem:[%s6043 + $0xa8] sm:$0xf]
        %v7688 = vld [vmem:[%s6043 + $0xac] sm:$0xf]
        %v7689 = vld [vmem:[%s6043 + $0xb0] sm:$0xf]
        %v7690 = vld [vmem:[%s6043 + $0xb4] sm:$0xf]
        %v7691 = vld [vmem:[%s6043 + $0xb8] sm:$0xf]
        %v7692 = vld [vmem:[%s6043 + $0xbc] sm:$0xf]
        %v7725 = vunpack.c.l.b16 %v7613
        %v7726 = vunpack.c.h.b16 %v7613
        %v7727 = vunpack.c.l.b16 %v7614
        %v7728 = vunpack.c.l.b16 %v7615
        %v7729 = vunpack.c.h.b16 %v7615
        %v7730 = vunpack.c.l.b16 %v7616
        %v7731 = vunpack.c.l.b16 %v7617
        %v7732 = vunpack.c.h.b16 %v7617
        %v7733 = vunpack.c.l.b16 %v7618
        %v7734 = vunpack.c.l.b16 %v7619
        %v7735 = vunpack.c.h.b16 %v7619
        %v7736 = vunpack.c.l.b16 %v7620
        %v7737 = vunpack.c.l.b16 %v7621
        %v7738 = vunpack.c.h.b16 %v7621
        %v7739 = vunpack.c.l.b16 %v7622
        %v7740 = vunpack.c.l.b16 %v7623
        %v7741 = vunpack.c.h.b16 %v7623
        %v7742 = vunpack.c.l.b16 %v7624
        %v7743 = vunpack.c.l.b16 %v7625
        %v7744 = vunpack.c.h.b16 %v7625
        %v7745 = vunpack.c.l.b16 %v7626
        %v7746 = vunpack.c.l.b16 %v7627
        %v7747 = vunpack.c.h.b16 %v7627
        %v7748 = vunpack.c.l.b16 %v7628
        %v7749 = vunpack.c.l.b16 %v7629
        %v7750 = vunpack.c.h.b16 %v7629
        %v7751 = vunpack.c.l.b16 %v7630
        %v7752 = vunpack.c.l.b16 %v7631
        %v7753 = vunpack.c.h.b16 %v7631
        %v7754 = vunpack.c.l.b16 %v7632
        %v7755 = vunpack.c.l.b16 %v7633
        %v7756 = vunpack.c.h.b16 %v7633
        %v7757 = vunpack.c.l.b16 %v7634
        %v7758 = vunpack.c.l.b16 %v7635
        %v7759 = vunpack.c.h.b16 %v7635
        %v7760 = vunpack.c.l.b16 %v7636
        %v7761 = vunpack.c.l.b16 %v7637
        %v7762 = vunpack.c.h.b16 %v7637
        %v7763 = vunpack.c.l.b16 %v7638
        %v7764 = vunpack.c.l.b16 %v7639
        %v7765 = vunpack.c.h.b16 %v7639
        %v7766 = vunpack.c.l.b16 %v7640
        %v7767 = vunpack.c.l.b16 %v7641
        %v7768 = vunpack.c.h.b16 %v7641
        %v7769 = vunpack.c.l.b16 %v7642
        %v7770 = vunpack.c.l.b16 %v7643
        %v7771 = vunpack.c.h.b16 %v7643
        %v7772 = vunpack.c.l.b16 %v7644
        %v7773 = vpack.c.b16 %v7728, %v7725
        %v7774 = vpack.c.b16 %v7729, %v7726
        %v7775 = vpack.c.b16 %v7730, %v7727
        %v7776 = vpack.c.b16 %v7734, %v7731
        %v7777 = vpack.c.b16 %v7735, %v7732
        %v7778 = vpack.c.b16 %v7736, %v7733
        %v7779 = vpack.c.b16 %v7740, %v7737
        %v7780 = vpack.c.b16 %v7741, %v7738
        %v7781 = vpack.c.b16 %v7742, %v7739
        %v7782 = vpack.c.b16 %v7746, %v7743
        %v7783 = vpack.c.b16 %v7747, %v7744
        %v7784 = vpack.c.b16 %v7748, %v7745
        %v7785 = vpack.c.b16 %v7752, %v7749
        %v7786 = vpack.c.b16 %v7753, %v7750
        %v7787 = vpack.c.b16 %v7754, %v7751
        %v7788 = vpack.c.b16 %v7758, %v7755
        %v7789 = vpack.c.b16 %v7759, %v7756
        %v7790 = vpack.c.b16 %v7760, %v7757
        %v7791 = vpack.c.b16 %v7764, %v7761
        %v7792 = vpack.c.b16 %v7765, %v7762
        %v7793 = vpack.c.b16 %v7766, %v7763
        %v7794 = vpack.c.b16 %v7770, %v7767
        %v7795 = vpack.c.b16 %v7771, %v7768
        %v7796 = vpack.c.b16 %v7772, %v7769
        %v7869 = vunpack.c.l.b16 %v7645
        %v7870 = vunpack.c.l.b16 %v7646
        %v7871 = vunpack.c.l.b16 %v7647
        %v7872 = vunpack.c.l.b16 %v7648
        %v7873 = vunpack.c.l.b16 %v7649
        %v7874 = vunpack.c.l.b16 %v7650
        %v7875 = vunpack.c.l.b16 %v7651
        %v7876 = vunpack.c.l.b16 %v7652
        %v7877 = vunpack.c.l.b16 %v7653
        %v7878 = vunpack.c.l.b16 %v7654
        %v7879 = vunpack.c.l.b16 %v7655
        %v7880 = vunpack.c.l.b16 %v7656
        %v7881 = vunpack.c.l.b16 %v7657
        %v7882 = vunpack.c.l.b16 %v7658
        %v7883 = vunpack.c.l.b16 %v7659
        %v7884 = vunpack.c.l.b16 %v7660
        %v7885 = vunpack.c.l.b16 %v7661
        %v7886 = vunpack.c.l.b16 %v7662
        %v7887 = vunpack.c.l.b16 %v7663
        %v7888 = vunpack.c.l.b16 %v7664
        %v7889 = vunpack.c.l.b16 %v7665
        %v7890 = vunpack.c.l.b16 %v7666
        %v7891 = vunpack.c.l.b16 %v7667
        %v7892 = vunpack.c.l.b16 %v7668
        %v7893 = vunpack.c.l.b16 %v7669
        %v7894 = vunpack.c.l.b16 %v7670
        %v7895 = vunpack.c.l.b16 %v7671
        %v7896 = vunpack.c.l.b16 %v7672
        %v7897 = vunpack.c.l.b16 %v7673
        %v7898 = vunpack.c.l.b16 %v7674
        %v7899 = vunpack.c.l.b16 %v7675
        %v7900 = vunpack.c.l.b16 %v7676
        %v7901 = vunpack.c.l.b16 %v7677
        %v7902 = vunpack.c.l.b16 %v7678
        %v7903 = vunpack.c.l.b16 %v7679
        %v7904 = vunpack.c.l.b16 %v7680
        %v7905 = vunpack.c.l.b16 %v7681
        %v7906 = vunpack.c.l.b16 %v7682
        %v7907 = vunpack.c.l.b16 %v7683
        %v7908 = vunpack.c.l.b16 %v7684
        %v7909 = vunpack.c.l.b16 %v7685
        %v7910 = vunpack.c.l.b16 %v7686
        %v7911 = vunpack.c.l.b16 %v7687
        %v7912 = vunpack.c.l.b16 %v7688
        %v7913 = vunpack.c.l.b16 %v7689
        %v7914 = vunpack.c.l.b16 %v7690
        %v7915 = vunpack.c.l.b16 %v7691
        %v7916 = vunpack.c.l.b16 %v7692
        %v7917 = vpack.c.b16 %v7870, %v7869
        %v7918 = vpack.c.b16 %v7872, %v7871
        %v7919 = vpack.c.b16 %v7874, %v7873
        %v7920 = vpack.c.b16 %v7876, %v7875
        %v7921 = vpack.c.b16 %v7878, %v7877
        %v7922 = vpack.c.b16 %v7880, %v7879
        %v7923 = vpack.c.b16 %v7882, %v7881
        %v7924 = vpack.c.b16 %v7884, %v7883
        %v7925 = vpack.c.b16 %v7886, %v7885
        %v7926 = vpack.c.b16 %v7888, %v7887
        %v7927 = vpack.c.b16 %v7890, %v7889
        %v7928 = vpack.c.b16 %v7892, %v7891
        %v7929 = vpack.c.b16 %v7894, %v7893
        %v7930 = vpack.c.b16 %v7896, %v7895
        %v7931 = vpack.c.b16 %v7898, %v7897
        %v7932 = vpack.c.b16 %v7900, %v7899
        %v7933 = vpack.c.b16 %v7902, %v7901
        %v7934 = vpack.c.b16 %v7904, %v7903
        %v7935 = vpack.c.b16 %v7906, %v7905
        %v7936 = vpack.c.b16 %v7908, %v7907
        %v7937 = vpack.c.b16 %v7910, %v7909
        %v7938 = vpack.c.b16 %v7912, %v7911
        %v7939 = vpack.c.b16 %v7914, %v7913
        %v7940 = vpack.c.b16 %v7916, %v7915
        %7965 = vmatprep.subr.bf16.mxu0 0
        %7966 = vmatpush1.bf16.msra.mxu0 %v7924
        %7967 = vmatprep.subr.bf16.mxu0 0
        %7968 = vmatpush1.bf16.msra.mxu0 %v7923
        %7969 = vmatprep.subr.bf16.mxu0 0
        %7970 = vmatpush1.bf16.msra.mxu0 %v7922
        %7971 = vmatprep.subr.bf16.mxu0 0
        %7972 = vmatpush1.bf16.msra.mxu0 %v7921
        %7973 = vmatprep.subr.bf16.mxu0 0
        %7974 = vmatpush1.bf16.msra.mxu0 %v7920
        %7975 = vmatprep.subr.bf16.mxu0 0
        %7976 = vmatpush1.bf16.msra.mxu0 %v7919
        %7977 = vmatprep.subr.bf16.mxu0 0
        %7978 = vmatpush1.bf16.msra.mxu0 %v7918
        %7979 = vmatprep.subr.bf16.mxu0 0
        %7980 = vmatpush1.bf16.msra.mxu0 %v7917
        %7981 = vmatprep.subr.bf16.mxu0 0
        %7982 = vmatpush2.bf16.msra.mxu0 %v7932
        %7983 = vmatprep.subr.bf16.mxu0 0
        %7984 = vmatpush2.bf16.msra.mxu0 %v7931
        %7985 = vmatprep.subr.bf16.mxu0 0
        %7986 = vmatpush2.bf16.msra.mxu0 %v7930
        %7987 = vmatprep.subr.bf16.mxu0 0
        %7988 = vmatpush2.bf16.msra.mxu0 %v7929
        %7989 = vmatprep.subr.bf16.mxu0 0
        %7990 = vmatpush2.bf16.msra.mxu0 %v7928
        %7991 = vmatprep.subr.bf16.mxu0 0
        %7992 = vmatpush2.bf16.msra.mxu0 %v7927
        %7993 = vmatprep.subr.bf16.mxu0 0
        %7994 = vmatpush2.bf16.msra.mxu0 %v7926
        %7995 = vmatprep.subr.bf16.mxu0 0
        %7996 = vmatpush2.bf16.msra.mxu0 %v7925
        %7997 = vmatprep.mubr.bf16.mxu0 %v7774
        %7998 = vmatmul.mubr.bf16.gmra.mxu0 %v7773
        %v7999 = vpop.f32.mrf.mxu0
        %v8000 = vadd.f32 0.0, %v7999
        %v8001 = vpop.f32.mrf.mxu0
        %v8002 = vpop.f32.mrf.mxu0
        %v8003 = vadd.f32 0.0, %v8002
        %v8004 = vpop.f32.mrf.mxu0
        %8005 = vmatprep.mubr.bf16.mxu0 %v7777
        %8006 = vmatmul.mubr.bf16.gmra.mxu0 %v7776
        %v8007 = vpop.f32.mrf.mxu0
        %v8008 = vadd.f32 0.0, %v8007
        %v8009 = vpop.f32.mrf.mxu0
        %v8010 = vpop.f32.mrf.mxu0
        %v8011 = vadd.f32 0.0, %v8010
        %v8012 = vpop.f32.mrf.mxu0
        %8013 = vmatprep.mubr.bf16.mxu0 %v7780
        %8014 = vmatmul.mubr.bf16.gmra.mxu0 %v7779
        %v8015 = vpop.f32.mrf.mxu0
        %v8016 = vadd.f32 0.0, %v8015
        %v8017 = vpop.f32.mrf.mxu0
        %v8018 = vpop.f32.mrf.mxu0
        %v8019 = vadd.f32 0.0, %v8018
        %v8020 = vpop.f32.mrf.mxu0
        %8021 = vmatprep.mubr.bf16.mxu0 %v7783
        %8022 = vmatmul.mubr.bf16.gmra.mxu0 %v7782
        %v8023 = vpop.f32.mrf.mxu0
        %v8024 = vadd.f32 0.0, %v8023
        %v8025 = vpop.f32.mrf.mxu0
        %v8026 = vpop.f32.mrf.mxu0
        %v8027 = vadd.f32 0.0, %v8026
        %v8028 = vpop.f32.mrf.mxu0
        %8029 = vmatprep.mubr.bf16.mxu0 %v7786
        %8030 = vmatmul.mubr.bf16.gmra.mxu0 %v7785
        %v8031 = vpop.f32.mrf.mxu0
        %v8032 = vadd.f32 0.0, %v8031
        %v8033 = vpop.f32.mrf.mxu0
        %v8034 = vpop.f32.mrf.mxu0
        %v8035 = vadd.f32 0.0, %v8034
        %v8036 = vpop.f32.mrf.mxu0
        %8037 = vmatprep.mubr.bf16.mxu0 %v7789
        %8038 = vmatmul.mubr.bf16.gmra.mxu0 %v7788
        %v8039 = vpop.f32.mrf.mxu0
        %v8040 = vadd.f32 0.0, %v8039
        %v8041 = vpop.f32.mrf.mxu0
        %v8042 = vpop.f32.mrf.mxu0
        %v8043 = vadd.f32 0.0, %v8042
        %v8044 = vpop.f32.mrf.mxu0
        %8045 = vmatprep.mubr.bf16.mxu0 %v7792
        %8046 = vmatmul.mubr.bf16.gmra.mxu0 %v7791
        %v8047 = vpop.f32.mrf.mxu0
        %v8048 = vadd.f32 0.0, %v8047
        %v8049 = vpop.f32.mrf.mxu0
        %v8050 = vpop.f32.mrf.mxu0
        %v8051 = vadd.f32 0.0, %v8050
        %v8052 = vpop.f32.mrf.mxu0
        %8053 = vmatprep.mubr.bf16.mxu0 %v7795
        %8054 = vmatmul.mubr.bf16.gmra.mxu0 %v7794
        %v8055 = vpop.f32.mrf.mxu0
        %v8056 = vadd.f32 0.0, %v8055
        %v8057 = vpop.f32.mrf.mxu0
        %v8058 = vpop.f32.mrf.mxu0
        %v8059 = vadd.f32 0.0, %v8058
        %v8060 = vpop.f32.mrf.mxu0
        %8061 = vdwg.mxu0
        %8062 = vmatprep.subr.bf16.mxu0 0
        %8063 = vmatpush1.bf16.msra.mxu0 %v7940
        %8064 = vmatprep.subr.bf16.mxu0 0
        %8065 = vmatpush1.bf16.msra.mxu0 %v7939
        %8066 = vmatprep.subr.bf16.mxu0 0
        %8067 = vmatpush1.bf16.msra.mxu0 %v7938
        %8068 = vmatprep.subr.bf16.mxu0 0
        %8069 = vmatpush1.bf16.msra.mxu0 %v7937
        %8070 = vmatprep.subr.bf16.mxu0 0
        %8071 = vmatpush1.bf16.msra.mxu0 %v7936
        %8072 = vmatprep.subr.bf16.mxu0 0
        %8073 = vmatpush1.bf16.msra.mxu0 %v7935
        %8074 = vmatprep.subr.bf16.mxu0 0
        %8075 = vmatpush1.bf16.msra.mxu0 %v7934
        %8076 = vmatprep.subr.bf16.mxu0 0
        %8077 = vmatpush1.bf16.msra.mxu0 %v7933
        %8078 = vmatprep.subr.bf16.mxu0 0
        %8079 = vmatpush2.bf16.msra.mxu0 0
        %8080 = vmatprep.subr.bf16.mxu0 0
        %8081 = vmatpush2.bf16.msra.mxu0 0
        %8082 = vmatprep.subr.bf16.mxu0 0
        %8083 = vmatpush2.bf16.msra.mxu0 0
        %8084 = vmatprep.subr.bf16.mxu0 0
        %8085 = vmatpush2.bf16.msra.mxu0 0
        %8086 = vmatprep.subr.bf16.mxu0 0
        %8087 = vmatpush2.bf16.msra.mxu0 0
        %8088 = vmatprep.subr.bf16.mxu0 0
        %8089 = vmatpush2.bf16.msra.mxu0 0
        %8090 = vmatprep.subr.bf16.mxu0 0
        %8091 = vmatpush2.bf16.msra.mxu0 0
        %8092 = vmatprep.subr.bf16.mxu0 0
        %8093 = vmatpush2.bf16.msra.mxu0 0
        %8094 = vmatprep.mubr.bf16.mxu0 0
        %8095 = vmatmul.mubr.bf16.gmra.mxu0 %v7775
        %v8096 = vpop.f32.mrf.mxu0
        %v8097 = vadd.f32 %v8000, %v8096
        %v8098 = vpop.f32.mrf.mxu0
        %v8099 = vpop.f32.mrf.mxu0
        %v8100 = vadd.f32 %v8003, %v8099
        %v8101 = vpop.f32.mrf.mxu0
        %8102 = vmatprep.mubr.bf16.mxu0 0
        %8103 = vmatmul.mubr.bf16.gmra.mxu0 %v7778
        %v8104 = vpop.f32.mrf.mxu0
        %v8105 = vadd.f32 %v8008, %v8104
        %v8106 = vpop.f32.mrf.mxu0
        %v8107 = vpop.f32.mrf.mxu0
        %v8108 = vadd.f32 %v8011, %v8107
        %v8109 = vpop.f32.mrf.mxu0
        %8110 = vmatprep.mubr.bf16.mxu0 0
        %8111 = vmatmul.mubr.bf16.gmra.mxu0 %v7781
        %v8112 = vpop.f32.mrf.mxu0
        %v8113 = vadd.f32 %v8016, %v8112
        %v8114 = vpop.f32.mrf.mxu0
        %v8115 = vpop.f32.mrf.mxu0
        %v8116 = vadd.f32 %v8019, %v8115
        %v8117 = vpop.f32.mrf.mxu0
        %8118 = vmatprep.mubr.bf16.mxu0 0
        %8119 = vmatmul.mubr.bf16.gmra.mxu0 %v7784
        %v8120 = vpop.f32.mrf.mxu0
        %v8121 = vadd.f32 %v8024, %v8120
        %v8122 = vpop.f32.mrf.mxu0
        %v8123 = vpop.f32.mrf.mxu0
        %v8124 = vadd.f32 %v8027, %v8123
        %v8125 = vpop.f32.mrf.mxu0
        %8126 = vmatprep.mubr.bf16.mxu0 0
        %8127 = vmatmul.mubr.bf16.gmra.mxu0 %v7787
        %v8128 = vpop.f32.mrf.mxu0
        %v8129 = vadd.f32 %v8032, %v8128
        %v8130 = vpop.f32.mrf.mxu0
        %v8131 = vpop.f32.mrf.mxu0
        %v8132 = vadd.f32 %v8035, %v8131
        %v8133 = vpop.f32.mrf.mxu0
        %8134 = vmatprep.mubr.bf16.mxu0 0
        %8135 = vmatmul.mubr.bf16.gmra.mxu0 %v7790
        %v8136 = vpop.f32.mrf.mxu0
        %v8137 = vadd.f32 %v8040, %v8136
        %v8138 = vpop.f32.mrf.mxu0
        %v8139 = vpop.f32.mrf.mxu0
        %v8140 = vadd.f32 %v8043, %v8139
        %v8141 = vpop.f32.mrf.mxu0
        %8142 = vmatprep.mubr.bf16.mxu0 0
        %8143 = vmatmul.mubr.bf16.gmra.mxu0 %v7793
        %v8144 = vpop.f32.mrf.mxu0
        %v8145 = vadd.f32 %v8048, %v8144
        %v8146 = vpop.f32.mrf.mxu0
        %v8147 = vpop.f32.mrf.mxu0
        %v8148 = vadd.f32 %v8051, %v8147
        %v8149 = vpop.f32.mrf.mxu0
        %8150 = vmatprep.mubr.bf16.mxu0 0
        %8151 = vmatmul.mubr.bf16.gmra.mxu0 %v7796
        %v8152 = vpop.f32.mrf.mxu0
        %v8153 = vadd.f32 %v8056, %v8152
        %v8154 = vpop.f32.mrf.mxu0
        %v8155 = vpop.f32.mrf.mxu0
        %v8156 = vadd.f32 %v8059, %v8155
        %v8157 = vpop.f32.mrf.mxu0
        %8158 = vdwg.mxu0
        %v8159 = vadd.f32 %v7551, %v8097
        %v8160 = vadd.f32 %v7554, %v8100
        %v8161 = vadd.f32 %v7559, %v8105
        %v8162 = vadd.f32 %v7562, %v8108
        %v8163 = vadd.f32 %v7567, %v8113
        %v8164 = vadd.f32 %v7570, %v8116
        %v8165 = vadd.f32 %v7575, %v8121
        %v8166 = vadd.f32 %v7578, %v8124
        %v8167 = vadd.f32 %v7583, %v8129
        %v8168 = vadd.f32 %v7586, %v8132
        %v8169 = vadd.f32 %v7591, %v8137
        %v8170 = vadd.f32 %v7594, %v8140
        %v8171 = vadd.f32 %v7599, %v8145
        %v8172 = vadd.f32 %v7602, %v8148
        %v8173 = vadd.f32 %v7607, %v8153
        %v8174 = vadd.f32 %v7610, %v8156
        %v8175 = vld [vmem:[%s4] sm:$0x1]
        %v8177 = vlaneseq
        %v8178 = vshrl.u32 %v8177, 7
        %v8179 = vsub.s32 0, %v8178
        %v8180 = vrot.slane %v8175, %v8179
        %v8182 = vadd.f32 %v8159, %v8180
        %v8183 = vadd.f32 %v8160, %v8180
        %v8184 = vadd.f32 %v8161, %v8180
        %v8185 = vadd.f32 %v8162, %v8180
        %v8186 = vadd.f32 %v8163, %v8180
        %v8187 = vadd.f32 %v8164, %v8180
        %v8188 = vadd.f32 %v8165, %v8180
        %v8189 = vadd.f32 %v8166, %v8180
        %v8190 = vadd.f32 %v8167, %v8180
        %v8191 = vadd.f32 %v8168, %v8180
        %v8192 = vadd.f32 %v8169, %v8180
        %v8193 = vadd.f32 %v8170, %v8180
        %v8194 = vadd.f32 %v8171, %v8180
        %v8195 = vadd.f32 %v8172, %v8180
        %v8196 = vadd.f32 %v8173, %v8180
        %v8197 = vadd.f32 %v8174, %v8180
        %v8198 = vld [vmem:[%s222 + $0x80] sm:$0xff]
        %v8199 = vld [vmem:[%s222 + $0x88] sm:$0xff]
        %v8200 = vld [vmem:[%s222 + $0x90] sm:$0xff]
        %v8201 = vld [vmem:[%s222 + $0x98] sm:$0xff]
        %v8202 = vld [vmem:[%s222 + $0xa0] sm:$0xff]
        %v8203 = vld [vmem:[%s222 + $0xa8] sm:$0xff]
        %v8204 = vld [vmem:[%s222 + $0xb0] sm:$0xff]
        %v8205 = vld [vmem:[%s222 + $0xb8] sm:$0xff]
        %v8206 = vld [vmem:[%s222 + $0xc0] sm:$0xff]
        %v8207 = vld [vmem:[%s222 + $0xc8] sm:$0xff]
        %v8208 = vld [vmem:[%s222 + $0xd0] sm:$0xff]
        %v8209 = vld [vmem:[%s222 + $0xd8] sm:$0xff]
        %v8210 = vld [vmem:[%s222 + $0xe0] sm:$0xff]
        %v8211 = vld [vmem:[%s222 + $0xe8] sm:$0xff]
        %v8212 = vld [vmem:[%s222 + $0xf0] sm:$0xff]
        %v8213 = vld [vmem:[%s222 + $0xf8] sm:$0xff]
        %v8214 = vmul.f32 %v8182, 0.2
        %v8215 = vmul.f32 %v8183, 0.2
        %v8216 = vmul.f32 %v8184, 0.2
        %v8217 = vmul.f32 %v8185, 0.2
        %v8218 = vmul.f32 %v8186, 0.2
        %v8219 = vmul.f32 %v8187, 0.2
        %v8220 = vmul.f32 %v8188, 0.2
        %v8221 = vmul.f32 %v8189, 0.2
        %v8222 = vmul.f32 %v8190, 0.2
        %v8223 = vmul.f32 %v8191, 0.2
        %v8224 = vmul.f32 %v8192, 0.2
        %v8225 = vmul.f32 %v8193, 0.2
        %v8226 = vmul.f32 %v8194, 0.2
        %v8227 = vmul.f32 %v8195, 0.2
        %v8228 = vmul.f32 %v8196, 0.2
        %v8229 = vmul.f32 %v8197, 0.2
        %v8230 = vadd.f32 %v8198, %v8214
        %v8231 = vadd.f32 %v8199, %v8215
        %v8232 = vadd.f32 %v8200, %v8216
        %v8233 = vadd.f32 %v8201, %v8217
        %v8234 = vadd.f32 %v8202, %v8218
        %v8235 = vadd.f32 %v8203, %v8219
        %v8236 = vadd.f32 %v8204, %v8220
        %v8237 = vadd.f32 %v8205, %v8221
        %v8238 = vadd.f32 %v8206, %v8222
        %v8239 = vadd.f32 %v8207, %v8223
        %v8240 = vadd.f32 %v8208, %v8224
        %v8241 = vadd.f32 %v8209, %v8225
        %v8242 = vadd.f32 %v8210, %v8226
        %v8243 = vadd.f32 %v8211, %v8227
        %v8244 = vadd.f32 %v8212, %v8228
        %v8245 = vadd.f32 %v8213, %v8229
        %8246 = vst [vmem:[%s217 + $0x80] sm:$0xff] %v8230
        %8247 = vst [vmem:[%s217 + $0x88] sm:$0xff] %v8231
        %8248 = vst [vmem:[%s217 + $0x90] sm:$0xff] %v8232
        %8249 = vst [vmem:[%s217 + $0x98] sm:$0xff] %v8233
        %8250 = vst [vmem:[%s217 + $0xa0] sm:$0xff] %v8234
        %8251 = vst [vmem:[%s217 + $0xa8] sm:$0xff] %v8235
        %8252 = vst [vmem:[%s217 + $0xb0] sm:$0xff] %v8236
        %8253 = vst [vmem:[%s217 + $0xb8] sm:$0xff] %v8237
        %8254 = vst [vmem:[%s217 + $0xc0] sm:$0xff] %v8238
        %8255 = vst [vmem:[%s217 + $0xc8] sm:$0xff] %v8239
        %8256 = vst [vmem:[%s217 + $0xd0] sm:$0xff] %v8240
        %8257 = vst [vmem:[%s217 + $0xd8] sm:$0xff] %v8241
        %8258 = vst [vmem:[%s217 + $0xe0] sm:$0xff] %v8242
        %8259 = vst [vmem:[%s217 + $0xe8] sm:$0xff] %v8243
        %8260 = vst [vmem:[%s217 + $0xf0] sm:$0xff] %v8244
        %8261 = vst [vmem:[%s217 + $0xf8] sm:$0xff] %v8245
        %s8262 = sand.u32 %s137, 1
        %s8263 = scalar_lea.sflag [#allocation5], %s8262
        %s8264 = sand.u32 %s137, 1
        %s8265 = smul.addr %s8264, 256
        %s8266 = scalar_lea.vmem [#allocation4], %s8265
        // Predicated region
        $region41: #{residual_block_forward.1} parent=39 // pred_check
          %p8267 = pneg %p147
        $region42: #{residual_block_forward.1} parent=39 // pred_check_branch
          %8269 = sbr.rel (%p8267) target = $region44
        $region43: #{residual_block_forward.1} parent=39 // pred_region
          %s8271 = ssub.s32 4096, 4096
          %8272 = vsyncadd %s8263, %s8271
          %s8273 = smul.addr %s19, 32
          %s8274 = smul.addr %s8273, 128
          %s8275 = scalar_lea.hbm %s5, %s8274
          %s8276 = sshll.u32 %s8266, 4
          %s8277 = int_to_ptr.vmem [resolvable:$true] %s8276
          %8282 = dma.vmem_to_hbm [thread:$0]  %s8277, 4096, %s8275, %s8263, 128, 128, 8
        $region44: #{residual_block_forward.1} parent=39 // pred_fallthru
          _
      $region40: #{residual_block_forward.1} parent=5 // pred_fallthru
        _
      %p8283 = scmp.le.s32.totalorder 2, %s14
      // Predicated region
      $region45: #{residual_block_forward.1} parent=5 // pred_check
        %p8284 = pneg %p8283
      $region46: #{residual_block_forward.1} parent=5 // pred_check_branch
        %8286 = sbr.rel (%p8284) target = $region48
      $region47: #{residual_block_forward.1} parent=5 // pred_region
        %s8287 = ssub.s32 %s14, 2
        // Predicated region
        $region49: #{residual_block_forward.1} parent=47 // pred_check
          %p8288 = pneg %p153
        $region50: #{residual_block_forward.1} parent=47 // pred_check_branch
          %8290 = sbr.rel (%p8288) target = $region52
        $region51: #{residual_block_forward.1} parent=47 // pred_region
          %s8291 = sand.u32 %s138, 1
          %s8292 = scalar_lea.sflag [#allocation5], %s8291
          %s8293 = sand.u32 %s138, 1
          %s8294 = smul.addr %s8293, 256
          %s8295 = scalar_lea.vmem [#allocation4], %s8294
          %8296 = dma.done %s8292, 4096
        $region52: #{residual_block_forward.1} parent=47 // pred_fallthru
          _
      $region48: #{residual_block_forward.1} parent=5 // pred_fallthru
        _
    $region6: #{residual_block_forward.1} parent=1 // loop_footer
      %s18 = sadd.s32 1, %s14
    $region7: #{residual_block_forward.1} parent=1 // loop_footer_branch
      %13 = sbr.rel target = $region3
    $region8: #{residual_block_forward.1} parent=1 // loop_exit
      _
    %8297 = vsyncpa [#allocation5], 1
    %s8298 = scalar_lea.sflag [#allocation5], 1
    %8299 = vsyncpa %s8298, 1

</llo_original>
